<compile_context>
chip_gen: v6e
topology: v6e:2x2x1
jax: 0.10.0
libtpu: 0.0.40
codegen_flags: <defaults>
</compile_context>

<pallas_src>
import jax
import jax.numpy as jnp
from jax.experimental import pallas as pl
from jax.experimental.pallas import tpu as pltpu

EPS = 1e-5
LANE = 128
# Below v7x's 64 MiB physical VMEM (headroom), above the 16/32 MiB scoped defaults.
VMEM_LIMIT = 48 * 1024 * 1024


def _round_up(x, m):
    return (x + m - 1) // m * m


def _pick_tm(m, bytes_per_row, budget=8 * 1024 * 1024):
    """Largest row-tile dividing M whose double-buffered streamed operands fit budget."""
    for tm in (1024, 512, 256, 128, 64, 32, 16, 8):
        if m % tm == 0 and tm * bytes_per_row * 2 <= budget:
            return tm
    # TODO(synk): for very large, oddly-sized M a masked remainder tile would be needed.
    return m


def _compiler_params(sem):
    return pltpu.CompilerParams(dimension_semantics=(sem,),
                                vmem_limit_bytes=VMEM_LIMIT)


# ----------------------------------------------------------------------------- kernels


def _matmul_stats_kernel(x_ref, w_ref, y_ref, stats_ref):
    """1x1 conv tile: y = x @ w (bf16 MXU, f32 acc) + per-channel sum / sumsq."""
    y = jnp.dot(x_ref[...].astype(jnp.bfloat16), w_ref[...],
                preferred_element_type=jnp.float32)
    y_ref[...] = y

    @pl.when(pl.program_id(0) == 0)
    def _init():
        stats_ref[...] = jnp.zeros_like(stats_ref)

    stats_ref[...] += jnp.concatenate(
        [jnp.sum(y, axis=0, keepdims=True),
         jnp.sum(y * y, axis=0, keepdims=True)], axis=0)


def _bn_relu_matmul_stats_kernel(y_ref, s_ref, b_ref, w_ref, o_ref, stats_ref):
    """Fused: a = relu(y*scale+shift); o = a @ w (bf16 MXU); accumulate stats of o."""
    a = jnp.maximum(y_ref[...] * s_ref[...] + b_ref[...], 0.0)
    o = jnp.dot(a.astype(jnp.bfloat16), w_ref[...],
                preferred_element_type=jnp.float32)
    o_ref[...] = o

    @pl.when(pl.program_id(0) == 0)
    def _init():
        stats_ref[...] = jnp.zeros_like(stats_ref)

    stats_ref[...] += jnp.concatenate(
        [jnp.sum(o, axis=0, keepdims=True),
         jnp.sum(o * o, axis=0, keepdims=True)], axis=0)


def _conv3x3_stats_kernel(a_ref, w_ref, y_ref, stats_ref):
    """3x3 'same' conv on one spatially padded NHWC image via 9 accumulated MXU
    matmuls on shifted slices (no im2col), plus per-channel sum / sumsq."""
    hp2, wp2 = a_ref.shape[1], a_ref.shape[2]
    h, w = hp2 - 2, wp2 - 2
    c = w_ref.shape[2]

    acc = jnp.zeros((h * w, c), jnp.float32)
    for t in range(9):                       # static unroll: 9 MXU dots
        di, dj = t // 3, t % 3
        a_tap = a_ref[0, di:di + h, dj:dj + w, :].reshape(h * w, c)
        acc = acc + jnp.dot(a_tap, w_ref[t], preferred_element_type=jnp.float32)
    y_ref[0] = acc

    @pl.when(pl.program_id(0) == 0)
    def _init():
        stats_ref[...] = jnp.zeros_like(stats_ref)

    stats_ref[...] += jnp.concatenate(
        [jnp.sum(acc, axis=0, keepdims=True),
         jnp.sum(acc * acc, axis=0, keepdims=True)], axis=0)


def _bn_relu_kernel(y_ref, s_ref, b_ref, o_ref):
    o_ref[...] = jnp.maximum(y_ref[...] * s_ref[...] + b_ref[...],
                             0.0).astype(o_ref.dtype)


def _bn_add_relu_kernel(y_ref, s_ref, b_ref, r_ref, o_ref):
    o_ref[...] = jnp.maximum(
        y_ref[...] * s_ref[...] + b_ref[...] + r_ref[...], 0.0)


# ---------------------------------------------------------------------------- wrappers


def _matmul_with_stats(x2d, w):
    m, k = x2d.shape
    c = w.shape[1]
    tm = _pick_tm(m, 4 * (k + c))
    return pl.pallas_call(
        _matmul_stats_kernel,
        out_shape=(jax.ShapeDtypeStruct((m, c), jnp.float32),
                   jax.ShapeDtypeStruct((2, c), jnp.float32)),
        grid=(m // tm,),
        in_specs=[pl.BlockSpec((tm, k), lambda i: (i, 0)),
                  pl.BlockSpec((k, c), lambda i: (0, 0))],
        out_specs=(pl.BlockSpec((tm, c), lambda i: (i, 0)),
                   pl.BlockSpec((2, c), lambda i: (0, 0))),
        compiler_params=_compiler_params("arbitrary"),
    )(x2d, w)


def _bn_relu_matmul_with_stats(y, scale, shift, w):
    m, k = y.shape
    c = w.shape[1]
    tm = _pick_tm(m, 4 * (k + c))
    return pl.pallas_call(
        _bn_relu_matmul_stats_kernel,
        out_shape=(jax.ShapeDtypeStruct((m, c), jnp.float32),
                   jax.ShapeDtypeStruct((2, c), jnp.float32)),
        grid=(m // tm,),
        in_specs=[pl.BlockSpec((tm, k), lambda i: (i, 0)),
                  pl.BlockSpec((1, k), lambda i: (0, 0)),
                  pl.BlockSpec((1, k), lambda i: (0, 0)),
                  pl.BlockSpec((k, c), lambda i: (0, 0))],
        out_specs=(pl.BlockSpec((tm, c), lambda i: (i, 0)),
                   pl.BlockSpec((2, c), lambda i: (0, 0))),
        compiler_params=_compiler_params("arbitrary"),
    )(y, scale, shift, w)


def _conv3x3_with_stats(a_pad, w9):
    # TODO(synk): for large images additionally tile H (haloed row blocks).
    n, hp2, wp2, c = a_pad.shape
    h, w = hp2 - 2, wp2 - 2
    return pl.pallas_call(
        _conv3x3_stats_kernel,
        out_shape=(jax.ShapeDtypeStruct((n, h * w, c), jnp.float32),
                   jax.ShapeDtypeStruct((2, c), jnp.float32)),
        grid=(n,),
        in_specs=[pl.BlockSpec((1, hp2, wp2, c), lambda i: (i, 0, 0, 0)),
                  pl.BlockSpec((9, c, c), lambda i: (0, 0, 0))],
        out_specs=(pl.BlockSpec((1, h * w, c), lambda i: (i, 0, 0)),
                   pl.BlockSpec((2, c), lambda i: (0, 0))),
        compiler_params=_compiler_params("arbitrary"),
    )(a_pad, w9)


def _bn_relu(y, scale, shift, out_dtype=jnp.bfloat16):
    m, c = y.shape
    tm = _pick_tm(m, 6 * c)
    return pl.pallas_call(
        _bn_relu_kernel,
        out_shape=jax.ShapeDtypeStruct((m, c), out_dtype),
        grid=(m // tm,),
        in_specs=[pl.BlockSpec((tm, c), lambda i: (i, 0)),
                  pl.BlockSpec((1, c), lambda i: (0, 0)),
                  pl.BlockSpec((1, c), lambda i: (0, 0))],
        out_specs=pl.BlockSpec((tm, c), lambda i: (i, 0)),
        compiler_params=_compiler_params("parallel"),
    )(y, scale, shift)


def _bn_add_relu(y, scale, shift, residual):
    m, c = y.shape
    tm = _pick_tm(m, 12 * c)
    return pl.pallas_call(
        _bn_add_relu_kernel,
        out_shape=jax.ShapeDtypeStruct((m, c), jnp.float32),
        grid=(m // tm,),
        in_specs=[pl.BlockSpec((tm, c), lambda i: (i, 0)),
                  pl.BlockSpec((1, c), lambda i: (0, 0)),
                  pl.BlockSpec((1, c), lambda i: (0, 0)),
                  pl.BlockSpec((tm, c), lambda i: (i, 0))],
        out_specs=pl.BlockSpec((tm, c), lambda i: (i, 0)),
        compiler_params=_compiler_params("parallel"),
    )(y, scale, shift, residual)


def _bn_coeffs(stats, count, gamma, beta):
    """Fold per-channel sum/sumsq into BN scale/shift (biased variance, train mode)."""
    mean = stats[0] / count
    var = jnp.maximum(stats[1] / count - mean * mean, 0.0)
    inv = jax.lax.rsqrt(var + EPS)
    scale = gamma * inv
    shift = beta - mean * scale
    return scale.reshape(1, -1), shift.reshape(1, -1)


# ----------------------------------------------------------------------------- forward


def init_params(key, inplanes, planes):
    ks = jax.random.split(key, 9)
    p = {}
    p["w1"] = 0.1 * jax.random.normal(ks[0], (inplanes, planes), jnp.float32)
    p["w2"] = 0.1 * jax.random.normal(ks[1], (3, 3, planes, planes), jnp.float32)
    p["w3"] = 0.1 * jax.random.normal(ks[2], (planes, 4 * planes), jnp.float32)
    p["g1"] = 1.0 + 0.1 * jax.random.normal(ks[3], (planes,), jnp.float32)
    p["b1"] = 0.1 * jax.random.normal(ks[4], (planes,), jnp.float32)
    p["g2"] = 1.0 + 0.1 * jax.random.normal(ks[5], (planes,), jnp.float32)
    p["b2"] = 0.1 * jax.random.normal(ks[6], (planes,), jnp.float32)
    p["g3"] = 1.0 + 0.1 * jax.random.normal(ks[7], (4 * planes,), jnp.float32)
    p["b3"] = 0.1 * jax.random.normal(ks[8], (4 * planes,), jnp.float32)
    return p


def bottleneck_forward(x_nchw, params):
    n, cin, h, w = x_nchw.shape
    inplanes, planes = params["w1"].shape
    assert cin == inplanes == 4 * planes, (
        "identity-residual Bottleneck requires inplanes == planes * expansion")

    cin_p = _round_up(cin, LANE)
    cmid_p = _round_up(planes, LANE)
    cout_p = _round_up(4 * planes, LANE)   # == cin_p
    m = n * h * w

    # NCHW -> NHWC -> [M, C], zero-pad channels to lane multiples (x stays f32: it is
    # also the residual; the conv1 kernel casts its tile to bf16 in-register).
    x2d = jnp.transpose(x_nchw, (0, 2, 3, 1)).astype(jnp.float32).reshape(m, cin)
    x2d = jnp.pad(x2d, ((0, 0), (0, cin_p - cin)))

    w1 = jnp.pad(params["w1"],
                 ((0, cin_p - inplanes), (0, cmid_p - planes))).astype(jnp.bfloat16)
    w2 = jnp.pad(params["w2"].reshape(9, planes, planes),
                 ((0, 0), (0, cmid_p - planes), (0, cmid_p - planes))).astype(jnp.bfloat16)
    w3 = jnp.pad(params["w3"],
                 ((0, cmid_p - planes), (0, cout_p - 4 * planes))).astype(jnp.bfloat16)
    g1 = jnp.pad(params["g1"], (0, cmid_p - planes))
    b1 = jnp.pad(params["b1"], (0, cmid_p - planes))
    g2 = jnp.pad(params["g2"], (0, cmid_p - planes))
    b2 = jnp.pad(params["b2"], (0, cmid_p - planes))
    g3 = jnp.pad(params["g3"], (0, cout_p - 4 * planes))
    b3 = jnp.pad(params["b3"], (0, cout_p - 4 * planes))

    # conv1 (1x1) + bn1 + relu  (matmul+stats pass, then tiled normalize pass)
    y1, st1 = _matmul_with_stats(x2d, w1)
    scale1, shift1 = _bn_coeffs(st1, m, g1, b1)
    a1 = _bn_relu(y1, scale1, shift1)                       # bf16 [M, cmid_p]

    # conv2 (3x3, stride=1, pad=1) + bn2 stats, in-kernel 9-tap accumulation
    a1_pad = jnp.pad(a1.reshape(n, h, w, cmid_p), ((0, 0), (1, 1), (1, 1), (0, 0)))
    y2, st2 = _conv3x3_with_stats(a1_pad, w2)               # f32 [N, H*W, cmid_p]
    scale2, shift2 = _bn_coeffs(st2, m, g2, b2)

    # conv3 (1x1) with bn2+relu fused in front and bn3 stats fused behind
    y3, st3 = _bn_relu_matmul_with_stats(y2.reshape(m, cmid_p), scale2, shift2, w3)
    scale3, shift3 = _bn_coeffs(st3, m, g3, b3)

    # bn3 + residual add + relu
    out2d = _bn_add_relu(y3, scale3, shift3, x2d)           # f32 [M, cout_p]

    out = out2d[:, :4 * planes].reshape(n, h, w, 4 * planes)
    return jnp.transpose(out, (0, 3, 1, 2))                 # back to NCHW


# ---------------------------------------------------------------- pure-JAX reference


def _reference_forward(x_nchw, params):
    n, cin, h, w = x_nchw.shape
    planes = params["w1"].shape[1]
    m = n * h * w
    x2d = jnp.transpose(x_nchw, (0, 2, 3, 1)).astype(jnp.float32).reshape(m, cin)

    def bn(y, g, b):
        mean = jnp.mean(y, axis=0, keepdims=True)
        var = jnp.mean(y * y, axis=0, keepdims=True) - mean * mean
        return (y - mean) * jax.lax.rsqrt(var + EPS) * g[None, :] + b[None, :]

    y1 = jnp.maximum(bn(x2d @ params["w1"], params["g1"], params["b1"]), 0.0)
    y1p = jnp.pad(y1.reshape(n, h, w, planes), ((0, 0), (1, 1), (1, 1), (0, 0)))
    patches = jnp.concatenate(
        [y1p[:, di:di + h, dj:dj + w, :] for di in range(3) for dj in range(3)],
        axis=-1).reshape(m, 9 * planes)
    w2 = params["w2"].reshape(9 * planes, planes)
    y2 = jnp.maximum(bn(patches @ w2, params["g2"], params["b2"]), 0.0)
    y3 = bn(y2 @ params["w3"], params["g3"], params["b3"])
    out = jnp.maximum(y3 + x2d, 0.0)
    return jnp.transpose(out.reshape(n, h, w, 4 * planes), (0, 3, 1, 2))


if __name__ == "__main__":
    key = jax.random.PRNGKey(0)
    kx, kp = jax.random.split(key)

    n, h, w = 3, 16, 16
    planes = 8
    inplanes = 4 * planes            # identity residual: inplanes == planes * expansion

    x = jax.random.normal(kx, (n, inplanes, h, w), jnp.float32)
    params = init_params(kp, inplanes, planes)

    out = jax.jit(bottleneck_forward)(x, params)
    jax.block_until_ready(out)

    assert out.shape == (n, 4 * planes, h, w)
    assert bool(jnp.all(jnp.isfinite(out)))

    ref = _reference_forward(x, params)
    assert bool(jnp.allclose(out, ref, atol=5e-2, rtol=5e-2)), float(
        jnp.max(jnp.abs(out - ref)))

    print("KERNEL_OK")
</pallas_src>

<mosaic_0001>
module attributes {stable_mosaic.version = 11 : i64} {
  func.func @_bn_relu_kernel(%arg0: i32, %arg1: memref<256x128xf32, #tpu.memory_space<vmem>>, %arg2: memref<1x128xf32, #tpu.memory_space<vmem>>, %arg3: memref<1x128xf32, #tpu.memory_space<vmem>>, %arg4: memref<256x128xbf16, #tpu.memory_space<vmem>>) attributes {dimension_semantics = [#tpu.dimension_semantics<parallel>], iteration_bounds = array<i64: 3>, scalar_prefetch = 0 : i64, scratch_operands = 0 : i64, tpu.core_type = #tpu.core_type<tc>, window_params = [{transform_indices = @transform_0, window_bounds = array<i64: 256, 128>}, {pipeline_mode = #tpu.pipeline_mode<synchronous>, transform_indices = @transform_1, window_bounds = array<i64: 1, 128>}, {pipeline_mode = #tpu.pipeline_mode<synchronous>, transform_indices = @transform_2, window_bounds = array<i64: 1, 128>}, {transform_indices = @transform_3, window_bounds = array<i64: 256, 128>}]} {
    %c0 = arith.constant 0 : index
    %c0_0 = arith.constant 0 : index
    %0 = vector.load %arg1[%c0, %c0_0] : memref<256x128xf32, #tpu.memory_space<vmem>>, vector<256x128xf32>
    %c0_1 = arith.constant 0 : index
    %c0_2 = arith.constant 0 : index
    %1 = vector.load %arg2[%c0_1, %c0_2] : memref<1x128xf32, #tpu.memory_space<vmem>>, vector<1x128xf32>
    %2 = vector.broadcast %1 : vector<1x128xf32> to vector<256x128xf32>
    %3 = arith.mulf %0, %2 : vector<256x128xf32>
    %c0_3 = arith.constant 0 : index
    %c0_4 = arith.constant 0 : index
    %4 = vector.load %arg3[%c0_3, %c0_4] : memref<1x128xf32, #tpu.memory_space<vmem>>, vector<1x128xf32>
    %5 = vector.broadcast %4 : vector<1x128xf32> to vector<256x128xf32>
    %6 = arith.addf %3, %5 : vector<256x128xf32>
    %cst = arith.constant 0.000000e+00 : f32
    %7 = vector.broadcast %cst : f32 to vector<256x128xf32>
    %8 = arith.maximumf %6, %7 : vector<256x128xf32>
    %9 = arith.truncf %8 : vector<256x128xf32> to vector<256x128xbf16>
    %c0_5 = arith.constant 0 : index
    %c0_6 = arith.constant 0 : index
    %10 = vector.load %arg4[%c0_5, %c0_6] : memref<256x128xbf16, #tpu.memory_space<vmem>>, vector<256x128xbf16>
    tpu.vector_store %arg4[%c0_5, %c0_6], %9 {strides = array<i32>} : memref<256x128xbf16, #tpu.memory_space<vmem>>, vector<256x128xbf16>,
    return
  }
  func.func @transform_0(%arg0: i32) -> (i32, i32) {
    %c0_i32 = arith.constant 0 : i32
    %c0_i32_0 = arith.constant 0 : i32
    return %arg0, %c0_i32 : i32, i32
  }
  func.func @transform_1(%arg0: i32) -> (i32, i32) {
    %c0_i32 = arith.constant 0 : i32
    %c0_i32_0 = arith.constant 0 : i32
    %c0_i32_1 = arith.constant 0 : i32
    return %c0_i32, %c0_i32_0 : i32, i32
  }
  func.func @transform_2(%arg0: i32) -> (i32, i32) {
    %c0_i32 = arith.constant 0 : i32
    %c0_i32_0 = arith.constant 0 : i32
    %c0_i32_1 = arith.constant 0 : i32
    return %c0_i32, %c0_i32_0 : i32, i32
  }
  func.func @transform_3(%arg0: i32) -> (i32, i32) {
    %c0_i32 = arith.constant 0 : i32
    %c0_i32_0 = arith.constant 0 : i32
    return %arg0, %c0_i32 : i32, i32
  }
}

module attributes {stable_mosaic.version = 11 : i64} {
  func.func @_matmul_stats_kernel(%arg0: i32, %arg1: memref<256x128xf32, #tpu.memory_space<vmem>>, %arg2: memref<128x128xbf16, #tpu.memory_space<vmem>>, %arg3: memref<256x128xf32, #tpu.memory_space<vmem>>, %arg4: memref<2x128xf32, #tpu.memory_space<vmem>>) attributes {dimension_semantics = [#tpu.dimension_semantics<arbitrary>], iteration_bounds = array<i64: 3>, scalar_prefetch = 0 : i64, scratch_operands = 0 : i64, tpu.core_type = #tpu.core_type<tc>, window_params = [{transform_indices = @transform_0, window_bounds = array<i64: 256, 128>}, {pipeline_mode = #tpu.pipeline_mode<synchronous>, transform_indices = @transform_1, window_bounds = array<i64: 128, 128>}, {transform_indices = @transform_2, window_bounds = array<i64: 256, 128>}, {pipeline_mode = #tpu.pipeline_mode<synchronous>, transform_indices = @transform_3, window_bounds = array<i64: 2, 128>}]} {
    %c0 = arith.constant 0 : index
    %c0_0 = arith.constant 0 : index
    %0 = vector.load %arg1[%c0, %c0_0] : memref<256x128xf32, #tpu.memory_space<vmem>>, vector<256x128xf32>
    %1 = arith.truncf %0 : vector<256x128xf32> to vector<256x128xbf16>
    %c0_1 = arith.constant 0 : index
    %c0_2 = arith.constant 0 : index
    %2 = vector.load %arg2[%c0_1, %c0_2] : memref<128x128xbf16, #tpu.memory_space<vmem>>, vector<128x128xbf16>
    %cst = arith.constant dense<0.000000e+00> : vector<256x128xf32>
    %3 = tpu.matmul %1, %2, %cst {dimension_numbers = #tpu.dot_dimension_numbers<[1], [0], [0], [1], [0, 0, 1, 1], [], []>} : vector<256x128xbf16>, vector<128x128xbf16>, vector<256x128xf32> -> vector<256x128xf32>
    %c0_3 = arith.constant 0 : index
    %c0_4 = arith.constant 0 : index
    %4 = vector.load %arg3[%c0_3, %c0_4] : memref<256x128xf32, #tpu.memory_space<vmem>>, vector<256x128xf32>
    tpu.vector_store %arg3[%c0_3, %c0_4], %3 {strides = array<i32>} : memref<256x128xf32, #tpu.memory_space<vmem>>, vector<256x128xf32>,
    %c0_i32 = arith.constant 0 : i32
    %5 = arith.cmpi eq, %arg0, %c0_i32 : i32
    %6 = arith.extui %5 : i1 to i32
    %c0_i32_5 = arith.constant 0 : i32
    %7 = arith.cmpi ne, %6, %c0_i32_5 : i32
    scf.if %7 {
      %cst_12 = arith.constant 0.000000e+00 : f32
      %17 = vector.broadcast %cst_12 : f32 to vector<2x128xf32>
      %c0_13 = arith.constant 0 : index
      %c0_14 = arith.constant 0 : index
      %18 = vector.load %arg4[%c0_13, %c0_14] : memref<2x128xf32, #tpu.memory_space<vmem>>, vector<2x128xf32>
      tpu.vector_store %arg4[%c0_13, %c0_14], %17 {strides = array<i32>} : memref<2x128xf32, #tpu.memory_space<vmem>>, vector<2x128xf32>,
    } else {
    }
    %c0_6 = arith.constant 0 : index
    %c0_7 = arith.constant 0 : index
    %8 = vector.load %arg4[%c0_6, %c0_7] : memref<2x128xf32, #tpu.memory_space<vmem>>, vector<2x128xf32>
    %cst_8 = arith.constant dense<0.000000e+00> : vector<128xf32>
    %9 = vector.multi_reduction <add>, %3, %cst_8 [0] : vector<256x128xf32> to vector<128xf32>
    %10 = vector.shape_cast %9 : vector<128xf32> to vector<1x128xf32>
    %11 = arith.mulf %3, %3 : vector<256x128xf32>
    %cst_9 = arith.constant dense<0.000000e+00> : vector<128xf32>
    %12 = vector.multi_reduction <add>, %11, %cst_9 [0] : vector<256x128xf32> to vector<128xf32>
    %13 = vector.shape_cast %12 : vector<128xf32> to vector<1x128xf32>
    %14 = tpu.concatenate %10, %13 in 0 : vector<1x128xf32>, vector<1x128xf32> -> vector<2x128xf32>
    %15 = arith.addf %8, %14 : vector<2x128xf32>
    %c0_10 = arith.constant 0 : index
    %c0_11 = arith.constant 0 : index
    %16 = vector.load %arg4[%c0_10, %c0_11] : memref<2x128xf32, #tpu.memory_space<vmem>>, vector<2x128xf32>
    tpu.vector_store %arg4[%c0_10, %c0_11], %15 {strides = array<i32>} : memref<2x128xf32, #tpu.memory_space<vmem>>, vector<2x128xf32>,
    return
  }
  func.func @transform_0(%arg0: i32) -> (i32, i32) {
    %c0_i32 = arith.constant 0 : i32
    %c0_i32_0 = arith.constant 0 : i32
    return %arg0, %c0_i32 : i32, i32
  }
  func.func @transform_1(%arg0: i32) -> (i32, i32) {
    %c0_i32 = arith.constant 0 : i32
    %c0_i32_0 = arith.constant 0 : i32
    %c0_i32_1 = arith.constant 0 : i32
    return %c0_i32, %c0_i32_0 : i32, i32
  }
  func.func @transform_2(%arg0: i32) -> (i32, i32) {
    %c0_i32 = arith.constant 0 : i32
    %c0_i32_0 = arith.constant 0 : i32
    return %arg0, %c0_i32 : i32, i32
  }
  func.func @transform_3(%arg0: i32) -> (i32, i32) {
    %c0_i32 = arith.constant 0 : i32
    %c0_i32_0 = arith.constant 0 : i32
    %c0_i32_1 = arith.constant 0 : i32
    return %c0_i32, %c0_i32_0 : i32, i32
  }
}

module attributes {stable_mosaic.version = 11 : i64} {
  func.func @_conv3x3_stats_kernel(%arg0: i32, %arg1: memref<1x18x18x128xbf16, #tpu.memory_space<vmem>>, %arg2: memref<9x128x128xbf16, #tpu.memory_space<vmem>>, %arg3: memref<1x256x128xf32, #tpu.memory_space<vmem>>, %arg4: memref<2x128xf32, #tpu.memory_space<vmem>>) attributes {dimension_semantics = [#tpu.dimension_semantics<arbitrary>], iteration_bounds = array<i64: 3>, scalar_prefetch = 0 : i64, scratch_operands = 0 : i64, tpu.core_type = #tpu.core_type<tc>, window_params = [{transform_indices = @transform_0, window_bounds = array<i64: 1, 18, 18, 128>}, {pipeline_mode = #tpu.pipeline_mode<synchronous>, transform_indices = @transform_1, window_bounds = array<i64: 9, 128, 128>}, {transform_indices = @transform_2, window_bounds = array<i64: 1, 256, 128>}, {pipeline_mode = #tpu.pipeline_mode<synchronous>, transform_indices = @transform_3, window_bounds = array<i64: 2, 128>}]} {
    %cst = arith.constant 0.000000e+00 : f32
    %0 = vector.broadcast %cst : f32 to vector<256x128xf32>
    %c0 = arith.constant 0 : index
    %c0_0 = arith.constant 0 : index
    %c0_1 = arith.constant 0 : index
    %c0_2 = arith.constant 0 : index
    %1 = vector.load %arg1[%c0, %c0_0, %c0_1, %c0_2] : memref<1x18x18x128xbf16, #tpu.memory_space<vmem>>, vector<1x16x16x128xbf16>
    %2 = vector.shape_cast %1 : vector<1x16x16x128xbf16> to vector<16x16x128xbf16>
    %3 = vector.shape_cast %2 : vector<16x16x128xbf16> to vector<256x128xbf16>
    %c0_3 = arith.constant 0 : index
    %c0_4 = arith.constant 0 : index
    %c0_5 = arith.constant 0 : index
    %4 = vector.load %arg2[%c0_3, %c0_4, %c0_5] : memref<9x128x128xbf16, #tpu.memory_space<vmem>>, vector<1x128x128xbf16>
    %5 = vector.shape_cast %4 : vector<1x128x128xbf16> to vector<128x128xbf16>
    %cst_6 = arith.constant dense<0.000000e+00> : vector<256x128xf32>
    %6 = tpu.matmul %3, %5, %cst_6 {dimension_numbers = #tpu.dot_dimension_numbers<[1], [0], [0], [1], [0, 0, 1, 1], [], []>} : vector<256x128xbf16>, vector<128x128xbf16>, vector<256x128xf32> -> vector<256x128xf32>
    %7 = arith.addf %0, %6 : vector<256x128xf32>
    %c0_7 = arith.constant 0 : index
    %c0_8 = arith.constant 0 : index
    %c1 = arith.constant 1 : index
    %c0_9 = arith.constant 0 : index
    %8 = vector.load %arg1[%c0_7, %c0_8, %c1, %c0_9] : memref<1x18x18x128xbf16, #tpu.memory_space<vmem>>, vector<1x16x16x128xbf16>
    %9 = vector.shape_cast %8 : vector<1x16x16x128xbf16> to vector<16x16x128xbf16>
    %10 = vector.shape_cast %9 : vector<16x16x128xbf16> to vector<256x128xbf16>
    %c1_10 = arith.constant 1 : index
    %c0_11 = arith.constant 0 : index
    %c0_12 = arith.constant 0 : index
    %11 = vector.load %arg2[%c1_10, %c0_11, %c0_12] : memref<9x128x128xbf16, #tpu.memory_space<vmem>>, vector<1x128x128xbf16>
    %12 = vector.shape_cast %11 : vector<1x128x128xbf16> to vector<128x128xbf16>
    %cst_13 = arith.constant dense<0.000000e+00> : vector<256x128xf32>
    %13 = tpu.matmul %10, %12, %cst_13 {dimension_numbers = #tpu.dot_dimension_numbers<[1], [0], [0], [1], [0, 0, 1, 1], [], []>} : vector<256x128xbf16>, vector<128x128xbf16>, vector<256x128xf32> -> vector<256x128xf32>
    %14 = arith.addf %7, %13 : vector<256x128xf32>
    %c0_14 = arith.constant 0 : index
    %c0_15 = arith.constant 0 : index
    %c2 = arith.constant 2 : index
    %c0_16 = arith.constant 0 : index
    %15 = vector.load %arg1[%c0_14, %c0_15, %c2, %c0_16] : memref<1x18x18x128xbf16, #tpu.memory_space<vmem>>, vector<1x16x16x128xbf16>
    %16 = vector.shape_cast %15 : vector<1x16x16x128xbf16> to vector<16x16x128xbf16>
    %17 = vector.shape_cast %16 : vector<16x16x128xbf16> to vector<256x128xbf16>
    %c2_17 = arith.constant 2 : index
    %c0_18 = arith.constant 0 : index
    %c0_19 = arith.constant 0 : index
    %18 = vector.load %arg2[%c2_17, %c0_18, %c0_19] : memref<9x128x128xbf16, #tpu.memory_space<vmem>>, vector<1x128x128xbf16>
    %19 = vector.shape_cast %18 : vector<1x128x128xbf16> to vector<128x128xbf16>
    %cst_20 = arith.constant dense<0.000000e+00> : vector<256x128xf32>
    %20 = tpu.matmul %17, %19, %cst_20 {dimension_numbers = #tpu.dot_dimension_numbers<[1], [0], [0], [1], [0, 0, 1, 1], [], []>} : vector<256x128xbf16>, vector<128x128xbf16>, vector<256x128xf32> -> vector<256x128xf32>
    %21 = arith.addf %14, %20 : vector<256x128xf32>
    %c0_21 = arith.constant 0 : index
    %c1_22 = arith.constant 1 : index
    %c0_23 = arith.constant 0 : index
    %c0_24 = arith.constant 0 : index
    %22 = vector.load %arg1[%c0_21, %c1_22, %c0_23, %c0_24] : memref<1x18x18x128xbf16, #tpu.memory_space<vmem>>, vector<1x16x16x128xbf16>
    %23 = vector.shape_cast %22 : vector<1x16x16x128xbf16> to vector<16x16x128xbf16>
    %24 = vector.shape_cast %23 : vector<16x16x128xbf16> to vector<256x128xbf16>
    %c3 = arith.constant 3 : index
    %c0_25 = arith.constant 0 : index
    %c0_26 = arith.constant 0 : index
    %25 = vector.load %arg2[%c3, %c0_25, %c0_26] : memref<9x128x128xbf16, #tpu.memory_space<vmem>>, vector<1x128x128xbf16>
    %26 = vector.shape_cast %25 : vector<1x128x128xbf16> to vector<128x128xbf16>
    %cst_27 = arith.constant dense<0.000000e+00> : vector<256x128xf32>
    %27 = tpu.matmul %24, %26, %cst_27 {dimension_numbers = #tpu.dot_dimension_numbers<[1], [0], [0], [1], [0, 0, 1, 1], [], []>} : vector<256x128xbf16>, vector<128x128xbf16>, vector<256x128xf32> -> vector<256x128xf32>
    %28 = arith.addf %21, %27 : vector<256x128xf32>
    %c0_28 = arith.constant 0 : index
    %c1_29 = arith.constant 1 : index
    %c1_30 = arith.constant 1 : index
    %c0_31 = arith.constant 0 : index
    %29 = vector.load %arg1[%c0_28, %c1_29, %c1_30, %c0_31] : memref<1x18x18x128xbf16, #tpu.memory_space<vmem>>, vector<1x16x16x128xbf16>
    %30 = vector.shape_cast %29 : vector<1x16x16x128xbf16> to vector<16x16x128xbf16>
    %31 = vector.shape_cast %30 : vector<16x16x128xbf16> to vector<256x128xbf16>
    %c4 = arith.constant 4 : index
    %c0_32 = arith.constant 0 : index
    %c0_33 = arith.constant 0 : index
    %32 = vector.load %arg2[%c4, %c0_32, %c0_33] : memref<9x128x128xbf16, #tpu.memory_space<vmem>>, vector<1x128x128xbf16>
    %33 = vector.shape_cast %32 : vector<1x128x128xbf16> to vector<128x128xbf16>
    %cst_34 = arith.constant dense<0.000000e+00> : vector<256x128xf32>
    %34 = tpu.matmul %31, %33, %cst_34 {dimension_numbers = #tpu.dot_dimension_numbers<[1], [0], [0], [1], [0, 0, 1, 1], [], []>} : vector<256x128xbf16>, vector<128x128xbf16>, vector<256x128xf32> -> vector<256x128xf32>
    %35 = arith.addf %28, %34 : vector<256x128xf32>
    %c0_35 = arith.constant 0 : index
    %c1_36 = arith.constant 1 : index
    %c2_37 = arith.constant 2 : index
    %c0_38 = arith.constant 0 : index
    %36 = vector.load %arg1[%c0_35, %c1_36, %c2_37, %c0_38] : memref<1x18x18x128xbf16, #tpu.memory_space<vmem>>, vector<1x16x16x128xbf16>
    %37 = vector.shape_cast %36 : vector<1x16x16x128xbf16> to vector<16x16x128xbf16>
    %38 = vector.shape_cast %37 : vector<16x16x128xbf16> to vector<256x128xbf16>
    %c5 = arith.constant 5 : index
    %c0_39 = arith.constant 0 : index
    %c0_40 = arith.constant 0 : index
    %39 = vector.load %arg2[%c5, %c0_39, %c0_40] : memref<9x128x128xbf16, #tpu.memory_space<vmem>>, vector<1x128x128xbf16>
    %40 = vector.shape_cast %39 : vector<1x128x128xbf16> to vector<128x128xbf16>
    %cst_41 = arith.constant dense<0.000000e+00> : vector<256x128xf32>
    %41 = tpu.matmul %38, %40, %cst_41 {dimension_numbers = #tpu.dot_dimension_numbers<[1], [0], [0], [1], [0, 0, 1, 1], [], []>} : vector<256x128xbf16>, vector<128x128xbf16>, vector<256x128xf32> -> vector<256x128xf32>
    %42 = arith.addf %35, %41 : vector<256x128xf32>
    %c0_42 = arith.constant 0 : index
    %c2_43 = arith.constant 2 : index
    %c0_44 = arith.constant 0 : index
    %c0_45 = arith.constant 0 : index
    %43 = vector.load %arg1[%c0_42, %c2_43, %c0_44, %c0_45] : memref<1x18x18x128xbf16, #tpu.memory_space<vmem>>, vector<1x16x16x128xbf16>
    %44 = vector.shape_cast %43 : vector<1x16x16x128xbf16> to vector<16x16x128xbf16>
    %45 = vector.shape_cast %44 : vector<16x16x128xbf16> to vector<256x128xbf16>
    %c6 = arith.constant 6 : index
    %c0_46 = arith.constant 0 : index
    %c0_47 = arith.constant 0 : index
    %46 = vector.load %arg2[%c6, %c0_46, %c0_47] : memref<9x128x128xbf16, #tpu.memory_space<vmem>>, vector<1x128x128xbf16>
    %47 = vector.shape_cast %46 : vector<1x128x128xbf16> to vector<128x128xbf16>
    %cst_48 = arith.constant dense<0.000000e+00> : vector<256x128xf32>
    %48 = tpu.matmul %45, %47, %cst_48 {dimension_numbers = #tpu.dot_dimension_numbers<[1], [0], [0], [1], [0, 0, 1, 1], [], []>} : vector<256x128xbf16>, vector<128x128xbf16>, vector<256x128xf32> -> vector<256x128xf32>
    %49 = arith.addf %42, %48 : vector<256x128xf32>
    %c0_49 = arith.constant 0 : index
    %c2_50 = arith.constant 2 : index
    %c1_51 = arith.constant 1 : index
    %c0_52 = arith.constant 0 : index
    %50 = vector.load %arg1[%c0_49, %c2_50, %c1_51, %c0_52] : memref<1x18x18x128xbf16, #tpu.memory_space<vmem>>, vector<1x16x16x128xbf16>
    %51 = vector.shape_cast %50 : vector<1x16x16x128xbf16> to vector<16x16x128xbf16>
    %52 = vector.shape_cast %51 : vector<16x16x128xbf16> to vector<256x128xbf16>
    %c7 = arith.constant 7 : index
    %c0_53 = arith.constant 0 : index
    %c0_54 = arith.constant 0 : index
    %53 = vector.load %arg2[%c7, %c0_53, %c0_54] : memref<9x128x128xbf16, #tpu.memory_space<vmem>>, vector<1x128x128xbf16>
    %54 = vector.shape_cast %53 : vector<1x128x128xbf16> to vector<128x128xbf16>
    %cst_55 = arith.constant dense<0.000000e+00> : vector<256x128xf32>
    %55 = tpu.matmul %52, %54, %cst_55 {dimension_numbers = #tpu.dot_dimension_numbers<[1], [0], [0], [1], [0, 0, 1, 1], [], []>} : vector<256x128xbf16>, vector<128x128xbf16>, vector<256x128xf32> -> vector<256x128xf32>
    %56 = arith.addf %49, %55 : vector<256x128xf32>
    %c0_56 = arith.constant 0 : index
    %c2_57 = arith.constant 2 : index
    %c2_58 = arith.constant 2 : index
    %c0_59 = arith.constant 0 : index
    %57 = vector.load %arg1[%c0_56, %c2_57, %c2_58, %c0_59] : memref<1x18x18x128xbf16, #tpu.memory_space<vmem>>, vector<1x16x16x128xbf16>
    %58 = vector.shape_cast %57 : vector<1x16x16x128xbf16> to vector<16x16x128xbf16>
    %59 = vector.shape_cast %58 : vector<16x16x128xbf16> to vector<256x128xbf16>
    %c8 = arith.constant 8 : index
    %c0_60 = arith.constant 0 : index
    %c0_61 = arith.constant 0 : index
    %60 = vector.load %arg2[%c8, %c0_60, %c0_61] : memref<9x128x128xbf16, #tpu.memory_space<vmem>>, vector<1x128x128xbf16>
    %61 = vector.shape_cast %60 : vector<1x128x128xbf16> to vector<128x128xbf16>
    %cst_62 = arith.constant dense<0.000000e+00> : vector<256x128xf32>
    %62 = tpu.matmul %59, %61, %cst_62 {dimension_numbers = #tpu.dot_dimension_numbers<[1], [0], [0], [1], [0, 0, 1, 1], [], []>} : vector<256x128xbf16>, vector<128x128xbf16>, vector<256x128xf32> -> vector<256x128xf32>
    %63 = arith.addf %56, %62 : vector<256x128xf32>
    %c0_63 = arith.constant 0 : index
    %c0_64 = arith.constant 0 : index
    %c0_65 = arith.constant 0 : index
    %64 = vector.load %arg3[%c0_63, %c0_64, %c0_65] : memref<1x256x128xf32, #tpu.memory_space<vmem>>, vector<1x256x128xf32>
    %65 = vector.shape_cast %64 : vector<1x256x128xf32> to vector<256x128xf32>
    %66 = vector.shape_cast %63 : vector<256x128xf32> to vector<1x256x128xf32>
    tpu.vector_store %arg3[%c0_63, %c0_64, %c0_65], %66 {strides = array<i32>} : memref<1x256x128xf32, #tpu.memory_space<vmem>>, vector<1x256x128xf32>,
    %c0_i32 = arith.constant 0 : i32
    %67 = arith.cmpi eq, %arg0, %c0_i32 : i32
    %68 = arith.extui %67 : i1 to i32
    %c0_i32_66 = arith.constant 0 : i32
    %69 = arith.cmpi ne, %68, %c0_i32_66 : i32
    scf.if %69 {
      %cst_73 = arith.constant 0.000000e+00 : f32
      %79 = vector.broadcast %cst_73 : f32 to vector<2x128xf32>
      %c0_74 = arith.constant 0 : index
      %c0_75 = arith.constant 0 : index
      %80 = vector.load %arg4[%c0_74, %c0_75] : memref<2x128xf32, #tpu.memory_space<vmem>>, vector<2x128xf32>
      tpu.vector_store %arg4[%c0_74, %c0_75], %79 {strides = array<i32>} : memref<2x128xf32, #tpu.memory_space<vmem>>, vector<2x128xf32>,
    } else {
    }
    %c0_67 = arith.constant 0 : index
    %c0_68 = arith.constant 0 : index
    %70 = vector.load %arg4[%c0_67, %c0_68] : memref<2x128xf32, #tpu.memory_space<vmem>>, vector<2x128xf32>
    %cst_69 = arith.constant dense<0.000000e+00> : vector<128xf32>
    %71 = vector.multi_reduction <add>, %63, %cst_69 [0] : vector<256x128xf32> to vector<128xf32>
    %72 = vector.shape_cast %71 : vector<128xf32> to vector<1x128xf32>
    %73 = arith.mulf %63, %63 : vector<256x128xf32>
    %cst_70 = arith.constant dense<0.000000e+00> : vector<128xf32>
    %74 = vector.multi_reduction <add>, %73, %cst_70 [0] : vector<256x128xf32> to vector<128xf32>
    %75 = vector.shape_cast %74 : vector<128xf32> to vector<1x128xf32>
    %76 = tpu.concatenate %72, %75 in 0 : vector<1x128xf32>, vector<1x128xf32> -> vector<2x128xf32>
    %77 = arith.addf %70, %76 : vector<2x128xf32>
    %c0_71 = arith.constant 0 : index
    %c0_72 = arith.constant 0 : index
    %78 = vector.load %arg4[%c0_71, %c0_72] : memref<2x128xf32, #tpu.memory_space<vmem>>, vector<2x128xf32>
    tpu.vector_store %arg4[%c0_71, %c0_72], %77 {strides = array<i32>} : memref<2x128xf32, #tpu.memory_space<vmem>>, vector<2x128xf32>,
    return
  }
  func.func @transform_0(%arg0: i32) -> (i32, i32, i32, i32) {
    %c0_i32 = arith.constant 0 : i32
    %c0_i32_0 = arith.constant 0 : i32
    %c0_i32_1 = arith.constant 0 : i32
    %c0_i32_2 = arith.constant 0 : i32
    return %arg0, %c0_i32, %c0_i32_0, %c0_i32_1 : i32, i32, i32, i32
  }
  func.func @transform_1(%arg0: i32) -> (i32, i32, i32) {
    %c0_i32 = arith.constant 0 : i32
    %c0_i32_0 = arith.constant 0 : i32
    %c0_i32_1 = arith.constant 0 : i32
    %c0_i32_2 = arith.constant 0 : i32
    return %c0_i32, %c0_i32_0, %c0_i32_1 : i32, i32, i32
  }
  func.func @transform_2(%arg0: i32) -> (i32, i32, i32) {
    %c0_i32 = arith.constant 0 : i32
    %c0_i32_0 = arith.constant 0 : i32
    %c0_i32_1 = arith.constant 0 : i32
    return %arg0, %c0_i32, %c0_i32_0 : i32, i32, i32
  }
  func.func @transform_3(%arg0: i32) -> (i32, i32) {
    %c0_i32 = arith.constant 0 : i32
    %c0_i32_0 = arith.constant 0 : i32
    %c0_i32_1 = arith.constant 0 : i32
    return %c0_i32, %c0_i32_0 : i32, i32
  }
}

module attributes {stable_mosaic.version = 11 : i64} {
  func.func @_bn_add_relu_kernel(%arg0: i32, %arg1: memref<256x128xf32, #tpu.memory_space<vmem>>, %arg2: memref<1x128xf32, #tpu.memory_space<vmem>>, %arg3: memref<1x128xf32, #tpu.memory_space<vmem>>, %arg4: memref<256x128xf32, #tpu.memory_space<vmem>>, %arg5: memref<256x128xf32, #tpu.memory_space<vmem>>) attributes {dimension_semantics = [#tpu.dimension_semantics<parallel>], iteration_bounds = array<i64: 3>, scalar_prefetch = 0 : i64, scratch_operands = 0 : i64, tpu.core_type = #tpu.core_type<tc>, window_params = [{transform_indices = @transform_0, window_bounds = array<i64: 256, 128>}, {pipeline_mode = #tpu.pipeline_mode<synchronous>, transform_indices = @transform_1, window_bounds = array<i64: 1, 128>}, {pipeline_mode = #tpu.pipeline_mode<synchronous>, transform_indices = @transform_2, window_bounds = array<i64: 1, 128>}, {transform_indices = @transform_3, window_bounds = array<i64: 256, 128>}, {transform_indices = @transform_4, window_bounds = array<i64: 256, 128>}]} {
    %c0 = arith.constant 0 : index
    %c0_0 = arith.constant 0 : index
    %0 = vector.load %arg1[%c0, %c0_0] : memref<256x128xf32, #tpu.memory_space<vmem>>, vector<256x128xf32>
    %c0_1 = arith.constant 0 : index
    %c0_2 = arith.constant 0 : index
    %1 = vector.load %arg2[%c0_1, %c0_2] : memref<1x128xf32, #tpu.memory_space<vmem>>, vector<1x128xf32>
    %2 = vector.broadcast %1 : vector<1x128xf32> to vector<256x128xf32>
    %3 = arith.mulf %0, %2 : vector<256x128xf32>
    %c0_3 = arith.constant 0 : index
    %c0_4 = arith.constant 0 : index
    %4 = vector.load %arg3[%c0_3, %c0_4] : memref<1x128xf32, #tpu.memory_space<vmem>>, vector<1x128xf32>
    %5 = vector.broadcast %4 : vector<1x128xf32> to vector<256x128xf32>
    %6 = arith.addf %3, %5 : vector<256x128xf32>
    %c0_5 = arith.constant 0 : index
    %c0_6 = arith.constant 0 : index
    %7 = vector.load %arg4[%c0_5, %c0_6] : memref<256x128xf32, #tpu.memory_space<vmem>>, vector<256x128xf32>
    %8 = arith.addf %6, %7 : vector<256x128xf32>
    %cst = arith.constant 0.000000e+00 : f32
    %9 = vector.broadcast %cst : f32 to vector<256x128xf32>
    %10 = arith.maximumf %8, %9 : vector<256x128xf32>
    %c0_7 = arith.constant 0 : index
    %c0_8 = arith.constant 0 : index
    %11 = vector.load %arg5[%c0_7, %c0_8] : memref<256x128xf32, #tpu.memory_space<vmem>>, vector<256x128xf32>
    tpu.vector_store %arg5[%c0_7, %c0_8], %10 {strides = array<i32>} : memref<256x128xf32, #tpu.memory_space<vmem>>, vector<256x128xf32>,
    return
  }
  func.func @transform_0(%arg0: i32) -> (i32, i32) {
    %c0_i32 = arith.constant 0 : i32
    %c0_i32_0 = arith.constant 0 : i32
    return %arg0, %c0_i32 : i32, i32
  }
  func.func @transform_1(%arg0: i32) -> (i32, i32) {
    %c0_i32 = arith.constant 0 : i32
    %c0_i32_0 = arith.constant 0 : i32
    %c0_i32_1 = arith.constant 0 : i32
    return %c0_i32, %c0_i32_0 : i32, i32
  }
  func.func @transform_2(%arg0: i32) -> (i32, i32) {
    %c0_i32 = arith.constant 0 : i32
    %c0_i32_0 = arith.constant 0 : i32
    %c0_i32_1 = arith.constant 0 : i32
    return %c0_i32, %c0_i32_0 : i32, i32
  }
  func.func @transform_3(%arg0: i32) -> (i32, i32) {
    %c0_i32 = arith.constant 0 : i32
    %c0_i32_0 = arith.constant 0 : i32
    return %arg0, %c0_i32 : i32, i32
  }
  func.func @transform_4(%arg0: i32) -> (i32, i32) {
    %c0_i32 = arith.constant 0 : i32
    %c0_i32_0 = arith.constant 0 : i32
    return %arg0, %c0_i32 : i32, i32
  }
}

module attributes {stable_mosaic.version = 11 : i64} {
  func.func @_bn_relu_matmul_stats_kernel(%arg0: i32, %arg1: memref<256x128xf32, #tpu.memory_space<vmem>>, %arg2: memref<1x128xf32, #tpu.memory_space<vmem>>, %arg3: memref<1x128xf32, #tpu.memory_space<vmem>>, %arg4: memref<128x128xbf16, #tpu.memory_space<vmem>>, %arg5: memref<256x128xf32, #tpu.memory_space<vmem>>, %arg6: memref<2x128xf32, #tpu.memory_space<vmem>>) attributes {dimension_semantics = [#tpu.dimension_semantics<arbitrary>], iteration_bounds = array<i64: 3>, scalar_prefetch = 0 : i64, scratch_operands = 0 : i64, tpu.core_type = #tpu.core_type<tc>, window_params = [{transform_indices = @transform_0, window_bounds = array<i64: 256, 128>}, {pipeline_mode = #tpu.pipeline_mode<synchronous>, transform_indices = @transform_1, window_bounds = array<i64: 1, 128>}, {pipeline_mode = #tpu.pipeline_mode<synchronous>, transform_indices = @transform_2, window_bounds = array<i64: 1, 128>}, {pipeline_mode = #tpu.pipeline_mode<synchronous>, transform_indices = @transform_3, window_bounds = array<i64: 128, 128>}, {transform_indices = @transform_4, window_bounds = array<i64: 256, 128>}, {pipeline_mode = #tpu.pipeline_mode<synchronous>, transform_indices = @transform_5, window_bounds = array<i64: 2, 128>}]} {
    %c0 = arith.constant 0 : index
    %c0_0 = arith.constant 0 : index
    %0 = vector.load %arg1[%c0, %c0_0] : memref<256x128xf32, #tpu.memory_space<vmem>>, vector<256x128xf32>
    %c0_1 = arith.constant 0 : index
    %c0_2 = arith.constant 0 : index
    %1 = vector.load %arg2[%c0_1, %c0_2] : memref<1x128xf32, #tpu.memory_space<vmem>>, vector<1x128xf32>
    %2 = vector.broadcast %1 : vector<1x128xf32> to vector<256x128xf32>
    %3 = arith.mulf %0, %2 : vector<256x128xf32>
    %c0_3 = arith.constant 0 : index
    %c0_4 = arith.constant 0 : index
    %4 = vector.load %arg3[%c0_3, %c0_4] : memref<1x128xf32, #tpu.memory_space<vmem>>, vector<1x128xf32>
    %5 = vector.broadcast %4 : vector<1x128xf32> to vector<256x128xf32>
    %6 = arith.addf %3, %5 : vector<256x128xf32>
    %cst = arith.constant 0.000000e+00 : f32
    %7 = vector.broadcast %cst : f32 to vector<256x128xf32>
    %8 = arith.maximumf %6, %7 : vector<256x128xf32>
    %9 = arith.truncf %8 : vector<256x128xf32> to vector<256x128xbf16>
    %c0_5 = arith.constant 0 : index
    %c0_6 = arith.constant 0 : index
    %10 = vector.load %arg4[%c0_5, %c0_6] : memref<128x128xbf16, #tpu.memory_space<vmem>>, vector<128x128xbf16>
    %cst_7 = arith.constant dense<0.000000e+00> : vector<256x128xf32>
    %11 = tpu.matmul %9, %10, %cst_7 {dimension_numbers = #tpu.dot_dimension_numbers<[1], [0], [0], [1], [0, 0, 1, 1], [], []>} : vector<256x128xbf16>, vector<128x128xbf16>, vector<256x128xf32> -> vector<256x128xf32>
    %c0_8 = arith.constant 0 : index
    %c0_9 = arith.constant 0 : index
    %12 = vector.load %arg5[%c0_8, %c0_9] : memref<256x128xf32, #tpu.memory_space<vmem>>, vector<256x128xf32>
    tpu.vector_store %arg5[%c0_8, %c0_9], %11 {strides = array<i32>} : memref<256x128xf32, #tpu.memory_space<vmem>>, vector<256x128xf32>,
    %c0_i32 = arith.constant 0 : i32
    %13 = arith.cmpi eq, %arg0, %c0_i32 : i32
    %14 = arith.extui %13 : i1 to i32
    %c0_i32_10 = arith.constant 0 : i32
    %15 = arith.cmpi ne, %14, %c0_i32_10 : i32
    scf.if %15 {
      %cst_17 = arith.constant 0.000000e+00 : f32
      %25 = vector.broadcast %cst_17 : f32 to vector<2x128xf32>
      %c0_18 = arith.constant 0 : index
      %c0_19 = arith.constant 0 : index
      %26 = vector.load %arg6[%c0_18, %c0_19] : memref<2x128xf32, #tpu.memory_space<vmem>>, vector<2x128xf32>
      tpu.vector_store %arg6[%c0_18, %c0_19], %25 {strides = array<i32>} : memref<2x128xf32, #tpu.memory_space<vmem>>, vector<2x128xf32>,
    } else {
    }
    %c0_11 = arith.constant 0 : index
    %c0_12 = arith.constant 0 : index
    %16 = vector.load %arg6[%c0_11, %c0_12] : memref<2x128xf32, #tpu.memory_space<vmem>>, vector<2x128xf32>
    %cst_13 = arith.constant dense<0.000000e+00> : vector<128xf32>
    %17 = vector.multi_reduction <add>, %11, %cst_13 [0] : vector<256x128xf32> to vector<128xf32>
    %18 = vector.shape_cast %17 : vector<128xf32> to vector<1x128xf32>
    %19 = arith.mulf %11, %11 : vector<256x128xf32>
    %cst_14 = arith.constant dense<0.000000e+00> : vector<128xf32>
    %20 = vector.multi_reduction <add>, %19, %cst_14 [0] : vector<256x128xf32> to vector<128xf32>
    %21 = vector.shape_cast %20 : vector<128xf32> to vector<1x128xf32>
    %22 = tpu.concatenate %18, %21 in 0 : vector<1x128xf32>, vector<1x128xf32> -> vector<2x128xf32>
    %23 = arith.addf %16, %22 : vector<2x128xf32>
    %c0_15 = arith.constant 0 : index
    %c0_16 = arith.constant 0 : index
    %24 = vector.load %arg6[%c0_15, %c0_16] : memref<2x128xf32, #tpu.memory_space<vmem>>, vector<2x128xf32>
    tpu.vector_store %arg6[%c0_15, %c0_16], %23 {strides = array<i32>} : memref<2x128xf32, #tpu.memory_space<vmem>>, vector<2x128xf32>,
    return
  }
  func.func @transform_0(%arg0: i32) -> (i32, i32) {
    %c0_i32 = arith.constant 0 : i32
    %c0_i32_0 = arith.constant 0 : i32
    return %arg0, %c0_i32 : i32, i32
  }
  func.func @transform_1(%arg0: i32) -> (i32, i32) {
    %c0_i32 = arith.constant 0 : i32
    %c0_i32_0 = arith.constant 0 : i32
    %c0_i32_1 = arith.constant 0 : i32
    return %c0_i32, %c0_i32_0 : i32, i32
  }
  func.func @transform_2(%arg0: i32) -> (i32, i32) {
    %c0_i32 = arith.constant 0 : i32
    %c0_i32_0 = arith.constant 0 : i32
    %c0_i32_1 = arith.constant 0 : i32
    return %c0_i32, %c0_i32_0 : i32, i32
  }
  func.func @transform_3(%arg0: i32) -> (i32, i32) {
    %c0_i32 = arith.constant 0 : i32
    %c0_i32_0 = arith.constant 0 : i32
    %c0_i32_1 = arith.constant 0 : i32
    return %c0_i32, %c0_i32_0 : i32, i32
  }
  func.func @transform_4(%arg0: i32) -> (i32, i32) {
    %c0_i32 = arith.constant 0 : i32
    %c0_i32_0 = arith.constant 0 : i32
    return %arg0, %c0_i32 : i32, i32
  }
  func.func @transform_5(%arg0: i32) -> (i32, i32) {
    %c0_i32 = arith.constant 0 : i32
    %c0_i32_0 = arith.constant 0 : i32
    %c0_i32_1 = arith.constant 0 : i32
    return %c0_i32, %c0_i32_0 : i32, i32
  }
}

</mosaic_0001>

<llo_original>
// kernel: bottleneck_forward.6
$region0: #{bottleneck_forward.6}
  #allocation0 [shape = 'u32[]', space=smem, size = 0x4, offset = 0x4, fixed_abs, tag = 'smem constant byte address 0x4 - core index']
  #allocation1 [shape = 'u32[144,128]{1,0:T(1,128)}', space=vmem, size = 0x12000, scoped, tag = 'internal scratch']
  %s0 = inlined_call_operand.vmem [shape: f32[768,128], index: 0, kind: input, shape index: {}]
  %s1 = inlined_call_operand.vmem [shape: f32[1,128], index: 1, kind: input, shape index: {}]
  %s2 = inlined_call_operand.vmem [shape: f32[1,128], index: 2, kind: input, shape index: {}]
  %s3 = inlined_call_operand.vmem [shape: bf16[768,128], index: 3, kind: output, shape index: {}]
  %s4 = sld [smem:[#allocation0]]
  $region45: #{bottleneck_forward.6} parent=0
    _
  %s6 = ssub.s32 1, %s4
  %s7 = scalar_select 0, %s6, %s4
  loop: start=0, step=1, limit=5
  $region2: #{bottleneck_forward.6} parent=0 // loop_pre_header
    _
  $region3: #{bottleneck_forward.6} parent=0 // loop_header
    %s9 = sphi 0, %s13
    %p10 = scmp.ge.s32.totalorder %s9, 5
    %s19 = sphi 0, %s21
    %s22 = sphi 0, %s19
    %s23 = sphi 0, %s22
    %s39 = sphi 0, %s23
    %s43 = sphi 0, %s43
    %s45 = sphi 0, %s43
    %s46 = sphi 0, %s45
    %s60 = sphi 0, %s46
    %s64 = sphi 0, %s64
    %s66 = sphi 0, %s64
    %s67 = sphi 0, %s66
    %s81 = sphi 0, %s67
    %s87 = sphi 0, %s89
    %s90 = sphi 0, %s87
    %s91 = sphi 0, %s90
    %s107 = sphi 0, %s91
  $region4: #{bottleneck_forward.6} parent=0 // loop_header_branch
    %12 = sbr.rel (%p10) target = $region8
  $region5: #{bottleneck_forward.6} parent=0 // loop_body
    %s14 = ssub.s32 %s9, 1
    %s15 = ssub.s32 %s9, 2
    %s16 = sadd.s32 %s9, 1
    %s17 = ssub.s32 %s9, %s16
    %p18 = scmp.eq.s32.totalorder %s17, 0
    %s20 = sadd.s32 %s19, 1
    %s21 = scalar_select %p18, %s19, %s20
    %p24 = pneg %p18
    %p25 = scmp.eq.s32.totalorder %s9, 2
    %p26 = por %p24, %p25
    %p27 = scmp.ne.s32.totalorder %s19, %s22
    %p28 = scmp.eq.s32.totalorder %s9, 0
    %p29 = por %p27, %p28
    %p30 = scmp.ne.s32.totalorder %s19, %s22
    %p31 = scmp.eq.s32.totalorder %s14, 2
    %p32 = por %p30, %p31
    %p33 = scmp.ne.s32.totalorder %s22, %s23
    %p34 = scmp.eq.s32.totalorder %s14, 0
    %p35 = por %p33, %p34
    %p36 = scmp.ne.s32.totalorder %s22, %s23
    %p37 = scmp.eq.s32.totalorder %s15, 2
    %p38 = por %p36, %p37
    %p40 = scmp.ne.s32.totalorder %s23, %s39
    %p41 = scmp.eq.s32.totalorder %s15, 0
    %p42 = por %p40, %p41
    %s44 = sadd.s32 %s43, 1
    %p47 = scmp.eq.s32.totalorder %s9, 2
    %p48 = scmp.ne.s32.totalorder %s43, %s45
    %p49 = scmp.eq.s32.totalorder %s9, 0
    %p50 = por %p48, %p49
    %p51 = scmp.ne.s32.totalorder %s43, %s45
    %p52 = scmp.eq.s32.totalorder %s14, 2
    %p53 = por %p51, %p52
    %p54 = scmp.ne.s32.totalorder %s45, %s46
    %p55 = scmp.eq.s32.totalorder %s14, 0
    %p56 = por %p54, %p55
    %p57 = scmp.ne.s32.totalorder %s45, %s46
    %p58 = scmp.eq.s32.totalorder %s15, 2
    %p59 = por %p57, %p58
    %p61 = scmp.ne.s32.totalorder %s46, %s60
    %p62 = scmp.eq.s32.totalorder %s15, 0
    %p63 = por %p61, %p62
    %s65 = sadd.s32 %s64, 1
    %p68 = scmp.eq.s32.totalorder %s9, 2
    %p69 = scmp.ne.s32.totalorder %s64, %s66
    %p70 = scmp.eq.s32.totalorder %s9, 0
    %p71 = por %p69, %p70
    %p72 = scmp.ne.s32.totalorder %s64, %s66
    %p73 = scmp.eq.s32.totalorder %s14, 2
    %p74 = por %p72, %p73
    %p75 = scmp.ne.s32.totalorder %s66, %s67
    %p76 = scmp.eq.s32.totalorder %s14, 0
    %p77 = por %p75, %p76
    %p78 = scmp.ne.s32.totalorder %s66, %s67
    %p79 = scmp.eq.s32.totalorder %s15, 2
    %p80 = por %p78, %p79
    %p82 = scmp.ne.s32.totalorder %s67, %s81
    %p83 = scmp.eq.s32.totalorder %s15, 0
    %p84 = por %p82, %p83
    %s85 = ssub.s32 %s9, %s16
    %p86 = scmp.eq.s32.totalorder %s85, 0
    %s88 = sadd.s32 %s87, 1
    %s89 = scalar_select %p86, %s87, %s88
    %p92 = pneg %p86
    %p93 = scmp.eq.s32.totalorder %s9, 2
    %p94 = por %p92, %p93
    %p95 = scmp.ne.s32.totalorder %s87, %s90
    %p96 = scmp.eq.s32.totalorder %s9, 0
    %p97 = por %p95, %p96
    %p98 = scmp.ne.s32.totalorder %s87, %s90
    %p99 = scmp.eq.s32.totalorder %s14, 2
    %p100 = por %p98, %p99
    %p101 = scmp.ne.s32.totalorder %s90, %s91
    %p102 = scmp.eq.s32.totalorder %s14, 0
    %p103 = por %p101, %p102
    %p104 = scmp.ne.s32.totalorder %s90, %s91
    %p105 = scmp.eq.s32.totalorder %s15, 2
    %p106 = por %p104, %p105
    %p108 = scmp.ne.s32.totalorder %s91, %s107
    %p109 = scmp.eq.s32.totalorder %s15, 0
    %p110 = por %p108, %p109
    %p111 = scmp.le.s32.totalorder 1, %s9
    %p112 = scmp.lt.s32.totalorder %s9, 4
    %p113 = pnand %p111, %p112
    %p114 = pneg %p113
    // Predicated region
    $region9: #{bottleneck_forward.6} parent=5 // pred_check
      _
    $region10: #{bottleneck_forward.6} parent=5 // pred_check_branch
      %116 = sbr.rel (%p113) target = $region12
    $region11: #{bottleneck_forward.6} parent=5 // pred_region
      %s117 = ssub.s32 %s9, 1
      // Predicated region
      $region13: #{bottleneck_forward.6} parent=11 // pred_check
        %p118 = pneg %p56
      $region14: #{bottleneck_forward.6} parent=11 // pred_check_branch
        %120 = sbr.rel (%p118) target = $region16
      $region15: #{bottleneck_forward.6} parent=11 // pred_region
        _
      $region16: #{bottleneck_forward.6} parent=11 // pred_fallthru
        _
      // Predicated region
      $region17: #{bottleneck_forward.6} parent=11 // pred_check
        %p121 = pneg %p77
      $region18: #{bottleneck_forward.6} parent=11 // pred_check_branch
        %123 = sbr.rel (%p121) target = $region20
      $region19: #{bottleneck_forward.6} parent=11 // pred_region
        _
      $region20: #{bottleneck_forward.6} parent=11 // pred_fallthru
        _
    $region12: #{bottleneck_forward.6} parent=5 // pred_fallthru
      _
    %p124 = scmp.lt.s32.totalorder %s9, 3
    // Predicated region
    $region21: #{bottleneck_forward.6} parent=5 // pred_check
      %p125 = pneg %p124
    $region22: #{bottleneck_forward.6} parent=5 // pred_check_branch
      %127 = sbr.rel (%p125) target = $region24
    $region23: #{bottleneck_forward.6} parent=5 // pred_region
      // Predicated region
      $region25: #{bottleneck_forward.6} parent=23 // pred_check
        %p128 = pneg %p29
      $region26: #{bottleneck_forward.6} parent=23 // pred_check_branch
        %130 = sbr.rel (%p128) target = $region28
      $region27: #{bottleneck_forward.6} parent=23 // pred_region
        %s131 = smul.u32 32, %s9
        %p132 = scmp.lt.s32.totalorder %s131, 95
        %s133 = scalar_select %p132, %s131, 95
        %s134 = smul.addr %s133, 8
        %s135 = scalar_lea.vmem %s0, %s134
        %s136 = smul.u32 32, %s9
      $region28: #{bottleneck_forward.6} parent=23 // pred_fallthru
        _
    $region24: #{bottleneck_forward.6} parent=5 // pred_fallthru
      _
    %p137 = scmp.le.s32.totalorder 1, %s9
    %p138 = scmp.lt.s32.totalorder %s9, 4
    %p139 = pnand %p137, %p138
    %p140 = pneg %p139
    // Predicated region
    $region29: #{bottleneck_forward.6} parent=5 // pred_check
      _
    $region30: #{bottleneck_forward.6} parent=5 // pred_check_branch
      %142 = sbr.rel (%p139) target = $region32
    $region31: #{bottleneck_forward.6} parent=5 // pred_region
      %s143 = ssub.s32 %s9, 1
      %s144 = smul.u32 32, %s14
      %p145 = scmp.lt.s32.totalorder %s144, 95
      %s146 = scalar_select %p145, %s144, 95
      %s147 = smul.addr %s146, 8
      %s148 = scalar_lea.vmem %s0, %s147
      %p149 = pneg %p35
      %p150 = pneg %p32
      %p151 = pneg %p56
      %p152 = pneg %p53
      %p153 = pneg %p77
      %p154 = pneg %p74
      %p155 = pneg %p103
      %p156 = pneg %p100
      %s157 = smul.u32 32, %s14
      %p158 = scmp.lt.s32.totalorder %s157, 95
      %s159 = scalar_select %p158, %s157, 95
      %s160 = smul.addr %s159, 4
      %s161 = scalar_lea.vmem %s3, %s160
      %s162 = smul.u32 32, %s14
      %p163 = scmp.lt.s32.totalorder %s162, 95
      %s164 = scalar_select %p163, %s162, 95
      %s165 = smul.addr %s164, 8
      %s166 = scalar_lea.vmem %s0, %s165
      %s167 = smul.u32 32, %s14
      %s168 = smul.u32 32, %s14
      %p169 = scmp.lt.s32.totalorder %s168, 95
      %s170 = scalar_select %p169, %s168, 95
      %s171 = smul.addr %s170, 4
      %s172 = scalar_lea.vmem %s3, %s171
      %s173 = smul.u32 32, %s14
      %v174 = vld [vmem:[%s166] sm:$0xff]
      %v175 = vld [vmem:[%s166 + $0x8] sm:$0xff]
      %v176 = vld [vmem:[%s166 + $0x10] sm:$0xff]
      %v177 = vld [vmem:[%s166 + $0x18] sm:$0xff]
      %v178 = vld [vmem:[%s166 + $0x20] sm:$0xff]
      %v179 = vld [vmem:[%s166 + $0x28] sm:$0xff]
      %v180 = vld [vmem:[%s166 + $0x30] sm:$0xff]
      %v181 = vld [vmem:[%s166 + $0x38] sm:$0xff]
      %v182 = vld [vmem:[%s166 + $0x40] sm:$0xff]
      %v183 = vld [vmem:[%s166 + $0x48] sm:$0xff]
      %v184 = vld [vmem:[%s166 + $0x50] sm:$0xff]
      %v185 = vld [vmem:[%s166 + $0x58] sm:$0xff]
      %v186 = vld [vmem:[%s166 + $0x60] sm:$0xff]
      %v187 = vld [vmem:[%s166 + $0x68] sm:$0xff]
      %v188 = vld [vmem:[%s166 + $0x70] sm:$0xff]
      %v189 = vld [vmem:[%s166 + $0x78] sm:$0xff]
      %v190 = vld [vmem:[%s166 + $0x80] sm:$0xff]
      %v191 = vld [vmem:[%s166 + $0x88] sm:$0xff]
      %v192 = vld [vmem:[%s166 + $0x90] sm:$0xff]
      %v193 = vld [vmem:[%s166 + $0x98] sm:$0xff]
      %v194 = vld [vmem:[%s166 + $0xa0] sm:$0xff]
      %v195 = vld [vmem:[%s166 + $0xa8] sm:$0xff]
      %v196 = vld [vmem:[%s166 + $0xb0] sm:$0xff]
      %v197 = vld [vmem:[%s166 + $0xb8] sm:$0xff]
      %v198 = vld [vmem:[%s166 + $0xc0] sm:$0xff]
      %v199 = vld [vmem:[%s166 + $0xc8] sm:$0xff]
      %v200 = vld [vmem:[%s166 + $0xd0] sm:$0xff]
      %v201 = vld [vmem:[%s166 + $0xd8] sm:$0xff]
      %v202 = vld [vmem:[%s166 + $0xe0] sm:$0xff]
      %v203 = vld [vmem:[%s166 + $0xe8] sm:$0xff]
      %v204 = vld [vmem:[%s166 + $0xf0] sm:$0xff]
      %v205 = vld [vmem:[%s166 + $0xf8] sm:$0xff]
      %v206 = vld [vmem:[%s1] sm:$0x1]
      %v208 = vlaneseq
      %v209 = vshrl.u32 %v208, 7
      %v210 = vsub.s32 0, %v209
      %v211 = vrot.slane %v206, %v210
      %v213 = vmul.f32 %v174, %v211
      %v214 = vmul.f32 %v175, %v211
      %v215 = vmul.f32 %v176, %v211
      %v216 = vmul.f32 %v177, %v211
      %v217 = vmul.f32 %v178, %v211
      %v218 = vmul.f32 %v179, %v211
      %v219 = vmul.f32 %v180, %v211
      %v220 = vmul.f32 %v181, %v211
      %v221 = vmul.f32 %v182, %v211
      %v222 = vmul.f32 %v183, %v211
      %v223 = vmul.f32 %v184, %v211
      %v224 = vmul.f32 %v185, %v211
      %v225 = vmul.f32 %v186, %v211
      %v226 = vmul.f32 %v187, %v211
      %v227 = vmul.f32 %v188, %v211
      %v228 = vmul.f32 %v189, %v211
      %v229 = vmul.f32 %v190, %v211
      %v230 = vmul.f32 %v191, %v211
      %v231 = vmul.f32 %v192, %v211
      %v232 = vmul.f32 %v193, %v211
      %v233 = vmul.f32 %v194, %v211
      %v234 = vmul.f32 %v195, %v211
      %v235 = vmul.f32 %v196, %v211
      %v236 = vmul.f32 %v197, %v211
      %v237 = vmul.f32 %v198, %v211
      %v238 = vmul.f32 %v199, %v211
      %v239 = vmul.f32 %v200, %v211
      %v240 = vmul.f32 %v201, %v211
      %v241 = vmul.f32 %v202, %v211
      %v242 = vmul.f32 %v203, %v211
      %v243 = vmul.f32 %v204, %v211
      %v244 = vmul.f32 %v205, %v211
      %v245 = vld [vmem:[%s2] sm:$0x1]
      %v247 = vlaneseq
      %v248 = vshrl.u32 %v247, 7
      %v249 = vsub.s32 0, %v248
      %v250 = vrot.slane %v245, %v249
      %v252 = vadd.f32 %v213, %v250
      %v253 = vadd.f32 %v214, %v250
      %v254 = vadd.f32 %v215, %v250
      %v255 = vadd.f32 %v216, %v250
      %v256 = vadd.f32 %v217, %v250
      %v257 = vadd.f32 %v218, %v250
      %v258 = vadd.f32 %v219, %v250
      %v259 = vadd.f32 %v220, %v250
      %v260 = vadd.f32 %v221, %v250
      %v261 = vadd.f32 %v222, %v250
      %v262 = vadd.f32 %v223, %v250
      %v263 = vadd.f32 %v224, %v250
      %v264 = vadd.f32 %v225, %v250
      %v265 = vadd.f32 %v226, %v250
      %v266 = vadd.f32 %v227, %v250
      %v267 = vadd.f32 %v228, %v250
      %v268 = vadd.f32 %v229, %v250
      %v269 = vadd.f32 %v230, %v250
      %v270 = vadd.f32 %v231, %v250
      %v271 = vadd.f32 %v232, %v250
      %v272 = vadd.f32 %v233, %v250
      %v273 = vadd.f32 %v234, %v250
      %v274 = vadd.f32 %v235, %v250
      %v275 = vadd.f32 %v236, %v250
      %v276 = vadd.f32 %v237, %v250
      %v277 = vadd.f32 %v238, %v250
      %v278 = vadd.f32 %v239, %v250
      %v279 = vadd.f32 %v240, %v250
      %v280 = vadd.f32 %v241, %v250
      %v281 = vadd.f32 %v242, %v250
      %v282 = vadd.f32 %v243, %v250
      %v283 = vadd.f32 %v244, %v250
      %v284 = vmax.f32 %v252, 0.0
      %v285 = vmax.f32 %v253, 0.0
      %v286 = vmax.f32 %v254, 0.0
      %v287 = vmax.f32 %v255, 0.0
      %v288 = vmax.f32 %v256, 0.0
      %v289 = vmax.f32 %v257, 0.0
      %v290 = vmax.f32 %v258, 0.0
      %v291 = vmax.f32 %v259, 0.0
      %v292 = vmax.f32 %v260, 0.0
      %v293 = vmax.f32 %v261, 0.0
      %v294 = vmax.f32 %v262, 0.0
      %v295 = vmax.f32 %v263, 0.0
      %v296 = vmax.f32 %v264, 0.0
      %v297 = vmax.f32 %v265, 0.0
      %v298 = vmax.f32 %v266, 0.0
      %v299 = vmax.f32 %v267, 0.0
      %v300 = vmax.f32 %v268, 0.0
      %v301 = vmax.f32 %v269, 0.0
      %v302 = vmax.f32 %v270, 0.0
      %v303 = vmax.f32 %v271, 0.0
      %v304 = vmax.f32 %v272, 0.0
      %v305 = vmax.f32 %v273, 0.0
      %v306 = vmax.f32 %v274, 0.0
      %v307 = vmax.f32 %v275, 0.0
      %v308 = vmax.f32 %v276, 0.0
      %v309 = vmax.f32 %v277, 0.0
      %v310 = vmax.f32 %v278, 0.0
      %v311 = vmax.f32 %v279, 0.0
      %v312 = vmax.f32 %v280, 0.0
      %v313 = vmax.f32 %v281, 0.0
      %v314 = vmax.f32 %v282, 0.0
      %v315 = vmax.f32 %v283, 0.0
      %v316 = vpack.c.bf16 %v285, %v284
      %v317 = vpack.c.bf16 %v287, %v286
      %v318 = vpack.c.bf16 %v289, %v288
      %v319 = vpack.c.bf16 %v291, %v290
      %v320 = vpack.c.bf16 %v293, %v292
      %v321 = vpack.c.bf16 %v295, %v294
      %v322 = vpack.c.bf16 %v297, %v296
      %v323 = vpack.c.bf16 %v299, %v298
      %v324 = vpack.c.bf16 %v301, %v300
      %v325 = vpack.c.bf16 %v303, %v302
      %v326 = vpack.c.bf16 %v305, %v304
      %v327 = vpack.c.bf16 %v307, %v306
      %v328 = vpack.c.bf16 %v309, %v308
      %v329 = vpack.c.bf16 %v311, %v310
      %v330 = vpack.c.bf16 %v313, %v312
      %v331 = vpack.c.bf16 %v315, %v314
      %v348 = vunpack.c.l.b16 %v316
      %v349 = vunpack.c.h.b16 %v316
      %v350 = vunpack.c.l.b16 %v317
      %v351 = vunpack.c.h.b16 %v317
      %v352 = vunpack.c.l.b16 %v318
      %v353 = vunpack.c.h.b16 %v318
      %v354 = vunpack.c.l.b16 %v319
      %v355 = vunpack.c.h.b16 %v319
      %v356 = vunpack.c.l.b16 %v320
      %v357 = vunpack.c.h.b16 %v320
      %v358 = vunpack.c.l.b16 %v321
      %v359 = vunpack.c.h.b16 %v321
      %v360 = vunpack.c.l.b16 %v322
      %v361 = vunpack.c.h.b16 %v322
      %v362 = vunpack.c.l.b16 %v323
      %v363 = vunpack.c.h.b16 %v323
      %v364 = vunpack.c.l.b16 %v324
      %v365 = vunpack.c.h.b16 %v324
      %v366 = vunpack.c.l.b16 %v325
      %v367 = vunpack.c.h.b16 %v325
      %v368 = vunpack.c.l.b16 %v326
      %v369 = vunpack.c.h.b16 %v326
      %v370 = vunpack.c.l.b16 %v327
      %v371 = vunpack.c.h.b16 %v327
      %v372 = vunpack.c.l.b16 %v328
      %v373 = vunpack.c.h.b16 %v328
      %v374 = vunpack.c.l.b16 %v329
      %v375 = vunpack.c.h.b16 %v329
      %v376 = vunpack.c.l.b16 %v330
      %v377 = vunpack.c.h.b16 %v330
      %v378 = vunpack.c.l.b16 %v331
      %v379 = vunpack.c.h.b16 %v331
      %v380 = vpack.c.b16 %v348, %v348
      %v381 = vpack.c.b16 %v349, %v349
      %v382 = vpack.c.b16 %v350, %v350
      %v383 = vpack.c.b16 %v351, %v351
      %v384 = vpack.c.b16 %v352, %v352
      %v385 = vpack.c.b16 %v353, %v353
      %v386 = vpack.c.b16 %v354, %v354
      %v387 = vpack.c.b16 %v355, %v355
      %v388 = vpack.c.b16 %v356, %v356
      %v389 = vpack.c.b16 %v357, %v357
      %v390 = vpack.c.b16 %v358, %v358
      %v391 = vpack.c.b16 %v359, %v359
      %v392 = vpack.c.b16 %v360, %v360
      %v393 = vpack.c.b16 %v361, %v361
      %v394 = vpack.c.b16 %v362, %v362
      %v395 = vpack.c.b16 %v363, %v363
      %v396 = vpack.c.b16 %v364, %v364
      %v397 = vpack.c.b16 %v365, %v365
      %v398 = vpack.c.b16 %v366, %v366
      %v399 = vpack.c.b16 %v367, %v367
      %v400 = vpack.c.b16 %v368, %v368
      %v401 = vpack.c.b16 %v369, %v369
      %v402 = vpack.c.b16 %v370, %v370
      %v403 = vpack.c.b16 %v371, %v371
      %v404 = vpack.c.b16 %v372, %v372
      %v405 = vpack.c.b16 %v373, %v373
      %v406 = vpack.c.b16 %v374, %v374
      %v407 = vpack.c.b16 %v375, %v375
      %v408 = vpack.c.b16 %v376, %v376
      %v409 = vpack.c.b16 %v377, %v377
      %v410 = vpack.c.b16 %v378, %v378
      %v411 = vpack.c.b16 %v379, %v379
      %444 = vst [vmem:[%s172] sm:$0xf] %v380
      %445 = vst [vmem:[%s172 + $0x4] sm:$0xf] %v381
      %446 = vst [vmem:[%s172 + $0x8] sm:$0xf] %v382
      %447 = vst [vmem:[%s172 + $0xc] sm:$0xf] %v383
      %448 = vst [vmem:[%s172 + $0x10] sm:$0xf] %v384
      %449 = vst [vmem:[%s172 + $0x14] sm:$0xf] %v385
      %450 = vst [vmem:[%s172 + $0x18] sm:$0xf] %v386
      %451 = vst [vmem:[%s172 + $0x1c] sm:$0xf] %v387
      %452 = vst [vmem:[%s172 + $0x20] sm:$0xf] %v388
      %453 = vst [vmem:[%s172 + $0x24] sm:$0xf] %v389
      %454 = vst [vmem:[%s172 + $0x28] sm:$0xf] %v390
      %455 = vst [vmem:[%s172 + $0x2c] sm:$0xf] %v391
      %456 = vst [vmem:[%s172 + $0x30] sm:$0xf] %v392
      %457 = vst [vmem:[%s172 + $0x34] sm:$0xf] %v393
      %458 = vst [vmem:[%s172 + $0x38] sm:$0xf] %v394
      %459 = vst [vmem:[%s172 + $0x3c] sm:$0xf] %v395
      %460 = vst [vmem:[%s172 + $0x40] sm:$0xf] %v396
      %461 = vst [vmem:[%s172 + $0x44] sm:$0xf] %v397
      %462 = vst [vmem:[%s172 + $0x48] sm:$0xf] %v398
      %463 = vst [vmem:[%s172 + $0x4c] sm:$0xf] %v399
      %464 = vst [vmem:[%s172 + $0x50] sm:$0xf] %v400
      %465 = vst [vmem:[%s172 + $0x54] sm:$0xf] %v401
      %466 = vst [vmem:[%s172 + $0x58] sm:$0xf] %v402
      %467 = vst [vmem:[%s172 + $0x5c] sm:$0xf] %v403
      %468 = vst [vmem:[%s172 + $0x60] sm:$0xf] %v404
      %469 = vst [vmem:[%s172 + $0x64] sm:$0xf] %v405
      %470 = vst [vmem:[%s172 + $0x68] sm:$0xf] %v406
      %471 = vst [vmem:[%s172 + $0x6c] sm:$0xf] %v407
      %472 = vst [vmem:[%s172 + $0x70] sm:$0xf] %v408
      %473 = vst [vmem:[%s172 + $0x74] sm:$0xf] %v409
      %474 = vst [vmem:[%s172 + $0x78] sm:$0xf] %v410
      %475 = vst [vmem:[%s172 + $0x7c] sm:$0xf] %v411
      %s476 = smul.u32 32, %s14
      %p477 = scmp.lt.s32.totalorder %s476, 95
      %s478 = scalar_select %p477, %s476, 95
      %s479 = smul.addr %s478, 4
      %s480 = scalar_lea.vmem %s3, %s479
      // Predicated region
      $region33: #{bottleneck_forward.6} parent=31 // pred_check
        %p481 = pneg %p100
      $region34: #{bottleneck_forward.6} parent=31 // pred_check_branch
        %483 = sbr.rel (%p481) target = $region36
      $region35: #{bottleneck_forward.6} parent=31 // pred_region
        %s484 = smul.u32 32, %s14
      $region36: #{bottleneck_forward.6} parent=31 // pred_fallthru
        _
    $region32: #{bottleneck_forward.6} parent=5 // pred_fallthru
      _
    %p485 = scmp.le.s32.totalorder 2, %s9
    // Predicated region
    $region37: #{bottleneck_forward.6} parent=5 // pred_check
      %p486 = pneg %p485
    $region38: #{bottleneck_forward.6} parent=5 // pred_check_branch
      %488 = sbr.rel (%p486) target = $region40
    $region39: #{bottleneck_forward.6} parent=5 // pred_region
      %s489 = ssub.s32 %s9, 2
      // Predicated region
      $region41: #{bottleneck_forward.6} parent=39 // pred_check
        %p490 = pneg %p106
      $region42: #{bottleneck_forward.6} parent=39 // pred_check_branch
        %492 = sbr.rel (%p490) target = $region44
      $region43: #{bottleneck_forward.6} parent=39 // pred_region
        %s493 = smul.u32 32, %s15
        %p494 = scmp.lt.s32.totalorder %s493, 95
        %s495 = scalar_select %p494, %s493, 95
        %s496 = smul.addr %s495, 4
        %s497 = scalar_lea.vmem %s3, %s496
      $region44: #{bottleneck_forward.6} parent=39 // pred_fallthru
        _
    $region40: #{bottleneck_forward.6} parent=5 // pred_fallthru
      _
  $region6: #{bottleneck_forward.6} parent=0 // loop_footer
    %s13 = sadd.s32 1, %s9
  $region7: #{bottleneck_forward.6} parent=0 // loop_footer_branch
    %8 = sbr.rel target = $region3
  $region8: #{bottleneck_forward.6} parent=0 // loop_exit
    _

// kernel: bottleneck_forward.5
$region0: #{bottleneck_forward.5}
  #allocation0 [shape = 'u32[]', space=smem, size = 0x4, offset = 0x4, fixed_abs, tag = 'smem constant byte address 0x4 - core index']
  #allocation1 [shape = 'u32[144,128]{1,0:T(1,128)}', space=vmem, size = 0x12000, scoped, tag = 'internal scratch']
  %s0 = inlined_call_operand.vmem [shape: f32[768,128], index: 0, kind: input, shape index: {}]
  %s1 = inlined_call_operand.vmem [shape: bf16[128,128], index: 1, kind: input, shape index: {}]
  %s2 = inlined_call_operand.vmem [shape: f32[768,128], index: 2, kind: output, shape index: {0}]
  %s3 = inlined_call_operand.vmem [shape: f32[2,128], index: 3, kind: output, shape index: {1}]
  %4 = xla_tuple %s2, %s3
  %s5 = sld [smem:[#allocation0]]
  $region53: #{bottleneck_forward.5} parent=0
    _
  %s7 = ssub.s32 1, %s5
  %s8 = scalar_select 0, %s7, %s5
  loop: start=0, step=1, limit=5
  $region2: #{bottleneck_forward.5} parent=0 // loop_pre_header
    _
  $region3: #{bottleneck_forward.5} parent=0 // loop_header
    %s10 = sphi 0, %s14
    %p11 = scmp.ge.s32.totalorder %s10, 5
    %s20 = sphi 0, %s22
    %s23 = sphi 0, %s20
    %s24 = sphi 0, %s23
    %s40 = sphi 0, %s24
    %s44 = sphi 0, %s44
    %s46 = sphi 0, %s44
    %s47 = sphi 0, %s46
    %s61 = sphi 0, %s47
    %s67 = sphi 0, %s69
    %s70 = sphi 0, %s67
    %s71 = sphi 0, %s70
    %s87 = sphi 0, %s71
    %s91 = sphi 0, %s91
    %s93 = sphi 0, %s91
    %s94 = sphi 0, %s93
    %s108 = sphi 0, %s94
  $region4: #{bottleneck_forward.5} parent=0 // loop_header_branch
    %13 = sbr.rel (%p11) target = $region8
  $region5: #{bottleneck_forward.5} parent=0 // loop_body
    %s15 = ssub.s32 %s10, 1
    %s16 = ssub.s32 %s10, 2
    %s17 = sadd.s32 %s10, 1
    %s18 = ssub.s32 %s10, %s17
    %p19 = scmp.eq.s32.totalorder %s18, 0
    %s21 = sadd.s32 %s20, 1
    %s22 = scalar_select %p19, %s20, %s21
    %p25 = pneg %p19
    %p26 = scmp.eq.s32.totalorder %s10, 2
    %p27 = por %p25, %p26
    %p28 = scmp.ne.s32.totalorder %s20, %s23
    %p29 = scmp.eq.s32.totalorder %s10, 0
    %p30 = por %p28, %p29
    %p31 = scmp.ne.s32.totalorder %s20, %s23
    %p32 = scmp.eq.s32.totalorder %s15, 2
    %p33 = por %p31, %p32
    %p34 = scmp.ne.s32.totalorder %s23, %s24
    %p35 = scmp.eq.s32.totalorder %s15, 0
    %p36 = por %p34, %p35
    %p37 = scmp.ne.s32.totalorder %s23, %s24
    %p38 = scmp.eq.s32.totalorder %s16, 2
    %p39 = por %p37, %p38
    %p41 = scmp.ne.s32.totalorder %s24, %s40
    %p42 = scmp.eq.s32.totalorder %s16, 0
    %p43 = por %p41, %p42
    %s45 = sadd.s32 %s44, 1
    %p48 = scmp.eq.s32.totalorder %s10, 2
    %p49 = scmp.ne.s32.totalorder %s44, %s46
    %p50 = scmp.eq.s32.totalorder %s10, 0
    %p51 = por %p49, %p50
    %p52 = scmp.ne.s32.totalorder %s44, %s46
    %p53 = scmp.eq.s32.totalorder %s15, 2
    %p54 = por %p52, %p53
    %p55 = scmp.ne.s32.totalorder %s46, %s47
    %p56 = scmp.eq.s32.totalorder %s15, 0
    %p57 = por %p55, %p56
    %p58 = scmp.ne.s32.totalorder %s46, %s47
    %p59 = scmp.eq.s32.totalorder %s16, 2
    %p60 = por %p58, %p59
    %p62 = scmp.ne.s32.totalorder %s47, %s61
    %p63 = scmp.eq.s32.totalorder %s16, 0
    %p64 = por %p62, %p63
    %s65 = ssub.s32 %s10, %s17
    %p66 = scmp.eq.s32.totalorder %s65, 0
    %s68 = sadd.s32 %s67, 1
    %s69 = scalar_select %p66, %s67, %s68
    %p72 = pneg %p66
    %p73 = scmp.eq.s32.totalorder %s10, 2
    %p74 = por %p72, %p73
    %p75 = scmp.ne.s32.totalorder %s67, %s70
    %p76 = scmp.eq.s32.totalorder %s10, 0
    %p77 = por %p75, %p76
    %p78 = scmp.ne.s32.totalorder %s67, %s70
    %p79 = scmp.eq.s32.totalorder %s15, 2
    %p80 = por %p78, %p79
    %p81 = scmp.ne.s32.totalorder %s70, %s71
    %p82 = scmp.eq.s32.totalorder %s15, 0
    %p83 = por %p81, %p82
    %p84 = scmp.ne.s32.totalorder %s70, %s71
    %p85 = scmp.eq.s32.totalorder %s16, 2
    %p86 = por %p84, %p85
    %p88 = scmp.ne.s32.totalorder %s71, %s87
    %p89 = scmp.eq.s32.totalorder %s16, 0
    %p90 = por %p88, %p89
    %s92 = sadd.s32 %s91, 1
    %p95 = scmp.eq.s32.totalorder %s10, 2
    %p96 = scmp.ne.s32.totalorder %s91, %s93
    %p97 = scmp.eq.s32.totalorder %s10, 0
    %p98 = por %p96, %p97
    %p99 = scmp.ne.s32.totalorder %s91, %s93
    %p100 = scmp.eq.s32.totalorder %s15, 2
    %p101 = por %p99, %p100
    %p102 = scmp.ne.s32.totalorder %s93, %s94
    %p103 = scmp.eq.s32.totalorder %s15, 0
    %p104 = por %p102, %p103
    %p105 = scmp.ne.s32.totalorder %s93, %s94
    %p106 = scmp.eq.s32.totalorder %s16, 2
    %p107 = por %p105, %p106
    %p109 = scmp.ne.s32.totalorder %s94, %s108
    %p110 = scmp.eq.s32.totalorder %s16, 0
    %p111 = por %p109, %p110
    %p112 = scmp.le.s32.totalorder 1, %s10
    %p113 = scmp.lt.s32.totalorder %s10, 4
    %p114 = pnand %p112, %p113
    %p115 = pneg %p114
    // Predicated region
    $region9: #{bottleneck_forward.5} parent=5 // pred_check
      _
    $region10: #{bottleneck_forward.5} parent=5 // pred_check_branch
      %117 = sbr.rel (%p114) target = $region12
    $region11: #{bottleneck_forward.5} parent=5 // pred_region
      %s118 = ssub.s32 %s10, 1
      // Predicated region
      $region13: #{bottleneck_forward.5} parent=11 // pred_check
        %p119 = pneg %p57
      $region14: #{bottleneck_forward.5} parent=11 // pred_check_branch
        %121 = sbr.rel (%p119) target = $region16
      $region15: #{bottleneck_forward.5} parent=11 // pred_region
        _
      $region16: #{bottleneck_forward.5} parent=11 // pred_fallthru
        _
    $region12: #{bottleneck_forward.5} parent=5 // pred_fallthru
      _
    %p122 = scmp.lt.s32.totalorder %s10, 3
    // Predicated region
    $region17: #{bottleneck_forward.5} parent=5 // pred_check
      %p123 = pneg %p122
    $region18: #{bottleneck_forward.5} parent=5 // pred_check_branch
      %125 = sbr.rel (%p123) target = $region20
    $region19: #{bottleneck_forward.5} parent=5 // pred_region
      // Predicated region
      $region21: #{bottleneck_forward.5} parent=19 // pred_check
        %p126 = pneg %p30
      $region22: #{bottleneck_forward.5} parent=19 // pred_check_branch
        %128 = sbr.rel (%p126) target = $region24
      $region23: #{bottleneck_forward.5} parent=19 // pred_region
        %s129 = smul.u32 32, %s10
        %p130 = scmp.lt.s32.totalorder %s129, 95
        %s131 = scalar_select %p130, %s129, 95
        %s132 = smul.addr %s131, 8
        %s133 = scalar_lea.vmem %s0, %s132
        %s134 = smul.u32 32, %s10
      $region24: #{bottleneck_forward.5} parent=19 // pred_fallthru
        _
    $region20: #{bottleneck_forward.5} parent=5 // pred_fallthru
      _
    %p135 = scmp.le.s32.totalorder 1, %s10
    %p136 = scmp.lt.s32.totalorder %s10, 4
    %p137 = pnand %p135, %p136
    %p138 = pneg %p137
    // Predicated region
    $region25: #{bottleneck_forward.5} parent=5 // pred_check
      _
    $region26: #{bottleneck_forward.5} parent=5 // pred_check_branch
      %140 = sbr.rel (%p137) target = $region28
    $region27: #{bottleneck_forward.5} parent=5 // pred_region
      %s141 = ssub.s32 %s10, 1
      %s142 = smul.u32 32, %s15
      %p143 = scmp.lt.s32.totalorder %s142, 95
      %s144 = scalar_select %p143, %s142, 95
      %s145 = smul.addr %s144, 8
      %s146 = scalar_lea.vmem %s0, %s145
      %p147 = pneg %p36
      %p148 = pneg %p33
      %p149 = pneg %p57
      %p150 = pneg %p54
      %p151 = pneg %p83
      %p152 = pneg %p80
      %s153 = smul.u32 32, %s15
      %p154 = scmp.lt.s32.totalorder %s153, 95
      %s155 = scalar_select %p154, %s153, 95
      %s156 = smul.addr %s155, 8
      %s157 = scalar_lea.vmem %s2, %s156
      %p158 = pneg %p104
      %p159 = pneg %p101
      %s160 = smul.u32 32, %s15
      %p161 = scmp.lt.s32.totalorder %s160, 95
      %s162 = scalar_select %p161, %s160, 95
      %s163 = smul.addr %s162, 8
      %s164 = scalar_lea.vmem %s0, %s163
      %s165 = smul.u32 32, %s15
      %s166 = smul.u32 32, %s15
      %p167 = scmp.lt.s32.totalorder %s166, 95
      %s168 = scalar_select %p167, %s166, 95
      %s169 = smul.addr %s168, 8
      %s170 = scalar_lea.vmem %s2, %s169
      %s171 = smul.u32 32, %s15
      %v173 = vld [vmem:[%s164] sm:$0xff]
      %v174 = vld [vmem:[%s164 + $0x8] sm:$0xff]
      %v175 = vld [vmem:[%s164 + $0x10] sm:$0xff]
      %v176 = vld [vmem:[%s164 + $0x18] sm:$0xff]
      %v177 = vld [vmem:[%s164 + $0x20] sm:$0xff]
      %v178 = vld [vmem:[%s164 + $0x28] sm:$0xff]
      %v179 = vld [vmem:[%s164 + $0x30] sm:$0xff]
      %v180 = vld [vmem:[%s164 + $0x38] sm:$0xff]
      %v181 = vld [vmem:[%s164 + $0x40] sm:$0xff]
      %v182 = vld [vmem:[%s164 + $0x48] sm:$0xff]
      %v183 = vld [vmem:[%s164 + $0x50] sm:$0xff]
      %v184 = vld [vmem:[%s164 + $0x58] sm:$0xff]
      %v185 = vld [vmem:[%s164 + $0x60] sm:$0xff]
      %v186 = vld [vmem:[%s164 + $0x68] sm:$0xff]
      %v187 = vld [vmem:[%s164 + $0x70] sm:$0xff]
      %v188 = vld [vmem:[%s164 + $0x78] sm:$0xff]
      %v189 = vld [vmem:[%s164 + $0x80] sm:$0xff]
      %v190 = vld [vmem:[%s164 + $0x88] sm:$0xff]
      %v191 = vld [vmem:[%s164 + $0x90] sm:$0xff]
      %v192 = vld [vmem:[%s164 + $0x98] sm:$0xff]
      %v193 = vld [vmem:[%s164 + $0xa0] sm:$0xff]
      %v194 = vld [vmem:[%s164 + $0xa8] sm:$0xff]
      %v195 = vld [vmem:[%s164 + $0xb0] sm:$0xff]
      %v196 = vld [vmem:[%s164 + $0xb8] sm:$0xff]
      %v197 = vld [vmem:[%s164 + $0xc0] sm:$0xff]
      %v198 = vld [vmem:[%s164 + $0xc8] sm:$0xff]
      %v199 = vld [vmem:[%s164 + $0xd0] sm:$0xff]
      %v200 = vld [vmem:[%s164 + $0xd8] sm:$0xff]
      %v201 = vld [vmem:[%s164 + $0xe0] sm:$0xff]
      %v202 = vld [vmem:[%s164 + $0xe8] sm:$0xff]
      %v203 = vld [vmem:[%s164 + $0xf0] sm:$0xff]
      %v204 = vld [vmem:[%s164 + $0xf8] sm:$0xff]
      %v205 = vpack.c.bf16 %v174, %v173
      %v206 = vpack.c.bf16 %v176, %v175
      %v207 = vpack.c.bf16 %v178, %v177
      %v208 = vpack.c.bf16 %v180, %v179
      %v209 = vpack.c.bf16 %v182, %v181
      %v210 = vpack.c.bf16 %v184, %v183
      %v211 = vpack.c.bf16 %v186, %v185
      %v212 = vpack.c.bf16 %v188, %v187
      %v213 = vpack.c.bf16 %v190, %v189
      %v214 = vpack.c.bf16 %v192, %v191
      %v215 = vpack.c.bf16 %v194, %v193
      %v216 = vpack.c.bf16 %v196, %v195
      %v217 = vpack.c.bf16 %v198, %v197
      %v218 = vpack.c.bf16 %v200, %v199
      %v219 = vpack.c.bf16 %v202, %v201
      %v220 = vpack.c.bf16 %v204, %v203
      %v221 = vld [vmem:[%s1] sm:$0xf]
      %v222 = vld [vmem:[%s1 + $0x4] sm:$0xf]
      %v223 = vld [vmem:[%s1 + $0x8] sm:$0xf]
      %v224 = vld [vmem:[%s1 + $0xc] sm:$0xf]
      %v225 = vld [vmem:[%s1 + $0x10] sm:$0xf]
      %v226 = vld [vmem:[%s1 + $0x14] sm:$0xf]
      %v227 = vld [vmem:[%s1 + $0x18] sm:$0xf]
      %v228 = vld [vmem:[%s1 + $0x1c] sm:$0xf]
      %v229 = vld [vmem:[%s1 + $0x20] sm:$0xf]
      %v230 = vld [vmem:[%s1 + $0x24] sm:$0xf]
      %v231 = vld [vmem:[%s1 + $0x28] sm:$0xf]
      %v232 = vld [vmem:[%s1 + $0x2c] sm:$0xf]
      %v233 = vld [vmem:[%s1 + $0x30] sm:$0xf]
      %v234 = vld [vmem:[%s1 + $0x34] sm:$0xf]
      %v235 = vld [vmem:[%s1 + $0x38] sm:$0xf]
      %v236 = vld [vmem:[%s1 + $0x3c] sm:$0xf]
      %v253 = vunpack.c.l.b16 %v221
      %v254 = vunpack.c.l.b16 %v222
      %v255 = vunpack.c.l.b16 %v223
      %v256 = vunpack.c.l.b16 %v224
      %v257 = vunpack.c.l.b16 %v225
      %v258 = vunpack.c.l.b16 %v226
      %v259 = vunpack.c.l.b16 %v227
      %v260 = vunpack.c.l.b16 %v228
      %v261 = vunpack.c.l.b16 %v229
      %v262 = vunpack.c.l.b16 %v230
      %v263 = vunpack.c.l.b16 %v231
      %v264 = vunpack.c.l.b16 %v232
      %v265 = vunpack.c.l.b16 %v233
      %v266 = vunpack.c.l.b16 %v234
      %v267 = vunpack.c.l.b16 %v235
      %v268 = vunpack.c.l.b16 %v236
      %v269 = vpack.c.b16 %v254, %v253
      %v270 = vpack.c.b16 %v256, %v255
      %v271 = vpack.c.b16 %v258, %v257
      %v272 = vpack.c.b16 %v260, %v259
      %v273 = vpack.c.b16 %v262, %v261
      %v274 = vpack.c.b16 %v264, %v263
      %v275 = vpack.c.b16 %v266, %v265
      %v276 = vpack.c.b16 %v268, %v267
      %285 = vmatprep.subr.bf16.mxu0 0
      %286 = vmatpush1.bf16.msra.mxu0 %v276
      %287 = vmatprep.subr.bf16.mxu0 0
      %288 = vmatpush1.bf16.msra.mxu0 %v275
      %289 = vmatprep.subr.bf16.mxu0 0
      %290 = vmatpush1.bf16.msra.mxu0 %v274
      %291 = vmatprep.subr.bf16.mxu0 0
      %292 = vmatpush1.bf16.msra.mxu0 %v273
      %293 = vmatprep.subr.bf16.mxu0 0
      %294 = vmatpush1.bf16.msra.mxu0 %v272
      %295 = vmatprep.subr.bf16.mxu0 0
      %296 = vmatpush1.bf16.msra.mxu0 %v271
      %297 = vmatprep.subr.bf16.mxu0 0
      %298 = vmatpush1.bf16.msra.mxu0 %v270
      %299 = vmatprep.subr.bf16.mxu0 0
      %300 = vmatpush1.bf16.msra.mxu0 %v269
      %301 = vmatprep.subr.bf16.mxu0 0
      %302 = vmatpush2.bf16.msra.mxu0 0
      %303 = vmatprep.subr.bf16.mxu0 0
      %304 = vmatpush2.bf16.msra.mxu0 0
      %305 = vmatprep.subr.bf16.mxu0 0
      %306 = vmatpush2.bf16.msra.mxu0 0
      %307 = vmatprep.subr.bf16.mxu0 0
      %308 = vmatpush2.bf16.msra.mxu0 0
      %309 = vmatprep.subr.bf16.mxu0 0
      %310 = vmatpush2.bf16.msra.mxu0 0
      %311 = vmatprep.subr.bf16.mxu0 0
      %312 = vmatpush2.bf16.msra.mxu0 0
      %313 = vmatprep.subr.bf16.mxu0 0
      %314 = vmatpush2.bf16.msra.mxu0 0
      %315 = vmatprep.subr.bf16.mxu0 0
      %316 = vmatpush2.bf16.msra.mxu0 0
      %317 = vmatprep.mubr.bf16.mxu0 0
      %318 = vmatmul.mubr.bf16.gmra.mxu0 %v205
      %v319 = vpop.f32.mrf.mxu0
      %v320 = vadd.f32 0.0, %v319
      %v321 = vpop.f32.mrf.mxu0
      %v322 = vpop.f32.mrf.mxu0
      %v323 = vadd.f32 0.0, %v322
      %v324 = vpop.f32.mrf.mxu0
      %325 = vmatprep.mubr.bf16.mxu0 0
      %326 = vmatmul.mubr.bf16.gmra.mxu0 %v206
      %v327 = vpop.f32.mrf.mxu0
      %v328 = vadd.f32 0.0, %v327
      %v329 = vpop.f32.mrf.mxu0
      %v330 = vpop.f32.mrf.mxu0
      %v331 = vadd.f32 0.0, %v330
      %v332 = vpop.f32.mrf.mxu0
      %333 = vmatprep.mubr.bf16.mxu0 0
      %334 = vmatmul.mubr.bf16.gmra.mxu0 %v207
      %v335 = vpop.f32.mrf.mxu0
      %v336 = vadd.f32 0.0, %v335
      %v337 = vpop.f32.mrf.mxu0
      %v338 = vpop.f32.mrf.mxu0
      %v339 = vadd.f32 0.0, %v338
      %v340 = vpop.f32.mrf.mxu0
      %341 = vmatprep.mubr.bf16.mxu0 0
      %342 = vmatmul.mubr.bf16.gmra.mxu0 %v208
      %v343 = vpop.f32.mrf.mxu0
      %v344 = vadd.f32 0.0, %v343
      %v345 = vpop.f32.mrf.mxu0
      %v346 = vpop.f32.mrf.mxu0
      %v347 = vadd.f32 0.0, %v346
      %v348 = vpop.f32.mrf.mxu0
      %349 = vmatprep.mubr.bf16.mxu0 0
      %350 = vmatmul.mubr.bf16.gmra.mxu0 %v209
      %v351 = vpop.f32.mrf.mxu0
      %v352 = vadd.f32 0.0, %v351
      %v353 = vpop.f32.mrf.mxu0
      %v354 = vpop.f32.mrf.mxu0
      %v355 = vadd.f32 0.0, %v354
      %v356 = vpop.f32.mrf.mxu0
      %357 = vmatprep.mubr.bf16.mxu0 0
      %358 = vmatmul.mubr.bf16.gmra.mxu0 %v210
      %v359 = vpop.f32.mrf.mxu0
      %v360 = vadd.f32 0.0, %v359
      %v361 = vpop.f32.mrf.mxu0
      %v362 = vpop.f32.mrf.mxu0
      %v363 = vadd.f32 0.0, %v362
      %v364 = vpop.f32.mrf.mxu0
      %365 = vmatprep.mubr.bf16.mxu0 0
      %366 = vmatmul.mubr.bf16.gmra.mxu0 %v211
      %v367 = vpop.f32.mrf.mxu0
      %v368 = vadd.f32 0.0, %v367
      %v369 = vpop.f32.mrf.mxu0
      %v370 = vpop.f32.mrf.mxu0
      %v371 = vadd.f32 0.0, %v370
      %v372 = vpop.f32.mrf.mxu0
      %373 = vmatprep.mubr.bf16.mxu0 0
      %374 = vmatmul.mubr.bf16.gmra.mxu0 %v212
      %v375 = vpop.f32.mrf.mxu0
      %v376 = vadd.f32 0.0, %v375
      %v377 = vpop.f32.mrf.mxu0
      %v378 = vpop.f32.mrf.mxu0
      %v379 = vadd.f32 0.0, %v378
      %v380 = vpop.f32.mrf.mxu0
      %381 = vmatprep.mubr.bf16.mxu0 0
      %382 = vmatmul.mubr.bf16.gmra.mxu0 %v213
      %v383 = vpop.f32.mrf.mxu0
      %v384 = vadd.f32 0.0, %v383
      %v385 = vpop.f32.mrf.mxu0
      %v386 = vpop.f32.mrf.mxu0
      %v387 = vadd.f32 0.0, %v386
      %v388 = vpop.f32.mrf.mxu0
      %389 = vmatprep.mubr.bf16.mxu0 0
      %390 = vmatmul.mubr.bf16.gmra.mxu0 %v214
      %v391 = vpop.f32.mrf.mxu0
      %v392 = vadd.f32 0.0, %v391
      %v393 = vpop.f32.mrf.mxu0
      %v394 = vpop.f32.mrf.mxu0
      %v395 = vadd.f32 0.0, %v394
      %v396 = vpop.f32.mrf.mxu0
      %397 = vmatprep.mubr.bf16.mxu0 0
      %398 = vmatmul.mubr.bf16.gmra.mxu0 %v215
      %v399 = vpop.f32.mrf.mxu0
      %v400 = vadd.f32 0.0, %v399
      %v401 = vpop.f32.mrf.mxu0
      %v402 = vpop.f32.mrf.mxu0
      %v403 = vadd.f32 0.0, %v402
      %v404 = vpop.f32.mrf.mxu0
      %405 = vmatprep.mubr.bf16.mxu0 0
      %406 = vmatmul.mubr.bf16.gmra.mxu0 %v216
      %v407 = vpop.f32.mrf.mxu0
      %v408 = vadd.f32 0.0, %v407
      %v409 = vpop.f32.mrf.mxu0
      %v410 = vpop.f32.mrf.mxu0
      %v411 = vadd.f32 0.0, %v410
      %v412 = vpop.f32.mrf.mxu0
      %413 = vmatprep.mubr.bf16.mxu0 0
      %414 = vmatmul.mubr.bf16.gmra.mxu0 %v217
      %v415 = vpop.f32.mrf.mxu0
      %v416 = vadd.f32 0.0, %v415
      %v417 = vpop.f32.mrf.mxu0
      %v418 = vpop.f32.mrf.mxu0
      %v419 = vadd.f32 0.0, %v418
      %v420 = vpop.f32.mrf.mxu0
      %421 = vmatprep.mubr.bf16.mxu0 0
      %422 = vmatmul.mubr.bf16.gmra.mxu0 %v218
      %v423 = vpop.f32.mrf.mxu0
      %v424 = vadd.f32 0.0, %v423
      %v425 = vpop.f32.mrf.mxu0
      %v426 = vpop.f32.mrf.mxu0
      %v427 = vadd.f32 0.0, %v426
      %v428 = vpop.f32.mrf.mxu0
      %429 = vmatprep.mubr.bf16.mxu0 0
      %430 = vmatmul.mubr.bf16.gmra.mxu0 %v219
      %v431 = vpop.f32.mrf.mxu0
      %v432 = vadd.f32 0.0, %v431
      %v433 = vpop.f32.mrf.mxu0
      %v434 = vpop.f32.mrf.mxu0
      %v435 = vadd.f32 0.0, %v434
      %v436 = vpop.f32.mrf.mxu0
      %437 = vmatprep.mubr.bf16.mxu0 0
      %438 = vmatmul.mubr.bf16.gmra.mxu0 %v220
      %v439 = vpop.f32.mrf.mxu0
      %v440 = vadd.f32 0.0, %v439
      %v441 = vpop.f32.mrf.mxu0
      %v442 = vpop.f32.mrf.mxu0
      %v443 = vadd.f32 0.0, %v442
      %v444 = vpop.f32.mrf.mxu0
      %445 = vdwg.mxu0
      %446 = vst [vmem:[%s170] sm:$0xff] %v320
      %447 = vst [vmem:[%s170 + $0x8] sm:$0xff] %v323
      %448 = vst [vmem:[%s170 + $0x10] sm:$0xff] %v328
      %449 = vst [vmem:[%s170 + $0x18] sm:$0xff] %v331
      %450 = vst [vmem:[%s170 + $0x20] sm:$0xff] %v336
      %451 = vst [vmem:[%s170 + $0x28] sm:$0xff] %v339
      %452 = vst [vmem:[%s170 + $0x30] sm:$0xff] %v344
      %453 = vst [vmem:[%s170 + $0x38] sm:$0xff] %v347
      %454 = vst [vmem:[%s170 + $0x40] sm:$0xff] %v352
      %455 = vst [vmem:[%s170 + $0x48] sm:$0xff] %v355
      %456 = vst [vmem:[%s170 + $0x50] sm:$0xff] %v360
      %457 = vst [vmem:[%s170 + $0x58] sm:$0xff] %v363
      %458 = vst [vmem:[%s170 + $0x60] sm:$0xff] %v368
      %459 = vst [vmem:[%s170 + $0x68] sm:$0xff] %v371
      %460 = vst [vmem:[%s170 + $0x70] sm:$0xff] %v376
      %461 = vst [vmem:[%s170 + $0x78] sm:$0xff] %v379
      %462 = vst [vmem:[%s170 + $0x80] sm:$0xff] %v384
      %463 = vst [vmem:[%s170 + $0x88] sm:$0xff] %v387
      %464 = vst [vmem:[%s170 + $0x90] sm:$0xff] %v392
      %465 = vst [vmem:[%s170 + $0x98] sm:$0xff] %v395
      %466 = vst [vmem:[%s170 + $0xa0] sm:$0xff] %v400
      %467 = vst [vmem:[%s170 + $0xa8] sm:$0xff] %v403
      %468 = vst [vmem:[%s170 + $0xb0] sm:$0xff] %v408
      %469 = vst [vmem:[%s170 + $0xb8] sm:$0xff] %v411
      %470 = vst [vmem:[%s170 + $0xc0] sm:$0xff] %v416
      %471 = vst [vmem:[%s170 + $0xc8] sm:$0xff] %v419
      %472 = vst [vmem:[%s170 + $0xd0] sm:$0xff] %v424
      %473 = vst [vmem:[%s170 + $0xd8] sm:$0xff] %v427
      %474 = vst [vmem:[%s170 + $0xe0] sm:$0xff] %v432
      %475 = vst [vmem:[%s170 + $0xe8] sm:$0xff] %v435
      %476 = vst [vmem:[%s170 + $0xf0] sm:$0xff] %v440
      %477 = vst [vmem:[%s170 + $0xf8] sm:$0xff] %v443
      %p478 = scmp.eq.s32.totalorder %s15, 0
      // Predicated region
      $region29: #{bottleneck_forward.5} parent=27 // pred_check
        %p479 = pneg %p478
      $region30: #{bottleneck_forward.5} parent=27 // pred_check_branch
        %481 = sbr.rel (%p479) target = $region32
      $region31: #{bottleneck_forward.5} parent=27 // pred_region
        %482 = vst [vmem:[%s3] sm:$0x3] 0.0
      $region32: #{bottleneck_forward.5} parent=27 // pred_fallthru
        _
      %v483 = vld [vmem:[%s3] sm:$0x3]
      %v484 = vadd.f32 %v320, %v323
      %v485 = vadd.f32 %v484, %v328
      %v486 = vadd.f32 %v485, %v331
      %v487 = vadd.f32 %v486, %v336
      %v488 = vadd.f32 %v487, %v339
      %v489 = vadd.f32 %v488, %v344
      %v490 = vadd.f32 %v489, %v347
      %v491 = vadd.f32 %v490, %v352
      %v492 = vadd.f32 %v491, %v355
      %v493 = vadd.f32 %v492, %v360
      %v494 = vadd.f32 %v493, %v363
      %v495 = vadd.f32 %v494, %v368
      %v496 = vadd.f32 %v495, %v371
      %v497 = vadd.f32 %v496, %v376
      %v498 = vadd.f32 %v497, %v379
      %v499 = vadd.f32 %v498, %v384
      %v500 = vadd.f32 %v499, %v387
      %v501 = vadd.f32 %v500, %v392
      %v502 = vadd.f32 %v501, %v395
      %v503 = vadd.f32 %v502, %v400
      %v504 = vadd.f32 %v503, %v403
      %v505 = vadd.f32 %v504, %v408
      %v506 = vadd.f32 %v505, %v411
      %v507 = vadd.f32 %v506, %v416
      %v508 = vadd.f32 %v507, %v419
      %v509 = vadd.f32 %v508, %v424
      %v510 = vadd.f32 %v509, %v427
      %v511 = vadd.f32 %v510, %v432
      %v512 = vadd.f32 %v511, %v435
      %v513 = vadd.f32 %v512, %v440
      %v514 = vadd.f32 %v513, %v443
      %v515 = vrot.slane %v514, 4
      %v516 = vadd.f32 %v514, %v515
      %v517 = vrot.slane %v516, 2
      %v518 = vadd.f32 %v516, %v517
      %v519 = vrot.slane %v518, 1
      %v520 = vadd.f32 %v518, %v519
      %v521 = vmul.f32 %v320, %v320
      %v522 = vmul.f32 %v323, %v323
      %v523 = vmul.f32 %v328, %v328
      %v524 = vmul.f32 %v331, %v331
      %v525 = vmul.f32 %v336, %v336
      %v526 = vmul.f32 %v339, %v339
      %v527 = vmul.f32 %v344, %v344
      %v528 = vmul.f32 %v347, %v347
      %v529 = vmul.f32 %v352, %v352
      %v530 = vmul.f32 %v355, %v355
      %v531 = vmul.f32 %v360, %v360
      %v532 = vmul.f32 %v363, %v363
      %v533 = vmul.f32 %v368, %v368
      %v534 = vmul.f32 %v371, %v371
      %v535 = vmul.f32 %v376, %v376
      %v536 = vmul.f32 %v379, %v379
      %v537 = vmul.f32 %v384, %v384
      %v538 = vmul.f32 %v387, %v387
      %v539 = vmul.f32 %v392, %v392
      %v540 = vmul.f32 %v395, %v395
      %v541 = vmul.f32 %v400, %v400
      %v542 = vmul.f32 %v403, %v403
      %v543 = vmul.f32 %v408, %v408
      %v544 = vmul.f32 %v411, %v411
      %v545 = vmul.f32 %v416, %v416
      %v546 = vmul.f32 %v419, %v419
      %v547 = vmul.f32 %v424, %v424
      %v548 = vmul.f32 %v427, %v427
      %v549 = vmul.f32 %v432, %v432
      %v550 = vmul.f32 %v435, %v435
      %v551 = vmul.f32 %v440, %v440
      %v552 = vmul.f32 %v443, %v443
      %v553 = vadd.f32 %v521, %v522
      %v554 = vadd.f32 %v553, %v523
      %v555 = vadd.f32 %v554, %v524
      %v556 = vadd.f32 %v555, %v525
      %v557 = vadd.f32 %v556, %v526
      %v558 = vadd.f32 %v557, %v527
      %v559 = vadd.f32 %v558, %v528
      %v560 = vadd.f32 %v559, %v529
      %v561 = vadd.f32 %v560, %v530
      %v562 = vadd.f32 %v561, %v531
      %v563 = vadd.f32 %v562, %v532
      %v564 = vadd.f32 %v563, %v533
      %v565 = vadd.f32 %v564, %v534
      %v566 = vadd.f32 %v565, %v535
      %v567 = vadd.f32 %v566, %v536
      %v568 = vadd.f32 %v567, %v537
      %v569 = vadd.f32 %v568, %v538
      %v570 = vadd.f32 %v569, %v539
      %v571 = vadd.f32 %v570, %v540
      %v572 = vadd.f32 %v571, %v541
      %v573 = vadd.f32 %v572, %v542
      %v574 = vadd.f32 %v573, %v543
      %v575 = vadd.f32 %v574, %v544
      %v576 = vadd.f32 %v575, %v545
      %v577 = vadd.f32 %v576, %v546
      %v578 = vadd.f32 %v577, %v547
      %v579 = vadd.f32 %v578, %v548
      %v580 = vadd.f32 %v579, %v549
      %v581 = vadd.f32 %v580, %v550
      %v582 = vadd.f32 %v581, %v551
      %v583 = vadd.f32 %v582, %v552
      %v584 = vrot.slane %v583, 4
      %v585 = vadd.f32 %v583, %v584
      %v586 = vrot.slane %v585, 2
      %v587 = vadd.f32 %v585, %v586
      %v588 = vrot.slane %v587, 1
      %v589 = vadd.f32 %v587, %v588
      %vm590 = vcmask 1040384
      %v591 = vsel %vm590, %v520, %v589
      %v592 = vadd.f32 %v483, %v591
      %593 = vst [vmem:[%s3] sm:$0x3] %v592
      %s594 = smul.u32 32, %s15
      %p595 = scmp.lt.s32.totalorder %s594, 95
      %s596 = scalar_select %p595, %s594, 95
      %s597 = smul.addr %s596, 8
      %s598 = scalar_lea.vmem %s2, %s597
      // Predicated region
      $region33: #{bottleneck_forward.5} parent=27 // pred_check
        %p599 = pneg %p80
      $region34: #{bottleneck_forward.5} parent=27 // pred_check_branch
        %601 = sbr.rel (%p599) target = $region36
      $region35: #{bottleneck_forward.5} parent=27 // pred_region
        %s602 = smul.u32 32, %s15
      $region36: #{bottleneck_forward.5} parent=27 // pred_fallthru
        _
      // Predicated region
      $region37: #{bottleneck_forward.5} parent=27 // pred_check
        %p603 = pneg %p101
      $region38: #{bottleneck_forward.5} parent=27 // pred_check_branch
        %605 = sbr.rel (%p603) target = $region40
      $region39: #{bottleneck_forward.5} parent=27 // pred_region
        _
      $region40: #{bottleneck_forward.5} parent=27 // pred_fallthru
        _
      // Predicated region
      $region41: #{bottleneck_forward.5} parent=27 // pred_check
        %p606 = pneg %p101
      $region42: #{bottleneck_forward.5} parent=27 // pred_check_branch
        %608 = sbr.rel (%p606) target = $region44
      $region43: #{bottleneck_forward.5} parent=27 // pred_region
        _
      $region44: #{bottleneck_forward.5} parent=27 // pred_fallthru
        _
    $region28: #{bottleneck_forward.5} parent=5 // pred_fallthru
      _
    %p609 = scmp.le.s32.totalorder 2, %s10
    // Predicated region
    $region45: #{bottleneck_forward.5} parent=5 // pred_check
      %p610 = pneg %p609
    $region46: #{bottleneck_forward.5} parent=5 // pred_check_branch
      %612 = sbr.rel (%p610) target = $region48
    $region47: #{bottleneck_forward.5} parent=5 // pred_region
      %s613 = ssub.s32 %s10, 2
      // Predicated region
      $region49: #{bottleneck_forward.5} parent=47 // pred_check
        %p614 = pneg %p86
      $region50: #{bottleneck_forward.5} parent=47 // pred_check_branch
        %616 = sbr.rel (%p614) target = $region52
      $region51: #{bottleneck_forward.5} parent=47 // pred_region
        %s617 = smul.u32 32, %s16
        %p618 = scmp.lt.s32.totalorder %s617, 95
        %s619 = scalar_select %p618, %s617, 95
        %s620 = smul.addr %s619, 8
        %s621 = scalar_lea.vmem %s2, %s620
      $region52: #{bottleneck_forward.5} parent=47 // pred_fallthru
        _
    $region48: #{bottleneck_forward.5} parent=5 // pred_fallthru
      _
  $region6: #{bottleneck_forward.5} parent=0 // loop_footer
    %s14 = sadd.s32 1, %s10
  $region7: #{bottleneck_forward.5} parent=0 // loop_footer_branch
    %9 = sbr.rel target = $region3
  $region8: #{bottleneck_forward.5} parent=0 // loop_exit
    _

// kernel: bottleneck_forward.9
$region0: #{bottleneck_forward.9}
  #allocation0 [shape = 'u32[]', space=smem, size = 0x4, offset = 0x4, fixed_abs, tag = 'smem constant byte address 0x4 - core index']
  #allocation1 [shape = 'u32[144,128]{1,0:T(1,128)}', space=vmem, size = 0x12000, scoped, tag = 'internal scratch']
  %s0 = inlined_call_operand.vmem [shape: f32[768,128], index: 0, kind: input, shape index: {}]
  %s1 = inlined_call_operand.vmem [shape: f32[1,128], index: 1, kind: input, shape index: {}]
  %s2 = inlined_call_operand.vmem [shape: f32[1,128], index: 2, kind: input, shape index: {}]
  %s3 = inlined_call_operand.vmem [shape: f32[768,128], index: 3, kind: input, shape index: {}]
  %s4 = inlined_call_operand.hbm [shape: f32[768,128], index: 4, kind: output, shape index: {}]
  %s5 = sld [smem:[#allocation0]]
  $region49: #{bottleneck_forward.9} parent=0
    _
  %s7 = ssub.s32 1, %s5
  %s8 = scalar_select 0, %s7, %s5
  $region1: #{bottleneck_forward.9} parent=0
    #allocation2 [shape = 'u8[262144]{0}', space=vmem, size = 0x40000, scoped, tag = 'output window, operand 0']
    #allocation3 [shape = 's32[2]{0}', space=sflag, size = 0x8, scoped, tag = 'scoped memory for bottleneck_forward.9']
    %9 = vsyncpa [#allocation3], 0
    %s10 = scalar_lea.sflag [#allocation3], 1
    %11 = vsyncpa %s10, 0
    loop: start=0, step=1, limit=5
    $region2: #{bottleneck_forward.9} parent=1 // loop_pre_header
      _
    $region3: #{bottleneck_forward.9} parent=1 // loop_header
      %s13 = sphi 0, %s17
      %p14 = scmp.ge.s32.totalorder %s13, 5
      %s23 = sphi 0, %s25
      %s26 = sphi 0, %s23
      %s27 = sphi 0, %s26
      %s43 = sphi 0, %s27
      %s47 = sphi 0, %s47
      %s49 = sphi 0, %s47
      %s50 = sphi 0, %s49
      %s64 = sphi 0, %s50
      %s68 = sphi 0, %s68
      %s70 = sphi 0, %s68
      %s71 = sphi 0, %s70
      %s85 = sphi 0, %s71
      %s91 = sphi 0, %s93
      %s94 = sphi 0, %s91
      %s95 = sphi 0, %s94
      %s111 = sphi 0, %s95
      %s117 = sphi 0, %s119
      %s120 = sphi 0, %s117
      %s121 = sphi 0, %s120
      %s137 = sphi 0, %s121
    $region4: #{bottleneck_forward.9} parent=1 // loop_header_branch
      %16 = sbr.rel (%p14) target = $region8
    $region5: #{bottleneck_forward.9} parent=1 // loop_body
      %s18 = ssub.s32 %s13, 1
      %s19 = ssub.s32 %s13, 2
      %s20 = sadd.s32 %s13, 1
      %s21 = ssub.s32 %s13, %s20
      %p22 = scmp.eq.s32.totalorder %s21, 0
      %s24 = sadd.s32 %s23, 1
      %s25 = scalar_select %p22, %s23, %s24
      %p28 = pneg %p22
      %p29 = scmp.eq.s32.totalorder %s13, 2
      %p30 = por %p28, %p29
      %p31 = scmp.ne.s32.totalorder %s23, %s26
      %p32 = scmp.eq.s32.totalorder %s13, 0
      %p33 = por %p31, %p32
      %p34 = scmp.ne.s32.totalorder %s23, %s26
      %p35 = scmp.eq.s32.totalorder %s18, 2
      %p36 = por %p34, %p35
      %p37 = scmp.ne.s32.totalorder %s26, %s27
      %p38 = scmp.eq.s32.totalorder %s18, 0
      %p39 = por %p37, %p38
      %p40 = scmp.ne.s32.totalorder %s26, %s27
      %p41 = scmp.eq.s32.totalorder %s19, 2
      %p42 = por %p40, %p41
      %p44 = scmp.ne.s32.totalorder %s27, %s43
      %p45 = scmp.eq.s32.totalorder %s19, 0
      %p46 = por %p44, %p45
      %s48 = sadd.s32 %s47, 1
      %p51 = scmp.eq.s32.totalorder %s13, 2
      %p52 = scmp.ne.s32.totalorder %s47, %s49
      %p53 = scmp.eq.s32.totalorder %s13, 0
      %p54 = por %p52, %p53
      %p55 = scmp.ne.s32.totalorder %s47, %s49
      %p56 = scmp.eq.s32.totalorder %s18, 2
      %p57 = por %p55, %p56
      %p58 = scmp.ne.s32.totalorder %s49, %s50
      %p59 = scmp.eq.s32.totalorder %s18, 0
      %p60 = por %p58, %p59
      %p61 = scmp.ne.s32.totalorder %s49, %s50
      %p62 = scmp.eq.s32.totalorder %s19, 2
      %p63 = por %p61, %p62
      %p65 = scmp.ne.s32.totalorder %s50, %s64
      %p66 = scmp.eq.s32.totalorder %s19, 0
      %p67 = por %p65, %p66
      %s69 = sadd.s32 %s68, 1
      %p72 = scmp.eq.s32.totalorder %s13, 2
      %p73 = scmp.ne.s32.totalorder %s68, %s70
      %p74 = scmp.eq.s32.totalorder %s13, 0
      %p75 = por %p73, %p74
      %p76 = scmp.ne.s32.totalorder %s68, %s70
      %p77 = scmp.eq.s32.totalorder %s18, 2
      %p78 = por %p76, %p77
      %p79 = scmp.ne.s32.totalorder %s70, %s71
      %p80 = scmp.eq.s32.totalorder %s18, 0
      %p81 = por %p79, %p80
      %p82 = scmp.ne.s32.totalorder %s70, %s71
      %p83 = scmp.eq.s32.totalorder %s19, 2
      %p84 = por %p82, %p83
      %p86 = scmp.ne.s32.totalorder %s71, %s85
      %p87 = scmp.eq.s32.totalorder %s19, 0
      %p88 = por %p86, %p87
      %s89 = ssub.s32 %s13, %s20
      %p90 = scmp.eq.s32.totalorder %s89, 0
      %s92 = sadd.s32 %s91, 1
      %s93 = scalar_select %p90, %s91, %s92
      %p96 = pneg %p90
      %p97 = scmp.eq.s32.totalorder %s13, 2
      %p98 = por %p96, %p97
      %p99 = scmp.ne.s32.totalorder %s91, %s94
      %p100 = scmp.eq.s32.totalorder %s13, 0
      %p101 = por %p99, %p100
      %p102 = scmp.ne.s32.totalorder %s91, %s94
      %p103 = scmp.eq.s32.totalorder %s18, 2
      %p104 = por %p102, %p103
      %p105 = scmp.ne.s32.totalorder %s94, %s95
      %p106 = scmp.eq.s32.totalorder %s18, 0
      %p107 = por %p105, %p106
      %p108 = scmp.ne.s32.totalorder %s94, %s95
      %p109 = scmp.eq.s32.totalorder %s19, 2
      %p110 = por %p108, %p109
      %p112 = scmp.ne.s32.totalorder %s95, %s111
      %p113 = scmp.eq.s32.totalorder %s19, 0
      %p114 = por %p112, %p113
      %s115 = ssub.s32 %s13, %s20
      %p116 = scmp.eq.s32.totalorder %s115, 0
      %s118 = sadd.s32 %s117, 1
      %s119 = scalar_select %p116, %s117, %s118
      %p122 = pneg %p116
      %p123 = scmp.eq.s32.totalorder %s13, 2
      %p124 = por %p122, %p123
      %p125 = scmp.ne.s32.totalorder %s117, %s120
      %p126 = scmp.eq.s32.totalorder %s13, 0
      %p127 = por %p125, %p126
      %p128 = scmp.ne.s32.totalorder %s117, %s120
      %p129 = scmp.eq.s32.totalorder %s18, 2
      %p130 = por %p128, %p129
      %p131 = scmp.ne.s32.totalorder %s120, %s121
      %p132 = scmp.eq.s32.totalorder %s18, 0
      %p133 = por %p131, %p132
      %p134 = scmp.ne.s32.totalorder %s120, %s121
      %p135 = scmp.eq.s32.totalorder %s19, 2
      %p136 = por %p134, %p135
      %p138 = scmp.ne.s32.totalorder %s121, %s137
      %p139 = scmp.eq.s32.totalorder %s19, 0
      %p140 = por %p138, %p139
      %p141 = scmp.le.s32.totalorder 1, %s13
      %p142 = scmp.lt.s32.totalorder %s13, 4
      %p143 = pnand %p141, %p142
      %p144 = pneg %p143
      // Predicated region
      $region9: #{bottleneck_forward.9} parent=5 // pred_check
        _
      $region10: #{bottleneck_forward.9} parent=5 // pred_check_branch
        %146 = sbr.rel (%p143) target = $region12
      $region11: #{bottleneck_forward.9} parent=5 // pred_region
        %s147 = ssub.s32 %s13, 1
        // Predicated region
        $region13: #{bottleneck_forward.9} parent=11 // pred_check
          %p148 = pneg %p60
        $region14: #{bottleneck_forward.9} parent=11 // pred_check_branch
          %150 = sbr.rel (%p148) target = $region16
        $region15: #{bottleneck_forward.9} parent=11 // pred_region
          _
        $region16: #{bottleneck_forward.9} parent=11 // pred_fallthru
          _
        // Predicated region
        $region17: #{bottleneck_forward.9} parent=11 // pred_check
          %p151 = pneg %p81
        $region18: #{bottleneck_forward.9} parent=11 // pred_check_branch
          %153 = sbr.rel (%p151) target = $region20
        $region19: #{bottleneck_forward.9} parent=11 // pred_region
          _
        $region20: #{bottleneck_forward.9} parent=11 // pred_fallthru
          _
      $region12: #{bottleneck_forward.9} parent=5 // pred_fallthru
        _
      %p154 = scmp.lt.s32.totalorder %s13, 3
      // Predicated region
      $region21: #{bottleneck_forward.9} parent=5 // pred_check
        %p155 = pneg %p154
      $region22: #{bottleneck_forward.9} parent=5 // pred_check_branch
        %157 = sbr.rel (%p155) target = $region24
      $region23: #{bottleneck_forward.9} parent=5 // pred_region
        // Predicated region
        $region25: #{bottleneck_forward.9} parent=23 // pred_check
          %p158 = pneg %p33
        $region26: #{bottleneck_forward.9} parent=23 // pred_check_branch
          %160 = sbr.rel (%p158) target = $region28
        $region27: #{bottleneck_forward.9} parent=23 // pred_region
          %s161 = smul.u32 32, %s13
          %p162 = scmp.lt.s32.totalorder %s161, 95
          %s163 = scalar_select %p162, %s161, 95
          %s164 = smul.addr %s163, 8
          %s165 = scalar_lea.vmem %s0, %s164
          %s166 = smul.u32 32, %s13
        $region28: #{bottleneck_forward.9} parent=23 // pred_fallthru
          _
        // Predicated region
        $region29: #{bottleneck_forward.9} parent=23 // pred_check
          %p167 = pneg %p101
        $region30: #{bottleneck_forward.9} parent=23 // pred_check_branch
          %169 = sbr.rel (%p167) target = $region32
        $region31: #{bottleneck_forward.9} parent=23 // pred_region
          %s170 = smul.u32 32, %s13
          %p171 = scmp.lt.s32.totalorder %s170, 95
          %s172 = scalar_select %p171, %s170, 95
          %s173 = smul.addr %s172, 8
          %s174 = scalar_lea.vmem %s3, %s173
          %s175 = smul.u32 32, %s13
        $region32: #{bottleneck_forward.9} parent=23 // pred_fallthru
          _
      $region24: #{bottleneck_forward.9} parent=5 // pred_fallthru
        _
      %p176 = scmp.le.s32.totalorder 1, %s13
      %p177 = scmp.lt.s32.totalorder %s13, 4
      %p178 = pnand %p176, %p177
      %p179 = pneg %p178
      // Predicated region
      $region33: #{bottleneck_forward.9} parent=5 // pred_check
        _
      $region34: #{bottleneck_forward.9} parent=5 // pred_check_branch
        %181 = sbr.rel (%p178) target = $region36
      $region35: #{bottleneck_forward.9} parent=5 // pred_region
        %s182 = ssub.s32 %s13, 1
        %s183 = smul.u32 32, %s18
        %p184 = scmp.lt.s32.totalorder %s183, 95
        %s185 = scalar_select %p184, %s183, 95
        %s186 = smul.addr %s185, 8
        %s187 = scalar_lea.vmem %s0, %s186
        %p188 = pneg %p39
        %p189 = pneg %p36
        %p190 = pneg %p60
        %p191 = pneg %p57
        %p192 = pneg %p81
        %p193 = pneg %p78
        %s194 = smul.u32 32, %s18
        %p195 = scmp.lt.s32.totalorder %s194, 95
        %s196 = scalar_select %p195, %s194, 95
        %s197 = smul.addr %s196, 8
        %s198 = scalar_lea.vmem %s3, %s197
        %p199 = pneg %p107
        %p200 = pneg %p104
        %p201 = pneg %p133
        %p202 = pneg %p130
        %s203 = sand.u32 %s120, 1
        %s204 = scalar_lea.sflag [#allocation3], %s203
        %s205 = sand.u32 %s120, 1
        %s206 = smul.addr %s205, 256
        %s207 = scalar_lea.vmem [#allocation2], %s206
        %s208 = smul.u32 32, %s18
        %p209 = scmp.lt.s32.totalorder %s208, 95
        %s210 = scalar_select %p209, %s208, 95
        %s211 = smul.addr %s210, 8
        %s212 = scalar_lea.vmem %s0, %s211
        %s213 = smul.u32 32, %s18
        %s214 = smul.u32 32, %s18
        %p215 = scmp.lt.s32.totalorder %s214, 95
        %s216 = scalar_select %p215, %s214, 95
        %s217 = smul.addr %s216, 8
        %s218 = scalar_lea.vmem %s3, %s217
        %s219 = smul.u32 32, %s18
        %s220 = smul.u32 32, %s18
        %v221 = vld [vmem:[%s212] sm:$0xff]
        %v222 = vld [vmem:[%s212 + $0x8] sm:$0xff]
        %v223 = vld [vmem:[%s212 + $0x10] sm:$0xff]
        %v224 = vld [vmem:[%s212 + $0x18] sm:$0xff]
        %v225 = vld [vmem:[%s212 + $0x20] sm:$0xff]
        %v226 = vld [vmem:[%s212 + $0x28] sm:$0xff]
        %v227 = vld [vmem:[%s212 + $0x30] sm:$0xff]
        %v228 = vld [vmem:[%s212 + $0x38] sm:$0xff]
        %v229 = vld [vmem:[%s212 + $0x40] sm:$0xff]
        %v230 = vld [vmem:[%s212 + $0x48] sm:$0xff]
        %v231 = vld [vmem:[%s212 + $0x50] sm:$0xff]
        %v232 = vld [vmem:[%s212 + $0x58] sm:$0xff]
        %v233 = vld [vmem:[%s212 + $0x60] sm:$0xff]
        %v234 = vld [vmem:[%s212 + $0x68] sm:$0xff]
        %v235 = vld [vmem:[%s212 + $0x70] sm:$0xff]
        %v236 = vld [vmem:[%s212 + $0x78] sm:$0xff]
        %v237 = vld [vmem:[%s212 + $0x80] sm:$0xff]
        %v238 = vld [vmem:[%s212 + $0x88] sm:$0xff]
        %v239 = vld [vmem:[%s212 + $0x90] sm:$0xff]
        %v240 = vld [vmem:[%s212 + $0x98] sm:$0xff]
        %v241 = vld [vmem:[%s212 + $0xa0] sm:$0xff]
        %v242 = vld [vmem:[%s212 + $0xa8] sm:$0xff]
        %v243 = vld [vmem:[%s212 + $0xb0] sm:$0xff]
        %v244 = vld [vmem:[%s212 + $0xb8] sm:$0xff]
        %v245 = vld [vmem:[%s212 + $0xc0] sm:$0xff]
        %v246 = vld [vmem:[%s212 + $0xc8] sm:$0xff]
        %v247 = vld [vmem:[%s212 + $0xd0] sm:$0xff]
        %v248 = vld [vmem:[%s212 + $0xd8] sm:$0xff]
        %v249 = vld [vmem:[%s212 + $0xe0] sm:$0xff]
        %v250 = vld [vmem:[%s212 + $0xe8] sm:$0xff]
        %v251 = vld [vmem:[%s212 + $0xf0] sm:$0xff]
        %v252 = vld [vmem:[%s212 + $0xf8] sm:$0xff]
        %v253 = vld [vmem:[%s1] sm:$0x1]
        %v255 = vlaneseq
        %v256 = vshrl.u32 %v255, 7
        %v257 = vsub.s32 0, %v256
        %v258 = vrot.slane %v253, %v257
        %v260 = vmul.f32 %v221, %v258
        %v261 = vmul.f32 %v222, %v258
        %v262 = vmul.f32 %v223, %v258
        %v263 = vmul.f32 %v224, %v258
        %v264 = vmul.f32 %v225, %v258
        %v265 = vmul.f32 %v226, %v258
        %v266 = vmul.f32 %v227, %v258
        %v267 = vmul.f32 %v228, %v258
        %v268 = vmul.f32 %v229, %v258
        %v269 = vmul.f32 %v230, %v258
        %v270 = vmul.f32 %v231, %v258
        %v271 = vmul.f32 %v232, %v258
        %v272 = vmul.f32 %v233, %v258
        %v273 = vmul.f32 %v234, %v258
        %v274 = vmul.f32 %v235, %v258
        %v275 = vmul.f32 %v236, %v258
        %v276 = vmul.f32 %v237, %v258
        %v277 = vmul.f32 %v238, %v258
        %v278 = vmul.f32 %v239, %v258
        %v279 = vmul.f32 %v240, %v258
        %v280 = vmul.f32 %v241, %v258
        %v281 = vmul.f32 %v242, %v258
        %v282 = vmul.f32 %v243, %v258
        %v283 = vmul.f32 %v244, %v258
        %v284 = vmul.f32 %v245, %v258
        %v285 = vmul.f32 %v246, %v258
        %v286 = vmul.f32 %v247, %v258
        %v287 = vmul.f32 %v248, %v258
        %v288 = vmul.f32 %v249, %v258
        %v289 = vmul.f32 %v250, %v258
        %v290 = vmul.f32 %v251, %v258
        %v291 = vmul.f32 %v252, %v258
        %v292 = vld [vmem:[%s2] sm:$0x1]
        %v294 = vlaneseq
        %v295 = vshrl.u32 %v294, 7
        %v296 = vsub.s32 0, %v295
        %v297 = vrot.slane %v292, %v296
        %v299 = vadd.f32 %v260, %v297
        %v300 = vadd.f32 %v261, %v297
        %v301 = vadd.f32 %v262, %v297
        %v302 = vadd.f32 %v263, %v297
        %v303 = vadd.f32 %v264, %v297
        %v304 = vadd.f32 %v265, %v297
        %v305 = vadd.f32 %v266, %v297
        %v306 = vadd.f32 %v267, %v297
        %v307 = vadd.f32 %v268, %v297
        %v308 = vadd.f32 %v269, %v297
        %v309 = vadd.f32 %v270, %v297
        %v310 = vadd.f32 %v271, %v297
        %v311 = vadd.f32 %v272, %v297
        %v312 = vadd.f32 %v273, %v297
        %v313 = vadd.f32 %v274, %v297
        %v314 = vadd.f32 %v275, %v297
        %v315 = vadd.f32 %v276, %v297
        %v316 = vadd.f32 %v277, %v297
        %v317 = vadd.f32 %v278, %v297
        %v318 = vadd.f32 %v279, %v297
        %v319 = vadd.f32 %v280, %v297
        %v320 = vadd.f32 %v281, %v297
        %v321 = vadd.f32 %v282, %v297
        %v322 = vadd.f32 %v283, %v297
        %v323 = vadd.f32 %v284, %v297
        %v324 = vadd.f32 %v285, %v297
        %v325 = vadd.f32 %v286, %v297
        %v326 = vadd.f32 %v287, %v297
        %v327 = vadd.f32 %v288, %v297
        %v328 = vadd.f32 %v289, %v297
        %v329 = vadd.f32 %v290, %v297
        %v330 = vadd.f32 %v291, %v297
        %v331 = vld [vmem:[%s218] sm:$0xff]
        %v332 = vld [vmem:[%s218 + $0x8] sm:$0xff]
        %v333 = vld [vmem:[%s218 + $0x10] sm:$0xff]
        %v334 = vld [vmem:[%s218 + $0x18] sm:$0xff]
        %v335 = vld [vmem:[%s218 + $0x20] sm:$0xff]
        %v336 = vld [vmem:[%s218 + $0x28] sm:$0xff]
        %v337 = vld [vmem:[%s218 + $0x30] sm:$0xff]
        %v338 = vld [vmem:[%s218 + $0x38] sm:$0xff]
        %v339 = vld [vmem:[%s218 + $0x40] sm:$0xff]
        %v340 = vld [vmem:[%s218 + $0x48] sm:$0xff]
        %v341 = vld [vmem:[%s218 + $0x50] sm:$0xff]
        %v342 = vld [vmem:[%s218 + $0x58] sm:$0xff]
        %v343 = vld [vmem:[%s218 + $0x60] sm:$0xff]
        %v344 = vld [vmem:[%s218 + $0x68] sm:$0xff]
        %v345 = vld [vmem:[%s218 + $0x70] sm:$0xff]
        %v346 = vld [vmem:[%s218 + $0x78] sm:$0xff]
        %v347 = vld [vmem:[%s218 + $0x80] sm:$0xff]
        %v348 = vld [vmem:[%s218 + $0x88] sm:$0xff]
        %v349 = vld [vmem:[%s218 + $0x90] sm:$0xff]
        %v350 = vld [vmem:[%s218 + $0x98] sm:$0xff]
        %v351 = vld [vmem:[%s218 + $0xa0] sm:$0xff]
        %v352 = vld [vmem:[%s218 + $0xa8] sm:$0xff]
        %v353 = vld [vmem:[%s218 + $0xb0] sm:$0xff]
        %v354 = vld [vmem:[%s218 + $0xb8] sm:$0xff]
        %v355 = vld [vmem:[%s218 + $0xc0] sm:$0xff]
        %v356 = vld [vmem:[%s218 + $0xc8] sm:$0xff]
        %v357 = vld [vmem:[%s218 + $0xd0] sm:$0xff]
        %v358 = vld [vmem:[%s218 + $0xd8] sm:$0xff]
        %v359 = vld [vmem:[%s218 + $0xe0] sm:$0xff]
        %v360 = vld [vmem:[%s218 + $0xe8] sm:$0xff]
        %v361 = vld [vmem:[%s218 + $0xf0] sm:$0xff]
        %v362 = vld [vmem:[%s218 + $0xf8] sm:$0xff]
        %v363 = vadd.f32 %v299, %v331
        %v364 = vadd.f32 %v300, %v332
        %v365 = vadd.f32 %v301, %v333
        %v366 = vadd.f32 %v302, %v334
        %v367 = vadd.f32 %v303, %v335
        %v368 = vadd.f32 %v304, %v336
        %v369 = vadd.f32 %v305, %v337
        %v370 = vadd.f32 %v306, %v338
        %v371 = vadd.f32 %v307, %v339
        %v372 = vadd.f32 %v308, %v340
        %v373 = vadd.f32 %v309, %v341
        %v374 = vadd.f32 %v310, %v342
        %v375 = vadd.f32 %v311, %v343
        %v376 = vadd.f32 %v312, %v344
        %v377 = vadd.f32 %v313, %v345
        %v378 = vadd.f32 %v314, %v346
        %v379 = vadd.f32 %v315, %v347
        %v380 = vadd.f32 %v316, %v348
        %v381 = vadd.f32 %v317, %v349
        %v382 = vadd.f32 %v318, %v350
        %v383 = vadd.f32 %v319, %v351
        %v384 = vadd.f32 %v320, %v352
        %v385 = vadd.f32 %v321, %v353
        %v386 = vadd.f32 %v322, %v354
        %v387 = vadd.f32 %v323, %v355
        %v388 = vadd.f32 %v324, %v356
        %v389 = vadd.f32 %v325, %v357
        %v390 = vadd.f32 %v326, %v358
        %v391 = vadd.f32 %v327, %v359
        %v392 = vadd.f32 %v328, %v360
        %v393 = vadd.f32 %v329, %v361
        %v394 = vadd.f32 %v330, %v362
        %v395 = vmax.f32 %v363, 0.0
        %v396 = vmax.f32 %v364, 0.0
        %v397 = vmax.f32 %v365, 0.0
        %v398 = vmax.f32 %v366, 0.0
        %v399 = vmax.f32 %v367, 0.0
        %v400 = vmax.f32 %v368, 0.0
        %v401 = vmax.f32 %v369, 0.0
        %v402 = vmax.f32 %v370, 0.0
        %v403 = vmax.f32 %v371, 0.0
        %v404 = vmax.f32 %v372, 0.0
        %v405 = vmax.f32 %v373, 0.0
        %v406 = vmax.f32 %v374, 0.0
        %v407 = vmax.f32 %v375, 0.0
        %v408 = vmax.f32 %v376, 0.0
        %v409 = vmax.f32 %v377, 0.0
        %v410 = vmax.f32 %v378, 0.0
        %v411 = vmax.f32 %v379, 0.0
        %v412 = vmax.f32 %v380, 0.0
        %v413 = vmax.f32 %v381, 0.0
        %v414 = vmax.f32 %v382, 0.0
        %v415 = vmax.f32 %v383, 0.0
        %v416 = vmax.f32 %v384, 0.0
        %v417 = vmax.f32 %v385, 0.0
        %v418 = vmax.f32 %v386, 0.0
        %v419 = vmax.f32 %v387, 0.0
        %v420 = vmax.f32 %v388, 0.0
        %v421 = vmax.f32 %v389, 0.0
        %v422 = vmax.f32 %v390, 0.0
        %v423 = vmax.f32 %v391, 0.0
        %v424 = vmax.f32 %v392, 0.0
        %v425 = vmax.f32 %v393, 0.0
        %v426 = vmax.f32 %v394, 0.0
        %427 = vst [vmem:[%s207] sm:$0xff] %v395
        %428 = vst [vmem:[%s207 + $0x8] sm:$0xff] %v396
        %429 = vst [vmem:[%s207 + $0x10] sm:$0xff] %v397
        %430 = vst [vmem:[%s207 + $0x18] sm:$0xff] %v398
        %431 = vst [vmem:[%s207 + $0x20] sm:$0xff] %v399
        %432 = vst [vmem:[%s207 + $0x28] sm:$0xff] %v400
        %433 = vst [vmem:[%s207 + $0x30] sm:$0xff] %v401
        %434 = vst [vmem:[%s207 + $0x38] sm:$0xff] %v402
        %435 = vst [vmem:[%s207 + $0x40] sm:$0xff] %v403
        %436 = vst [vmem:[%s207 + $0x48] sm:$0xff] %v404
        %437 = vst [vmem:[%s207 + $0x50] sm:$0xff] %v405
        %438 = vst [vmem:[%s207 + $0x58] sm:$0xff] %v406
        %439 = vst [vmem:[%s207 + $0x60] sm:$0xff] %v407
        %440 = vst [vmem:[%s207 + $0x68] sm:$0xff] %v408
        %441 = vst [vmem:[%s207 + $0x70] sm:$0xff] %v409
        %442 = vst [vmem:[%s207 + $0x78] sm:$0xff] %v410
        %443 = vst [vmem:[%s207 + $0x80] sm:$0xff] %v411
        %444 = vst [vmem:[%s207 + $0x88] sm:$0xff] %v412
        %445 = vst [vmem:[%s207 + $0x90] sm:$0xff] %v413
        %446 = vst [vmem:[%s207 + $0x98] sm:$0xff] %v414
        %447 = vst [vmem:[%s207 + $0xa0] sm:$0xff] %v415
        %448 = vst [vmem:[%s207 + $0xa8] sm:$0xff] %v416
        %449 = vst [vmem:[%s207 + $0xb0] sm:$0xff] %v417
        %450 = vst [vmem:[%s207 + $0xb8] sm:$0xff] %v418
        %451 = vst [vmem:[%s207 + $0xc0] sm:$0xff] %v419
        %452 = vst [vmem:[%s207 + $0xc8] sm:$0xff] %v420
        %453 = vst [vmem:[%s207 + $0xd0] sm:$0xff] %v421
        %454 = vst [vmem:[%s207 + $0xd8] sm:$0xff] %v422
        %455 = vst [vmem:[%s207 + $0xe0] sm:$0xff] %v423
        %456 = vst [vmem:[%s207 + $0xe8] sm:$0xff] %v424
        %457 = vst [vmem:[%s207 + $0xf0] sm:$0xff] %v425
        %458 = vst [vmem:[%s207 + $0xf8] sm:$0xff] %v426
        %s459 = sand.u32 %s120, 1
        %s460 = scalar_lea.sflag [#allocation3], %s459
        %s461 = sand.u32 %s120, 1
        %s462 = smul.addr %s461, 256
        %s463 = scalar_lea.vmem [#allocation2], %s462
        // Predicated region
        $region37: #{bottleneck_forward.9} parent=35 // pred_check
          %p464 = pneg %p130
        $region38: #{bottleneck_forward.9} parent=35 // pred_check_branch
          %466 = sbr.rel (%p464) target = $region40
        $region39: #{bottleneck_forward.9} parent=35 // pred_region
          %s467 = smul.u32 32, %s18
          %s469 = ssub.s32 4096, 4096
          %470 = vsyncadd %s460, %s469
          %s471 = smul.addr %s467, 128
          %s472 = scalar_lea.hbm %s4, %s471
          %s473 = sshll.u32 %s463, 4
          %s474 = int_to_ptr.vmem [resolvable:$true] %s473
          %479 = dma.vmem_to_hbm [thread:$0]  %s474, 4096, %s472, %s460, 128, 128, 8
        $region40: #{bottleneck_forward.9} parent=35 // pred_fallthru
          _
      $region36: #{bottleneck_forward.9} parent=5 // pred_fallthru
        _
      %p480 = scmp.le.s32.totalorder 2, %s13
      // Predicated region
      $region41: #{bottleneck_forward.9} parent=5 // pred_check
        %p481 = pneg %p480
      $region42: #{bottleneck_forward.9} parent=5 // pred_check_branch
        %483 = sbr.rel (%p481) target = $region44
      $region43: #{bottleneck_forward.9} parent=5 // pred_region
        %s484 = ssub.s32 %s13, 2
        // Predicated region
        $region45: #{bottleneck_forward.9} parent=43 // pred_check
          %p485 = pneg %p136
        $region46: #{bottleneck_forward.9} parent=43 // pred_check_branch
          %487 = sbr.rel (%p485) target = $region48
        $region47: #{bottleneck_forward.9} parent=43 // pred_region
          %s488 = sand.u32 %s121, 1
          %s489 = scalar_lea.sflag [#allocation3], %s488
          %s490 = sand.u32 %s121, 1
          %s491 = smul.addr %s490, 256
          %s492 = scalar_lea.vmem [#allocation2], %s491
          %493 = dma.done %s489, 4096
        $region48: #{bottleneck_forward.9} parent=43 // pred_fallthru
          _
      $region44: #{bottleneck_forward.9} parent=5 // pred_fallthru
        _
    $region6: #{bottleneck_forward.9} parent=1 // loop_footer
      %s17 = sadd.s32 1, %s13
    $region7: #{bottleneck_forward.9} parent=1 // loop_footer_branch
      %12 = sbr.rel target = $region3
    $region8: #{bottleneck_forward.9} parent=1 // loop_exit
      _
    %494 = vsyncpa [#allocation3], 1
    %s495 = scalar_lea.sflag [#allocation3], 1
    %496 = vsyncpa %s495, 1

// kernel: bottleneck_forward.8
$region0: #{bottleneck_forward.8}
  #allocation0 [shape = 'u32[]', space=smem, size = 0x4, offset = 0x4, fixed_abs, tag = 'smem constant byte address 0x4 - core index']
  #allocation1 [shape = 'u32[144,128]{1,0:T(1,128)}', space=vmem, size = 0x12000, scoped, tag = 'internal scratch']
  %s0 = inlined_call_operand.vmem [shape: f32[768,128], index: 0, kind: input, shape index: {}]
  %s1 = inlined_call_operand.vmem [shape: f32[1,128], index: 1, kind: input, shape index: {}]
  %s2 = inlined_call_operand.vmem [shape: f32[1,128], index: 2, kind: input, shape index: {}]
  %s3 = inlined_call_operand.vmem [shape: bf16[128,128], index: 3, kind: input, shape index: {}]
  %s4 = inlined_call_operand.vmem [shape: f32[768,128], index: 4, kind: output, shape index: {0}]
  %s5 = inlined_call_operand.vmem [shape: f32[2,128], index: 5, kind: output, shape index: {1}]
  %6 = xla_tuple %s4, %s5
  %s7 = sld [smem:[#allocation0]]
  $region61: #{bottleneck_forward.8} parent=0
    _
  %s9 = ssub.s32 1, %s7
  %s10 = scalar_select 0, %s9, %s7
  loop: start=0, step=1, limit=5
  $region2: #{bottleneck_forward.8} parent=0 // loop_pre_header
    _
  $region3: #{bottleneck_forward.8} parent=0 // loop_header
    %s12 = sphi 0, %s16
    %p13 = scmp.ge.s32.totalorder %s12, 5
    %s22 = sphi 0, %s24
    %s25 = sphi 0, %s22
    %s26 = sphi 0, %s25
    %s42 = sphi 0, %s26
    %s46 = sphi 0, %s46
    %s48 = sphi 0, %s46
    %s49 = sphi 0, %s48
    %s63 = sphi 0, %s49
    %s67 = sphi 0, %s67
    %s69 = sphi 0, %s67
    %s70 = sphi 0, %s69
    %s84 = sphi 0, %s70
    %s88 = sphi 0, %s88
    %s90 = sphi 0, %s88
    %s91 = sphi 0, %s90
    %s105 = sphi 0, %s91
    %s111 = sphi 0, %s113
    %s114 = sphi 0, %s111
    %s115 = sphi 0, %s114
    %s131 = sphi 0, %s115
    %s135 = sphi 0, %s135
    %s137 = sphi 0, %s135
    %s138 = sphi 0, %s137
    %s152 = sphi 0, %s138
  $region4: #{bottleneck_forward.8} parent=0 // loop_header_branch
    %15 = sbr.rel (%p13) target = $region8
  $region5: #{bottleneck_forward.8} parent=0 // loop_body
    %s17 = ssub.s32 %s12, 1
    %s18 = ssub.s32 %s12, 2
    %s19 = sadd.s32 %s12, 1
    %s20 = ssub.s32 %s12, %s19
    %p21 = scmp.eq.s32.totalorder %s20, 0
    %s23 = sadd.s32 %s22, 1
    %s24 = scalar_select %p21, %s22, %s23
    %p27 = pneg %p21
    %p28 = scmp.eq.s32.totalorder %s12, 2
    %p29 = por %p27, %p28
    %p30 = scmp.ne.s32.totalorder %s22, %s25
    %p31 = scmp.eq.s32.totalorder %s12, 0
    %p32 = por %p30, %p31
    %p33 = scmp.ne.s32.totalorder %s22, %s25
    %p34 = scmp.eq.s32.totalorder %s17, 2
    %p35 = por %p33, %p34
    %p36 = scmp.ne.s32.totalorder %s25, %s26
    %p37 = scmp.eq.s32.totalorder %s17, 0
    %p38 = por %p36, %p37
    %p39 = scmp.ne.s32.totalorder %s25, %s26
    %p40 = scmp.eq.s32.totalorder %s18, 2
    %p41 = por %p39, %p40
    %p43 = scmp.ne.s32.totalorder %s26, %s42
    %p44 = scmp.eq.s32.totalorder %s18, 0
    %p45 = por %p43, %p44
    %s47 = sadd.s32 %s46, 1
    %p50 = scmp.eq.s32.totalorder %s12, 2
    %p51 = scmp.ne.s32.totalorder %s46, %s48
    %p52 = scmp.eq.s32.totalorder %s12, 0
    %p53 = por %p51, %p52
    %p54 = scmp.ne.s32.totalorder %s46, %s48
    %p55 = scmp.eq.s32.totalorder %s17, 2
    %p56 = por %p54, %p55
    %p57 = scmp.ne.s32.totalorder %s48, %s49
    %p58 = scmp.eq.s32.totalorder %s17, 0
    %p59 = por %p57, %p58
    %p60 = scmp.ne.s32.totalorder %s48, %s49
    %p61 = scmp.eq.s32.totalorder %s18, 2
    %p62 = por %p60, %p61
    %p64 = scmp.ne.s32.totalorder %s49, %s63
    %p65 = scmp.eq.s32.totalorder %s18, 0
    %p66 = por %p64, %p65
    %s68 = sadd.s32 %s67, 1
    %p71 = scmp.eq.s32.totalorder %s12, 2
    %p72 = scmp.ne.s32.totalorder %s67, %s69
    %p73 = scmp.eq.s32.totalorder %s12, 0
    %p74 = por %p72, %p73
    %p75 = scmp.ne.s32.totalorder %s67, %s69
    %p76 = scmp.eq.s32.totalorder %s17, 2
    %p77 = por %p75, %p76
    %p78 = scmp.ne.s32.totalorder %s69, %s70
    %p79 = scmp.eq.s32.totalorder %s17, 0
    %p80 = por %p78, %p79
    %p81 = scmp.ne.s32.totalorder %s69, %s70
    %p82 = scmp.eq.s32.totalorder %s18, 2
    %p83 = por %p81, %p82
    %p85 = scmp.ne.s32.totalorder %s70, %s84
    %p86 = scmp.eq.s32.totalorder %s18, 0
    %p87 = por %p85, %p86
    %s89 = sadd.s32 %s88, 1
    %p92 = scmp.eq.s32.totalorder %s12, 2
    %p93 = scmp.ne.s32.totalorder %s88, %s90
    %p94 = scmp.eq.s32.totalorder %s12, 0
    %p95 = por %p93, %p94
    %p96 = scmp.ne.s32.totalorder %s88, %s90
    %p97 = scmp.eq.s32.totalorder %s17, 2
    %p98 = por %p96, %p97
    %p99 = scmp.ne.s32.totalorder %s90, %s91
    %p100 = scmp.eq.s32.totalorder %s17, 0
    %p101 = por %p99, %p100
    %p102 = scmp.ne.s32.totalorder %s90, %s91
    %p103 = scmp.eq.s32.totalorder %s18, 2
    %p104 = por %p102, %p103
    %p106 = scmp.ne.s32.totalorder %s91, %s105
    %p107 = scmp.eq.s32.totalorder %s18, 0
    %p108 = por %p106, %p107
    %s109 = ssub.s32 %s12, %s19
    %p110 = scmp.eq.s32.totalorder %s109, 0
    %s112 = sadd.s32 %s111, 1
    %s113 = scalar_select %p110, %s111, %s112
    %p116 = pneg %p110
    %p117 = scmp.eq.s32.totalorder %s12, 2
    %p118 = por %p116, %p117
    %p119 = scmp.ne.s32.totalorder %s111, %s114
    %p120 = scmp.eq.s32.totalorder %s12, 0
    %p121 = por %p119, %p120
    %p122 = scmp.ne.s32.totalorder %s111, %s114
    %p123 = scmp.eq.s32.totalorder %s17, 2
    %p124 = por %p122, %p123
    %p125 = scmp.ne.s32.totalorder %s114, %s115
    %p126 = scmp.eq.s32.totalorder %s17, 0
    %p127 = por %p125, %p126
    %p128 = scmp.ne.s32.totalorder %s114, %s115
    %p129 = scmp.eq.s32.totalorder %s18, 2
    %p130 = por %p128, %p129
    %p132 = scmp.ne.s32.totalorder %s115, %s131
    %p133 = scmp.eq.s32.totalorder %s18, 0
    %p134 = por %p132, %p133
    %s136 = sadd.s32 %s135, 1
    %p139 = scmp.eq.s32.totalorder %s12, 2
    %p140 = scmp.ne.s32.totalorder %s135, %s137
    %p141 = scmp.eq.s32.totalorder %s12, 0
    %p142 = por %p140, %p141
    %p143 = scmp.ne.s32.totalorder %s135, %s137
    %p144 = scmp.eq.s32.totalorder %s17, 2
    %p145 = por %p143, %p144
    %p146 = scmp.ne.s32.totalorder %s137, %s138
    %p147 = scmp.eq.s32.totalorder %s17, 0
    %p148 = por %p146, %p147
    %p149 = scmp.ne.s32.totalorder %s137, %s138
    %p150 = scmp.eq.s32.totalorder %s18, 2
    %p151 = por %p149, %p150
    %p153 = scmp.ne.s32.totalorder %s138, %s152
    %p154 = scmp.eq.s32.totalorder %s18, 0
    %p155 = por %p153, %p154
    %p156 = scmp.le.s32.totalorder 1, %s12
    %p157 = scmp.lt.s32.totalorder %s12, 4
    %p158 = pnand %p156, %p157
    %p159 = pneg %p158
    // Predicated region
    $region9: #{bottleneck_forward.8} parent=5 // pred_check
      _
    $region10: #{bottleneck_forward.8} parent=5 // pred_check_branch
      %161 = sbr.rel (%p158) target = $region12
    $region11: #{bottleneck_forward.8} parent=5 // pred_region
      %s162 = ssub.s32 %s12, 1
      // Predicated region
      $region13: #{bottleneck_forward.8} parent=11 // pred_check
        %p163 = pneg %p59
      $region14: #{bottleneck_forward.8} parent=11 // pred_check_branch
        %165 = sbr.rel (%p163) target = $region16
      $region15: #{bottleneck_forward.8} parent=11 // pred_region
        _
      $region16: #{bottleneck_forward.8} parent=11 // pred_fallthru
        _
      // Predicated region
      $region17: #{bottleneck_forward.8} parent=11 // pred_check
        %p166 = pneg %p80
      $region18: #{bottleneck_forward.8} parent=11 // pred_check_branch
        %168 = sbr.rel (%p166) target = $region20
      $region19: #{bottleneck_forward.8} parent=11 // pred_region
        _
      $region20: #{bottleneck_forward.8} parent=11 // pred_fallthru
        _
      // Predicated region
      $region21: #{bottleneck_forward.8} parent=11 // pred_check
        %p169 = pneg %p101
      $region22: #{bottleneck_forward.8} parent=11 // pred_check_branch
        %171 = sbr.rel (%p169) target = $region24
      $region23: #{bottleneck_forward.8} parent=11 // pred_region
        _
      $region24: #{bottleneck_forward.8} parent=11 // pred_fallthru
        _
    $region12: #{bottleneck_forward.8} parent=5 // pred_fallthru
      _
    %p172 = scmp.lt.s32.totalorder %s12, 3
    // Predicated region
    $region25: #{bottleneck_forward.8} parent=5 // pred_check
      %p173 = pneg %p172
    $region26: #{bottleneck_forward.8} parent=5 // pred_check_branch
      %175 = sbr.rel (%p173) target = $region28
    $region27: #{bottleneck_forward.8} parent=5 // pred_region
      // Predicated region
      $region29: #{bottleneck_forward.8} parent=27 // pred_check
        %p176 = pneg %p32
      $region30: #{bottleneck_forward.8} parent=27 // pred_check_branch
        %178 = sbr.rel (%p176) target = $region32
      $region31: #{bottleneck_forward.8} parent=27 // pred_region
        %s179 = smul.u32 32, %s12
        %p180 = scmp.lt.s32.totalorder %s179, 95
        %s181 = scalar_select %p180, %s179, 95
        %s182 = smul.addr %s181, 8
        %s183 = scalar_lea.vmem %s0, %s182
        %s184 = smul.u32 32, %s12
      $region32: #{bottleneck_forward.8} parent=27 // pred_fallthru
        _
    $region28: #{bottleneck_forward.8} parent=5 // pred_fallthru
      _
    %p185 = scmp.le.s32.totalorder 1, %s12
    %p186 = scmp.lt.s32.totalorder %s12, 4
    %p187 = pnand %p185, %p186
    %p188 = pneg %p187
    // Predicated region
    $region33: #{bottleneck_forward.8} parent=5 // pred_check
      _
    $region34: #{bottleneck_forward.8} parent=5 // pred_check_branch
      %190 = sbr.rel (%p187) target = $region36
    $region35: #{bottleneck_forward.8} parent=5 // pred_region
      %s191 = ssub.s32 %s12, 1
      %s192 = smul.u32 32, %s17
      %p193 = scmp.lt.s32.totalorder %s192, 95
      %s194 = scalar_select %p193, %s192, 95
      %s195 = smul.addr %s194, 8
      %s196 = scalar_lea.vmem %s0, %s195
      %p197 = pneg %p38
      %p198 = pneg %p35
      %p199 = pneg %p59
      %p200 = pneg %p56
      %p201 = pneg %p80
      %p202 = pneg %p77
      %p203 = pneg %p101
      %p204 = pneg %p98
      %p205 = pneg %p127
      %p206 = pneg %p124
      %s207 = smul.u32 32, %s17
      %p208 = scmp.lt.s32.totalorder %s207, 95
      %s209 = scalar_select %p208, %s207, 95
      %s210 = smul.addr %s209, 8
      %s211 = scalar_lea.vmem %s4, %s210
      %p212 = pneg %p148
      %p213 = pneg %p145
      %s214 = smul.u32 32, %s17
      %p215 = scmp.lt.s32.totalorder %s214, 95
      %s216 = scalar_select %p215, %s214, 95
      %s217 = smul.addr %s216, 8
      %s218 = scalar_lea.vmem %s0, %s217
      %s219 = smul.u32 32, %s17
      %s220 = smul.u32 32, %s17
      %p221 = scmp.lt.s32.totalorder %s220, 95
      %s222 = scalar_select %p221, %s220, 95
      %s223 = smul.addr %s222, 8
      %s224 = scalar_lea.vmem %s4, %s223
      %s225 = smul.u32 32, %s17
      %v227 = vld [vmem:[%s218] sm:$0xff]
      %v228 = vld [vmem:[%s218 + $0x8] sm:$0xff]
      %v229 = vld [vmem:[%s218 + $0x10] sm:$0xff]
      %v230 = vld [vmem:[%s218 + $0x18] sm:$0xff]
      %v231 = vld [vmem:[%s218 + $0x20] sm:$0xff]
      %v232 = vld [vmem:[%s218 + $0x28] sm:$0xff]
      %v233 = vld [vmem:[%s218 + $0x30] sm:$0xff]
      %v234 = vld [vmem:[%s218 + $0x38] sm:$0xff]
      %v235 = vld [vmem:[%s218 + $0x40] sm:$0xff]
      %v236 = vld [vmem:[%s218 + $0x48] sm:$0xff]
      %v237 = vld [vmem:[%s218 + $0x50] sm:$0xff]
      %v238 = vld [vmem:[%s218 + $0x58] sm:$0xff]
      %v239 = vld [vmem:[%s218 + $0x60] sm:$0xff]
      %v240 = vld [vmem:[%s218 + $0x68] sm:$0xff]
      %v241 = vld [vmem:[%s218 + $0x70] sm:$0xff]
      %v242 = vld [vmem:[%s218 + $0x78] sm:$0xff]
      %v243 = vld [vmem:[%s218 + $0x80] sm:$0xff]
      %v244 = vld [vmem:[%s218 + $0x88] sm:$0xff]
      %v245 = vld [vmem:[%s218 + $0x90] sm:$0xff]
      %v246 = vld [vmem:[%s218 + $0x98] sm:$0xff]
      %v247 = vld [vmem:[%s218 + $0xa0] sm:$0xff]
      %v248 = vld [vmem:[%s218 + $0xa8] sm:$0xff]
      %v249 = vld [vmem:[%s218 + $0xb0] sm:$0xff]
      %v250 = vld [vmem:[%s218 + $0xb8] sm:$0xff]
      %v251 = vld [vmem:[%s218 + $0xc0] sm:$0xff]
      %v252 = vld [vmem:[%s218 + $0xc8] sm:$0xff]
      %v253 = vld [vmem:[%s218 + $0xd0] sm:$0xff]
      %v254 = vld [vmem:[%s218 + $0xd8] sm:$0xff]
      %v255 = vld [vmem:[%s218 + $0xe0] sm:$0xff]
      %v256 = vld [vmem:[%s218 + $0xe8] sm:$0xff]
      %v257 = vld [vmem:[%s218 + $0xf0] sm:$0xff]
      %v258 = vld [vmem:[%s218 + $0xf8] sm:$0xff]
      %v259 = vld [vmem:[%s1] sm:$0x1]
      %v261 = vlaneseq
      %v262 = vshrl.u32 %v261, 7
      %v263 = vsub.s32 0, %v262
      %v264 = vrot.slane %v259, %v263
      %v266 = vmul.f32 %v227, %v264
      %v267 = vmul.f32 %v228, %v264
      %v268 = vmul.f32 %v229, %v264
      %v269 = vmul.f32 %v230, %v264
      %v270 = vmul.f32 %v231, %v264
      %v271 = vmul.f32 %v232, %v264
      %v272 = vmul.f32 %v233, %v264
      %v273 = vmul.f32 %v234, %v264
      %v274 = vmul.f32 %v235, %v264
      %v275 = vmul.f32 %v236, %v264
      %v276 = vmul.f32 %v237, %v264
      %v277 = vmul.f32 %v238, %v264
      %v278 = vmul.f32 %v239, %v264
      %v279 = vmul.f32 %v240, %v264
      %v280 = vmul.f32 %v241, %v264
      %v281 = vmul.f32 %v242, %v264
      %v282 = vmul.f32 %v243, %v264
      %v283 = vmul.f32 %v244, %v264
      %v284 = vmul.f32 %v245, %v264
      %v285 = vmul.f32 %v246, %v264
      %v286 = vmul.f32 %v247, %v264
      %v287 = vmul.f32 %v248, %v264
      %v288 = vmul.f32 %v249, %v264
      %v289 = vmul.f32 %v250, %v264
      %v290 = vmul.f32 %v251, %v264
      %v291 = vmul.f32 %v252, %v264
      %v292 = vmul.f32 %v253, %v264
      %v293 = vmul.f32 %v254, %v264
      %v294 = vmul.f32 %v255, %v264
      %v295 = vmul.f32 %v256, %v264
      %v296 = vmul.f32 %v257, %v264
      %v297 = vmul.f32 %v258, %v264
      %v298 = vld [vmem:[%s2] sm:$0x1]
      %v300 = vlaneseq
      %v301 = vshrl.u32 %v300, 7
      %v302 = vsub.s32 0, %v301
      %v303 = vrot.slane %v298, %v302
      %v305 = vadd.f32 %v266, %v303
      %v306 = vadd.f32 %v267, %v303
      %v307 = vadd.f32 %v268, %v303
      %v308 = vadd.f32 %v269, %v303
      %v309 = vadd.f32 %v270, %v303
      %v310 = vadd.f32 %v271, %v303
      %v311 = vadd.f32 %v272, %v303
      %v312 = vadd.f32 %v273, %v303
      %v313 = vadd.f32 %v274, %v303
      %v314 = vadd.f32 %v275, %v303
      %v315 = vadd.f32 %v276, %v303
      %v316 = vadd.f32 %v277, %v303
      %v317 = vadd.f32 %v278, %v303
      %v318 = vadd.f32 %v279, %v303
      %v319 = vadd.f32 %v280, %v303
      %v320 = vadd.f32 %v281, %v303
      %v321 = vadd.f32 %v282, %v303
      %v322 = vadd.f32 %v283, %v303
      %v323 = vadd.f32 %v284, %v303
      %v324 = vadd.f32 %v285, %v303
      %v325 = vadd.f32 %v286, %v303
      %v326 = vadd.f32 %v287, %v303
      %v327 = vadd.f32 %v288, %v303
      %v328 = vadd.f32 %v289, %v303
      %v329 = vadd.f32 %v290, %v303
      %v330 = vadd.f32 %v291, %v303
      %v331 = vadd.f32 %v292, %v303
      %v332 = vadd.f32 %v293, %v303
      %v333 = vadd.f32 %v294, %v303
      %v334 = vadd.f32 %v295, %v303
      %v335 = vadd.f32 %v296, %v303
      %v336 = vadd.f32 %v297, %v303
      %v337 = vmax.f32 %v305, 0.0
      %v338 = vmax.f32 %v306, 0.0
      %v339 = vmax.f32 %v307, 0.0
      %v340 = vmax.f32 %v308, 0.0
      %v341 = vmax.f32 %v309, 0.0
      %v342 = vmax.f32 %v310, 0.0
      %v343 = vmax.f32 %v311, 0.0
      %v344 = vmax.f32 %v312, 0.0
      %v345 = vmax.f32 %v313, 0.0
      %v346 = vmax.f32 %v314, 0.0
      %v347 = vmax.f32 %v315, 0.0
      %v348 = vmax.f32 %v316, 0.0
      %v349 = vmax.f32 %v317, 0.0
      %v350 = vmax.f32 %v318, 0.0
      %v351 = vmax.f32 %v319, 0.0
      %v352 = vmax.f32 %v320, 0.0
      %v353 = vmax.f32 %v321, 0.0
      %v354 = vmax.f32 %v322, 0.0
      %v355 = vmax.f32 %v323, 0.0
      %v356 = vmax.f32 %v324, 0.0
      %v357 = vmax.f32 %v325, 0.0
      %v358 = vmax.f32 %v326, 0.0
      %v359 = vmax.f32 %v327, 0.0
      %v360 = vmax.f32 %v328, 0.0
      %v361 = vmax.f32 %v329, 0.0
      %v362 = vmax.f32 %v330, 0.0
      %v363 = vmax.f32 %v331, 0.0
      %v364 = vmax.f32 %v332, 0.0
      %v365 = vmax.f32 %v333, 0.0
      %v366 = vmax.f32 %v334, 0.0
      %v367 = vmax.f32 %v335, 0.0
      %v368 = vmax.f32 %v336, 0.0
      %v369 = vpack.c.bf16 %v338, %v337
      %v370 = vpack.c.bf16 %v340, %v339
      %v371 = vpack.c.bf16 %v342, %v341
      %v372 = vpack.c.bf16 %v344, %v343
      %v373 = vpack.c.bf16 %v346, %v345
      %v374 = vpack.c.bf16 %v348, %v347
      %v375 = vpack.c.bf16 %v350, %v349
      %v376 = vpack.c.bf16 %v352, %v351
      %v377 = vpack.c.bf16 %v354, %v353
      %v378 = vpack.c.bf16 %v356, %v355
      %v379 = vpack.c.bf16 %v358, %v357
      %v380 = vpack.c.bf16 %v360, %v359
      %v381 = vpack.c.bf16 %v362, %v361
      %v382 = vpack.c.bf16 %v364, %v363
      %v383 = vpack.c.bf16 %v366, %v365
      %v384 = vpack.c.bf16 %v368, %v367
      %v385 = vld [vmem:[%s3] sm:$0xf]
      %v386 = vld [vmem:[%s3 + $0x4] sm:$0xf]
      %v387 = vld [vmem:[%s3 + $0x8] sm:$0xf]
      %v388 = vld [vmem:[%s3 + $0xc] sm:$0xf]
      %v389 = vld [vmem:[%s3 + $0x10] sm:$0xf]
      %v390 = vld [vmem:[%s3 + $0x14] sm:$0xf]
      %v391 = vld [vmem:[%s3 + $0x18] sm:$0xf]
      %v392 = vld [vmem:[%s3 + $0x1c] sm:$0xf]
      %v393 = vld [vmem:[%s3 + $0x20] sm:$0xf]
      %v394 = vld [vmem:[%s3 + $0x24] sm:$0xf]
      %v395 = vld [vmem:[%s3 + $0x28] sm:$0xf]
      %v396 = vld [vmem:[%s3 + $0x2c] sm:$0xf]
      %v397 = vld [vmem:[%s3 + $0x30] sm:$0xf]
      %v398 = vld [vmem:[%s3 + $0x34] sm:$0xf]
      %v399 = vld [vmem:[%s3 + $0x38] sm:$0xf]
      %v400 = vld [vmem:[%s3 + $0x3c] sm:$0xf]
      %v417 = vunpack.c.l.b16 %v385
      %v418 = vunpack.c.l.b16 %v386
      %v419 = vunpack.c.l.b16 %v387
      %v420 = vunpack.c.l.b16 %v388
      %v421 = vunpack.c.l.b16 %v389
      %v422 = vunpack.c.l.b16 %v390
      %v423 = vunpack.c.l.b16 %v391
      %v424 = vunpack.c.l.b16 %v392
      %v425 = vunpack.c.l.b16 %v393
      %v426 = vunpack.c.l.b16 %v394
      %v427 = vunpack.c.l.b16 %v395
      %v428 = vunpack.c.l.b16 %v396
      %v429 = vunpack.c.l.b16 %v397
      %v430 = vunpack.c.l.b16 %v398
      %v431 = vunpack.c.l.b16 %v399
      %v432 = vunpack.c.l.b16 %v400
      %v433 = vpack.c.b16 %v418, %v417
      %v434 = vpack.c.b16 %v420, %v419
      %v435 = vpack.c.b16 %v422, %v421
      %v436 = vpack.c.b16 %v424, %v423
      %v437 = vpack.c.b16 %v426, %v425
      %v438 = vpack.c.b16 %v428, %v427
      %v439 = vpack.c.b16 %v430, %v429
      %v440 = vpack.c.b16 %v432, %v431
      %449 = vmatprep.subr.bf16.mxu0 0
      %450 = vmatpush1.bf16.msra.mxu0 %v440
      %451 = vmatprep.subr.bf16.mxu0 0
      %452 = vmatpush1.bf16.msra.mxu0 %v439
      %453 = vmatprep.subr.bf16.mxu0 0
      %454 = vmatpush1.bf16.msra.mxu0 %v438
      %455 = vmatprep.subr.bf16.mxu0 0
      %456 = vmatpush1.bf16.msra.mxu0 %v437
      %457 = vmatprep.subr.bf16.mxu0 0
      %458 = vmatpush1.bf16.msra.mxu0 %v436
      %459 = vmatprep.subr.bf16.mxu0 0
      %460 = vmatpush1.bf16.msra.mxu0 %v435
      %461 = vmatprep.subr.bf16.mxu0 0
      %462 = vmatpush1.bf16.msra.mxu0 %v434
      %463 = vmatprep.subr.bf16.mxu0 0
      %464 = vmatpush1.bf16.msra.mxu0 %v433
      %465 = vmatprep.subr.bf16.mxu0 0
      %466 = vmatpush2.bf16.msra.mxu0 0
      %467 = vmatprep.subr.bf16.mxu0 0
      %468 = vmatpush2.bf16.msra.mxu0 0
      %469 = vmatprep.subr.bf16.mxu0 0
      %470 = vmatpush2.bf16.msra.mxu0 0
      %471 = vmatprep.subr.bf16.mxu0 0
      %472 = vmatpush2.bf16.msra.mxu0 0
      %473 = vmatprep.subr.bf16.mxu0 0
      %474 = vmatpush2.bf16.msra.mxu0 0
      %475 = vmatprep.subr.bf16.mxu0 0
      %476 = vmatpush2.bf16.msra.mxu0 0
      %477 = vmatprep.subr.bf16.mxu0 0
      %478 = vmatpush2.bf16.msra.mxu0 0
      %479 = vmatprep.subr.bf16.mxu0 0
      %480 = vmatpush2.bf16.msra.mxu0 0
      %481 = vmatprep.mubr.bf16.mxu0 0
      %482 = vmatmul.mubr.bf16.gmra.mxu0 %v369
      %v483 = vpop.f32.mrf.mxu0
      %v484 = vadd.f32 0.0, %v483
      %v485 = vpop.f32.mrf.mxu0
      %v486 = vpop.f32.mrf.mxu0
      %v487 = vadd.f32 0.0, %v486
      %v488 = vpop.f32.mrf.mxu0
      %489 = vmatprep.mubr.bf16.mxu0 0
      %490 = vmatmul.mubr.bf16.gmra.mxu0 %v370
      %v491 = vpop.f32.mrf.mxu0
      %v492 = vadd.f32 0.0, %v491
      %v493 = vpop.f32.mrf.mxu0
      %v494 = vpop.f32.mrf.mxu0
      %v495 = vadd.f32 0.0, %v494
      %v496 = vpop.f32.mrf.mxu0
      %497 = vmatprep.mubr.bf16.mxu0 0
      %498 = vmatmul.mubr.bf16.gmra.mxu0 %v371
      %v499 = vpop.f32.mrf.mxu0
      %v500 = vadd.f32 0.0, %v499
      %v501 = vpop.f32.mrf.mxu0
      %v502 = vpop.f32.mrf.mxu0
      %v503 = vadd.f32 0.0, %v502
      %v504 = vpop.f32.mrf.mxu0
      %505 = vmatprep.mubr.bf16.mxu0 0
      %506 = vmatmul.mubr.bf16.gmra.mxu0 %v372
      %v507 = vpop.f32.mrf.mxu0
      %v508 = vadd.f32 0.0, %v507
      %v509 = vpop.f32.mrf.mxu0
      %v510 = vpop.f32.mrf.mxu0
      %v511 = vadd.f32 0.0, %v510
      %v512 = vpop.f32.mrf.mxu0
      %513 = vmatprep.mubr.bf16.mxu0 0
      %514 = vmatmul.mubr.bf16.gmra.mxu0 %v373
      %v515 = vpop.f32.mrf.mxu0
      %v516 = vadd.f32 0.0, %v515
      %v517 = vpop.f32.mrf.mxu0
      %v518 = vpop.f32.mrf.mxu0
      %v519 = vadd.f32 0.0, %v518
      %v520 = vpop.f32.mrf.mxu0
      %521 = vmatprep.mubr.bf16.mxu0 0
      %522 = vmatmul.mubr.bf16.gmra.mxu0 %v374
      %v523 = vpop.f32.mrf.mxu0
      %v524 = vadd.f32 0.0, %v523
      %v525 = vpop.f32.mrf.mxu0
      %v526 = vpop.f32.mrf.mxu0
      %v527 = vadd.f32 0.0, %v526
      %v528 = vpop.f32.mrf.mxu0
      %529 = vmatprep.mubr.bf16.mxu0 0
      %530 = vmatmul.mubr.bf16.gmra.mxu0 %v375
      %v531 = vpop.f32.mrf.mxu0
      %v532 = vadd.f32 0.0, %v531
      %v533 = vpop.f32.mrf.mxu0
      %v534 = vpop.f32.mrf.mxu0
      %v535 = vadd.f32 0.0, %v534
      %v536 = vpop.f32.mrf.mxu0
      %537 = vmatprep.mubr.bf16.mxu0 0
      %538 = vmatmul.mubr.bf16.gmra.mxu0 %v376
      %v539 = vpop.f32.mrf.mxu0
      %v540 = vadd.f32 0.0, %v539
      %v541 = vpop.f32.mrf.mxu0
      %v542 = vpop.f32.mrf.mxu0
      %v543 = vadd.f32 0.0, %v542
      %v544 = vpop.f32.mrf.mxu0
      %545 = vmatprep.mubr.bf16.mxu0 0
      %546 = vmatmul.mubr.bf16.gmra.mxu0 %v377
      %v547 = vpop.f32.mrf.mxu0
      %v548 = vadd.f32 0.0, %v547
      %v549 = vpop.f32.mrf.mxu0
      %v550 = vpop.f32.mrf.mxu0
      %v551 = vadd.f32 0.0, %v550
      %v552 = vpop.f32.mrf.mxu0
      %553 = vmatprep.mubr.bf16.mxu0 0
      %554 = vmatmul.mubr.bf16.gmra.mxu0 %v378
      %v555 = vpop.f32.mrf.mxu0
      %v556 = vadd.f32 0.0, %v555
      %v557 = vpop.f32.mrf.mxu0
      %v558 = vpop.f32.mrf.mxu0
      %v559 = vadd.f32 0.0, %v558
      %v560 = vpop.f32.mrf.mxu0
      %561 = vmatprep.mubr.bf16.mxu0 0
      %562 = vmatmul.mubr.bf16.gmra.mxu0 %v379
      %v563 = vpop.f32.mrf.mxu0
      %v564 = vadd.f32 0.0, %v563
      %v565 = vpop.f32.mrf.mxu0
      %v566 = vpop.f32.mrf.mxu0
      %v567 = vadd.f32 0.0, %v566
      %v568 = vpop.f32.mrf.mxu0
      %569 = vmatprep.mubr.bf16.mxu0 0
      %570 = vmatmul.mubr.bf16.gmra.mxu0 %v380
      %v571 = vpop.f32.mrf.mxu0
      %v572 = vadd.f32 0.0, %v571
      %v573 = vpop.f32.mrf.mxu0
      %v574 = vpop.f32.mrf.mxu0
      %v575 = vadd.f32 0.0, %v574
      %v576 = vpop.f32.mrf.mxu0
      %577 = vmatprep.mubr.bf16.mxu0 0
      %578 = vmatmul.mubr.bf16.gmra.mxu0 %v381
      %v579 = vpop.f32.mrf.mxu0
      %v580 = vadd.f32 0.0, %v579
      %v581 = vpop.f32.mrf.mxu0
      %v582 = vpop.f32.mrf.mxu0
      %v583 = vadd.f32 0.0, %v582
      %v584 = vpop.f32.mrf.mxu0
      %585 = vmatprep.mubr.bf16.mxu0 0
      %586 = vmatmul.mubr.bf16.gmra.mxu0 %v382
      %v587 = vpop.f32.mrf.mxu0
      %v588 = vadd.f32 0.0, %v587
      %v589 = vpop.f32.mrf.mxu0
      %v590 = vpop.f32.mrf.mxu0
      %v591 = vadd.f32 0.0, %v590
      %v592 = vpop.f32.mrf.mxu0
      %593 = vmatprep.mubr.bf16.mxu0 0
      %594 = vmatmul.mubr.bf16.gmra.mxu0 %v383
      %v595 = vpop.f32.mrf.mxu0
      %v596 = vadd.f32 0.0, %v595
      %v597 = vpop.f32.mrf.mxu0
      %v598 = vpop.f32.mrf.mxu0
      %v599 = vadd.f32 0.0, %v598
      %v600 = vpop.f32.mrf.mxu0
      %601 = vmatprep.mubr.bf16.mxu0 0
      %602 = vmatmul.mubr.bf16.gmra.mxu0 %v384
      %v603 = vpop.f32.mrf.mxu0
      %v604 = vadd.f32 0.0, %v603
      %v605 = vpop.f32.mrf.mxu0
      %v606 = vpop.f32.mrf.mxu0
      %v607 = vadd.f32 0.0, %v606
      %v608 = vpop.f32.mrf.mxu0
      %609 = vdwg.mxu0
      %610 = vst [vmem:[%s224] sm:$0xff] %v484
      %611 = vst [vmem:[%s224 + $0x8] sm:$0xff] %v487
      %612 = vst [vmem:[%s224 + $0x10] sm:$0xff] %v492
      %613 = vst [vmem:[%s224 + $0x18] sm:$0xff] %v495
      %614 = vst [vmem:[%s224 + $0x20] sm:$0xff] %v500
      %615 = vst [vmem:[%s224 + $0x28] sm:$0xff] %v503
      %616 = vst [vmem:[%s224 + $0x30] sm:$0xff] %v508
      %617 = vst [vmem:[%s224 + $0x38] sm:$0xff] %v511
      %618 = vst [vmem:[%s224 + $0x40] sm:$0xff] %v516
      %619 = vst [vmem:[%s224 + $0x48] sm:$0xff] %v519
      %620 = vst [vmem:[%s224 + $0x50] sm:$0xff] %v524
      %621 = vst [vmem:[%s224 + $0x58] sm:$0xff] %v527
      %622 = vst [vmem:[%s224 + $0x60] sm:$0xff] %v532
      %623 = vst [vmem:[%s224 + $0x68] sm:$0xff] %v535
      %624 = vst [vmem:[%s224 + $0x70] sm:$0xff] %v540
      %625 = vst [vmem:[%s224 + $0x78] sm:$0xff] %v543
      %626 = vst [vmem:[%s224 + $0x80] sm:$0xff] %v548
      %627 = vst [vmem:[%s224 + $0x88] sm:$0xff] %v551
      %628 = vst [vmem:[%s224 + $0x90] sm:$0xff] %v556
      %629 = vst [vmem:[%s224 + $0x98] sm:$0xff] %v559
      %630 = vst [vmem:[%s224 + $0xa0] sm:$0xff] %v564
      %631 = vst [vmem:[%s224 + $0xa8] sm:$0xff] %v567
      %632 = vst [vmem:[%s224 + $0xb0] sm:$0xff] %v572
      %633 = vst [vmem:[%s224 + $0xb8] sm:$0xff] %v575
      %634 = vst [vmem:[%s224 + $0xc0] sm:$0xff] %v580
      %635 = vst [vmem:[%s224 + $0xc8] sm:$0xff] %v583
      %636 = vst [vmem:[%s224 + $0xd0] sm:$0xff] %v588
      %637 = vst [vmem:[%s224 + $0xd8] sm:$0xff] %v591
      %638 = vst [vmem:[%s224 + $0xe0] sm:$0xff] %v596
      %639 = vst [vmem:[%s224 + $0xe8] sm:$0xff] %v599
      %640 = vst [vmem:[%s224 + $0xf0] sm:$0xff] %v604
      %641 = vst [vmem:[%s224 + $0xf8] sm:$0xff] %v607
      %p642 = scmp.eq.s32.totalorder %s17, 0
      // Predicated region
      $region37: #{bottleneck_forward.8} parent=35 // pred_check
        %p643 = pneg %p642
      $region38: #{bottleneck_forward.8} parent=35 // pred_check_branch
        %645 = sbr.rel (%p643) target = $region40
      $region39: #{bottleneck_forward.8} parent=35 // pred_region
        %646 = vst [vmem:[%s5] sm:$0x3] 0.0
      $region40: #{bottleneck_forward.8} parent=35 // pred_fallthru
        _
      %v647 = vld [vmem:[%s5] sm:$0x3]
      %v648 = vadd.f32 %v484, %v487
      %v649 = vadd.f32 %v648, %v492
      %v650 = vadd.f32 %v649, %v495
      %v651 = vadd.f32 %v650, %v500
      %v652 = vadd.f32 %v651, %v503
      %v653 = vadd.f32 %v652, %v508
      %v654 = vadd.f32 %v653, %v511
      %v655 = vadd.f32 %v654, %v516
      %v656 = vadd.f32 %v655, %v519
      %v657 = vadd.f32 %v656, %v524
      %v658 = vadd.f32 %v657, %v527
      %v659 = vadd.f32 %v658, %v532
      %v660 = vadd.f32 %v659, %v535
      %v661 = vadd.f32 %v660, %v540
      %v662 = vadd.f32 %v661, %v543
      %v663 = vadd.f32 %v662, %v548
      %v664 = vadd.f32 %v663, %v551
      %v665 = vadd.f32 %v664, %v556
      %v666 = vadd.f32 %v665, %v559
      %v667 = vadd.f32 %v666, %v564
      %v668 = vadd.f32 %v667, %v567
      %v669 = vadd.f32 %v668, %v572
      %v670 = vadd.f32 %v669, %v575
      %v671 = vadd.f32 %v670, %v580
      %v672 = vadd.f32 %v671, %v583
      %v673 = vadd.f32 %v672, %v588
      %v674 = vadd.f32 %v673, %v591
      %v675 = vadd.f32 %v674, %v596
      %v676 = vadd.f32 %v675, %v599
      %v677 = vadd.f32 %v676, %v604
      %v678 = vadd.f32 %v677, %v607
      %v679 = vrot.slane %v678, 4
      %v680 = vadd.f32 %v678, %v679
      %v681 = vrot.slane %v680, 2
      %v682 = vadd.f32 %v680, %v681
      %v683 = vrot.slane %v682, 1
      %v684 = vadd.f32 %v682, %v683
      %v685 = vmul.f32 %v484, %v484
      %v686 = vmul.f32 %v487, %v487
      %v687 = vmul.f32 %v492, %v492
      %v688 = vmul.f32 %v495, %v495
      %v689 = vmul.f32 %v500, %v500
      %v690 = vmul.f32 %v503, %v503
      %v691 = vmul.f32 %v508, %v508
      %v692 = vmul.f32 %v511, %v511
      %v693 = vmul.f32 %v516, %v516
      %v694 = vmul.f32 %v519, %v519
      %v695 = vmul.f32 %v524, %v524
      %v696 = vmul.f32 %v527, %v527
      %v697 = vmul.f32 %v532, %v532
      %v698 = vmul.f32 %v535, %v535
      %v699 = vmul.f32 %v540, %v540
      %v700 = vmul.f32 %v543, %v543
      %v701 = vmul.f32 %v548, %v548
      %v702 = vmul.f32 %v551, %v551
      %v703 = vmul.f32 %v556, %v556
      %v704 = vmul.f32 %v559, %v559
      %v705 = vmul.f32 %v564, %v564
      %v706 = vmul.f32 %v567, %v567
      %v707 = vmul.f32 %v572, %v572
      %v708 = vmul.f32 %v575, %v575
      %v709 = vmul.f32 %v580, %v580
      %v710 = vmul.f32 %v583, %v583
      %v711 = vmul.f32 %v588, %v588
      %v712 = vmul.f32 %v591, %v591
      %v713 = vmul.f32 %v596, %v596
      %v714 = vmul.f32 %v599, %v599
      %v715 = vmul.f32 %v604, %v604
      %v716 = vmul.f32 %v607, %v607
      %v717 = vadd.f32 %v685, %v686
      %v718 = vadd.f32 %v717, %v687
      %v719 = vadd.f32 %v718, %v688
      %v720 = vadd.f32 %v719, %v689
      %v721 = vadd.f32 %v720, %v690
      %v722 = vadd.f32 %v721, %v691
      %v723 = vadd.f32 %v722, %v692
      %v724 = vadd.f32 %v723, %v693
      %v725 = vadd.f32 %v724, %v694
      %v726 = vadd.f32 %v725, %v695
      %v727 = vadd.f32 %v726, %v696
      %v728 = vadd.f32 %v727, %v697
      %v729 = vadd.f32 %v728, %v698
      %v730 = vadd.f32 %v729, %v699
      %v731 = vadd.f32 %v730, %v700
      %v732 = vadd.f32 %v731, %v701
      %v733 = vadd.f32 %v732, %v702
      %v734 = vadd.f32 %v733, %v703
      %v735 = vadd.f32 %v734, %v704
      %v736 = vadd.f32 %v735, %v705
      %v737 = vadd.f32 %v736, %v706
      %v738 = vadd.f32 %v737, %v707
      %v739 = vadd.f32 %v738, %v708
      %v740 = vadd.f32 %v739, %v709
      %v741 = vadd.f32 %v740, %v710
      %v742 = vadd.f32 %v741, %v711
      %v743 = vadd.f32 %v742, %v712
      %v744 = vadd.f32 %v743, %v713
      %v745 = vadd.f32 %v744, %v714
      %v746 = vadd.f32 %v745, %v715
      %v747 = vadd.f32 %v746, %v716
      %v748 = vrot.slane %v747, 4
      %v749 = vadd.f32 %v747, %v748
      %v750 = vrot.slane %v749, 2
      %v751 = vadd.f32 %v749, %v750
      %v752 = vrot.slane %v751, 1
      %v753 = vadd.f32 %v751, %v752
      %vm754 = vcmask 1040384
      %v755 = vsel %vm754, %v684, %v753
      %v756 = vadd.f32 %v647, %v755
      %757 = vst [vmem:[%s5] sm:$0x3] %v756
      %s758 = smul.u32 32, %s17
      %p759 = scmp.lt.s32.totalorder %s758, 95
      %s760 = scalar_select %p759, %s758, 95
      %s761 = smul.addr %s760, 8
      %s762 = scalar_lea.vmem %s4, %s761
      // Predicated region
      $region41: #{bottleneck_forward.8} parent=35 // pred_check
        %p763 = pneg %p124
      $region42: #{bottleneck_forward.8} parent=35 // pred_check_branch
        %765 = sbr.rel (%p763) target = $region44
      $region43: #{bottleneck_forward.8} parent=35 // pred_region
        %s766 = smul.u32 32, %s17
      $region44: #{bottleneck_forward.8} parent=35 // pred_fallthru
        _
      // Predicated region
      $region45: #{bottleneck_forward.8} parent=35 // pred_check
        %p767 = pneg %p145
      $region46: #{bottleneck_forward.8} parent=35 // pred_check_branch
        %769 = sbr.rel (%p767) target = $region48
      $region47: #{bottleneck_forward.8} parent=35 // pred_region
        _
      $region48: #{bottleneck_forward.8} parent=35 // pred_fallthru
        _
      // Predicated region
      $region49: #{bottleneck_forward.8} parent=35 // pred_check
        %p770 = pneg %p145
      $region50: #{bottleneck_forward.8} parent=35 // pred_check_branch
        %772 = sbr.rel (%p770) target = $region52
      $region51: #{bottleneck_forward.8} parent=35 // pred_region
        _
      $region52: #{bottleneck_forward.8} parent=35 // pred_fallthru
        _
    $region36: #{bottleneck_forward.8} parent=5 // pred_fallthru
      _
    %p773 = scmp.le.s32.totalorder 2, %s12
    // Predicated region
    $region53: #{bottleneck_forward.8} parent=5 // pred_check
      %p774 = pneg %p773
    $region54: #{bottleneck_forward.8} parent=5 // pred_check_branch
      %776 = sbr.rel (%p774) target = $region56
    $region55: #{bottleneck_forward.8} parent=5 // pred_region
      %s777 = ssub.s32 %s12, 2
      // Predicated region
      $region57: #{bottleneck_forward.8} parent=55 // pred_check
        %p778 = pneg %p130
      $region58: #{bottleneck_forward.8} parent=55 // pred_check_branch
        %780 = sbr.rel (%p778) target = $region60
      $region59: #{bottleneck_forward.8} parent=55 // pred_region
        %s781 = smul.u32 32, %s18
        %p782 = scmp.lt.s32.totalorder %s781, 95
        %s783 = scalar_select %p782, %s781, 95
        %s784 = smul.addr %s783, 8
        %s785 = scalar_lea.vmem %s4, %s784
      $region60: #{bottleneck_forward.8} parent=55 // pred_fallthru
        _
    $region56: #{bottleneck_forward.8} parent=5 // pred_fallthru
      _
  $region6: #{bottleneck_forward.8} parent=0 // loop_footer
    %s16 = sadd.s32 1, %s12
  $region7: #{bottleneck_forward.8} parent=0 // loop_footer_branch
    %11 = sbr.rel target = $region3
  $region8: #{bottleneck_forward.8} parent=0 // loop_exit
    _

// kernel: bottleneck_forward.7
$region0: #{bottleneck_forward.7}
  #allocation0 [shape = 'u32[]', space=smem, size = 0x4, offset = 0x4, fixed_abs, tag = 'smem constant byte address 0x4 - core index']
  #allocation1 [shape = 'u32[144,128]{1,0:T(1,128)}', space=vmem, size = 0x12000, scoped, tag = 'internal scratch']
  %s0 = inlined_call_operand.vmem [shape: bf16[3,18,18,128], index: 0, kind: input, shape index: {}]
  %s1 = inlined_call_operand.vmem [shape: bf16[9,128,128], index: 1, kind: input, shape index: {}]
  %s2 = inlined_call_operand.vmem [shape: f32[3,256,128], index: 2, kind: output, shape index: {0}]
  %s3 = inlined_call_operand.vmem [shape: f32[2,128], index: 3, kind: output, shape index: {1}]
  %4 = xla_tuple %s2, %s3
  %s5 = sld [smem:[#allocation0]]
  $region53: #{bottleneck_forward.7} parent=0
    _
  %s7 = ssub.s32 1, %s5
  %s8 = scalar_select 0, %s7, %s5
  loop: start=0, step=1, limit=5
  $region2: #{bottleneck_forward.7} parent=0 // loop_pre_header
    _
  $region3: #{bottleneck_forward.7} parent=0 // loop_header
    %s10 = sphi 0, %s14
    %p11 = scmp.ge.s32.totalorder %s10, 5
    %s20 = sphi 0, %s22
    %s23 = sphi 0, %s20
    %s24 = sphi 0, %s23
    %s40 = sphi 0, %s24
    %s44 = sphi 0, %s44
    %s46 = sphi 0, %s44
    %s47 = sphi 0, %s46
    %s61 = sphi 0, %s47
    %s67 = sphi 0, %s69
    %s70 = sphi 0, %s67
    %s71 = sphi 0, %s70
    %s87 = sphi 0, %s71
    %s91 = sphi 0, %s91
    %s93 = sphi 0, %s91
    %s94 = sphi 0, %s93
    %s108 = sphi 0, %s94
  $region4: #{bottleneck_forward.7} parent=0 // loop_header_branch
    %13 = sbr.rel (%p11) target = $region8
  $region5: #{bottleneck_forward.7} parent=0 // loop_body
    %s15 = ssub.s32 %s10, 1
    %s16 = ssub.s32 %s10, 2
    %s17 = sadd.s32 %s10, 1
    %s18 = ssub.s32 %s10, %s17
    %p19 = scmp.eq.s32.totalorder %s18, 0
    %s21 = sadd.s32 %s20, 1
    %s22 = scalar_select %p19, %s20, %s21
    %p25 = pneg %p19
    %p26 = scmp.eq.s32.totalorder %s10, 2
    %p27 = por %p25, %p26
    %p28 = scmp.ne.s32.totalorder %s20, %s23
    %p29 = scmp.eq.s32.totalorder %s10, 0
    %p30 = por %p28, %p29
    %p31 = scmp.ne.s32.totalorder %s20, %s23
    %p32 = scmp.eq.s32.totalorder %s15, 2
    %p33 = por %p31, %p32
    %p34 = scmp.ne.s32.totalorder %s23, %s24
    %p35 = scmp.eq.s32.totalorder %s15, 0
    %p36 = por %p34, %p35
    %p37 = scmp.ne.s32.totalorder %s23, %s24
    %p38 = scmp.eq.s32.totalorder %s16, 2
    %p39 = por %p37, %p38
    %p41 = scmp.ne.s32.totalorder %s24, %s40
    %p42 = scmp.eq.s32.totalorder %s16, 0
    %p43 = por %p41, %p42
    %s45 = sadd.s32 %s44, 1
    %p48 = scmp.eq.s32.totalorder %s10, 2
    %p49 = scmp.ne.s32.totalorder %s44, %s46
    %p50 = scmp.eq.s32.totalorder %s10, 0
    %p51 = por %p49, %p50
    %p52 = scmp.ne.s32.totalorder %s44, %s46
    %p53 = scmp.eq.s32.totalorder %s15, 2
    %p54 = por %p52, %p53
    %p55 = scmp.ne.s32.totalorder %s46, %s47
    %p56 = scmp.eq.s32.totalorder %s15, 0
    %p57 = por %p55, %p56
    %p58 = scmp.ne.s32.totalorder %s46, %s47
    %p59 = scmp.eq.s32.totalorder %s16, 2
    %p60 = por %p58, %p59
    %p62 = scmp.ne.s32.totalorder %s47, %s61
    %p63 = scmp.eq.s32.totalorder %s16, 0
    %p64 = por %p62, %p63
    %s65 = ssub.s32 %s10, %s17
    %p66 = scmp.eq.s32.totalorder %s65, 0
    %s68 = sadd.s32 %s67, 1
    %s69 = scalar_select %p66, %s67, %s68
    %p72 = pneg %p66
    %p73 = scmp.eq.s32.totalorder %s10, 2
    %p74 = por %p72, %p73
    %p75 = scmp.ne.s32.totalorder %s67, %s70
    %p76 = scmp.eq.s32.totalorder %s10, 0
    %p77 = por %p75, %p76
    %p78 = scmp.ne.s32.totalorder %s67, %s70
    %p79 = scmp.eq.s32.totalorder %s15, 2
    %p80 = por %p78, %p79
    %p81 = scmp.ne.s32.totalorder %s70, %s71
    %p82 = scmp.eq.s32.totalorder %s15, 0
    %p83 = por %p81, %p82
    %p84 = scmp.ne.s32.totalorder %s70, %s71
    %p85 = scmp.eq.s32.totalorder %s16, 2
    %p86 = por %p84, %p85
    %p88 = scmp.ne.s32.totalorder %s71, %s87
    %p89 = scmp.eq.s32.totalorder %s16, 0
    %p90 = por %p88, %p89
    %s92 = sadd.s32 %s91, 1
    %p95 = scmp.eq.s32.totalorder %s10, 2
    %p96 = scmp.ne.s32.totalorder %s91, %s93
    %p97 = scmp.eq.s32.totalorder %s10, 0
    %p98 = por %p96, %p97
    %p99 = scmp.ne.s32.totalorder %s91, %s93
    %p100 = scmp.eq.s32.totalorder %s15, 2
    %p101 = por %p99, %p100
    %p102 = scmp.ne.s32.totalorder %s93, %s94
    %p103 = scmp.eq.s32.totalorder %s15, 0
    %p104 = por %p102, %p103
    %p105 = scmp.ne.s32.totalorder %s93, %s94
    %p106 = scmp.eq.s32.totalorder %s16, 2
    %p107 = por %p105, %p106
    %p109 = scmp.ne.s32.totalorder %s94, %s108
    %p110 = scmp.eq.s32.totalorder %s16, 0
    %p111 = por %p109, %p110
    %p112 = scmp.le.s32.totalorder 1, %s10
    %p113 = scmp.lt.s32.totalorder %s10, 4
    %p114 = pnand %p112, %p113
    %p115 = pneg %p114
    // Predicated region
    $region9: #{bottleneck_forward.7} parent=5 // pred_check
      _
    $region10: #{bottleneck_forward.7} parent=5 // pred_check_branch
      %117 = sbr.rel (%p114) target = $region12
    $region11: #{bottleneck_forward.7} parent=5 // pred_region
      %s118 = ssub.s32 %s10, 1
      // Predicated region
      $region13: #{bottleneck_forward.7} parent=11 // pred_check
        %p119 = pneg %p57
      $region14: #{bottleneck_forward.7} parent=11 // pred_check_branch
        %121 = sbr.rel (%p119) target = $region16
      $region15: #{bottleneck_forward.7} parent=11 // pred_region
        _
      $region16: #{bottleneck_forward.7} parent=11 // pred_fallthru
        _
    $region12: #{bottleneck_forward.7} parent=5 // pred_fallthru
      _
    %p122 = scmp.lt.s32.totalorder %s10, 3
    // Predicated region
    $region17: #{bottleneck_forward.7} parent=5 // pred_check
      %p123 = pneg %p122
    $region18: #{bottleneck_forward.7} parent=5 // pred_check_branch
      %125 = sbr.rel (%p123) target = $region20
    $region19: #{bottleneck_forward.7} parent=5 // pred_region
      // Predicated region
      $region21: #{bottleneck_forward.7} parent=19 // pred_check
        %p126 = pneg %p30
      $region22: #{bottleneck_forward.7} parent=19 // pred_check_branch
        %128 = sbr.rel (%p126) target = $region24
      $region23: #{bottleneck_forward.7} parent=19 // pred_region
        %p129 = scmp.lt.s32.totalorder %s10, 2
        %s130 = scalar_select %p129, %s10, 2
        %s131 = smul.addr %s130, 54
        %s132 = smul.addr %s131, 4
        %s133 = scalar_lea.vmem %s0, %s132
      $region24: #{bottleneck_forward.7} parent=19 // pred_fallthru
        _
    $region20: #{bottleneck_forward.7} parent=5 // pred_fallthru
      _
    %p134 = scmp.le.s32.totalorder 1, %s10
    %p135 = scmp.lt.s32.totalorder %s10, 4
    %p136 = pnand %p134, %p135
    %p137 = pneg %p136
    // Predicated region
    $region25: #{bottleneck_forward.7} parent=5 // pred_check
      _
    $region26: #{bottleneck_forward.7} parent=5 // pred_check_branch
      %139 = sbr.rel (%p136) target = $region28
    $region27: #{bottleneck_forward.7} parent=5 // pred_region
      %s140 = ssub.s32 %s10, 1
      %p141 = scmp.lt.s32.totalorder %s15, 2
      %s142 = scalar_select %p141, %s15, 2
      %s143 = smul.addr %s142, 54
      %s144 = smul.addr %s143, 4
      %s145 = scalar_lea.vmem %s0, %s144
      %p146 = pneg %p36
      %p147 = pneg %p33
      %p148 = pneg %p57
      %p149 = pneg %p54
      %p150 = pneg %p83
      %p151 = pneg %p80
      %p152 = scmp.lt.s32.totalorder %s15, 2
      %s153 = scalar_select %p152, %s15, 2
      %s154 = smul.addr %s153, 32
      %s155 = smul.addr %s154, 8
      %s156 = scalar_lea.vmem %s2, %s155
      %p157 = pneg %p104
      %p158 = pneg %p101
      %p159 = scmp.lt.s32.totalorder %s15, 2
      %s160 = scalar_select %p159, %s15, 2
      %s161 = smul.addr %s160, 54
      %s162 = smul.addr %s161, 4
      %s163 = scalar_lea.vmem %s0, %s162
      %p164 = scmp.lt.s32.totalorder %s15, 2
      %s165 = scalar_select %p164, %s15, 2
      %s166 = smul.addr %s165, 32
      %s167 = smul.addr %s166, 8
      %s168 = scalar_lea.vmem %s2, %s167
      %v170 = vld [vmem:[%s163] sm:$0xf]
      %v171 = vld [vmem:[%s163 + $0x4] sm:$0xf]
      %v172 = vld [vmem:[%s163 + $0xc] sm:$0xf]
      %v173 = vld [vmem:[%s163 + $0x10] sm:$0xf]
      %v174 = vld [vmem:[%s163 + $0x18] sm:$0xf]
      %v175 = vld [vmem:[%s163 + $0x1c] sm:$0xf]
      %v176 = vld [vmem:[%s163 + $0x24] sm:$0xf]
      %v177 = vld [vmem:[%s163 + $0x28] sm:$0xf]
      %v178 = vld [vmem:[%s163 + $0x30] sm:$0xf]
      %v179 = vld [vmem:[%s163 + $0x34] sm:$0xf]
      %v180 = vld [vmem:[%s163 + $0x3c] sm:$0xf]
      %v181 = vld [vmem:[%s163 + $0x40] sm:$0xf]
      %v182 = vld [vmem:[%s163 + $0x48] sm:$0xf]
      %v183 = vld [vmem:[%s163 + $0x4c] sm:$0xf]
      %v184 = vld [vmem:[%s163 + $0x54] sm:$0xf]
      %v185 = vld [vmem:[%s163 + $0x58] sm:$0xf]
      %v186 = vld [vmem:[%s163 + $0x60] sm:$0xf]
      %v187 = vld [vmem:[%s163 + $0x64] sm:$0xf]
      %v188 = vld [vmem:[%s163 + $0x6c] sm:$0xf]
      %v189 = vld [vmem:[%s163 + $0x70] sm:$0xf]
      %v190 = vld [vmem:[%s163 + $0x78] sm:$0xf]
      %v191 = vld [vmem:[%s163 + $0x7c] sm:$0xf]
      %v192 = vld [vmem:[%s163 + $0x84] sm:$0xf]
      %v193 = vld [vmem:[%s163 + $0x88] sm:$0xf]
      %v194 = vld [vmem:[%s163 + $0x90] sm:$0xf]
      %v195 = vld [vmem:[%s163 + $0x94] sm:$0xf]
      %v196 = vld [vmem:[%s163 + $0x9c] sm:$0xf]
      %v197 = vld [vmem:[%s163 + $0xa0] sm:$0xf]
      %v198 = vld [vmem:[%s163 + $0xa8] sm:$0xf]
      %v199 = vld [vmem:[%s163 + $0xac] sm:$0xf]
      %v200 = vld [vmem:[%s163 + $0xb4] sm:$0xf]
      %v201 = vld [vmem:[%s163 + $0xb8] sm:$0xf]
      %v202 = vld [vmem:[%s1] sm:$0xf]
      %v203 = vld [vmem:[%s1 + $0x4] sm:$0xf]
      %v204 = vld [vmem:[%s1 + $0x8] sm:$0xf]
      %v205 = vld [vmem:[%s1 + $0xc] sm:$0xf]
      %v206 = vld [vmem:[%s1 + $0x10] sm:$0xf]
      %v207 = vld [vmem:[%s1 + $0x14] sm:$0xf]
      %v208 = vld [vmem:[%s1 + $0x18] sm:$0xf]
      %v209 = vld [vmem:[%s1 + $0x1c] sm:$0xf]
      %v210 = vld [vmem:[%s1 + $0x20] sm:$0xf]
      %v211 = vld [vmem:[%s1 + $0x24] sm:$0xf]
      %v212 = vld [vmem:[%s1 + $0x28] sm:$0xf]
      %v213 = vld [vmem:[%s1 + $0x2c] sm:$0xf]
      %v214 = vld [vmem:[%s1 + $0x30] sm:$0xf]
      %v215 = vld [vmem:[%s1 + $0x34] sm:$0xf]
      %v216 = vld [vmem:[%s1 + $0x38] sm:$0xf]
      %v217 = vld [vmem:[%s1 + $0x3c] sm:$0xf]
      %v218 = vld [vmem:[%s163 + $0x8] sm:$0x1]
      %v219 = vld [vmem:[%s163 + $0x14] sm:$0x1]
      %v220 = vld [vmem:[%s163 + $0x20] sm:$0x1]
      %v221 = vld [vmem:[%s163 + $0x2c] sm:$0x1]
      %v222 = vld [vmem:[%s163 + $0x38] sm:$0x1]
      %v223 = vld [vmem:[%s163 + $0x44] sm:$0x1]
      %v224 = vld [vmem:[%s163 + $0x50] sm:$0x1]
      %v225 = vld [vmem:[%s163 + $0x5c] sm:$0x1]
      %v226 = vld [vmem:[%s163 + $0x68] sm:$0x1]
      %v227 = vld [vmem:[%s163 + $0x74] sm:$0x1]
      %v228 = vld [vmem:[%s163 + $0x80] sm:$0x1]
      %v229 = vld [vmem:[%s163 + $0x8c] sm:$0x1]
      %v230 = vld [vmem:[%s163 + $0x98] sm:$0x1]
      %v231 = vld [vmem:[%s163 + $0xa4] sm:$0x1]
      %v232 = vld [vmem:[%s163 + $0xb0] sm:$0x1]
      %v233 = vld [vmem:[%s163 + $0xbc] sm:$0x1]
      %vm234 = vsmask.f32 3328
      %vm235 = vsmask.f32 7440
      %vm236 = vmor %vm234, %vm235
      %v238 = vshrl.u32 %v170, 16
      %v240 = vrot.slane %v238, 4
      %v241 = vshll.u32 %v170, 16
      %v243 = vrot.slane %v241, 5
      %v244 = vor.u32 %v240, %v243
      %v245 = vrot.slane %v244, 4
      %v247 = vshll.u32 %v171, 16
      %v249 = vrot.slane %v247, 5
      %v250 = vsel %vm236, %v245, %v249
      %v251 = vshrl.u32 %v171, 16
      %v253 = vrot.slane %v251, 4
      %v254 = vor.u32 %v253, %v249
      %v255 = vrot.slane %v254, 4
      %v257 = vshll.u32 %v218, 16
      %v259 = vrot.slane %v257, 5
      %v260 = vsel %vm236, %v255, %v259
      %v262 = vshrl.u32 %v172, 16
      %v264 = vrot.slane %v262, 4
      %v265 = vshll.u32 %v172, 16
      %v267 = vrot.slane %v265, 5
      %v268 = vor.u32 %v264, %v267
      %v269 = vrot.slane %v268, 4
      %v271 = vshll.u32 %v173, 16
      %v273 = vrot.slane %v271, 5
      %v274 = vsel %vm236, %v269, %v273
      %v275 = vshrl.u32 %v173, 16
      %v277 = vrot.slane %v275, 4
      %v278 = vor.u32 %v277, %v273
      %v279 = vrot.slane %v278, 4
      %v281 = vshll.u32 %v219, 16
      %v283 = vrot.slane %v281, 5
      %v284 = vsel %vm236, %v279, %v283
      %v286 = vshrl.u32 %v174, 16
      %v288 = vrot.slane %v286, 4
      %v289 = vshll.u32 %v174, 16
      %v291 = vrot.slane %v289, 5
      %v292 = vor.u32 %v288, %v291
      %v293 = vrot.slane %v292, 4
      %v295 = vshll.u32 %v175, 16
      %v297 = vrot.slane %v295, 5
      %v298 = vsel %vm236, %v293, %v297
      %v299 = vshrl.u32 %v175, 16
      %v301 = vrot.slane %v299, 4
      %v302 = vor.u32 %v301, %v297
      %v303 = vrot.slane %v302, 4
      %v305 = vshll.u32 %v220, 16
      %v307 = vrot.slane %v305, 5
      %v308 = vsel %vm236, %v303, %v307
      %v310 = vshrl.u32 %v176, 16
      %v312 = vrot.slane %v310, 4
      %v313 = vshll.u32 %v176, 16
      %v315 = vrot.slane %v313, 5
      %v316 = vor.u32 %v312, %v315
      %v317 = vrot.slane %v316, 4
      %v319 = vshll.u32 %v177, 16
      %v321 = vrot.slane %v319, 5
      %v322 = vsel %vm236, %v317, %v321
      %v323 = vshrl.u32 %v177, 16
      %v325 = vrot.slane %v323, 4
      %v326 = vor.u32 %v325, %v321
      %v327 = vrot.slane %v326, 4
      %v329 = vshll.u32 %v221, 16
      %v331 = vrot.slane %v329, 5
      %v332 = vsel %vm236, %v327, %v331
      %v334 = vshrl.u32 %v178, 16
      %v336 = vrot.slane %v334, 4
      %v337 = vshll.u32 %v178, 16
      %v339 = vrot.slane %v337, 5
      %v340 = vor.u32 %v336, %v339
      %v341 = vrot.slane %v340, 4
      %v343 = vshll.u32 %v179, 16
      %v345 = vrot.slane %v343, 5
      %v346 = vsel %vm236, %v341, %v345
      %v347 = vshrl.u32 %v179, 16
      %v349 = vrot.slane %v347, 4
      %v350 = vor.u32 %v349, %v345
      %v351 = vrot.slane %v350, 4
      %v353 = vshll.u32 %v222, 16
      %v355 = vrot.slane %v353, 5
      %v356 = vsel %vm236, %v351, %v355
      %v358 = vshrl.u32 %v180, 16
      %v360 = vrot.slane %v358, 4
      %v361 = vshll.u32 %v180, 16
      %v363 = vrot.slane %v361, 5
      %v364 = vor.u32 %v360, %v363
      %v365 = vrot.slane %v364, 4
      %v367 = vshll.u32 %v181, 16
      %v369 = vrot.slane %v367, 5
      %v370 = vsel %vm236, %v365, %v369
      %v371 = vshrl.u32 %v181, 16
      %v373 = vrot.slane %v371, 4
      %v374 = vor.u32 %v373, %v369
      %v375 = vrot.slane %v374, 4
      %v377 = vshll.u32 %v223, 16
      %v379 = vrot.slane %v377, 5
      %v380 = vsel %vm236, %v375, %v379
      %v382 = vshrl.u32 %v182, 16
      %v384 = vrot.slane %v382, 4
      %v385 = vshll.u32 %v182, 16
      %v387 = vrot.slane %v385, 5
      %v388 = vor.u32 %v384, %v387
      %v389 = vrot.slane %v388, 4
      %v391 = vshll.u32 %v183, 16
      %v393 = vrot.slane %v391, 5
      %v394 = vsel %vm236, %v389, %v393
      %v395 = vshrl.u32 %v183, 16
      %v397 = vrot.slane %v395, 4
      %v398 = vor.u32 %v397, %v393
      %v399 = vrot.slane %v398, 4
      %v401 = vshll.u32 %v224, 16
      %v403 = vrot.slane %v401, 5
      %v404 = vsel %vm236, %v399, %v403
      %v406 = vshrl.u32 %v184, 16
      %v408 = vrot.slane %v406, 4
      %v409 = vshll.u32 %v184, 16
      %v411 = vrot.slane %v409, 5
      %v412 = vor.u32 %v408, %v411
      %v413 = vrot.slane %v412, 4
      %v415 = vshll.u32 %v185, 16
      %v417 = vrot.slane %v415, 5
      %v418 = vsel %vm236, %v413, %v417
      %v419 = vshrl.u32 %v185, 16
      %v421 = vrot.slane %v419, 4
      %v422 = vor.u32 %v421, %v417
      %v423 = vrot.slane %v422, 4
      %v425 = vshll.u32 %v225, 16
      %v427 = vrot.slane %v425, 5
      %v428 = vsel %vm236, %v423, %v427
      %v430 = vshrl.u32 %v186, 16
      %v432 = vrot.slane %v430, 4
      %v433 = vshll.u32 %v186, 16
      %v435 = vrot.slane %v433, 5
      %v436 = vor.u32 %v432, %v435
      %v437 = vrot.slane %v436, 4
      %v439 = vshll.u32 %v187, 16
      %v441 = vrot.slane %v439, 5
      %v442 = vsel %vm236, %v437, %v441
      %v443 = vshrl.u32 %v187, 16
      %v445 = vrot.slane %v443, 4
      %v446 = vor.u32 %v445, %v441
      %v447 = vrot.slane %v446, 4
      %v449 = vshll.u32 %v226, 16
      %v451 = vrot.slane %v449, 5
      %v452 = vsel %vm236, %v447, %v451
      %v454 = vshrl.u32 %v188, 16
      %v456 = vrot.slane %v454, 4
      %v457 = vshll.u32 %v188, 16
      %v459 = vrot.slane %v457, 5
      %v460 = vor.u32 %v456, %v459
      %v461 = vrot.slane %v460, 4
      %v463 = vshll.u32 %v189, 16
      %v465 = vrot.slane %v463, 5
      %v466 = vsel %vm236, %v461, %v465
      %v467 = vshrl.u32 %v189, 16
      %v469 = vrot.slane %v467, 4
      %v470 = vor.u32 %v469, %v465
      %v471 = vrot.slane %v470, 4
      %v473 = vshll.u32 %v227, 16
      %v475 = vrot.slane %v473, 5
      %v476 = vsel %vm236, %v471, %v475
      %v478 = vshrl.u32 %v190, 16
      %v480 = vrot.slane %v478, 4
      %v481 = vshll.u32 %v190, 16
      %v483 = vrot.slane %v481, 5
      %v484 = vor.u32 %v480, %v483
      %v485 = vrot.slane %v484, 4
      %v487 = vshll.u32 %v191, 16
      %v489 = vrot.slane %v487, 5
      %v490 = vsel %vm236, %v485, %v489
      %v491 = vshrl.u32 %v191, 16
      %v493 = vrot.slane %v491, 4
      %v494 = vor.u32 %v493, %v489
      %v495 = vrot.slane %v494, 4
      %v497 = vshll.u32 %v228, 16
      %v499 = vrot.slane %v497, 5
      %v500 = vsel %vm236, %v495, %v499
      %v502 = vshrl.u32 %v192, 16
      %v504 = vrot.slane %v502, 4
      %v505 = vshll.u32 %v192, 16
      %v507 = vrot.slane %v505, 5
      %v508 = vor.u32 %v504, %v507
      %v509 = vrot.slane %v508, 4
      %v511 = vshll.u32 %v193, 16
      %v513 = vrot.slane %v511, 5
      %v514 = vsel %vm236, %v509, %v513
      %v515 = vshrl.u32 %v193, 16
      %v517 = vrot.slane %v515, 4
      %v518 = vor.u32 %v517, %v513
      %v519 = vrot.slane %v518, 4
      %v521 = vshll.u32 %v229, 16
      %v523 = vrot.slane %v521, 5
      %v524 = vsel %vm236, %v519, %v523
      %v526 = vshrl.u32 %v194, 16
      %v528 = vrot.slane %v526, 4
      %v529 = vshll.u32 %v194, 16
      %v531 = vrot.slane %v529, 5
      %v532 = vor.u32 %v528, %v531
      %v533 = vrot.slane %v532, 4
      %v535 = vshll.u32 %v195, 16
      %v537 = vrot.slane %v535, 5
      %v538 = vsel %vm236, %v533, %v537
      %v539 = vshrl.u32 %v195, 16
      %v541 = vrot.slane %v539, 4
      %v542 = vor.u32 %v541, %v537
      %v543 = vrot.slane %v542, 4
      %v545 = vshll.u32 %v230, 16
      %v547 = vrot.slane %v545, 5
      %v548 = vsel %vm236, %v543, %v547
      %v550 = vshrl.u32 %v196, 16
      %v552 = vrot.slane %v550, 4
      %v553 = vshll.u32 %v196, 16
      %v555 = vrot.slane %v553, 5
      %v556 = vor.u32 %v552, %v555
      %v557 = vrot.slane %v556, 4
      %v559 = vshll.u32 %v197, 16
      %v561 = vrot.slane %v559, 5
      %v562 = vsel %vm236, %v557, %v561
      %v563 = vshrl.u32 %v197, 16
      %v565 = vrot.slane %v563, 4
      %v566 = vor.u32 %v565, %v561
      %v567 = vrot.slane %v566, 4
      %v569 = vshll.u32 %v231, 16
      %v571 = vrot.slane %v569, 5
      %v572 = vsel %vm236, %v567, %v571
      %v574 = vshrl.u32 %v198, 16
      %v576 = vrot.slane %v574, 4
      %v577 = vshll.u32 %v198, 16
      %v579 = vrot.slane %v577, 5
      %v580 = vor.u32 %v576, %v579
      %v581 = vrot.slane %v580, 4
      %v583 = vshll.u32 %v199, 16
      %v585 = vrot.slane %v583, 5
      %v586 = vsel %vm236, %v581, %v585
      %v587 = vshrl.u32 %v199, 16
      %v589 = vrot.slane %v587, 4
      %v590 = vor.u32 %v589, %v585
      %v591 = vrot.slane %v590, 4
      %v593 = vshll.u32 %v232, 16
      %v595 = vrot.slane %v593, 5
      %v596 = vsel %vm236, %v591, %v595
      %v598 = vshrl.u32 %v200, 16
      %v600 = vrot.slane %v598, 4
      %v601 = vshll.u32 %v200, 16
      %v603 = vrot.slane %v601, 5
      %v604 = vor.u32 %v600, %v603
      %v605 = vrot.slane %v604, 4
      %v607 = vshll.u32 %v201, 16
      %v609 = vrot.slane %v607, 5
      %v610 = vsel %vm236, %v605, %v609
      %v611 = vshrl.u32 %v201, 16
      %v613 = vrot.slane %v611, 4
      %v614 = vor.u32 %v613, %v609
      %v615 = vrot.slane %v614, 4
      %v617 = vshll.u32 %v233, 16
      %v619 = vrot.slane %v617, 5
      %v620 = vsel %vm236, %v615, %v619
      %s621 = scalar_lea.vmem %s1, 64
      %v622 = vld [vmem:[%s621] sm:$0xf]
      %v623 = vld [vmem:[%s621 + $0x4] sm:$0xf]
      %v624 = vld [vmem:[%s621 + $0x8] sm:$0xf]
      %v625 = vld [vmem:[%s621 + $0xc] sm:$0xf]
      %v626 = vld [vmem:[%s621 + $0x10] sm:$0xf]
      %v627 = vld [vmem:[%s621 + $0x14] sm:$0xf]
      %v628 = vld [vmem:[%s621 + $0x18] sm:$0xf]
      %v629 = vld [vmem:[%s621 + $0x1c] sm:$0xf]
      %v630 = vld [vmem:[%s621 + $0x20] sm:$0xf]
      %v631 = vld [vmem:[%s621 + $0x24] sm:$0xf]
      %v632 = vld [vmem:[%s621 + $0x28] sm:$0xf]
      %v633 = vld [vmem:[%s621 + $0x2c] sm:$0xf]
      %v634 = vld [vmem:[%s621 + $0x30] sm:$0xf]
      %v635 = vld [vmem:[%s621 + $0x34] sm:$0xf]
      %v636 = vld [vmem:[%s621 + $0x38] sm:$0xf]
      %v637 = vld [vmem:[%s621 + $0x3c] sm:$0xf]
      %v638 = vunpack.c.l.b16 %v250
      %v639 = vunpack.c.l.b16 %v260
      %v640 = vunpack.c.l.b16 %v274
      %v641 = vunpack.c.l.b16 %v284
      %v642 = vunpack.c.l.b16 %v298
      %v643 = vunpack.c.l.b16 %v308
      %v644 = vunpack.c.l.b16 %v322
      %v645 = vunpack.c.l.b16 %v332
      %v646 = vunpack.c.l.b16 %v346
      %v647 = vunpack.c.l.b16 %v356
      %v648 = vunpack.c.l.b16 %v370
      %v649 = vunpack.c.l.b16 %v380
      %v650 = vunpack.c.l.b16 %v394
      %v651 = vunpack.c.l.b16 %v404
      %v652 = vunpack.c.l.b16 %v418
      %v653 = vunpack.c.l.b16 %v428
      %v654 = vunpack.c.l.b16 %v442
      %v655 = vunpack.c.l.b16 %v452
      %v656 = vunpack.c.l.b16 %v466
      %v657 = vunpack.c.l.b16 %v476
      %v658 = vunpack.c.l.b16 %v490
      %v659 = vunpack.c.l.b16 %v500
      %v660 = vunpack.c.l.b16 %v514
      %v661 = vunpack.c.l.b16 %v524
      %v662 = vunpack.c.l.b16 %v538
      %v663 = vunpack.c.l.b16 %v548
      %v664 = vunpack.c.l.b16 %v562
      %v665 = vunpack.c.l.b16 %v572
      %v666 = vunpack.c.l.b16 %v586
      %v667 = vunpack.c.l.b16 %v596
      %v668 = vunpack.c.l.b16 %v610
      %v669 = vunpack.c.l.b16 %v620
      %v670 = vpack.c.b16 %v639, %v638
      %v671 = vpack.c.b16 %v641, %v640
      %v672 = vpack.c.b16 %v643, %v642
      %v673 = vpack.c.b16 %v645, %v644
      %v674 = vpack.c.b16 %v647, %v646
      %v675 = vpack.c.b16 %v649, %v648
      %v676 = vpack.c.b16 %v651, %v650
      %v677 = vpack.c.b16 %v653, %v652
      %v678 = vpack.c.b16 %v655, %v654
      %v679 = vpack.c.b16 %v657, %v656
      %v680 = vpack.c.b16 %v659, %v658
      %v681 = vpack.c.b16 %v661, %v660
      %v682 = vpack.c.b16 %v663, %v662
      %v683 = vpack.c.b16 %v665, %v664
      %v684 = vpack.c.b16 %v667, %v666
      %v685 = vpack.c.b16 %v669, %v668
      %v718 = vunpack.c.l.b16 %v622
      %v719 = vunpack.c.l.b16 %v623
      %v720 = vunpack.c.l.b16 %v624
      %v721 = vunpack.c.l.b16 %v625
      %v722 = vunpack.c.l.b16 %v626
      %v723 = vunpack.c.l.b16 %v627
      %v724 = vunpack.c.l.b16 %v628
      %v725 = vunpack.c.l.b16 %v629
      %v726 = vunpack.c.l.b16 %v630
      %v727 = vunpack.c.l.b16 %v631
      %v728 = vunpack.c.l.b16 %v632
      %v729 = vunpack.c.l.b16 %v633
      %v730 = vunpack.c.l.b16 %v634
      %v731 = vunpack.c.l.b16 %v635
      %v732 = vunpack.c.l.b16 %v636
      %v733 = vunpack.c.l.b16 %v637
      %v734 = vpack.c.b16 %v719, %v718
      %v735 = vpack.c.b16 %v721, %v720
      %v736 = vpack.c.b16 %v723, %v722
      %v737 = vpack.c.b16 %v725, %v724
      %v738 = vpack.c.b16 %v727, %v726
      %v739 = vpack.c.b16 %v729, %v728
      %v740 = vpack.c.b16 %v731, %v730
      %v741 = vpack.c.b16 %v733, %v732
      %750 = vmatprep.subr.bf16.mxu0 0
      %751 = vmatpush1.bf16.msra.mxu0 %v741
      %752 = vmatprep.subr.bf16.mxu0 0
      %753 = vmatpush1.bf16.msra.mxu0 %v740
      %754 = vmatprep.subr.bf16.mxu0 0
      %755 = vmatpush1.bf16.msra.mxu0 %v739
      %756 = vmatprep.subr.bf16.mxu0 0
      %757 = vmatpush1.bf16.msra.mxu0 %v738
      %758 = vmatprep.subr.bf16.mxu0 0
      %759 = vmatpush1.bf16.msra.mxu0 %v737
      %760 = vmatprep.subr.bf16.mxu0 0
      %761 = vmatpush1.bf16.msra.mxu0 %v736
      %762 = vmatprep.subr.bf16.mxu0 0
      %763 = vmatpush1.bf16.msra.mxu0 %v735
      %764 = vmatprep.subr.bf16.mxu0 0
      %765 = vmatpush1.bf16.msra.mxu0 %v734
      %766 = vmatprep.subr.bf16.mxu0 0
      %767 = vmatpush2.bf16.msra.mxu0 0
      %768 = vmatprep.subr.bf16.mxu0 0
      %769 = vmatpush2.bf16.msra.mxu0 0
      %770 = vmatprep.subr.bf16.mxu0 0
      %771 = vmatpush2.bf16.msra.mxu0 0
      %772 = vmatprep.subr.bf16.mxu0 0
      %773 = vmatpush2.bf16.msra.mxu0 0
      %774 = vmatprep.subr.bf16.mxu0 0
      %775 = vmatpush2.bf16.msra.mxu0 0
      %776 = vmatprep.subr.bf16.mxu0 0
      %777 = vmatpush2.bf16.msra.mxu0 0
      %778 = vmatprep.subr.bf16.mxu0 0
      %779 = vmatpush2.bf16.msra.mxu0 0
      %780 = vmatprep.subr.bf16.mxu0 0
      %781 = vmatpush2.bf16.msra.mxu0 0
      %782 = vmatprep.mubr.bf16.mxu0 0
      %783 = vmatmul.mubr.bf16.gmra.mxu0 %v670
      %v784 = vpop.f32.mrf.mxu0
      %v785 = vadd.f32 0.0, %v784
      %v786 = vpop.f32.mrf.mxu0
      %v787 = vpop.f32.mrf.mxu0
      %v788 = vadd.f32 0.0, %v787
      %v789 = vpop.f32.mrf.mxu0
      %790 = vmatprep.mubr.bf16.mxu0 0
      %791 = vmatmul.mubr.bf16.gmra.mxu0 %v671
      %v792 = vpop.f32.mrf.mxu0
      %v793 = vadd.f32 0.0, %v792
      %v794 = vpop.f32.mrf.mxu0
      %v795 = vpop.f32.mrf.mxu0
      %v796 = vadd.f32 0.0, %v795
      %v797 = vpop.f32.mrf.mxu0
      %798 = vmatprep.mubr.bf16.mxu0 0
      %799 = vmatmul.mubr.bf16.gmra.mxu0 %v672
      %v800 = vpop.f32.mrf.mxu0
      %v801 = vadd.f32 0.0, %v800
      %v802 = vpop.f32.mrf.mxu0
      %v803 = vpop.f32.mrf.mxu0
      %v804 = vadd.f32 0.0, %v803
      %v805 = vpop.f32.mrf.mxu0
      %806 = vmatprep.mubr.bf16.mxu0 0
      %807 = vmatmul.mubr.bf16.gmra.mxu0 %v673
      %v808 = vpop.f32.mrf.mxu0
      %v809 = vadd.f32 0.0, %v808
      %v810 = vpop.f32.mrf.mxu0
      %v811 = vpop.f32.mrf.mxu0
      %v812 = vadd.f32 0.0, %v811
      %v813 = vpop.f32.mrf.mxu0
      %814 = vmatprep.mubr.bf16.mxu0 0
      %815 = vmatmul.mubr.bf16.gmra.mxu0 %v674
      %v816 = vpop.f32.mrf.mxu0
      %v817 = vadd.f32 0.0, %v816
      %v818 = vpop.f32.mrf.mxu0
      %v819 = vpop.f32.mrf.mxu0
      %v820 = vadd.f32 0.0, %v819
      %v821 = vpop.f32.mrf.mxu0
      %822 = vmatprep.mubr.bf16.mxu0 0
      %823 = vmatmul.mubr.bf16.gmra.mxu0 %v675
      %v824 = vpop.f32.mrf.mxu0
      %v825 = vadd.f32 0.0, %v824
      %v826 = vpop.f32.mrf.mxu0
      %v827 = vpop.f32.mrf.mxu0
      %v828 = vadd.f32 0.0, %v827
      %v829 = vpop.f32.mrf.mxu0
      %830 = vmatprep.mubr.bf16.mxu0 0
      %831 = vmatmul.mubr.bf16.gmra.mxu0 %v676
      %v832 = vpop.f32.mrf.mxu0
      %v833 = vadd.f32 0.0, %v832
      %v834 = vpop.f32.mrf.mxu0
      %v835 = vpop.f32.mrf.mxu0
      %v836 = vadd.f32 0.0, %v835
      %v837 = vpop.f32.mrf.mxu0
      %838 = vmatprep.mubr.bf16.mxu0 0
      %839 = vmatmul.mubr.bf16.gmra.mxu0 %v677
      %v840 = vpop.f32.mrf.mxu0
      %v841 = vadd.f32 0.0, %v840
      %v842 = vpop.f32.mrf.mxu0
      %v843 = vpop.f32.mrf.mxu0
      %v844 = vadd.f32 0.0, %v843
      %v845 = vpop.f32.mrf.mxu0
      %846 = vmatprep.mubr.bf16.mxu0 0
      %847 = vmatmul.mubr.bf16.gmra.mxu0 %v678
      %v848 = vpop.f32.mrf.mxu0
      %v849 = vadd.f32 0.0, %v848
      %v850 = vpop.f32.mrf.mxu0
      %v851 = vpop.f32.mrf.mxu0
      %v852 = vadd.f32 0.0, %v851
      %v853 = vpop.f32.mrf.mxu0
      %854 = vmatprep.mubr.bf16.mxu0 0
      %855 = vmatmul.mubr.bf16.gmra.mxu0 %v679
      %v856 = vpop.f32.mrf.mxu0
      %v857 = vadd.f32 0.0, %v856
      %v858 = vpop.f32.mrf.mxu0
      %v859 = vpop.f32.mrf.mxu0
      %v860 = vadd.f32 0.0, %v859
      %v861 = vpop.f32.mrf.mxu0
      %862 = vmatprep.mubr.bf16.mxu0 0
      %863 = vmatmul.mubr.bf16.gmra.mxu0 %v680
      %v864 = vpop.f32.mrf.mxu0
      %v865 = vadd.f32 0.0, %v864
      %v866 = vpop.f32.mrf.mxu0
      %v867 = vpop.f32.mrf.mxu0
      %v868 = vadd.f32 0.0, %v867
      %v869 = vpop.f32.mrf.mxu0
      %870 = vmatprep.mubr.bf16.mxu0 0
      %871 = vmatmul.mubr.bf16.gmra.mxu0 %v681
      %v872 = vpop.f32.mrf.mxu0
      %v873 = vadd.f32 0.0, %v872
      %v874 = vpop.f32.mrf.mxu0
      %v875 = vpop.f32.mrf.mxu0
      %v876 = vadd.f32 0.0, %v875
      %v877 = vpop.f32.mrf.mxu0
      %878 = vmatprep.mubr.bf16.mxu0 0
      %879 = vmatmul.mubr.bf16.gmra.mxu0 %v682
      %v880 = vpop.f32.mrf.mxu0
      %v881 = vadd.f32 0.0, %v880
      %v882 = vpop.f32.mrf.mxu0
      %v883 = vpop.f32.mrf.mxu0
      %v884 = vadd.f32 0.0, %v883
      %v885 = vpop.f32.mrf.mxu0
      %886 = vmatprep.mubr.bf16.mxu0 0
      %887 = vmatmul.mubr.bf16.gmra.mxu0 %v683
      %v888 = vpop.f32.mrf.mxu0
      %v889 = vadd.f32 0.0, %v888
      %v890 = vpop.f32.mrf.mxu0
      %v891 = vpop.f32.mrf.mxu0
      %v892 = vadd.f32 0.0, %v891
      %v893 = vpop.f32.mrf.mxu0
      %894 = vmatprep.mubr.bf16.mxu0 0
      %895 = vmatmul.mubr.bf16.gmra.mxu0 %v684
      %v896 = vpop.f32.mrf.mxu0
      %v897 = vadd.f32 0.0, %v896
      %v898 = vpop.f32.mrf.mxu0
      %v899 = vpop.f32.mrf.mxu0
      %v900 = vadd.f32 0.0, %v899
      %v901 = vpop.f32.mrf.mxu0
      %902 = vmatprep.mubr.bf16.mxu0 0
      %903 = vmatmul.mubr.bf16.gmra.mxu0 %v685
      %v904 = vpop.f32.mrf.mxu0
      %v905 = vadd.f32 0.0, %v904
      %v906 = vpop.f32.mrf.mxu0
      %v907 = vpop.f32.mrf.mxu0
      %v908 = vadd.f32 0.0, %v907
      %v909 = vpop.f32.mrf.mxu0
      %910 = vdwg.mxu0
      %v943 = vunpack.c.l.b16 %v170
      %v944 = vunpack.c.l.b16 %v171
      %v945 = vunpack.c.l.b16 %v172
      %v946 = vunpack.c.l.b16 %v173
      %v947 = vunpack.c.l.b16 %v174
      %v948 = vunpack.c.l.b16 %v175
      %v949 = vunpack.c.l.b16 %v176
      %v950 = vunpack.c.l.b16 %v177
      %v951 = vunpack.c.l.b16 %v178
      %v952 = vunpack.c.l.b16 %v179
      %v953 = vunpack.c.l.b16 %v180
      %v954 = vunpack.c.l.b16 %v181
      %v955 = vunpack.c.l.b16 %v182
      %v956 = vunpack.c.l.b16 %v183
      %v957 = vunpack.c.l.b16 %v184
      %v958 = vunpack.c.l.b16 %v185
      %v959 = vunpack.c.l.b16 %v186
      %v960 = vunpack.c.l.b16 %v187
      %v961 = vunpack.c.l.b16 %v188
      %v962 = vunpack.c.l.b16 %v189
      %v963 = vunpack.c.l.b16 %v190
      %v964 = vunpack.c.l.b16 %v191
      %v965 = vunpack.c.l.b16 %v192
      %v966 = vunpack.c.l.b16 %v193
      %v967 = vunpack.c.l.b16 %v194
      %v968 = vunpack.c.l.b16 %v195
      %v969 = vunpack.c.l.b16 %v196
      %v970 = vunpack.c.l.b16 %v197
      %v971 = vunpack.c.l.b16 %v198
      %v972 = vunpack.c.l.b16 %v199
      %v973 = vunpack.c.l.b16 %v200
      %v974 = vunpack.c.l.b16 %v201
      %v975 = vpack.c.b16 %v944, %v943
      %v976 = vpack.c.b16 %v946, %v945
      %v977 = vpack.c.b16 %v948, %v947
      %v978 = vpack.c.b16 %v950, %v949
      %v979 = vpack.c.b16 %v952, %v951
      %v980 = vpack.c.b16 %v954, %v953
      %v981 = vpack.c.b16 %v956, %v955
      %v982 = vpack.c.b16 %v958, %v957
      %v983 = vpack.c.b16 %v960, %v959
      %v984 = vpack.c.b16 %v962, %v961
      %v985 = vpack.c.b16 %v964, %v963
      %v986 = vpack.c.b16 %v966, %v965
      %v987 = vpack.c.b16 %v968, %v967
      %v988 = vpack.c.b16 %v970, %v969
      %v989 = vpack.c.b16 %v972, %v971
      %v990 = vpack.c.b16 %v974, %v973
      %v1023 = vunpack.c.l.b16 %v202
      %v1024 = vunpack.c.l.b16 %v203
      %v1025 = vunpack.c.l.b16 %v204
      %v1026 = vunpack.c.l.b16 %v205
      %v1027 = vunpack.c.l.b16 %v206
      %v1028 = vunpack.c.l.b16 %v207
      %v1029 = vunpack.c.l.b16 %v208
      %v1030 = vunpack.c.l.b16 %v209
      %v1031 = vunpack.c.l.b16 %v210
      %v1032 = vunpack.c.l.b16 %v211
      %v1033 = vunpack.c.l.b16 %v212
      %v1034 = vunpack.c.l.b16 %v213
      %v1035 = vunpack.c.l.b16 %v214
      %v1036 = vunpack.c.l.b16 %v215
      %v1037 = vunpack.c.l.b16 %v216
      %v1038 = vunpack.c.l.b16 %v217
      %v1039 = vpack.c.b16 %v1024, %v1023
      %v1040 = vpack.c.b16 %v1026, %v1025
      %v1041 = vpack.c.b16 %v1028, %v1027
      %v1042 = vpack.c.b16 %v1030, %v1029
      %v1043 = vpack.c.b16 %v1032, %v1031
      %v1044 = vpack.c.b16 %v1034, %v1033
      %v1045 = vpack.c.b16 %v1036, %v1035
      %v1046 = vpack.c.b16 %v1038, %v1037
      %1055 = vmatprep.subr.bf16.mxu0 0
      %1056 = vmatpush1.bf16.msra.mxu0 %v1046
      %1057 = vmatprep.subr.bf16.mxu0 0
      %1058 = vmatpush1.bf16.msra.mxu0 %v1045
      %1059 = vmatprep.subr.bf16.mxu0 0
      %1060 = vmatpush1.bf16.msra.mxu0 %v1044
      %1061 = vmatprep.subr.bf16.mxu0 0
      %1062 = vmatpush1.bf16.msra.mxu0 %v1043
      %1063 = vmatprep.subr.bf16.mxu0 0
      %1064 = vmatpush1.bf16.msra.mxu0 %v1042
      %1065 = vmatprep.subr.bf16.mxu0 0
      %1066 = vmatpush1.bf16.msra.mxu0 %v1041
      %1067 = vmatprep.subr.bf16.mxu0 0
      %1068 = vmatpush1.bf16.msra.mxu0 %v1040
      %1069 = vmatprep.subr.bf16.mxu0 0
      %1070 = vmatpush1.bf16.msra.mxu0 %v1039
      %1071 = vmatprep.subr.bf16.mxu0 0
      %1072 = vmatpush2.bf16.msra.mxu0 0
      %1073 = vmatprep.subr.bf16.mxu0 0
      %1074 = vmatpush2.bf16.msra.mxu0 0
      %1075 = vmatprep.subr.bf16.mxu0 0
      %1076 = vmatpush2.bf16.msra.mxu0 0
      %1077 = vmatprep.subr.bf16.mxu0 0
      %1078 = vmatpush2.bf16.msra.mxu0 0
      %1079 = vmatprep.subr.bf16.mxu0 0
      %1080 = vmatpush2.bf16.msra.mxu0 0
      %1081 = vmatprep.subr.bf16.mxu0 0
      %1082 = vmatpush2.bf16.msra.mxu0 0
      %1083 = vmatprep.subr.bf16.mxu0 0
      %1084 = vmatpush2.bf16.msra.mxu0 0
      %1085 = vmatprep.subr.bf16.mxu0 0
      %1086 = vmatpush2.bf16.msra.mxu0 0
      %1087 = vmatprep.mubr.bf16.mxu0 0
      %1088 = vmatmul.mubr.bf16.gmra.mxu0 %v975
      %v1089 = vpop.f32.mrf.mxu0
      %v1090 = vadd.f32 %v785, %v1089
      %v1091 = vpop.f32.mrf.mxu0
      %v1092 = vpop.f32.mrf.mxu0
      %v1093 = vadd.f32 %v788, %v1092
      %v1094 = vpop.f32.mrf.mxu0
      %1095 = vmatprep.mubr.bf16.mxu0 0
      %1096 = vmatmul.mubr.bf16.gmra.mxu0 %v976
      %v1097 = vpop.f32.mrf.mxu0
      %v1098 = vadd.f32 %v793, %v1097
      %v1099 = vpop.f32.mrf.mxu0
      %v1100 = vpop.f32.mrf.mxu0
      %v1101 = vadd.f32 %v796, %v1100
      %v1102 = vpop.f32.mrf.mxu0
      %1103 = vmatprep.mubr.bf16.mxu0 0
      %1104 = vmatmul.mubr.bf16.gmra.mxu0 %v977
      %v1105 = vpop.f32.mrf.mxu0
      %v1106 = vadd.f32 %v801, %v1105
      %v1107 = vpop.f32.mrf.mxu0
      %v1108 = vpop.f32.mrf.mxu0
      %v1109 = vadd.f32 %v804, %v1108
      %v1110 = vpop.f32.mrf.mxu0
      %1111 = vmatprep.mubr.bf16.mxu0 0
      %1112 = vmatmul.mubr.bf16.gmra.mxu0 %v978
      %v1113 = vpop.f32.mrf.mxu0
      %v1114 = vadd.f32 %v809, %v1113
      %v1115 = vpop.f32.mrf.mxu0
      %v1116 = vpop.f32.mrf.mxu0
      %v1117 = vadd.f32 %v812, %v1116
      %v1118 = vpop.f32.mrf.mxu0
      %1119 = vmatprep.mubr.bf16.mxu0 0
      %1120 = vmatmul.mubr.bf16.gmra.mxu0 %v979
      %v1121 = vpop.f32.mrf.mxu0
      %v1122 = vadd.f32 %v817, %v1121
      %v1123 = vpop.f32.mrf.mxu0
      %v1124 = vpop.f32.mrf.mxu0
      %v1125 = vadd.f32 %v820, %v1124
      %v1126 = vpop.f32.mrf.mxu0
      %1127 = vmatprep.mubr.bf16.mxu0 0
      %1128 = vmatmul.mubr.bf16.gmra.mxu0 %v980
      %v1129 = vpop.f32.mrf.mxu0
      %v1130 = vadd.f32 %v825, %v1129
      %v1131 = vpop.f32.mrf.mxu0
      %v1132 = vpop.f32.mrf.mxu0
      %v1133 = vadd.f32 %v828, %v1132
      %v1134 = vpop.f32.mrf.mxu0
      %1135 = vmatprep.mubr.bf16.mxu0 0
      %1136 = vmatmul.mubr.bf16.gmra.mxu0 %v981
      %v1137 = vpop.f32.mrf.mxu0
      %v1138 = vadd.f32 %v833, %v1137
      %v1139 = vpop.f32.mrf.mxu0
      %v1140 = vpop.f32.mrf.mxu0
      %v1141 = vadd.f32 %v836, %v1140
      %v1142 = vpop.f32.mrf.mxu0
      %1143 = vmatprep.mubr.bf16.mxu0 0
      %1144 = vmatmul.mubr.bf16.gmra.mxu0 %v982
      %v1145 = vpop.f32.mrf.mxu0
      %v1146 = vadd.f32 %v841, %v1145
      %v1147 = vpop.f32.mrf.mxu0
      %v1148 = vpop.f32.mrf.mxu0
      %v1149 = vadd.f32 %v844, %v1148
      %v1150 = vpop.f32.mrf.mxu0
      %1151 = vmatprep.mubr.bf16.mxu0 0
      %1152 = vmatmul.mubr.bf16.gmra.mxu0 %v983
      %v1153 = vpop.f32.mrf.mxu0
      %v1154 = vadd.f32 %v849, %v1153
      %v1155 = vpop.f32.mrf.mxu0
      %v1156 = vpop.f32.mrf.mxu0
      %v1157 = vadd.f32 %v852, %v1156
      %v1158 = vpop.f32.mrf.mxu0
      %1159 = vmatprep.mubr.bf16.mxu0 0
      %1160 = vmatmul.mubr.bf16.gmra.mxu0 %v984
      %v1161 = vpop.f32.mrf.mxu0
      %v1162 = vadd.f32 %v857, %v1161
      %v1163 = vpop.f32.mrf.mxu0
      %v1164 = vpop.f32.mrf.mxu0
      %v1165 = vadd.f32 %v860, %v1164
      %v1166 = vpop.f32.mrf.mxu0
      %1167 = vmatprep.mubr.bf16.mxu0 0
      %1168 = vmatmul.mubr.bf16.gmra.mxu0 %v985
      %v1169 = vpop.f32.mrf.mxu0
      %v1170 = vadd.f32 %v865, %v1169
      %v1171 = vpop.f32.mrf.mxu0
      %v1172 = vpop.f32.mrf.mxu0
      %v1173 = vadd.f32 %v868, %v1172
      %v1174 = vpop.f32.mrf.mxu0
      %1175 = vmatprep.mubr.bf16.mxu0 0
      %1176 = vmatmul.mubr.bf16.gmra.mxu0 %v986
      %v1177 = vpop.f32.mrf.mxu0
      %v1178 = vadd.f32 %v873, %v1177
      %v1179 = vpop.f32.mrf.mxu0
      %v1180 = vpop.f32.mrf.mxu0
      %v1181 = vadd.f32 %v876, %v1180
      %v1182 = vpop.f32.mrf.mxu0
      %1183 = vmatprep.mubr.bf16.mxu0 0
      %1184 = vmatmul.mubr.bf16.gmra.mxu0 %v987
      %v1185 = vpop.f32.mrf.mxu0
      %v1186 = vadd.f32 %v881, %v1185
      %v1187 = vpop.f32.mrf.mxu0
      %v1188 = vpop.f32.mrf.mxu0
      %v1189 = vadd.f32 %v884, %v1188
      %v1190 = vpop.f32.mrf.mxu0
      %1191 = vmatprep.mubr.bf16.mxu0 0
      %1192 = vmatmul.mubr.bf16.gmra.mxu0 %v988
      %v1193 = vpop.f32.mrf.mxu0
      %v1194 = vadd.f32 %v889, %v1193
      %v1195 = vpop.f32.mrf.mxu0
      %v1196 = vpop.f32.mrf.mxu0
      %v1197 = vadd.f32 %v892, %v1196
      %v1198 = vpop.f32.mrf.mxu0
      %1199 = vmatprep.mubr.bf16.mxu0 0
      %1200 = vmatmul.mubr.bf16.gmra.mxu0 %v989
      %v1201 = vpop.f32.mrf.mxu0
      %v1202 = vadd.f32 %v897, %v1201
      %v1203 = vpop.f32.mrf.mxu0
      %v1204 = vpop.f32.mrf.mxu0
      %v1205 = vadd.f32 %v900, %v1204
      %v1206 = vpop.f32.mrf.mxu0
      %1207 = vmatprep.mubr.bf16.mxu0 0
      %1208 = vmatmul.mubr.bf16.gmra.mxu0 %v990
      %v1209 = vpop.f32.mrf.mxu0
      %v1210 = vadd.f32 %v905, %v1209
      %v1211 = vpop.f32.mrf.mxu0
      %v1212 = vpop.f32.mrf.mxu0
      %v1213 = vadd.f32 %v908, %v1212
      %v1214 = vpop.f32.mrf.mxu0
      %1215 = vdwg.mxu0
      %v1216 = vld [vmem:[%s163] sm:$0xe]
      %v1217 = vld [vmem:[%s163 + $0xc] sm:$0xe]
      %v1218 = vld [vmem:[%s163 + $0x18] sm:$0xe]
      %v1219 = vld [vmem:[%s163 + $0x24] sm:$0xe]
      %v1220 = vld [vmem:[%s163 + $0x30] sm:$0xe]
      %v1221 = vld [vmem:[%s163 + $0x3c] sm:$0xe]
      %v1222 = vld [vmem:[%s163 + $0x48] sm:$0xe]
      %v1223 = vld [vmem:[%s163 + $0x54] sm:$0xe]
      %v1224 = vld [vmem:[%s163 + $0x60] sm:$0xe]
      %v1225 = vld [vmem:[%s163 + $0x6c] sm:$0xe]
      %v1226 = vld [vmem:[%s163 + $0x78] sm:$0xe]
      %v1227 = vld [vmem:[%s163 + $0x84] sm:$0xe]
      %v1228 = vld [vmem:[%s163 + $0x90] sm:$0xe]
      %v1229 = vld [vmem:[%s163 + $0x9c] sm:$0xe]
      %v1230 = vld [vmem:[%s163 + $0xa8] sm:$0xe]
      %v1231 = vld [vmem:[%s163 + $0xb4] sm:$0xe]
      %vm1264 = vcmask 1042432
      %vm1265 = vcmask 1046532
      %vm1266 = vmor %vm1264, %vm1265
      %v1267 = vrot.slane %v1216, 5
      %v1268 = vrot.slane %v1267, 4
      %v1269 = vrot.slane %v171, 5
      %v1270 = vsel %vm1266, %v1268, %v1269
      %v1271 = vrot.slane %v1269, 4
      %v1272 = vrot.slane %v218, 5
      %v1273 = vsel %vm1266, %v1271, %v1272
      %v1274 = vrot.slane %v1217, 5
      %v1275 = vrot.slane %v1274, 4
      %v1276 = vrot.slane %v173, 5
      %v1277 = vsel %vm1266, %v1275, %v1276
      %v1278 = vrot.slane %v1276, 4
      %v1279 = vrot.slane %v219, 5
      %v1280 = vsel %vm1266, %v1278, %v1279
      %v1281 = vrot.slane %v1218, 5
      %v1282 = vrot.slane %v1281, 4
      %v1283 = vrot.slane %v175, 5
      %v1284 = vsel %vm1266, %v1282, %v1283
      %v1285 = vrot.slane %v1283, 4
      %v1286 = vrot.slane %v220, 5
      %v1287 = vsel %vm1266, %v1285, %v1286
      %v1288 = vrot.slane %v1219, 5
      %v1289 = vrot.slane %v1288, 4
      %v1290 = vrot.slane %v177, 5
      %v1291 = vsel %vm1266, %v1289, %v1290
      %v1292 = vrot.slane %v1290, 4
      %v1293 = vrot.slane %v221, 5
      %v1294 = vsel %vm1266, %v1292, %v1293
      %v1295 = vrot.slane %v1220, 5
      %v1296 = vrot.slane %v1295, 4
      %v1297 = vrot.slane %v179, 5
      %v1298 = vsel %vm1266, %v1296, %v1297
      %v1299 = vrot.slane %v1297, 4
      %v1300 = vrot.slane %v222, 5
      %v1301 = vsel %vm1266, %v1299, %v1300
      %v1302 = vrot.slane %v1221, 5
      %v1303 = vrot.slane %v1302, 4
      %v1304 = vrot.slane %v181, 5
      %v1305 = vsel %vm1266, %v1303, %v1304
      %v1306 = vrot.slane %v1304, 4
      %v1307 = vrot.slane %v223, 5
      %v1308 = vsel %vm1266, %v1306, %v1307
      %v1309 = vrot.slane %v1222, 5
      %v1310 = vrot.slane %v1309, 4
      %v1311 = vrot.slane %v183, 5
      %v1312 = vsel %vm1266, %v1310, %v1311
      %v1313 = vrot.slane %v1311, 4
      %v1314 = vrot.slane %v224, 5
      %v1315 = vsel %vm1266, %v1313, %v1314
      %v1316 = vrot.slane %v1223, 5
      %v1317 = vrot.slane %v1316, 4
      %v1318 = vrot.slane %v185, 5
      %v1319 = vsel %vm1266, %v1317, %v1318
      %v1320 = vrot.slane %v1318, 4
      %v1321 = vrot.slane %v225, 5
      %v1322 = vsel %vm1266, %v1320, %v1321
      %v1323 = vrot.slane %v1224, 5
      %v1324 = vrot.slane %v1323, 4
      %v1325 = vrot.slane %v187, 5
      %v1326 = vsel %vm1266, %v1324, %v1325
      %v1327 = vrot.slane %v1325, 4
      %v1328 = vrot.slane %v226, 5
      %v1329 = vsel %vm1266, %v1327, %v1328
      %v1330 = vrot.slane %v1225, 5
      %v1331 = vrot.slane %v1330, 4
      %v1332 = vrot.slane %v189, 5
      %v1333 = vsel %vm1266, %v1331, %v1332
      %v1334 = vrot.slane %v1332, 4
      %v1335 = vrot.slane %v227, 5
      %v1336 = vsel %vm1266, %v1334, %v1335
      %v1337 = vrot.slane %v1226, 5
      %v1338 = vrot.slane %v1337, 4
      %v1339 = vrot.slane %v191, 5
      %v1340 = vsel %vm1266, %v1338, %v1339
      %v1341 = vrot.slane %v1339, 4
      %v1342 = vrot.slane %v228, 5
      %v1343 = vsel %vm1266, %v1341, %v1342
      %v1344 = vrot.slane %v1227, 5
      %v1345 = vrot.slane %v1344, 4
      %v1346 = vrot.slane %v193, 5
      %v1347 = vsel %vm1266, %v1345, %v1346
      %v1348 = vrot.slane %v1346, 4
      %v1349 = vrot.slane %v229, 5
      %v1350 = vsel %vm1266, %v1348, %v1349
      %v1351 = vrot.slane %v1228, 5
      %v1352 = vrot.slane %v1351, 4
      %v1353 = vrot.slane %v195, 5
      %v1354 = vsel %vm1266, %v1352, %v1353
      %v1355 = vrot.slane %v1353, 4
      %v1356 = vrot.slane %v230, 5
      %v1357 = vsel %vm1266, %v1355, %v1356
      %v1358 = vrot.slane %v1229, 5
      %v1359 = vrot.slane %v1358, 4
      %v1360 = vrot.slane %v197, 5
      %v1361 = vsel %vm1266, %v1359, %v1360
      %v1362 = vrot.slane %v1360, 4
      %v1363 = vrot.slane %v231, 5
      %v1364 = vsel %vm1266, %v1362, %v1363
      %v1365 = vrot.slane %v1230, 5
      %v1366 = vrot.slane %v1365, 4
      %v1367 = vrot.slane %v199, 5
      %v1368 = vsel %vm1266, %v1366, %v1367
      %v1369 = vrot.slane %v1367, 4
      %v1370 = vrot.slane %v232, 5
      %v1371 = vsel %vm1266, %v1369, %v1370
      %v1372 = vrot.slane %v1231, 5
      %v1373 = vrot.slane %v1372, 4
      %v1374 = vrot.slane %v201, 5
      %v1375 = vsel %vm1266, %v1373, %v1374
      %v1376 = vrot.slane %v1374, 4
      %v1377 = vrot.slane %v233, 5
      %v1378 = vsel %vm1266, %v1376, %v1377
      %s1379 = scalar_lea.vmem %s1, 128
      %v1380 = vld [vmem:[%s1379] sm:$0xf]
      %v1381 = vld [vmem:[%s1379 + $0x4] sm:$0xf]
      %v1382 = vld [vmem:[%s1379 + $0x8] sm:$0xf]
      %v1383 = vld [vmem:[%s1379 + $0xc] sm:$0xf]
      %v1384 = vld [vmem:[%s1379 + $0x10] sm:$0xf]
      %v1385 = vld [vmem:[%s1379 + $0x14] sm:$0xf]
      %v1386 = vld [vmem:[%s1379 + $0x18] sm:$0xf]
      %v1387 = vld [vmem:[%s1379 + $0x1c] sm:$0xf]
      %v1388 = vld [vmem:[%s1379 + $0x20] sm:$0xf]
      %v1389 = vld [vmem:[%s1379 + $0x24] sm:$0xf]
      %v1390 = vld [vmem:[%s1379 + $0x28] sm:$0xf]
      %v1391 = vld [vmem:[%s1379 + $0x2c] sm:$0xf]
      %v1392 = vld [vmem:[%s1379 + $0x30] sm:$0xf]
      %v1393 = vld [vmem:[%s1379 + $0x34] sm:$0xf]
      %v1394 = vld [vmem:[%s1379 + $0x38] sm:$0xf]
      %v1395 = vld [vmem:[%s1379 + $0x3c] sm:$0xf]
      %v1396 = vunpack.c.l.b16 %v1270
      %v1397 = vunpack.c.l.b16 %v1273
      %v1398 = vunpack.c.l.b16 %v1277
      %v1399 = vunpack.c.l.b16 %v1280
      %v1400 = vunpack.c.l.b16 %v1284
      %v1401 = vunpack.c.l.b16 %v1287
      %v1402 = vunpack.c.l.b16 %v1291
      %v1403 = vunpack.c.l.b16 %v1294
      %v1404 = vunpack.c.l.b16 %v1298
      %v1405 = vunpack.c.l.b16 %v1301
      %v1406 = vunpack.c.l.b16 %v1305
      %v1407 = vunpack.c.l.b16 %v1308
      %v1408 = vunpack.c.l.b16 %v1312
      %v1409 = vunpack.c.l.b16 %v1315
      %v1410 = vunpack.c.l.b16 %v1319
      %v1411 = vunpack.c.l.b16 %v1322
      %v1412 = vunpack.c.l.b16 %v1326
      %v1413 = vunpack.c.l.b16 %v1329
      %v1414 = vunpack.c.l.b16 %v1333
      %v1415 = vunpack.c.l.b16 %v1336
      %v1416 = vunpack.c.l.b16 %v1340
      %v1417 = vunpack.c.l.b16 %v1343
      %v1418 = vunpack.c.l.b16 %v1347
      %v1419 = vunpack.c.l.b16 %v1350
      %v1420 = vunpack.c.l.b16 %v1354
      %v1421 = vunpack.c.l.b16 %v1357
      %v1422 = vunpack.c.l.b16 %v1361
      %v1423 = vunpack.c.l.b16 %v1364
      %v1424 = vunpack.c.l.b16 %v1368
      %v1425 = vunpack.c.l.b16 %v1371
      %v1426 = vunpack.c.l.b16 %v1375
      %v1427 = vunpack.c.l.b16 %v1378
      %v1428 = vpack.c.b16 %v1397, %v1396
      %v1429 = vpack.c.b16 %v1399, %v1398
      %v1430 = vpack.c.b16 %v1401, %v1400
      %v1431 = vpack.c.b16 %v1403, %v1402
      %v1432 = vpack.c.b16 %v1405, %v1404
      %v1433 = vpack.c.b16 %v1407, %v1406
      %v1434 = vpack.c.b16 %v1409, %v1408
      %v1435 = vpack.c.b16 %v1411, %v1410
      %v1436 = vpack.c.b16 %v1413, %v1412
      %v1437 = vpack.c.b16 %v1415, %v1414
      %v1438 = vpack.c.b16 %v1417, %v1416
      %v1439 = vpack.c.b16 %v1419, %v1418
      %v1440 = vpack.c.b16 %v1421, %v1420
      %v1441 = vpack.c.b16 %v1423, %v1422
      %v1442 = vpack.c.b16 %v1425, %v1424
      %v1443 = vpack.c.b16 %v1427, %v1426
      %v1476 = vunpack.c.l.b16 %v1380
      %v1477 = vunpack.c.l.b16 %v1381
      %v1478 = vunpack.c.l.b16 %v1382
      %v1479 = vunpack.c.l.b16 %v1383
      %v1480 = vunpack.c.l.b16 %v1384
      %v1481 = vunpack.c.l.b16 %v1385
      %v1482 = vunpack.c.l.b16 %v1386
      %v1483 = vunpack.c.l.b16 %v1387
      %v1484 = vunpack.c.l.b16 %v1388
      %v1485 = vunpack.c.l.b16 %v1389
      %v1486 = vunpack.c.l.b16 %v1390
      %v1487 = vunpack.c.l.b16 %v1391
      %v1488 = vunpack.c.l.b16 %v1392
      %v1489 = vunpack.c.l.b16 %v1393
      %v1490 = vunpack.c.l.b16 %v1394
      %v1491 = vunpack.c.l.b16 %v1395
      %v1492 = vpack.c.b16 %v1477, %v1476
      %v1493 = vpack.c.b16 %v1479, %v1478
      %v1494 = vpack.c.b16 %v1481, %v1480
      %v1495 = vpack.c.b16 %v1483, %v1482
      %v1496 = vpack.c.b16 %v1485, %v1484
      %v1497 = vpack.c.b16 %v1487, %v1486
      %v1498 = vpack.c.b16 %v1489, %v1488
      %v1499 = vpack.c.b16 %v1491, %v1490
      %1508 = vmatprep.subr.bf16.mxu0 0
      %1509 = vmatpush1.bf16.msra.mxu0 %v1499
      %1510 = vmatprep.subr.bf16.mxu0 0
      %1511 = vmatpush1.bf16.msra.mxu0 %v1498
      %1512 = vmatprep.subr.bf16.mxu0 0
      %1513 = vmatpush1.bf16.msra.mxu0 %v1497
      %1514 = vmatprep.subr.bf16.mxu0 0
      %1515 = vmatpush1.bf16.msra.mxu0 %v1496
      %1516 = vmatprep.subr.bf16.mxu0 0
      %1517 = vmatpush1.bf16.msra.mxu0 %v1495
      %1518 = vmatprep.subr.bf16.mxu0 0
      %1519 = vmatpush1.bf16.msra.mxu0 %v1494
      %1520 = vmatprep.subr.bf16.mxu0 0
      %1521 = vmatpush1.bf16.msra.mxu0 %v1493
      %1522 = vmatprep.subr.bf16.mxu0 0
      %1523 = vmatpush1.bf16.msra.mxu0 %v1492
      %1524 = vmatprep.subr.bf16.mxu0 0
      %1525 = vmatpush2.bf16.msra.mxu0 0
      %1526 = vmatprep.subr.bf16.mxu0 0
      %1527 = vmatpush2.bf16.msra.mxu0 0
      %1528 = vmatprep.subr.bf16.mxu0 0
      %1529 = vmatpush2.bf16.msra.mxu0 0
      %1530 = vmatprep.subr.bf16.mxu0 0
      %1531 = vmatpush2.bf16.msra.mxu0 0
      %1532 = vmatprep.subr.bf16.mxu0 0
      %1533 = vmatpush2.bf16.msra.mxu0 0
      %1534 = vmatprep.subr.bf16.mxu0 0
      %1535 = vmatpush2.bf16.msra.mxu0 0
      %1536 = vmatprep.subr.bf16.mxu0 0
      %1537 = vmatpush2.bf16.msra.mxu0 0
      %1538 = vmatprep.subr.bf16.mxu0 0
      %1539 = vmatpush2.bf16.msra.mxu0 0
      %1540 = vmatprep.mubr.bf16.mxu0 0
      %1541 = vmatmul.mubr.bf16.gmra.mxu0 %v1428
      %v1542 = vpop.f32.mrf.mxu0
      %v1543 = vadd.f32 0.0, %v1542
      %v1544 = vpop.f32.mrf.mxu0
      %v1545 = vpop.f32.mrf.mxu0
      %v1546 = vadd.f32 0.0, %v1545
      %v1547 = vpop.f32.mrf.mxu0
      %1548 = vmatprep.mubr.bf16.mxu0 0
      %1549 = vmatmul.mubr.bf16.gmra.mxu0 %v1429
      %v1550 = vpop.f32.mrf.mxu0
      %v1551 = vadd.f32 0.0, %v1550
      %v1552 = vpop.f32.mrf.mxu0
      %v1553 = vpop.f32.mrf.mxu0
      %v1554 = vadd.f32 0.0, %v1553
      %v1555 = vpop.f32.mrf.mxu0
      %1556 = vmatprep.mubr.bf16.mxu0 0
      %1557 = vmatmul.mubr.bf16.gmra.mxu0 %v1430
      %v1558 = vpop.f32.mrf.mxu0
      %v1559 = vadd.f32 0.0, %v1558
      %v1560 = vpop.f32.mrf.mxu0
      %v1561 = vpop.f32.mrf.mxu0
      %v1562 = vadd.f32 0.0, %v1561
      %v1563 = vpop.f32.mrf.mxu0
      %1564 = vmatprep.mubr.bf16.mxu0 0
      %1565 = vmatmul.mubr.bf16.gmra.mxu0 %v1431
      %v1566 = vpop.f32.mrf.mxu0
      %v1567 = vadd.f32 0.0, %v1566
      %v1568 = vpop.f32.mrf.mxu0
      %v1569 = vpop.f32.mrf.mxu0
      %v1570 = vadd.f32 0.0, %v1569
      %v1571 = vpop.f32.mrf.mxu0
      %1572 = vmatprep.mubr.bf16.mxu0 0
      %1573 = vmatmul.mubr.bf16.gmra.mxu0 %v1432
      %v1574 = vpop.f32.mrf.mxu0
      %v1575 = vadd.f32 0.0, %v1574
      %v1576 = vpop.f32.mrf.mxu0
      %v1577 = vpop.f32.mrf.mxu0
      %v1578 = vadd.f32 0.0, %v1577
      %v1579 = vpop.f32.mrf.mxu0
      %1580 = vmatprep.mubr.bf16.mxu0 0
      %1581 = vmatmul.mubr.bf16.gmra.mxu0 %v1433
      %v1582 = vpop.f32.mrf.mxu0
      %v1583 = vadd.f32 0.0, %v1582
      %v1584 = vpop.f32.mrf.mxu0
      %v1585 = vpop.f32.mrf.mxu0
      %v1586 = vadd.f32 0.0, %v1585
      %v1587 = vpop.f32.mrf.mxu0
      %1588 = vmatprep.mubr.bf16.mxu0 0
      %1589 = vmatmul.mubr.bf16.gmra.mxu0 %v1434
      %v1590 = vpop.f32.mrf.mxu0
      %v1591 = vadd.f32 0.0, %v1590
      %v1592 = vpop.f32.mrf.mxu0
      %v1593 = vpop.f32.mrf.mxu0
      %v1594 = vadd.f32 0.0, %v1593
      %v1595 = vpop.f32.mrf.mxu0
      %1596 = vmatprep.mubr.bf16.mxu0 0
      %1597 = vmatmul.mubr.bf16.gmra.mxu0 %v1435
      %v1598 = vpop.f32.mrf.mxu0
      %v1599 = vadd.f32 0.0, %v1598
      %v1600 = vpop.f32.mrf.mxu0
      %v1601 = vpop.f32.mrf.mxu0
      %v1602 = vadd.f32 0.0, %v1601
      %v1603 = vpop.f32.mrf.mxu0
      %1604 = vmatprep.mubr.bf16.mxu0 0
      %1605 = vmatmul.mubr.bf16.gmra.mxu0 %v1436
      %v1606 = vpop.f32.mrf.mxu0
      %v1607 = vadd.f32 0.0, %v1606
      %v1608 = vpop.f32.mrf.mxu0
      %v1609 = vpop.f32.mrf.mxu0
      %v1610 = vadd.f32 0.0, %v1609
      %v1611 = vpop.f32.mrf.mxu0
      %1612 = vmatprep.mubr.bf16.mxu0 0
      %1613 = vmatmul.mubr.bf16.gmra.mxu0 %v1437
      %v1614 = vpop.f32.mrf.mxu0
      %v1615 = vadd.f32 0.0, %v1614
      %v1616 = vpop.f32.mrf.mxu0
      %v1617 = vpop.f32.mrf.mxu0
      %v1618 = vadd.f32 0.0, %v1617
      %v1619 = vpop.f32.mrf.mxu0
      %1620 = vmatprep.mubr.bf16.mxu0 0
      %1621 = vmatmul.mubr.bf16.gmra.mxu0 %v1438
      %v1622 = vpop.f32.mrf.mxu0
      %v1623 = vadd.f32 0.0, %v1622
      %v1624 = vpop.f32.mrf.mxu0
      %v1625 = vpop.f32.mrf.mxu0
      %v1626 = vadd.f32 0.0, %v1625
      %v1627 = vpop.f32.mrf.mxu0
      %1628 = vmatprep.mubr.bf16.mxu0 0
      %1629 = vmatmul.mubr.bf16.gmra.mxu0 %v1439
      %v1630 = vpop.f32.mrf.mxu0
      %v1631 = vadd.f32 0.0, %v1630
      %v1632 = vpop.f32.mrf.mxu0
      %v1633 = vpop.f32.mrf.mxu0
      %v1634 = vadd.f32 0.0, %v1633
      %v1635 = vpop.f32.mrf.mxu0
      %1636 = vmatprep.mubr.bf16.mxu0 0
      %1637 = vmatmul.mubr.bf16.gmra.mxu0 %v1440
      %v1638 = vpop.f32.mrf.mxu0
      %v1639 = vadd.f32 0.0, %v1638
      %v1640 = vpop.f32.mrf.mxu0
      %v1641 = vpop.f32.mrf.mxu0
      %v1642 = vadd.f32 0.0, %v1641
      %v1643 = vpop.f32.mrf.mxu0
      %1644 = vmatprep.mubr.bf16.mxu0 0
      %1645 = vmatmul.mubr.bf16.gmra.mxu0 %v1441
      %v1646 = vpop.f32.mrf.mxu0
      %v1647 = vadd.f32 0.0, %v1646
      %v1648 = vpop.f32.mrf.mxu0
      %v1649 = vpop.f32.mrf.mxu0
      %v1650 = vadd.f32 0.0, %v1649
      %v1651 = vpop.f32.mrf.mxu0
      %1652 = vmatprep.mubr.bf16.mxu0 0
      %1653 = vmatmul.mubr.bf16.gmra.mxu0 %v1442
      %v1654 = vpop.f32.mrf.mxu0
      %v1655 = vadd.f32 0.0, %v1654
      %v1656 = vpop.f32.mrf.mxu0
      %v1657 = vpop.f32.mrf.mxu0
      %v1658 = vadd.f32 0.0, %v1657
      %v1659 = vpop.f32.mrf.mxu0
      %1660 = vmatprep.mubr.bf16.mxu0 0
      %1661 = vmatmul.mubr.bf16.gmra.mxu0 %v1443
      %v1662 = vpop.f32.mrf.mxu0
      %v1663 = vadd.f32 0.0, %v1662
      %v1664 = vpop.f32.mrf.mxu0
      %v1665 = vpop.f32.mrf.mxu0
      %v1666 = vadd.f32 0.0, %v1665
      %v1667 = vpop.f32.mrf.mxu0
      %1668 = vdwg.mxu0
      %v1669 = vadd.f32 %v1090, %v1543
      %v1670 = vadd.f32 %v1093, %v1546
      %v1671 = vadd.f32 %v1098, %v1551
      %v1672 = vadd.f32 %v1101, %v1554
      %v1673 = vadd.f32 %v1106, %v1559
      %v1674 = vadd.f32 %v1109, %v1562
      %v1675 = vadd.f32 %v1114, %v1567
      %v1676 = vadd.f32 %v1117, %v1570
      %v1677 = vadd.f32 %v1122, %v1575
      %v1678 = vadd.f32 %v1125, %v1578
      %v1679 = vadd.f32 %v1130, %v1583
      %v1680 = vadd.f32 %v1133, %v1586
      %v1681 = vadd.f32 %v1138, %v1591
      %v1682 = vadd.f32 %v1141, %v1594
      %v1683 = vadd.f32 %v1146, %v1599
      %v1684 = vadd.f32 %v1149, %v1602
      %v1685 = vadd.f32 %v1154, %v1607
      %v1686 = vadd.f32 %v1157, %v1610
      %v1687 = vadd.f32 %v1162, %v1615
      %v1688 = vadd.f32 %v1165, %v1618
      %v1689 = vadd.f32 %v1170, %v1623
      %v1690 = vadd.f32 %v1173, %v1626
      %v1691 = vadd.f32 %v1178, %v1631
      %v1692 = vadd.f32 %v1181, %v1634
      %v1693 = vadd.f32 %v1186, %v1639
      %v1694 = vadd.f32 %v1189, %v1642
      %v1695 = vadd.f32 %v1194, %v1647
      %v1696 = vadd.f32 %v1197, %v1650
      %v1697 = vadd.f32 %v1202, %v1655
      %v1698 = vadd.f32 %v1205, %v1658
      %v1699 = vadd.f32 %v1210, %v1663
      %v1700 = vadd.f32 %v1213, %v1666
      %s1701 = scalar_lea.vmem %s163, 12
      %v1702 = vld [vmem:[%s1701] sm:$0xf]
      %v1703 = vld [vmem:[%s1701 + $0x4] sm:$0xf]
      %v1704 = vld [vmem:[%s1701 + $0xc] sm:$0xf]
      %v1705 = vld [vmem:[%s1701 + $0x10] sm:$0xf]
      %v1706 = vld [vmem:[%s1701 + $0x18] sm:$0xf]
      %v1707 = vld [vmem:[%s1701 + $0x1c] sm:$0xf]
      %v1708 = vld [vmem:[%s1701 + $0x24] sm:$0xf]
      %v1709 = vld [vmem:[%s1701 + $0x28] sm:$0xf]
      %v1710 = vld [vmem:[%s1701 + $0x30] sm:$0xf]
      %v1711 = vld [vmem:[%s1701 + $0x34] sm:$0xf]
      %v1712 = vld [vmem:[%s1701 + $0x3c] sm:$0xf]
      %v1713 = vld [vmem:[%s1701 + $0x40] sm:$0xf]
      %v1714 = vld [vmem:[%s1701 + $0x48] sm:$0xf]
      %v1715 = vld [vmem:[%s1701 + $0x4c] sm:$0xf]
      %v1716 = vld [vmem:[%s1701 + $0x54] sm:$0xf]
      %v1717 = vld [vmem:[%s1701 + $0x58] sm:$0xf]
      %v1718 = vld [vmem:[%s1701 + $0x60] sm:$0xf]
      %v1719 = vld [vmem:[%s1701 + $0x64] sm:$0xf]
      %v1720 = vld [vmem:[%s1701 + $0x6c] sm:$0xf]
      %v1721 = vld [vmem:[%s1701 + $0x70] sm:$0xf]
      %v1722 = vld [vmem:[%s1701 + $0x78] sm:$0xf]
      %v1723 = vld [vmem:[%s1701 + $0x7c] sm:$0xf]
      %v1724 = vld [vmem:[%s1701 + $0x84] sm:$0xf]
      %v1725 = vld [vmem:[%s1701 + $0x88] sm:$0xf]
      %v1726 = vld [vmem:[%s1701 + $0x90] sm:$0xf]
      %v1727 = vld [vmem:[%s1701 + $0x94] sm:$0xf]
      %v1728 = vld [vmem:[%s1701 + $0x9c] sm:$0xf]
      %v1729 = vld [vmem:[%s1701 + $0xa0] sm:$0xf]
      %v1730 = vld [vmem:[%s1701 + $0xa8] sm:$0xf]
      %v1731 = vld [vmem:[%s1701 + $0xac] sm:$0xf]
      %v1732 = vld [vmem:[%s1701 + $0xb4] sm:$0xf]
      %v1733 = vld [vmem:[%s1701 + $0xb8] sm:$0xf]
      %s1734 = scalar_lea.vmem %s1, 192
      %v1735 = vld [vmem:[%s1734] sm:$0xf]
      %v1736 = vld [vmem:[%s1734 + $0x4] sm:$0xf]
      %v1737 = vld [vmem:[%s1734 + $0x8] sm:$0xf]
      %v1738 = vld [vmem:[%s1734 + $0xc] sm:$0xf]
      %v1739 = vld [vmem:[%s1734 + $0x10] sm:$0xf]
      %v1740 = vld [vmem:[%s1734 + $0x14] sm:$0xf]
      %v1741 = vld [vmem:[%s1734 + $0x18] sm:$0xf]
      %v1742 = vld [vmem:[%s1734 + $0x1c] sm:$0xf]
      %v1743 = vld [vmem:[%s1734 + $0x20] sm:$0xf]
      %v1744 = vld [vmem:[%s1734 + $0x24] sm:$0xf]
      %v1745 = vld [vmem:[%s1734 + $0x28] sm:$0xf]
      %v1746 = vld [vmem:[%s1734 + $0x2c] sm:$0xf]
      %v1747 = vld [vmem:[%s1734 + $0x30] sm:$0xf]
      %v1748 = vld [vmem:[%s1734 + $0x34] sm:$0xf]
      %v1749 = vld [vmem:[%s1734 + $0x38] sm:$0xf]
      %v1750 = vld [vmem:[%s1734 + $0x3c] sm:$0xf]
      %v1783 = vunpack.c.l.b16 %v1702
      %v1784 = vunpack.c.l.b16 %v1703
      %v1785 = vunpack.c.l.b16 %v1704
      %v1786 = vunpack.c.l.b16 %v1705
      %v1787 = vunpack.c.l.b16 %v1706
      %v1788 = vunpack.c.l.b16 %v1707
      %v1789 = vunpack.c.l.b16 %v1708
      %v1790 = vunpack.c.l.b16 %v1709
      %v1791 = vunpack.c.l.b16 %v1710
      %v1792 = vunpack.c.l.b16 %v1711
      %v1793 = vunpack.c.l.b16 %v1712
      %v1794 = vunpack.c.l.b16 %v1713
      %v1795 = vunpack.c.l.b16 %v1714
      %v1796 = vunpack.c.l.b16 %v1715
      %v1797 = vunpack.c.l.b16 %v1716
      %v1798 = vunpack.c.l.b16 %v1717
      %v1799 = vunpack.c.l.b16 %v1718
      %v1800 = vunpack.c.l.b16 %v1719
      %v1801 = vunpack.c.l.b16 %v1720
      %v1802 = vunpack.c.l.b16 %v1721
      %v1803 = vunpack.c.l.b16 %v1722
      %v1804 = vunpack.c.l.b16 %v1723
      %v1805 = vunpack.c.l.b16 %v1724
      %v1806 = vunpack.c.l.b16 %v1725
      %v1807 = vunpack.c.l.b16 %v1726
      %v1808 = vunpack.c.l.b16 %v1727
      %v1809 = vunpack.c.l.b16 %v1728
      %v1810 = vunpack.c.l.b16 %v1729
      %v1811 = vunpack.c.l.b16 %v1730
      %v1812 = vunpack.c.l.b16 %v1731
      %v1813 = vunpack.c.l.b16 %v1732
      %v1814 = vunpack.c.l.b16 %v1733
      %v1815 = vpack.c.b16 %v1784, %v1783
      %v1816 = vpack.c.b16 %v1786, %v1785
      %v1817 = vpack.c.b16 %v1788, %v1787
      %v1818 = vpack.c.b16 %v1790, %v1789
      %v1819 = vpack.c.b16 %v1792, %v1791
      %v1820 = vpack.c.b16 %v1794, %v1793
      %v1821 = vpack.c.b16 %v1796, %v1795
      %v1822 = vpack.c.b16 %v1798, %v1797
      %v1823 = vpack.c.b16 %v1800, %v1799
      %v1824 = vpack.c.b16 %v1802, %v1801
      %v1825 = vpack.c.b16 %v1804, %v1803
      %v1826 = vpack.c.b16 %v1806, %v1805
      %v1827 = vpack.c.b16 %v1808, %v1807
      %v1828 = vpack.c.b16 %v1810, %v1809
      %v1829 = vpack.c.b16 %v1812, %v1811
      %v1830 = vpack.c.b16 %v1814, %v1813
      %v1863 = vunpack.c.l.b16 %v1735
      %v1864 = vunpack.c.l.b16 %v1736
      %v1865 = vunpack.c.l.b16 %v1737
      %v1866 = vunpack.c.l.b16 %v1738
      %v1867 = vunpack.c.l.b16 %v1739
      %v1868 = vunpack.c.l.b16 %v1740
      %v1869 = vunpack.c.l.b16 %v1741
      %v1870 = vunpack.c.l.b16 %v1742
      %v1871 = vunpack.c.l.b16 %v1743
      %v1872 = vunpack.c.l.b16 %v1744
      %v1873 = vunpack.c.l.b16 %v1745
      %v1874 = vunpack.c.l.b16 %v1746
      %v1875 = vunpack.c.l.b16 %v1747
      %v1876 = vunpack.c.l.b16 %v1748
      %v1877 = vunpack.c.l.b16 %v1749
      %v1878 = vunpack.c.l.b16 %v1750
      %v1879 = vpack.c.b16 %v1864, %v1863
      %v1880 = vpack.c.b16 %v1866, %v1865
      %v1881 = vpack.c.b16 %v1868, %v1867
      %v1882 = vpack.c.b16 %v1870, %v1869
      %v1883 = vpack.c.b16 %v1872, %v1871
      %v1884 = vpack.c.b16 %v1874, %v1873
      %v1885 = vpack.c.b16 %v1876, %v1875
      %v1886 = vpack.c.b16 %v1878, %v1877
      %1895 = vmatprep.subr.bf16.mxu0 0
      %1896 = vmatpush1.bf16.msra.mxu0 %v1886
      %1897 = vmatprep.subr.bf16.mxu0 0
      %1898 = vmatpush1.bf16.msra.mxu0 %v1885
      %1899 = vmatprep.subr.bf16.mxu0 0
      %1900 = vmatpush1.bf16.msra.mxu0 %v1884
      %1901 = vmatprep.subr.bf16.mxu0 0
      %1902 = vmatpush1.bf16.msra.mxu0 %v1883
      %1903 = vmatprep.subr.bf16.mxu0 0
      %1904 = vmatpush1.bf16.msra.mxu0 %v1882
      %1905 = vmatprep.subr.bf16.mxu0 0
      %1906 = vmatpush1.bf16.msra.mxu0 %v1881
      %1907 = vmatprep.subr.bf16.mxu0 0
      %1908 = vmatpush1.bf16.msra.mxu0 %v1880
      %1909 = vmatprep.subr.bf16.mxu0 0
      %1910 = vmatpush1.bf16.msra.mxu0 %v1879
      %1911 = vmatprep.subr.bf16.mxu0 0
      %1912 = vmatpush2.bf16.msra.mxu0 0
      %1913 = vmatprep.subr.bf16.mxu0 0
      %1914 = vmatpush2.bf16.msra.mxu0 0
      %1915 = vmatprep.subr.bf16.mxu0 0
      %1916 = vmatpush2.bf16.msra.mxu0 0
      %1917 = vmatprep.subr.bf16.mxu0 0
      %1918 = vmatpush2.bf16.msra.mxu0 0
      %1919 = vmatprep.subr.bf16.mxu0 0
      %1920 = vmatpush2.bf16.msra.mxu0 0
      %1921 = vmatprep.subr.bf16.mxu0 0
      %1922 = vmatpush2.bf16.msra.mxu0 0
      %1923 = vmatprep.subr.bf16.mxu0 0
      %1924 = vmatpush2.bf16.msra.mxu0 0
      %1925 = vmatprep.subr.bf16.mxu0 0
      %1926 = vmatpush2.bf16.msra.mxu0 0
      %1927 = vmatprep.mubr.bf16.mxu0 0
      %1928 = vmatmul.mubr.bf16.gmra.mxu0 %v1815
      %v1929 = vpop.f32.mrf.mxu0
      %v1930 = vadd.f32 0.0, %v1929
      %v1931 = vpop.f32.mrf.mxu0
      %v1932 = vpop.f32.mrf.mxu0
      %v1933 = vadd.f32 0.0, %v1932
      %v1934 = vpop.f32.mrf.mxu0
      %1935 = vmatprep.mubr.bf16.mxu0 0
      %1936 = vmatmul.mubr.bf16.gmra.mxu0 %v1816
      %v1937 = vpop.f32.mrf.mxu0
      %v1938 = vadd.f32 0.0, %v1937
      %v1939 = vpop.f32.mrf.mxu0
      %v1940 = vpop.f32.mrf.mxu0
      %v1941 = vadd.f32 0.0, %v1940
      %v1942 = vpop.f32.mrf.mxu0
      %1943 = vmatprep.mubr.bf16.mxu0 0
      %1944 = vmatmul.mubr.bf16.gmra.mxu0 %v1817
      %v1945 = vpop.f32.mrf.mxu0
      %v1946 = vadd.f32 0.0, %v1945
      %v1947 = vpop.f32.mrf.mxu0
      %v1948 = vpop.f32.mrf.mxu0
      %v1949 = vadd.f32 0.0, %v1948
      %v1950 = vpop.f32.mrf.mxu0
      %1951 = vmatprep.mubr.bf16.mxu0 0
      %1952 = vmatmul.mubr.bf16.gmra.mxu0 %v1818
      %v1953 = vpop.f32.mrf.mxu0
      %v1954 = vadd.f32 0.0, %v1953
      %v1955 = vpop.f32.mrf.mxu0
      %v1956 = vpop.f32.mrf.mxu0
      %v1957 = vadd.f32 0.0, %v1956
      %v1958 = vpop.f32.mrf.mxu0
      %1959 = vmatprep.mubr.bf16.mxu0 0
      %1960 = vmatmul.mubr.bf16.gmra.mxu0 %v1819
      %v1961 = vpop.f32.mrf.mxu0
      %v1962 = vadd.f32 0.0, %v1961
      %v1963 = vpop.f32.mrf.mxu0
      %v1964 = vpop.f32.mrf.mxu0
      %v1965 = vadd.f32 0.0, %v1964
      %v1966 = vpop.f32.mrf.mxu0
      %1967 = vmatprep.mubr.bf16.mxu0 0
      %1968 = vmatmul.mubr.bf16.gmra.mxu0 %v1820
      %v1969 = vpop.f32.mrf.mxu0
      %v1970 = vadd.f32 0.0, %v1969
      %v1971 = vpop.f32.mrf.mxu0
      %v1972 = vpop.f32.mrf.mxu0
      %v1973 = vadd.f32 0.0, %v1972
      %v1974 = vpop.f32.mrf.mxu0
      %1975 = vmatprep.mubr.bf16.mxu0 0
      %1976 = vmatmul.mubr.bf16.gmra.mxu0 %v1821
      %v1977 = vpop.f32.mrf.mxu0
      %v1978 = vadd.f32 0.0, %v1977
      %v1979 = vpop.f32.mrf.mxu0
      %v1980 = vpop.f32.mrf.mxu0
      %v1981 = vadd.f32 0.0, %v1980
      %v1982 = vpop.f32.mrf.mxu0
      %1983 = vmatprep.mubr.bf16.mxu0 0
      %1984 = vmatmul.mubr.bf16.gmra.mxu0 %v1822
      %v1985 = vpop.f32.mrf.mxu0
      %v1986 = vadd.f32 0.0, %v1985
      %v1987 = vpop.f32.mrf.mxu0
      %v1988 = vpop.f32.mrf.mxu0
      %v1989 = vadd.f32 0.0, %v1988
      %v1990 = vpop.f32.mrf.mxu0
      %1991 = vmatprep.mubr.bf16.mxu0 0
      %1992 = vmatmul.mubr.bf16.gmra.mxu0 %v1823
      %v1993 = vpop.f32.mrf.mxu0
      %v1994 = vadd.f32 0.0, %v1993
      %v1995 = vpop.f32.mrf.mxu0
      %v1996 = vpop.f32.mrf.mxu0
      %v1997 = vadd.f32 0.0, %v1996
      %v1998 = vpop.f32.mrf.mxu0
      %1999 = vmatprep.mubr.bf16.mxu0 0
      %2000 = vmatmul.mubr.bf16.gmra.mxu0 %v1824
      %v2001 = vpop.f32.mrf.mxu0
      %v2002 = vadd.f32 0.0, %v2001
      %v2003 = vpop.f32.mrf.mxu0
      %v2004 = vpop.f32.mrf.mxu0
      %v2005 = vadd.f32 0.0, %v2004
      %v2006 = vpop.f32.mrf.mxu0
      %2007 = vmatprep.mubr.bf16.mxu0 0
      %2008 = vmatmul.mubr.bf16.gmra.mxu0 %v1825
      %v2009 = vpop.f32.mrf.mxu0
      %v2010 = vadd.f32 0.0, %v2009
      %v2011 = vpop.f32.mrf.mxu0
      %v2012 = vpop.f32.mrf.mxu0
      %v2013 = vadd.f32 0.0, %v2012
      %v2014 = vpop.f32.mrf.mxu0
      %2015 = vmatprep.mubr.bf16.mxu0 0
      %2016 = vmatmul.mubr.bf16.gmra.mxu0 %v1826
      %v2017 = vpop.f32.mrf.mxu0
      %v2018 = vadd.f32 0.0, %v2017
      %v2019 = vpop.f32.mrf.mxu0
      %v2020 = vpop.f32.mrf.mxu0
      %v2021 = vadd.f32 0.0, %v2020
      %v2022 = vpop.f32.mrf.mxu0
      %2023 = vmatprep.mubr.bf16.mxu0 0
      %2024 = vmatmul.mubr.bf16.gmra.mxu0 %v1827
      %v2025 = vpop.f32.mrf.mxu0
      %v2026 = vadd.f32 0.0, %v2025
      %v2027 = vpop.f32.mrf.mxu0
      %v2028 = vpop.f32.mrf.mxu0
      %v2029 = vadd.f32 0.0, %v2028
      %v2030 = vpop.f32.mrf.mxu0
      %2031 = vmatprep.mubr.bf16.mxu0 0
      %2032 = vmatmul.mubr.bf16.gmra.mxu0 %v1828
      %v2033 = vpop.f32.mrf.mxu0
      %v2034 = vadd.f32 0.0, %v2033
      %v2035 = vpop.f32.mrf.mxu0
      %v2036 = vpop.f32.mrf.mxu0
      %v2037 = vadd.f32 0.0, %v2036
      %v2038 = vpop.f32.mrf.mxu0
      %2039 = vmatprep.mubr.bf16.mxu0 0
      %2040 = vmatmul.mubr.bf16.gmra.mxu0 %v1829
      %v2041 = vpop.f32.mrf.mxu0
      %v2042 = vadd.f32 0.0, %v2041
      %v2043 = vpop.f32.mrf.mxu0
      %v2044 = vpop.f32.mrf.mxu0
      %v2045 = vadd.f32 0.0, %v2044
      %v2046 = vpop.f32.mrf.mxu0
      %2047 = vmatprep.mubr.bf16.mxu0 0
      %2048 = vmatmul.mubr.bf16.gmra.mxu0 %v1830
      %v2049 = vpop.f32.mrf.mxu0
      %v2050 = vadd.f32 0.0, %v2049
      %v2051 = vpop.f32.mrf.mxu0
      %v2052 = vpop.f32.mrf.mxu0
      %v2053 = vadd.f32 0.0, %v2052
      %v2054 = vpop.f32.mrf.mxu0
      %2055 = vdwg.mxu0
      %v2056 = vadd.f32 %v1669, %v1930
      %v2057 = vadd.f32 %v1670, %v1933
      %v2058 = vadd.f32 %v1671, %v1938
      %v2059 = vadd.f32 %v1672, %v1941
      %v2060 = vadd.f32 %v1673, %v1946
      %v2061 = vadd.f32 %v1674, %v1949
      %v2062 = vadd.f32 %v1675, %v1954
      %v2063 = vadd.f32 %v1676, %v1957
      %v2064 = vadd.f32 %v1677, %v1962
      %v2065 = vadd.f32 %v1678, %v1965
      %v2066 = vadd.f32 %v1679, %v1970
      %v2067 = vadd.f32 %v1680, %v1973
      %v2068 = vadd.f32 %v1681, %v1978
      %v2069 = vadd.f32 %v1682, %v1981
      %v2070 = vadd.f32 %v1683, %v1986
      %v2071 = vadd.f32 %v1684, %v1989
      %v2072 = vadd.f32 %v1685, %v1994
      %v2073 = vadd.f32 %v1686, %v1997
      %v2074 = vadd.f32 %v1687, %v2002
      %v2075 = vadd.f32 %v1688, %v2005
      %v2076 = vadd.f32 %v1689, %v2010
      %v2077 = vadd.f32 %v1690, %v2013
      %v2078 = vadd.f32 %v1691, %v2018
      %v2079 = vadd.f32 %v1692, %v2021
      %v2080 = vadd.f32 %v1693, %v2026
      %v2081 = vadd.f32 %v1694, %v2029
      %v2082 = vadd.f32 %v1695, %v2034
      %v2083 = vadd.f32 %v1696, %v2037
      %v2084 = vadd.f32 %v1697, %v2042
      %v2085 = vadd.f32 %v1698, %v2045
      %v2086 = vadd.f32 %v1699, %v2050
      %v2087 = vadd.f32 %v1700, %v2053
      %v2088 = vld [vmem:[%s1701] sm:$0xf]
      %v2089 = vld [vmem:[%s1701 + $0x4] sm:$0xf]
      %v2090 = vld [vmem:[%s1701 + $0x8] sm:$0x1]
      %v2091 = vld [vmem:[%s1701 + $0xc] sm:$0xf]
      %v2092 = vld [vmem:[%s1701 + $0x10] sm:$0xf]
      %v2093 = vld [vmem:[%s1701 + $0x14] sm:$0x1]
      %v2094 = vld [vmem:[%s1701 + $0x18] sm:$0xf]
      %v2095 = vld [vmem:[%s1701 + $0x1c] sm:$0xf]
      %v2096 = vld [vmem:[%s1701 + $0x20] sm:$0x1]
      %v2097 = vld [vmem:[%s1701 + $0x24] sm:$0xf]
      %v2098 = vld [vmem:[%s1701 + $0x28] sm:$0xf]
      %v2099 = vld [vmem:[%s1701 + $0x2c] sm:$0x1]
      %v2100 = vld [vmem:[%s1701 + $0x30] sm:$0xf]
      %v2101 = vld [vmem:[%s1701 + $0x34] sm:$0xf]
      %v2102 = vld [vmem:[%s1701 + $0x38] sm:$0x1]
      %v2103 = vld [vmem:[%s1701 + $0x3c] sm:$0xf]
      %v2104 = vld [vmem:[%s1701 + $0x40] sm:$0xf]
      %v2105 = vld [vmem:[%s1701 + $0x44] sm:$0x1]
      %v2106 = vld [vmem:[%s1701 + $0x48] sm:$0xf]
      %v2107 = vld [vmem:[%s1701 + $0x4c] sm:$0xf]
      %v2108 = vld [vmem:[%s1701 + $0x50] sm:$0x1]
      %v2109 = vld [vmem:[%s1701 + $0x54] sm:$0xf]
      %v2110 = vld [vmem:[%s1701 + $0x58] sm:$0xf]
      %v2111 = vld [vmem:[%s1701 + $0x5c] sm:$0x1]
      %v2112 = vld [vmem:[%s1701 + $0x60] sm:$0xf]
      %v2113 = vld [vmem:[%s1701 + $0x64] sm:$0xf]
      %v2114 = vld [vmem:[%s1701 + $0x68] sm:$0x1]
      %v2115 = vld [vmem:[%s1701 + $0x6c] sm:$0xf]
      %v2116 = vld [vmem:[%s1701 + $0x70] sm:$0xf]
      %v2117 = vld [vmem:[%s1701 + $0x74] sm:$0x1]
      %v2118 = vld [vmem:[%s1701 + $0x78] sm:$0xf]
      %v2119 = vld [vmem:[%s1701 + $0x7c] sm:$0xf]
      %v2120 = vld [vmem:[%s1701 + $0x80] sm:$0x1]
      %v2121 = vld [vmem:[%s1701 + $0x84] sm:$0xf]
      %v2122 = vld [vmem:[%s1701 + $0x88] sm:$0xf]
      %v2123 = vld [vmem:[%s1701 + $0x8c] sm:$0x1]
      %v2124 = vld [vmem:[%s1701 + $0x90] sm:$0xf]
      %v2125 = vld [vmem:[%s1701 + $0x94] sm:$0xf]
      %v2126 = vld [vmem:[%s1701 + $0x98] sm:$0x1]
      %v2127 = vld [vmem:[%s1701 + $0x9c] sm:$0xf]
      %v2128 = vld [vmem:[%s1701 + $0xa0] sm:$0xf]
      %v2129 = vld [vmem:[%s1701 + $0xa4] sm:$0x1]
      %v2130 = vld [vmem:[%s1701 + $0xa8] sm:$0xf]
      %v2131 = vld [vmem:[%s1701 + $0xac] sm:$0xf]
      %v2132 = vld [vmem:[%s1701 + $0xb0] sm:$0x1]
      %v2133 = vld [vmem:[%s1701 + $0xb4] sm:$0xf]
      %v2134 = vld [vmem:[%s1701 + $0xb8] sm:$0xf]
      %v2135 = vld [vmem:[%s1701 + $0xbc] sm:$0x1]
      %v2137 = vshrl.u32 %v2088, 16
      %v2139 = vrot.slane %v2137, 4
      %v2140 = vshll.u32 %v2088, 16
      %v2142 = vrot.slane %v2140, 5
      %v2143 = vor.u32 %v2139, %v2142
      %v2144 = vrot.slane %v2143, 4
      %v2146 = vshll.u32 %v2089, 16
      %v2148 = vrot.slane %v2146, 5
      %v2149 = vsel %vm236, %v2144, %v2148
      %v2150 = vshrl.u32 %v2089, 16
      %v2152 = vrot.slane %v2150, 4
      %v2153 = vor.u32 %v2152, %v2148
      %v2154 = vrot.slane %v2153, 4
      %v2156 = vshll.u32 %v2090, 16
      %v2158 = vrot.slane %v2156, 5
      %v2159 = vsel %vm236, %v2154, %v2158
      %v2161 = vshrl.u32 %v2091, 16
      %v2163 = vrot.slane %v2161, 4
      %v2164 = vshll.u32 %v2091, 16
      %v2166 = vrot.slane %v2164, 5
      %v2167 = vor.u32 %v2163, %v2166
      %v2168 = vrot.slane %v2167, 4
      %v2170 = vshll.u32 %v2092, 16
      %v2172 = vrot.slane %v2170, 5
      %v2173 = vsel %vm236, %v2168, %v2172
      %v2174 = vshrl.u32 %v2092, 16
      %v2176 = vrot.slane %v2174, 4
      %v2177 = vor.u32 %v2176, %v2172
      %v2178 = vrot.slane %v2177, 4
      %v2180 = vshll.u32 %v2093, 16
      %v2182 = vrot.slane %v2180, 5
      %v2183 = vsel %vm236, %v2178, %v2182
      %v2185 = vshrl.u32 %v2094, 16
      %v2187 = vrot.slane %v2185, 4
      %v2188 = vshll.u32 %v2094, 16
      %v2190 = vrot.slane %v2188, 5
      %v2191 = vor.u32 %v2187, %v2190
      %v2192 = vrot.slane %v2191, 4
      %v2194 = vshll.u32 %v2095, 16
      %v2196 = vrot.slane %v2194, 5
      %v2197 = vsel %vm236, %v2192, %v2196
      %v2198 = vshrl.u32 %v2095, 16
      %v2200 = vrot.slane %v2198, 4
      %v2201 = vor.u32 %v2200, %v2196
      %v2202 = vrot.slane %v2201, 4
      %v2204 = vshll.u32 %v2096, 16
      %v2206 = vrot.slane %v2204, 5
      %v2207 = vsel %vm236, %v2202, %v2206
      %v2209 = vshrl.u32 %v2097, 16
      %v2211 = vrot.slane %v2209, 4
      %v2212 = vshll.u32 %v2097, 16
      %v2214 = vrot.slane %v2212, 5
      %v2215 = vor.u32 %v2211, %v2214
      %v2216 = vrot.slane %v2215, 4
      %v2218 = vshll.u32 %v2098, 16
      %v2220 = vrot.slane %v2218, 5
      %v2221 = vsel %vm236, %v2216, %v2220
      %v2222 = vshrl.u32 %v2098, 16
      %v2224 = vrot.slane %v2222, 4
      %v2225 = vor.u32 %v2224, %v2220
      %v2226 = vrot.slane %v2225, 4
      %v2228 = vshll.u32 %v2099, 16
      %v2230 = vrot.slane %v2228, 5
      %v2231 = vsel %vm236, %v2226, %v2230
      %v2233 = vshrl.u32 %v2100, 16
      %v2235 = vrot.slane %v2233, 4
      %v2236 = vshll.u32 %v2100, 16
      %v2238 = vrot.slane %v2236, 5
      %v2239 = vor.u32 %v2235, %v2238
      %v2240 = vrot.slane %v2239, 4
      %v2242 = vshll.u32 %v2101, 16
      %v2244 = vrot.slane %v2242, 5
      %v2245 = vsel %vm236, %v2240, %v2244
      %v2246 = vshrl.u32 %v2101, 16
      %v2248 = vrot.slane %v2246, 4
      %v2249 = vor.u32 %v2248, %v2244
      %v2250 = vrot.slane %v2249, 4
      %v2252 = vshll.u32 %v2102, 16
      %v2254 = vrot.slane %v2252, 5
      %v2255 = vsel %vm236, %v2250, %v2254
      %v2257 = vshrl.u32 %v2103, 16
      %v2259 = vrot.slane %v2257, 4
      %v2260 = vshll.u32 %v2103, 16
      %v2262 = vrot.slane %v2260, 5
      %v2263 = vor.u32 %v2259, %v2262
      %v2264 = vrot.slane %v2263, 4
      %v2266 = vshll.u32 %v2104, 16
      %v2268 = vrot.slane %v2266, 5
      %v2269 = vsel %vm236, %v2264, %v2268
      %v2270 = vshrl.u32 %v2104, 16
      %v2272 = vrot.slane %v2270, 4
      %v2273 = vor.u32 %v2272, %v2268
      %v2274 = vrot.slane %v2273, 4
      %v2276 = vshll.u32 %v2105, 16
      %v2278 = vrot.slane %v2276, 5
      %v2279 = vsel %vm236, %v2274, %v2278
      %v2281 = vshrl.u32 %v2106, 16
      %v2283 = vrot.slane %v2281, 4
      %v2284 = vshll.u32 %v2106, 16
      %v2286 = vrot.slane %v2284, 5
      %v2287 = vor.u32 %v2283, %v2286
      %v2288 = vrot.slane %v2287, 4
      %v2290 = vshll.u32 %v2107, 16
      %v2292 = vrot.slane %v2290, 5
      %v2293 = vsel %vm236, %v2288, %v2292
      %v2294 = vshrl.u32 %v2107, 16
      %v2296 = vrot.slane %v2294, 4
      %v2297 = vor.u32 %v2296, %v2292
      %v2298 = vrot.slane %v2297, 4
      %v2300 = vshll.u32 %v2108, 16
      %v2302 = vrot.slane %v2300, 5
      %v2303 = vsel %vm236, %v2298, %v2302
      %v2305 = vshrl.u32 %v2109, 16
      %v2307 = vrot.slane %v2305, 4
      %v2308 = vshll.u32 %v2109, 16
      %v2310 = vrot.slane %v2308, 5
      %v2311 = vor.u32 %v2307, %v2310
      %v2312 = vrot.slane %v2311, 4
      %v2314 = vshll.u32 %v2110, 16
      %v2316 = vrot.slane %v2314, 5
      %v2317 = vsel %vm236, %v2312, %v2316
      %v2318 = vshrl.u32 %v2110, 16
      %v2320 = vrot.slane %v2318, 4
      %v2321 = vor.u32 %v2320, %v2316
      %v2322 = vrot.slane %v2321, 4
      %v2324 = vshll.u32 %v2111, 16
      %v2326 = vrot.slane %v2324, 5
      %v2327 = vsel %vm236, %v2322, %v2326
      %v2329 = vshrl.u32 %v2112, 16
      %v2331 = vrot.slane %v2329, 4
      %v2332 = vshll.u32 %v2112, 16
      %v2334 = vrot.slane %v2332, 5
      %v2335 = vor.u32 %v2331, %v2334
      %v2336 = vrot.slane %v2335, 4
      %v2338 = vshll.u32 %v2113, 16
      %v2340 = vrot.slane %v2338, 5
      %v2341 = vsel %vm236, %v2336, %v2340
      %v2342 = vshrl.u32 %v2113, 16
      %v2344 = vrot.slane %v2342, 4
      %v2345 = vor.u32 %v2344, %v2340
      %v2346 = vrot.slane %v2345, 4
      %v2348 = vshll.u32 %v2114, 16
      %v2350 = vrot.slane %v2348, 5
      %v2351 = vsel %vm236, %v2346, %v2350
      %v2353 = vshrl.u32 %v2115, 16
      %v2355 = vrot.slane %v2353, 4
      %v2356 = vshll.u32 %v2115, 16
      %v2358 = vrot.slane %v2356, 5
      %v2359 = vor.u32 %v2355, %v2358
      %v2360 = vrot.slane %v2359, 4
      %v2362 = vshll.u32 %v2116, 16
      %v2364 = vrot.slane %v2362, 5
      %v2365 = vsel %vm236, %v2360, %v2364
      %v2366 = vshrl.u32 %v2116, 16
      %v2368 = vrot.slane %v2366, 4
      %v2369 = vor.u32 %v2368, %v2364
      %v2370 = vrot.slane %v2369, 4
      %v2372 = vshll.u32 %v2117, 16
      %v2374 = vrot.slane %v2372, 5
      %v2375 = vsel %vm236, %v2370, %v2374
      %v2377 = vshrl.u32 %v2118, 16
      %v2379 = vrot.slane %v2377, 4
      %v2380 = vshll.u32 %v2118, 16
      %v2382 = vrot.slane %v2380, 5
      %v2383 = vor.u32 %v2379, %v2382
      %v2384 = vrot.slane %v2383, 4
      %v2386 = vshll.u32 %v2119, 16
      %v2388 = vrot.slane %v2386, 5
      %v2389 = vsel %vm236, %v2384, %v2388
      %v2390 = vshrl.u32 %v2119, 16
      %v2392 = vrot.slane %v2390, 4
      %v2393 = vor.u32 %v2392, %v2388
      %v2394 = vrot.slane %v2393, 4
      %v2396 = vshll.u32 %v2120, 16
      %v2398 = vrot.slane %v2396, 5
      %v2399 = vsel %vm236, %v2394, %v2398
      %v2401 = vshrl.u32 %v2121, 16
      %v2403 = vrot.slane %v2401, 4
      %v2404 = vshll.u32 %v2121, 16
      %v2406 = vrot.slane %v2404, 5
      %v2407 = vor.u32 %v2403, %v2406
      %v2408 = vrot.slane %v2407, 4
      %v2410 = vshll.u32 %v2122, 16
      %v2412 = vrot.slane %v2410, 5
      %v2413 = vsel %vm236, %v2408, %v2412
      %v2414 = vshrl.u32 %v2122, 16
      %v2416 = vrot.slane %v2414, 4
      %v2417 = vor.u32 %v2416, %v2412
      %v2418 = vrot.slane %v2417, 4
      %v2420 = vshll.u32 %v2123, 16
      %v2422 = vrot.slane %v2420, 5
      %v2423 = vsel %vm236, %v2418, %v2422
      %v2425 = vshrl.u32 %v2124, 16
      %v2427 = vrot.slane %v2425, 4
      %v2428 = vshll.u32 %v2124, 16
      %v2430 = vrot.slane %v2428, 5
      %v2431 = vor.u32 %v2427, %v2430
      %v2432 = vrot.slane %v2431, 4
      %v2434 = vshll.u32 %v2125, 16
      %v2436 = vrot.slane %v2434, 5
      %v2437 = vsel %vm236, %v2432, %v2436
      %v2438 = vshrl.u32 %v2125, 16
      %v2440 = vrot.slane %v2438, 4
      %v2441 = vor.u32 %v2440, %v2436
      %v2442 = vrot.slane %v2441, 4
      %v2444 = vshll.u32 %v2126, 16
      %v2446 = vrot.slane %v2444, 5
      %v2447 = vsel %vm236, %v2442, %v2446
      %v2449 = vshrl.u32 %v2127, 16
      %v2451 = vrot.slane %v2449, 4
      %v2452 = vshll.u32 %v2127, 16
      %v2454 = vrot.slane %v2452, 5
      %v2455 = vor.u32 %v2451, %v2454
      %v2456 = vrot.slane %v2455, 4
      %v2458 = vshll.u32 %v2128, 16
      %v2460 = vrot.slane %v2458, 5
      %v2461 = vsel %vm236, %v2456, %v2460
      %v2462 = vshrl.u32 %v2128, 16
      %v2464 = vrot.slane %v2462, 4
      %v2465 = vor.u32 %v2464, %v2460
      %v2466 = vrot.slane %v2465, 4
      %v2468 = vshll.u32 %v2129, 16
      %v2470 = vrot.slane %v2468, 5
      %v2471 = vsel %vm236, %v2466, %v2470
      %v2473 = vshrl.u32 %v2130, 16
      %v2475 = vrot.slane %v2473, 4
      %v2476 = vshll.u32 %v2130, 16
      %v2478 = vrot.slane %v2476, 5
      %v2479 = vor.u32 %v2475, %v2478
      %v2480 = vrot.slane %v2479, 4
      %v2482 = vshll.u32 %v2131, 16
      %v2484 = vrot.slane %v2482, 5
      %v2485 = vsel %vm236, %v2480, %v2484
      %v2486 = vshrl.u32 %v2131, 16
      %v2488 = vrot.slane %v2486, 4
      %v2489 = vor.u32 %v2488, %v2484
      %v2490 = vrot.slane %v2489, 4
      %v2492 = vshll.u32 %v2132, 16
      %v2494 = vrot.slane %v2492, 5
      %v2495 = vsel %vm236, %v2490, %v2494
      %v2497 = vshrl.u32 %v2133, 16
      %v2499 = vrot.slane %v2497, 4
      %v2500 = vshll.u32 %v2133, 16
      %v2502 = vrot.slane %v2500, 5
      %v2503 = vor.u32 %v2499, %v2502
      %v2504 = vrot.slane %v2503, 4
      %v2506 = vshll.u32 %v2134, 16
      %v2508 = vrot.slane %v2506, 5
      %v2509 = vsel %vm236, %v2504, %v2508
      %v2510 = vshrl.u32 %v2134, 16
      %v2512 = vrot.slane %v2510, 4
      %v2513 = vor.u32 %v2512, %v2508
      %v2514 = vrot.slane %v2513, 4
      %v2516 = vshll.u32 %v2135, 16
      %v2518 = vrot.slane %v2516, 5
      %v2519 = vsel %vm236, %v2514, %v2518
      %s2520 = scalar_lea.vmem %s1, 256
      %v2521 = vld [vmem:[%s2520] sm:$0xf]
      %v2522 = vld [vmem:[%s2520 + $0x4] sm:$0xf]
      %v2523 = vld [vmem:[%s2520 + $0x8] sm:$0xf]
      %v2524 = vld [vmem:[%s2520 + $0xc] sm:$0xf]
      %v2525 = vld [vmem:[%s2520 + $0x10] sm:$0xf]
      %v2526 = vld [vmem:[%s2520 + $0x14] sm:$0xf]
      %v2527 = vld [vmem:[%s2520 + $0x18] sm:$0xf]
      %v2528 = vld [vmem:[%s2520 + $0x1c] sm:$0xf]
      %v2529 = vld [vmem:[%s2520 + $0x20] sm:$0xf]
      %v2530 = vld [vmem:[%s2520 + $0x24] sm:$0xf]
      %v2531 = vld [vmem:[%s2520 + $0x28] sm:$0xf]
      %v2532 = vld [vmem:[%s2520 + $0x2c] sm:$0xf]
      %v2533 = vld [vmem:[%s2520 + $0x30] sm:$0xf]
      %v2534 = vld [vmem:[%s2520 + $0x34] sm:$0xf]
      %v2535 = vld [vmem:[%s2520 + $0x38] sm:$0xf]
      %v2536 = vld [vmem:[%s2520 + $0x3c] sm:$0xf]
      %v2537 = vunpack.c.l.b16 %v2149
      %v2538 = vunpack.c.l.b16 %v2159
      %v2539 = vunpack.c.l.b16 %v2173
      %v2540 = vunpack.c.l.b16 %v2183
      %v2541 = vunpack.c.l.b16 %v2197
      %v2542 = vunpack.c.l.b16 %v2207
      %v2543 = vunpack.c.l.b16 %v2221
      %v2544 = vunpack.c.l.b16 %v2231
      %v2545 = vunpack.c.l.b16 %v2245
      %v2546 = vunpack.c.l.b16 %v2255
      %v2547 = vunpack.c.l.b16 %v2269
      %v2548 = vunpack.c.l.b16 %v2279
      %v2549 = vunpack.c.l.b16 %v2293
      %v2550 = vunpack.c.l.b16 %v2303
      %v2551 = vunpack.c.l.b16 %v2317
      %v2552 = vunpack.c.l.b16 %v2327
      %v2553 = vunpack.c.l.b16 %v2341
      %v2554 = vunpack.c.l.b16 %v2351
      %v2555 = vunpack.c.l.b16 %v2365
      %v2556 = vunpack.c.l.b16 %v2375
      %v2557 = vunpack.c.l.b16 %v2389
      %v2558 = vunpack.c.l.b16 %v2399
      %v2559 = vunpack.c.l.b16 %v2413
      %v2560 = vunpack.c.l.b16 %v2423
      %v2561 = vunpack.c.l.b16 %v2437
      %v2562 = vunpack.c.l.b16 %v2447
      %v2563 = vunpack.c.l.b16 %v2461
      %v2564 = vunpack.c.l.b16 %v2471
      %v2565 = vunpack.c.l.b16 %v2485
      %v2566 = vunpack.c.l.b16 %v2495
      %v2567 = vunpack.c.l.b16 %v2509
      %v2568 = vunpack.c.l.b16 %v2519
      %v2569 = vpack.c.b16 %v2538, %v2537
      %v2570 = vpack.c.b16 %v2540, %v2539
      %v2571 = vpack.c.b16 %v2542, %v2541
      %v2572 = vpack.c.b16 %v2544, %v2543
      %v2573 = vpack.c.b16 %v2546, %v2545
      %v2574 = vpack.c.b16 %v2548, %v2547
      %v2575 = vpack.c.b16 %v2550, %v2549
      %v2576 = vpack.c.b16 %v2552, %v2551
      %v2577 = vpack.c.b16 %v2554, %v2553
      %v2578 = vpack.c.b16 %v2556, %v2555
      %v2579 = vpack.c.b16 %v2558, %v2557
      %v2580 = vpack.c.b16 %v2560, %v2559
      %v2581 = vpack.c.b16 %v2562, %v2561
      %v2582 = vpack.c.b16 %v2564, %v2563
      %v2583 = vpack.c.b16 %v2566, %v2565
      %v2584 = vpack.c.b16 %v2568, %v2567
      %v2617 = vunpack.c.l.b16 %v2521
      %v2618 = vunpack.c.l.b16 %v2522
      %v2619 = vunpack.c.l.b16 %v2523
      %v2620 = vunpack.c.l.b16 %v2524
      %v2621 = vunpack.c.l.b16 %v2525
      %v2622 = vunpack.c.l.b16 %v2526
      %v2623 = vunpack.c.l.b16 %v2527
      %v2624 = vunpack.c.l.b16 %v2528
      %v2625 = vunpack.c.l.b16 %v2529
      %v2626 = vunpack.c.l.b16 %v2530
      %v2627 = vunpack.c.l.b16 %v2531
      %v2628 = vunpack.c.l.b16 %v2532
      %v2629 = vunpack.c.l.b16 %v2533
      %v2630 = vunpack.c.l.b16 %v2534
      %v2631 = vunpack.c.l.b16 %v2535
      %v2632 = vunpack.c.l.b16 %v2536
      %v2633 = vpack.c.b16 %v2618, %v2617
      %v2634 = vpack.c.b16 %v2620, %v2619
      %v2635 = vpack.c.b16 %v2622, %v2621
      %v2636 = vpack.c.b16 %v2624, %v2623
      %v2637 = vpack.c.b16 %v2626, %v2625
      %v2638 = vpack.c.b16 %v2628, %v2627
      %v2639 = vpack.c.b16 %v2630, %v2629
      %v2640 = vpack.c.b16 %v2632, %v2631
      %2649 = vmatprep.subr.bf16.mxu0 0
      %2650 = vmatpush1.bf16.msra.mxu0 %v2640
      %2651 = vmatprep.subr.bf16.mxu0 0
      %2652 = vmatpush1.bf16.msra.mxu0 %v2639
      %2653 = vmatprep.subr.bf16.mxu0 0
      %2654 = vmatpush1.bf16.msra.mxu0 %v2638
      %2655 = vmatprep.subr.bf16.mxu0 0
      %2656 = vmatpush1.bf16.msra.mxu0 %v2637
      %2657 = vmatprep.subr.bf16.mxu0 0
      %2658 = vmatpush1.bf16.msra.mxu0 %v2636
      %2659 = vmatprep.subr.bf16.mxu0 0
      %2660 = vmatpush1.bf16.msra.mxu0 %v2635
      %2661 = vmatprep.subr.bf16.mxu0 0
      %2662 = vmatpush1.bf16.msra.mxu0 %v2634
      %2663 = vmatprep.subr.bf16.mxu0 0
      %2664 = vmatpush1.bf16.msra.mxu0 %v2633
      %2665 = vmatprep.subr.bf16.mxu0 0
      %2666 = vmatpush2.bf16.msra.mxu0 0
      %2667 = vmatprep.subr.bf16.mxu0 0
      %2668 = vmatpush2.bf16.msra.mxu0 0
      %2669 = vmatprep.subr.bf16.mxu0 0
      %2670 = vmatpush2.bf16.msra.mxu0 0
      %2671 = vmatprep.subr.bf16.mxu0 0
      %2672 = vmatpush2.bf16.msra.mxu0 0
      %2673 = vmatprep.subr.bf16.mxu0 0
      %2674 = vmatpush2.bf16.msra.mxu0 0
      %2675 = vmatprep.subr.bf16.mxu0 0
      %2676 = vmatpush2.bf16.msra.mxu0 0
      %2677 = vmatprep.subr.bf16.mxu0 0
      %2678 = vmatpush2.bf16.msra.mxu0 0
      %2679 = vmatprep.subr.bf16.mxu0 0
      %2680 = vmatpush2.bf16.msra.mxu0 0
      %2681 = vmatprep.mubr.bf16.mxu0 0
      %2682 = vmatmul.mubr.bf16.gmra.mxu0 %v2569
      %v2683 = vpop.f32.mrf.mxu0
      %v2684 = vadd.f32 0.0, %v2683
      %v2685 = vpop.f32.mrf.mxu0
      %v2686 = vpop.f32.mrf.mxu0
      %v2687 = vadd.f32 0.0, %v2686
      %v2688 = vpop.f32.mrf.mxu0
      %2689 = vmatprep.mubr.bf16.mxu0 0
      %2690 = vmatmul.mubr.bf16.gmra.mxu0 %v2570
      %v2691 = vpop.f32.mrf.mxu0
      %v2692 = vadd.f32 0.0, %v2691
      %v2693 = vpop.f32.mrf.mxu0
      %v2694 = vpop.f32.mrf.mxu0
      %v2695 = vadd.f32 0.0, %v2694
      %v2696 = vpop.f32.mrf.mxu0
      %2697 = vmatprep.mubr.bf16.mxu0 0
      %2698 = vmatmul.mubr.bf16.gmra.mxu0 %v2571
      %v2699 = vpop.f32.mrf.mxu0
      %v2700 = vadd.f32 0.0, %v2699
      %v2701 = vpop.f32.mrf.mxu0
      %v2702 = vpop.f32.mrf.mxu0
      %v2703 = vadd.f32 0.0, %v2702
      %v2704 = vpop.f32.mrf.mxu0
      %2705 = vmatprep.mubr.bf16.mxu0 0
      %2706 = vmatmul.mubr.bf16.gmra.mxu0 %v2572
      %v2707 = vpop.f32.mrf.mxu0
      %v2708 = vadd.f32 0.0, %v2707
      %v2709 = vpop.f32.mrf.mxu0
      %v2710 = vpop.f32.mrf.mxu0
      %v2711 = vadd.f32 0.0, %v2710
      %v2712 = vpop.f32.mrf.mxu0
      %2713 = vmatprep.mubr.bf16.mxu0 0
      %2714 = vmatmul.mubr.bf16.gmra.mxu0 %v2573
      %v2715 = vpop.f32.mrf.mxu0
      %v2716 = vadd.f32 0.0, %v2715
      %v2717 = vpop.f32.mrf.mxu0
      %v2718 = vpop.f32.mrf.mxu0
      %v2719 = vadd.f32 0.0, %v2718
      %v2720 = vpop.f32.mrf.mxu0
      %2721 = vmatprep.mubr.bf16.mxu0 0
      %2722 = vmatmul.mubr.bf16.gmra.mxu0 %v2574
      %v2723 = vpop.f32.mrf.mxu0
      %v2724 = vadd.f32 0.0, %v2723
      %v2725 = vpop.f32.mrf.mxu0
      %v2726 = vpop.f32.mrf.mxu0
      %v2727 = vadd.f32 0.0, %v2726
      %v2728 = vpop.f32.mrf.mxu0
      %2729 = vmatprep.mubr.bf16.mxu0 0
      %2730 = vmatmul.mubr.bf16.gmra.mxu0 %v2575
      %v2731 = vpop.f32.mrf.mxu0
      %v2732 = vadd.f32 0.0, %v2731
      %v2733 = vpop.f32.mrf.mxu0
      %v2734 = vpop.f32.mrf.mxu0
      %v2735 = vadd.f32 0.0, %v2734
      %v2736 = vpop.f32.mrf.mxu0
      %2737 = vmatprep.mubr.bf16.mxu0 0
      %2738 = vmatmul.mubr.bf16.gmra.mxu0 %v2576
      %v2739 = vpop.f32.mrf.mxu0
      %v2740 = vadd.f32 0.0, %v2739
      %v2741 = vpop.f32.mrf.mxu0
      %v2742 = vpop.f32.mrf.mxu0
      %v2743 = vadd.f32 0.0, %v2742
      %v2744 = vpop.f32.mrf.mxu0
      %2745 = vmatprep.mubr.bf16.mxu0 0
      %2746 = vmatmul.mubr.bf16.gmra.mxu0 %v2577
      %v2747 = vpop.f32.mrf.mxu0
      %v2748 = vadd.f32 0.0, %v2747
      %v2749 = vpop.f32.mrf.mxu0
      %v2750 = vpop.f32.mrf.mxu0
      %v2751 = vadd.f32 0.0, %v2750
      %v2752 = vpop.f32.mrf.mxu0
      %2753 = vmatprep.mubr.bf16.mxu0 0
      %2754 = vmatmul.mubr.bf16.gmra.mxu0 %v2578
      %v2755 = vpop.f32.mrf.mxu0
      %v2756 = vadd.f32 0.0, %v2755
      %v2757 = vpop.f32.mrf.mxu0
      %v2758 = vpop.f32.mrf.mxu0
      %v2759 = vadd.f32 0.0, %v2758
      %v2760 = vpop.f32.mrf.mxu0
      %2761 = vmatprep.mubr.bf16.mxu0 0
      %2762 = vmatmul.mubr.bf16.gmra.mxu0 %v2579
      %v2763 = vpop.f32.mrf.mxu0
      %v2764 = vadd.f32 0.0, %v2763
      %v2765 = vpop.f32.mrf.mxu0
      %v2766 = vpop.f32.mrf.mxu0
      %v2767 = vadd.f32 0.0, %v2766
      %v2768 = vpop.f32.mrf.mxu0
      %2769 = vmatprep.mubr.bf16.mxu0 0
      %2770 = vmatmul.mubr.bf16.gmra.mxu0 %v2580
      %v2771 = vpop.f32.mrf.mxu0
      %v2772 = vadd.f32 0.0, %v2771
      %v2773 = vpop.f32.mrf.mxu0
      %v2774 = vpop.f32.mrf.mxu0
      %v2775 = vadd.f32 0.0, %v2774
      %v2776 = vpop.f32.mrf.mxu0
      %2777 = vmatprep.mubr.bf16.mxu0 0
      %2778 = vmatmul.mubr.bf16.gmra.mxu0 %v2581
      %v2779 = vpop.f32.mrf.mxu0
      %v2780 = vadd.f32 0.0, %v2779
      %v2781 = vpop.f32.mrf.mxu0
      %v2782 = vpop.f32.mrf.mxu0
      %v2783 = vadd.f32 0.0, %v2782
      %v2784 = vpop.f32.mrf.mxu0
      %2785 = vmatprep.mubr.bf16.mxu0 0
      %2786 = vmatmul.mubr.bf16.gmra.mxu0 %v2582
      %v2787 = vpop.f32.mrf.mxu0
      %v2788 = vadd.f32 0.0, %v2787
      %v2789 = vpop.f32.mrf.mxu0
      %v2790 = vpop.f32.mrf.mxu0
      %v2791 = vadd.f32 0.0, %v2790
      %v2792 = vpop.f32.mrf.mxu0
      %2793 = vmatprep.mubr.bf16.mxu0 0
      %2794 = vmatmul.mubr.bf16.gmra.mxu0 %v2583
      %v2795 = vpop.f32.mrf.mxu0
      %v2796 = vadd.f32 0.0, %v2795
      %v2797 = vpop.f32.mrf.mxu0
      %v2798 = vpop.f32.mrf.mxu0
      %v2799 = vadd.f32 0.0, %v2798
      %v2800 = vpop.f32.mrf.mxu0
      %2801 = vmatprep.mubr.bf16.mxu0 0
      %2802 = vmatmul.mubr.bf16.gmra.mxu0 %v2584
      %v2803 = vpop.f32.mrf.mxu0
      %v2804 = vadd.f32 0.0, %v2803
      %v2805 = vpop.f32.mrf.mxu0
      %v2806 = vpop.f32.mrf.mxu0
      %v2807 = vadd.f32 0.0, %v2806
      %v2808 = vpop.f32.mrf.mxu0
      %2809 = vdwg.mxu0
      %v2810 = vadd.f32 %v2056, %v2684
      %v2811 = vadd.f32 %v2057, %v2687
      %v2812 = vadd.f32 %v2058, %v2692
      %v2813 = vadd.f32 %v2059, %v2695
      %v2814 = vadd.f32 %v2060, %v2700
      %v2815 = vadd.f32 %v2061, %v2703
      %v2816 = vadd.f32 %v2062, %v2708
      %v2817 = vadd.f32 %v2063, %v2711
      %v2818 = vadd.f32 %v2064, %v2716
      %v2819 = vadd.f32 %v2065, %v2719
      %v2820 = vadd.f32 %v2066, %v2724
      %v2821 = vadd.f32 %v2067, %v2727
      %v2822 = vadd.f32 %v2068, %v2732
      %v2823 = vadd.f32 %v2069, %v2735
      %v2824 = vadd.f32 %v2070, %v2740
      %v2825 = vadd.f32 %v2071, %v2743
      %v2826 = vadd.f32 %v2072, %v2748
      %v2827 = vadd.f32 %v2073, %v2751
      %v2828 = vadd.f32 %v2074, %v2756
      %v2829 = vadd.f32 %v2075, %v2759
      %v2830 = vadd.f32 %v2076, %v2764
      %v2831 = vadd.f32 %v2077, %v2767
      %v2832 = vadd.f32 %v2078, %v2772
      %v2833 = vadd.f32 %v2079, %v2775
      %v2834 = vadd.f32 %v2080, %v2780
      %v2835 = vadd.f32 %v2081, %v2783
      %v2836 = vadd.f32 %v2082, %v2788
      %v2837 = vadd.f32 %v2083, %v2791
      %v2838 = vadd.f32 %v2084, %v2796
      %v2839 = vadd.f32 %v2085, %v2799
      %v2840 = vadd.f32 %v2086, %v2804
      %v2841 = vadd.f32 %v2087, %v2807
      %v2842 = vld [vmem:[%s1701] sm:$0xe]
      %v2843 = vld [vmem:[%s1701 + $0xc] sm:$0xe]
      %v2844 = vld [vmem:[%s1701 + $0x18] sm:$0xe]
      %v2845 = vld [vmem:[%s1701 + $0x24] sm:$0xe]
      %v2846 = vld [vmem:[%s1701 + $0x30] sm:$0xe]
      %v2847 = vld [vmem:[%s1701 + $0x3c] sm:$0xe]
      %v2848 = vld [vmem:[%s1701 + $0x48] sm:$0xe]
      %v2849 = vld [vmem:[%s1701 + $0x54] sm:$0xe]
      %v2850 = vld [vmem:[%s1701 + $0x60] sm:$0xe]
      %v2851 = vld [vmem:[%s1701 + $0x6c] sm:$0xe]
      %v2852 = vld [vmem:[%s1701 + $0x78] sm:$0xe]
      %v2853 = vld [vmem:[%s1701 + $0x84] sm:$0xe]
      %v2854 = vld [vmem:[%s1701 + $0x90] sm:$0xe]
      %v2855 = vld [vmem:[%s1701 + $0x9c] sm:$0xe]
      %v2856 = vld [vmem:[%s1701 + $0xa8] sm:$0xe]
      %v2857 = vld [vmem:[%s1701 + $0xb4] sm:$0xe]
      %v2906 = vrot.slane %v2842, 5
      %v2907 = vrot.slane %v2906, 4
      %v2908 = vrot.slane %v2089, 5
      %v2909 = vsel %vm1266, %v2907, %v2908
      %v2910 = vrot.slane %v2908, 4
      %v2911 = vrot.slane %v2090, 5
      %v2912 = vsel %vm1266, %v2910, %v2911
      %v2913 = vrot.slane %v2843, 5
      %v2914 = vrot.slane %v2913, 4
      %v2915 = vrot.slane %v2092, 5
      %v2916 = vsel %vm1266, %v2914, %v2915
      %v2917 = vrot.slane %v2915, 4
      %v2918 = vrot.slane %v2093, 5
      %v2919 = vsel %vm1266, %v2917, %v2918
      %v2920 = vrot.slane %v2844, 5
      %v2921 = vrot.slane %v2920, 4
      %v2922 = vrot.slane %v2095, 5
      %v2923 = vsel %vm1266, %v2921, %v2922
      %v2924 = vrot.slane %v2922, 4
      %v2925 = vrot.slane %v2096, 5
      %v2926 = vsel %vm1266, %v2924, %v2925
      %v2927 = vrot.slane %v2845, 5
      %v2928 = vrot.slane %v2927, 4
      %v2929 = vrot.slane %v2098, 5
      %v2930 = vsel %vm1266, %v2928, %v2929
      %v2931 = vrot.slane %v2929, 4
      %v2932 = vrot.slane %v2099, 5
      %v2933 = vsel %vm1266, %v2931, %v2932
      %v2934 = vrot.slane %v2846, 5
      %v2935 = vrot.slane %v2934, 4
      %v2936 = vrot.slane %v2101, 5
      %v2937 = vsel %vm1266, %v2935, %v2936
      %v2938 = vrot.slane %v2936, 4
      %v2939 = vrot.slane %v2102, 5
      %v2940 = vsel %vm1266, %v2938, %v2939
      %v2941 = vrot.slane %v2847, 5
      %v2942 = vrot.slane %v2941, 4
      %v2943 = vrot.slane %v2104, 5
      %v2944 = vsel %vm1266, %v2942, %v2943
      %v2945 = vrot.slane %v2943, 4
      %v2946 = vrot.slane %v2105, 5
      %v2947 = vsel %vm1266, %v2945, %v2946
      %v2948 = vrot.slane %v2848, 5
      %v2949 = vrot.slane %v2948, 4
      %v2950 = vrot.slane %v2107, 5
      %v2951 = vsel %vm1266, %v2949, %v2950
      %v2952 = vrot.slane %v2950, 4
      %v2953 = vrot.slane %v2108, 5
      %v2954 = vsel %vm1266, %v2952, %v2953
      %v2955 = vrot.slane %v2849, 5
      %v2956 = vrot.slane %v2955, 4
      %v2957 = vrot.slane %v2110, 5
      %v2958 = vsel %vm1266, %v2956, %v2957
      %v2959 = vrot.slane %v2957, 4
      %v2960 = vrot.slane %v2111, 5
      %v2961 = vsel %vm1266, %v2959, %v2960
      %v2962 = vrot.slane %v2850, 5
      %v2963 = vrot.slane %v2962, 4
      %v2964 = vrot.slane %v2113, 5
      %v2965 = vsel %vm1266, %v2963, %v2964
      %v2966 = vrot.slane %v2964, 4
      %v2967 = vrot.slane %v2114, 5
      %v2968 = vsel %vm1266, %v2966, %v2967
      %v2969 = vrot.slane %v2851, 5
      %v2970 = vrot.slane %v2969, 4
      %v2971 = vrot.slane %v2116, 5
      %v2972 = vsel %vm1266, %v2970, %v2971
      %v2973 = vrot.slane %v2971, 4
      %v2974 = vrot.slane %v2117, 5
      %v2975 = vsel %vm1266, %v2973, %v2974
      %v2976 = vrot.slane %v2852, 5
      %v2977 = vrot.slane %v2976, 4
      %v2978 = vrot.slane %v2119, 5
      %v2979 = vsel %vm1266, %v2977, %v2978
      %v2980 = vrot.slane %v2978, 4
      %v2981 = vrot.slane %v2120, 5
      %v2982 = vsel %vm1266, %v2980, %v2981
      %v2983 = vrot.slane %v2853, 5
      %v2984 = vrot.slane %v2983, 4
      %v2985 = vrot.slane %v2122, 5
      %v2986 = vsel %vm1266, %v2984, %v2985
      %v2987 = vrot.slane %v2985, 4
      %v2988 = vrot.slane %v2123, 5
      %v2989 = vsel %vm1266, %v2987, %v2988
      %v2990 = vrot.slane %v2854, 5
      %v2991 = vrot.slane %v2990, 4
      %v2992 = vrot.slane %v2125, 5
      %v2993 = vsel %vm1266, %v2991, %v2992
      %v2994 = vrot.slane %v2992, 4
      %v2995 = vrot.slane %v2126, 5
      %v2996 = vsel %vm1266, %v2994, %v2995
      %v2997 = vrot.slane %v2855, 5
      %v2998 = vrot.slane %v2997, 4
      %v2999 = vrot.slane %v2128, 5
      %v3000 = vsel %vm1266, %v2998, %v2999
      %v3001 = vrot.slane %v2999, 4
      %v3002 = vrot.slane %v2129, 5
      %v3003 = vsel %vm1266, %v3001, %v3002
      %v3004 = vrot.slane %v2856, 5
      %v3005 = vrot.slane %v3004, 4
      %v3006 = vrot.slane %v2131, 5
      %v3007 = vsel %vm1266, %v3005, %v3006
      %v3008 = vrot.slane %v3006, 4
      %v3009 = vrot.slane %v2132, 5
      %v3010 = vsel %vm1266, %v3008, %v3009
      %v3011 = vrot.slane %v2857, 5
      %v3012 = vrot.slane %v3011, 4
      %v3013 = vrot.slane %v2134, 5
      %v3014 = vsel %vm1266, %v3012, %v3013
      %v3015 = vrot.slane %v3013, 4
      %v3016 = vrot.slane %v2135, 5
      %v3017 = vsel %vm1266, %v3015, %v3016
      %s3018 = scalar_lea.vmem %s1, 320
      %v3019 = vld [vmem:[%s3018] sm:$0xf]
      %v3020 = vld [vmem:[%s3018 + $0x4] sm:$0xf]
      %v3021 = vld [vmem:[%s3018 + $0x8] sm:$0xf]
      %v3022 = vld [vmem:[%s3018 + $0xc] sm:$0xf]
      %v3023 = vld [vmem:[%s3018 + $0x10] sm:$0xf]
      %v3024 = vld [vmem:[%s3018 + $0x14] sm:$0xf]
      %v3025 = vld [vmem:[%s3018 + $0x18] sm:$0xf]
      %v3026 = vld [vmem:[%s3018 + $0x1c] sm:$0xf]
      %v3027 = vld [vmem:[%s3018 + $0x20] sm:$0xf]
      %v3028 = vld [vmem:[%s3018 + $0x24] sm:$0xf]
      %v3029 = vld [vmem:[%s3018 + $0x28] sm:$0xf]
      %v3030 = vld [vmem:[%s3018 + $0x2c] sm:$0xf]
      %v3031 = vld [vmem:[%s3018 + $0x30] sm:$0xf]
      %v3032 = vld [vmem:[%s3018 + $0x34] sm:$0xf]
      %v3033 = vld [vmem:[%s3018 + $0x38] sm:$0xf]
      %v3034 = vld [vmem:[%s3018 + $0x3c] sm:$0xf]
      %v3035 = vunpack.c.l.b16 %v2909
      %v3036 = vunpack.c.l.b16 %v2912
      %v3037 = vunpack.c.l.b16 %v2916
      %v3038 = vunpack.c.l.b16 %v2919
      %v3039 = vunpack.c.l.b16 %v2923
      %v3040 = vunpack.c.l.b16 %v2926
      %v3041 = vunpack.c.l.b16 %v2930
      %v3042 = vunpack.c.l.b16 %v2933
      %v3043 = vunpack.c.l.b16 %v2937
      %v3044 = vunpack.c.l.b16 %v2940
      %v3045 = vunpack.c.l.b16 %v2944
      %v3046 = vunpack.c.l.b16 %v2947
      %v3047 = vunpack.c.l.b16 %v2951
      %v3048 = vunpack.c.l.b16 %v2954
      %v3049 = vunpack.c.l.b16 %v2958
      %v3050 = vunpack.c.l.b16 %v2961
      %v3051 = vunpack.c.l.b16 %v2965
      %v3052 = vunpack.c.l.b16 %v2968
      %v3053 = vunpack.c.l.b16 %v2972
      %v3054 = vunpack.c.l.b16 %v2975
      %v3055 = vunpack.c.l.b16 %v2979
      %v3056 = vunpack.c.l.b16 %v2982
      %v3057 = vunpack.c.l.b16 %v2986
      %v3058 = vunpack.c.l.b16 %v2989
      %v3059 = vunpack.c.l.b16 %v2993
      %v3060 = vunpack.c.l.b16 %v2996
      %v3061 = vunpack.c.l.b16 %v3000
      %v3062 = vunpack.c.l.b16 %v3003
      %v3063 = vunpack.c.l.b16 %v3007
      %v3064 = vunpack.c.l.b16 %v3010
      %v3065 = vunpack.c.l.b16 %v3014
      %v3066 = vunpack.c.l.b16 %v3017
      %v3067 = vpack.c.b16 %v3036, %v3035
      %v3068 = vpack.c.b16 %v3038, %v3037
      %v3069 = vpack.c.b16 %v3040, %v3039
      %v3070 = vpack.c.b16 %v3042, %v3041
      %v3071 = vpack.c.b16 %v3044, %v3043
      %v3072 = vpack.c.b16 %v3046, %v3045
      %v3073 = vpack.c.b16 %v3048, %v3047
      %v3074 = vpack.c.b16 %v3050, %v3049
      %v3075 = vpack.c.b16 %v3052, %v3051
      %v3076 = vpack.c.b16 %v3054, %v3053
      %v3077 = vpack.c.b16 %v3056, %v3055
      %v3078 = vpack.c.b16 %v3058, %v3057
      %v3079 = vpack.c.b16 %v3060, %v3059
      %v3080 = vpack.c.b16 %v3062, %v3061
      %v3081 = vpack.c.b16 %v3064, %v3063
      %v3082 = vpack.c.b16 %v3066, %v3065
      %v3115 = vunpack.c.l.b16 %v3019
      %v3116 = vunpack.c.l.b16 %v3020
      %v3117 = vunpack.c.l.b16 %v3021
      %v3118 = vunpack.c.l.b16 %v3022
      %v3119 = vunpack.c.l.b16 %v3023
      %v3120 = vunpack.c.l.b16 %v3024
      %v3121 = vunpack.c.l.b16 %v3025
      %v3122 = vunpack.c.l.b16 %v3026
      %v3123 = vunpack.c.l.b16 %v3027
      %v3124 = vunpack.c.l.b16 %v3028
      %v3125 = vunpack.c.l.b16 %v3029
      %v3126 = vunpack.c.l.b16 %v3030
      %v3127 = vunpack.c.l.b16 %v3031
      %v3128 = vunpack.c.l.b16 %v3032
      %v3129 = vunpack.c.l.b16 %v3033
      %v3130 = vunpack.c.l.b16 %v3034
      %v3131 = vpack.c.b16 %v3116, %v3115
      %v3132 = vpack.c.b16 %v3118, %v3117
      %v3133 = vpack.c.b16 %v3120, %v3119
      %v3134 = vpack.c.b16 %v3122, %v3121
      %v3135 = vpack.c.b16 %v3124, %v3123
      %v3136 = vpack.c.b16 %v3126, %v3125
      %v3137 = vpack.c.b16 %v3128, %v3127
      %v3138 = vpack.c.b16 %v3130, %v3129
      %3147 = vmatprep.subr.bf16.mxu0 0
      %3148 = vmatpush1.bf16.msra.mxu0 %v3138
      %3149 = vmatprep.subr.bf16.mxu0 0
      %3150 = vmatpush1.bf16.msra.mxu0 %v3137
      %3151 = vmatprep.subr.bf16.mxu0 0
      %3152 = vmatpush1.bf16.msra.mxu0 %v3136
      %3153 = vmatprep.subr.bf16.mxu0 0
      %3154 = vmatpush1.bf16.msra.mxu0 %v3135
      %3155 = vmatprep.subr.bf16.mxu0 0
      %3156 = vmatpush1.bf16.msra.mxu0 %v3134
      %3157 = vmatprep.subr.bf16.mxu0 0
      %3158 = vmatpush1.bf16.msra.mxu0 %v3133
      %3159 = vmatprep.subr.bf16.mxu0 0
      %3160 = vmatpush1.bf16.msra.mxu0 %v3132
      %3161 = vmatprep.subr.bf16.mxu0 0
      %3162 = vmatpush1.bf16.msra.mxu0 %v3131
      %3163 = vmatprep.subr.bf16.mxu0 0
      %3164 = vmatpush2.bf16.msra.mxu0 0
      %3165 = vmatprep.subr.bf16.mxu0 0
      %3166 = vmatpush2.bf16.msra.mxu0 0
      %3167 = vmatprep.subr.bf16.mxu0 0
      %3168 = vmatpush2.bf16.msra.mxu0 0
      %3169 = vmatprep.subr.bf16.mxu0 0
      %3170 = vmatpush2.bf16.msra.mxu0 0
      %3171 = vmatprep.subr.bf16.mxu0 0
      %3172 = vmatpush2.bf16.msra.mxu0 0
      %3173 = vmatprep.subr.bf16.mxu0 0
      %3174 = vmatpush2.bf16.msra.mxu0 0
      %3175 = vmatprep.subr.bf16.mxu0 0
      %3176 = vmatpush2.bf16.msra.mxu0 0
      %3177 = vmatprep.subr.bf16.mxu0 0
      %3178 = vmatpush2.bf16.msra.mxu0 0
      %3179 = vmatprep.mubr.bf16.mxu0 0
      %3180 = vmatmul.mubr.bf16.gmra.mxu0 %v3067
      %v3181 = vpop.f32.mrf.mxu0
      %v3182 = vadd.f32 0.0, %v3181
      %v3183 = vpop.f32.mrf.mxu0
      %v3184 = vpop.f32.mrf.mxu0
      %v3185 = vadd.f32 0.0, %v3184
      %v3186 = vpop.f32.mrf.mxu0
      %3187 = vmatprep.mubr.bf16.mxu0 0
      %3188 = vmatmul.mubr.bf16.gmra.mxu0 %v3068
      %v3189 = vpop.f32.mrf.mxu0
      %v3190 = vadd.f32 0.0, %v3189
      %v3191 = vpop.f32.mrf.mxu0
      %v3192 = vpop.f32.mrf.mxu0
      %v3193 = vadd.f32 0.0, %v3192
      %v3194 = vpop.f32.mrf.mxu0
      %3195 = vmatprep.mubr.bf16.mxu0 0
      %3196 = vmatmul.mubr.bf16.gmra.mxu0 %v3069
      %v3197 = vpop.f32.mrf.mxu0
      %v3198 = vadd.f32 0.0, %v3197
      %v3199 = vpop.f32.mrf.mxu0
      %v3200 = vpop.f32.mrf.mxu0
      %v3201 = vadd.f32 0.0, %v3200
      %v3202 = vpop.f32.mrf.mxu0
      %3203 = vmatprep.mubr.bf16.mxu0 0
      %3204 = vmatmul.mubr.bf16.gmra.mxu0 %v3070
      %v3205 = vpop.f32.mrf.mxu0
      %v3206 = vadd.f32 0.0, %v3205
      %v3207 = vpop.f32.mrf.mxu0
      %v3208 = vpop.f32.mrf.mxu0
      %v3209 = vadd.f32 0.0, %v3208
      %v3210 = vpop.f32.mrf.mxu0
      %3211 = vmatprep.mubr.bf16.mxu0 0
      %3212 = vmatmul.mubr.bf16.gmra.mxu0 %v3071
      %v3213 = vpop.f32.mrf.mxu0
      %v3214 = vadd.f32 0.0, %v3213
      %v3215 = vpop.f32.mrf.mxu0
      %v3216 = vpop.f32.mrf.mxu0
      %v3217 = vadd.f32 0.0, %v3216
      %v3218 = vpop.f32.mrf.mxu0
      %3219 = vmatprep.mubr.bf16.mxu0 0
      %3220 = vmatmul.mubr.bf16.gmra.mxu0 %v3072
      %v3221 = vpop.f32.mrf.mxu0
      %v3222 = vadd.f32 0.0, %v3221
      %v3223 = vpop.f32.mrf.mxu0
      %v3224 = vpop.f32.mrf.mxu0
      %v3225 = vadd.f32 0.0, %v3224
      %v3226 = vpop.f32.mrf.mxu0
      %3227 = vmatprep.mubr.bf16.mxu0 0
      %3228 = vmatmul.mubr.bf16.gmra.mxu0 %v3073
      %v3229 = vpop.f32.mrf.mxu0
      %v3230 = vadd.f32 0.0, %v3229
      %v3231 = vpop.f32.mrf.mxu0
      %v3232 = vpop.f32.mrf.mxu0
      %v3233 = vadd.f32 0.0, %v3232
      %v3234 = vpop.f32.mrf.mxu0
      %3235 = vmatprep.mubr.bf16.mxu0 0
      %3236 = vmatmul.mubr.bf16.gmra.mxu0 %v3074
      %v3237 = vpop.f32.mrf.mxu0
      %v3238 = vadd.f32 0.0, %v3237
      %v3239 = vpop.f32.mrf.mxu0
      %v3240 = vpop.f32.mrf.mxu0
      %v3241 = vadd.f32 0.0, %v3240
      %v3242 = vpop.f32.mrf.mxu0
      %3243 = vmatprep.mubr.bf16.mxu0 0
      %3244 = vmatmul.mubr.bf16.gmra.mxu0 %v3075
      %v3245 = vpop.f32.mrf.mxu0
      %v3246 = vadd.f32 0.0, %v3245
      %v3247 = vpop.f32.mrf.mxu0
      %v3248 = vpop.f32.mrf.mxu0
      %v3249 = vadd.f32 0.0, %v3248
      %v3250 = vpop.f32.mrf.mxu0
      %3251 = vmatprep.mubr.bf16.mxu0 0
      %3252 = vmatmul.mubr.bf16.gmra.mxu0 %v3076
      %v3253 = vpop.f32.mrf.mxu0
      %v3254 = vadd.f32 0.0, %v3253
      %v3255 = vpop.f32.mrf.mxu0
      %v3256 = vpop.f32.mrf.mxu0
      %v3257 = vadd.f32 0.0, %v3256
      %v3258 = vpop.f32.mrf.mxu0
      %3259 = vmatprep.mubr.bf16.mxu0 0
      %3260 = vmatmul.mubr.bf16.gmra.mxu0 %v3077
      %v3261 = vpop.f32.mrf.mxu0
      %v3262 = vadd.f32 0.0, %v3261
      %v3263 = vpop.f32.mrf.mxu0
      %v3264 = vpop.f32.mrf.mxu0
      %v3265 = vadd.f32 0.0, %v3264
      %v3266 = vpop.f32.mrf.mxu0
      %3267 = vmatprep.mubr.bf16.mxu0 0
      %3268 = vmatmul.mubr.bf16.gmra.mxu0 %v3078
      %v3269 = vpop.f32.mrf.mxu0
      %v3270 = vadd.f32 0.0, %v3269
      %v3271 = vpop.f32.mrf.mxu0
      %v3272 = vpop.f32.mrf.mxu0
      %v3273 = vadd.f32 0.0, %v3272
      %v3274 = vpop.f32.mrf.mxu0
      %3275 = vmatprep.mubr.bf16.mxu0 0
      %3276 = vmatmul.mubr.bf16.gmra.mxu0 %v3079
      %v3277 = vpop.f32.mrf.mxu0
      %v3278 = vadd.f32 0.0, %v3277
      %v3279 = vpop.f32.mrf.mxu0
      %v3280 = vpop.f32.mrf.mxu0
      %v3281 = vadd.f32 0.0, %v3280
      %v3282 = vpop.f32.mrf.mxu0
      %3283 = vmatprep.mubr.bf16.mxu0 0
      %3284 = vmatmul.mubr.bf16.gmra.mxu0 %v3080
      %v3285 = vpop.f32.mrf.mxu0
      %v3286 = vadd.f32 0.0, %v3285
      %v3287 = vpop.f32.mrf.mxu0
      %v3288 = vpop.f32.mrf.mxu0
      %v3289 = vadd.f32 0.0, %v3288
      %v3290 = vpop.f32.mrf.mxu0
      %3291 = vmatprep.mubr.bf16.mxu0 0
      %3292 = vmatmul.mubr.bf16.gmra.mxu0 %v3081
      %v3293 = vpop.f32.mrf.mxu0
      %v3294 = vadd.f32 0.0, %v3293
      %v3295 = vpop.f32.mrf.mxu0
      %v3296 = vpop.f32.mrf.mxu0
      %v3297 = vadd.f32 0.0, %v3296
      %v3298 = vpop.f32.mrf.mxu0
      %3299 = vmatprep.mubr.bf16.mxu0 0
      %3300 = vmatmul.mubr.bf16.gmra.mxu0 %v3082
      %v3301 = vpop.f32.mrf.mxu0
      %v3302 = vadd.f32 0.0, %v3301
      %v3303 = vpop.f32.mrf.mxu0
      %v3304 = vpop.f32.mrf.mxu0
      %v3305 = vadd.f32 0.0, %v3304
      %v3306 = vpop.f32.mrf.mxu0
      %3307 = vdwg.mxu0
      %v3308 = vadd.f32 %v2810, %v3182
      %v3309 = vadd.f32 %v2811, %v3185
      %v3310 = vadd.f32 %v2812, %v3190
      %v3311 = vadd.f32 %v2813, %v3193
      %v3312 = vadd.f32 %v2814, %v3198
      %v3313 = vadd.f32 %v2815, %v3201
      %v3314 = vadd.f32 %v2816, %v3206
      %v3315 = vadd.f32 %v2817, %v3209
      %v3316 = vadd.f32 %v2818, %v3214
      %v3317 = vadd.f32 %v2819, %v3217
      %v3318 = vadd.f32 %v2820, %v3222
      %v3319 = vadd.f32 %v2821, %v3225
      %v3320 = vadd.f32 %v2822, %v3230
      %v3321 = vadd.f32 %v2823, %v3233
      %v3322 = vadd.f32 %v2824, %v3238
      %v3323 = vadd.f32 %v2825, %v3241
      %v3324 = vadd.f32 %v2826, %v3246
      %v3325 = vadd.f32 %v2827, %v3249
      %v3326 = vadd.f32 %v2828, %v3254
      %v3327 = vadd.f32 %v2829, %v3257
      %v3328 = vadd.f32 %v2830, %v3262
      %v3329 = vadd.f32 %v2831, %v3265
      %v3330 = vadd.f32 %v2832, %v3270
      %v3331 = vadd.f32 %v2833, %v3273
      %v3332 = vadd.f32 %v2834, %v3278
      %v3333 = vadd.f32 %v2835, %v3281
      %v3334 = vadd.f32 %v2836, %v3286
      %v3335 = vadd.f32 %v2837, %v3289
      %v3336 = vadd.f32 %v2838, %v3294
      %v3337 = vadd.f32 %v2839, %v3297
      %v3338 = vadd.f32 %v2840, %v3302
      %v3339 = vadd.f32 %v2841, %v3305
      %s3340 = scalar_lea.vmem %s163, 24
      %v3341 = vld [vmem:[%s3340] sm:$0xf]
      %v3342 = vld [vmem:[%s3340 + $0x4] sm:$0xf]
      %v3343 = vld [vmem:[%s3340 + $0xc] sm:$0xf]
      %v3344 = vld [vmem:[%s3340 + $0x10] sm:$0xf]
      %v3345 = vld [vmem:[%s3340 + $0x18] sm:$0xf]
      %v3346 = vld [vmem:[%s3340 + $0x1c] sm:$0xf]
      %v3347 = vld [vmem:[%s3340 + $0x24] sm:$0xf]
      %v3348 = vld [vmem:[%s3340 + $0x28] sm:$0xf]
      %v3349 = vld [vmem:[%s3340 + $0x30] sm:$0xf]
      %v3350 = vld [vmem:[%s3340 + $0x34] sm:$0xf]
      %v3351 = vld [vmem:[%s3340 + $0x3c] sm:$0xf]
      %v3352 = vld [vmem:[%s3340 + $0x40] sm:$0xf]
      %v3353 = vld [vmem:[%s3340 + $0x48] sm:$0xf]
      %v3354 = vld [vmem:[%s3340 + $0x4c] sm:$0xf]
      %v3355 = vld [vmem:[%s3340 + $0x54] sm:$0xf]
      %v3356 = vld [vmem:[%s3340 + $0x58] sm:$0xf]
      %v3357 = vld [vmem:[%s3340 + $0x60] sm:$0xf]
      %v3358 = vld [vmem:[%s3340 + $0x64] sm:$0xf]
      %v3359 = vld [vmem:[%s3340 + $0x6c] sm:$0xf]
      %v3360 = vld [vmem:[%s3340 + $0x70] sm:$0xf]
      %v3361 = vld [vmem:[%s3340 + $0x78] sm:$0xf]
      %v3362 = vld [vmem:[%s3340 + $0x7c] sm:$0xf]
      %v3363 = vld [vmem:[%s3340 + $0x84] sm:$0xf]
      %v3364 = vld [vmem:[%s3340 + $0x88] sm:$0xf]
      %v3365 = vld [vmem:[%s3340 + $0x90] sm:$0xf]
      %v3366 = vld [vmem:[%s3340 + $0x94] sm:$0xf]
      %v3367 = vld [vmem:[%s3340 + $0x9c] sm:$0xf]
      %v3368 = vld [vmem:[%s3340 + $0xa0] sm:$0xf]
      %v3369 = vld [vmem:[%s3340 + $0xa8] sm:$0xf]
      %v3370 = vld [vmem:[%s3340 + $0xac] sm:$0xf]
      %v3371 = vld [vmem:[%s3340 + $0xb4] sm:$0xf]
      %v3372 = vld [vmem:[%s3340 + $0xb8] sm:$0xf]
      %s3373 = scalar_lea.vmem %s1, 384
      %v3374 = vld [vmem:[%s3373] sm:$0xf]
      %v3375 = vld [vmem:[%s3373 + $0x4] sm:$0xf]
      %v3376 = vld [vmem:[%s3373 + $0x8] sm:$0xf]
      %v3377 = vld [vmem:[%s3373 + $0xc] sm:$0xf]
      %v3378 = vld [vmem:[%s3373 + $0x10] sm:$0xf]
      %v3379 = vld [vmem:[%s3373 + $0x14] sm:$0xf]
      %v3380 = vld [vmem:[%s3373 + $0x18] sm:$0xf]
      %v3381 = vld [vmem:[%s3373 + $0x1c] sm:$0xf]
      %v3382 = vld [vmem:[%s3373 + $0x20] sm:$0xf]
      %v3383 = vld [vmem:[%s3373 + $0x24] sm:$0xf]
      %v3384 = vld [vmem:[%s3373 + $0x28] sm:$0xf]
      %v3385 = vld [vmem:[%s3373 + $0x2c] sm:$0xf]
      %v3386 = vld [vmem:[%s3373 + $0x30] sm:$0xf]
      %v3387 = vld [vmem:[%s3373 + $0x34] sm:$0xf]
      %v3388 = vld [vmem:[%s3373 + $0x38] sm:$0xf]
      %v3389 = vld [vmem:[%s3373 + $0x3c] sm:$0xf]
      %v3422 = vunpack.c.l.b16 %v3341
      %v3423 = vunpack.c.l.b16 %v3342
      %v3424 = vunpack.c.l.b16 %v3343
      %v3425 = vunpack.c.l.b16 %v3344
      %v3426 = vunpack.c.l.b16 %v3345
      %v3427 = vunpack.c.l.b16 %v3346
      %v3428 = vunpack.c.l.b16 %v3347
      %v3429 = vunpack.c.l.b16 %v3348
      %v3430 = vunpack.c.l.b16 %v3349
      %v3431 = vunpack.c.l.b16 %v3350
      %v3432 = vunpack.c.l.b16 %v3351
      %v3433 = vunpack.c.l.b16 %v3352
      %v3434 = vunpack.c.l.b16 %v3353
      %v3435 = vunpack.c.l.b16 %v3354
      %v3436 = vunpack.c.l.b16 %v3355
      %v3437 = vunpack.c.l.b16 %v3356
      %v3438 = vunpack.c.l.b16 %v3357
      %v3439 = vunpack.c.l.b16 %v3358
      %v3440 = vunpack.c.l.b16 %v3359
      %v3441 = vunpack.c.l.b16 %v3360
      %v3442 = vunpack.c.l.b16 %v3361
      %v3443 = vunpack.c.l.b16 %v3362
      %v3444 = vunpack.c.l.b16 %v3363
      %v3445 = vunpack.c.l.b16 %v3364
      %v3446 = vunpack.c.l.b16 %v3365
      %v3447 = vunpack.c.l.b16 %v3366
      %v3448 = vunpack.c.l.b16 %v3367
      %v3449 = vunpack.c.l.b16 %v3368
      %v3450 = vunpack.c.l.b16 %v3369
      %v3451 = vunpack.c.l.b16 %v3370
      %v3452 = vunpack.c.l.b16 %v3371
      %v3453 = vunpack.c.l.b16 %v3372
      %v3454 = vpack.c.b16 %v3423, %v3422
      %v3455 = vpack.c.b16 %v3425, %v3424
      %v3456 = vpack.c.b16 %v3427, %v3426
      %v3457 = vpack.c.b16 %v3429, %v3428
      %v3458 = vpack.c.b16 %v3431, %v3430
      %v3459 = vpack.c.b16 %v3433, %v3432
      %v3460 = vpack.c.b16 %v3435, %v3434
      %v3461 = vpack.c.b16 %v3437, %v3436
      %v3462 = vpack.c.b16 %v3439, %v3438
      %v3463 = vpack.c.b16 %v3441, %v3440
      %v3464 = vpack.c.b16 %v3443, %v3442
      %v3465 = vpack.c.b16 %v3445, %v3444
      %v3466 = vpack.c.b16 %v3447, %v3446
      %v3467 = vpack.c.b16 %v3449, %v3448
      %v3468 = vpack.c.b16 %v3451, %v3450
      %v3469 = vpack.c.b16 %v3453, %v3452
      %v3502 = vunpack.c.l.b16 %v3374
      %v3503 = vunpack.c.l.b16 %v3375
      %v3504 = vunpack.c.l.b16 %v3376
      %v3505 = vunpack.c.l.b16 %v3377
      %v3506 = vunpack.c.l.b16 %v3378
      %v3507 = vunpack.c.l.b16 %v3379
      %v3508 = vunpack.c.l.b16 %v3380
      %v3509 = vunpack.c.l.b16 %v3381
      %v3510 = vunpack.c.l.b16 %v3382
      %v3511 = vunpack.c.l.b16 %v3383
      %v3512 = vunpack.c.l.b16 %v3384
      %v3513 = vunpack.c.l.b16 %v3385
      %v3514 = vunpack.c.l.b16 %v3386
      %v3515 = vunpack.c.l.b16 %v3387
      %v3516 = vunpack.c.l.b16 %v3388
      %v3517 = vunpack.c.l.b16 %v3389
      %v3518 = vpack.c.b16 %v3503, %v3502
      %v3519 = vpack.c.b16 %v3505, %v3504
      %v3520 = vpack.c.b16 %v3507, %v3506
      %v3521 = vpack.c.b16 %v3509, %v3508
      %v3522 = vpack.c.b16 %v3511, %v3510
      %v3523 = vpack.c.b16 %v3513, %v3512
      %v3524 = vpack.c.b16 %v3515, %v3514
      %v3525 = vpack.c.b16 %v3517, %v3516
      %3534 = vmatprep.subr.bf16.mxu0 0
      %3535 = vmatpush1.bf16.msra.mxu0 %v3525
      %3536 = vmatprep.subr.bf16.mxu0 0
      %3537 = vmatpush1.bf16.msra.mxu0 %v3524
      %3538 = vmatprep.subr.bf16.mxu0 0
      %3539 = vmatpush1.bf16.msra.mxu0 %v3523
      %3540 = vmatprep.subr.bf16.mxu0 0
      %3541 = vmatpush1.bf16.msra.mxu0 %v3522
      %3542 = vmatprep.subr.bf16.mxu0 0
      %3543 = vmatpush1.bf16.msra.mxu0 %v3521
      %3544 = vmatprep.subr.bf16.mxu0 0
      %3545 = vmatpush1.bf16.msra.mxu0 %v3520
      %3546 = vmatprep.subr.bf16.mxu0 0
      %3547 = vmatpush1.bf16.msra.mxu0 %v3519
      %3548 = vmatprep.subr.bf16.mxu0 0
      %3549 = vmatpush1.bf16.msra.mxu0 %v3518
      %3550 = vmatprep.subr.bf16.mxu0 0
      %3551 = vmatpush2.bf16.msra.mxu0 0
      %3552 = vmatprep.subr.bf16.mxu0 0
      %3553 = vmatpush2.bf16.msra.mxu0 0
      %3554 = vmatprep.subr.bf16.mxu0 0
      %3555 = vmatpush2.bf16.msra.mxu0 0
      %3556 = vmatprep.subr.bf16.mxu0 0
      %3557 = vmatpush2.bf16.msra.mxu0 0
      %3558 = vmatprep.subr.bf16.mxu0 0
      %3559 = vmatpush2.bf16.msra.mxu0 0
      %3560 = vmatprep.subr.bf16.mxu0 0
      %3561 = vmatpush2.bf16.msra.mxu0 0
      %3562 = vmatprep.subr.bf16.mxu0 0
      %3563 = vmatpush2.bf16.msra.mxu0 0
      %3564 = vmatprep.subr.bf16.mxu0 0
      %3565 = vmatpush2.bf16.msra.mxu0 0
      %3566 = vmatprep.mubr.bf16.mxu0 0
      %3567 = vmatmul.mubr.bf16.gmra.mxu0 %v3454
      %v3568 = vpop.f32.mrf.mxu0
      %v3569 = vadd.f32 0.0, %v3568
      %v3570 = vpop.f32.mrf.mxu0
      %v3571 = vpop.f32.mrf.mxu0
      %v3572 = vadd.f32 0.0, %v3571
      %v3573 = vpop.f32.mrf.mxu0
      %3574 = vmatprep.mubr.bf16.mxu0 0
      %3575 = vmatmul.mubr.bf16.gmra.mxu0 %v3455
      %v3576 = vpop.f32.mrf.mxu0
      %v3577 = vadd.f32 0.0, %v3576
      %v3578 = vpop.f32.mrf.mxu0
      %v3579 = vpop.f32.mrf.mxu0
      %v3580 = vadd.f32 0.0, %v3579
      %v3581 = vpop.f32.mrf.mxu0
      %3582 = vmatprep.mubr.bf16.mxu0 0
      %3583 = vmatmul.mubr.bf16.gmra.mxu0 %v3456
      %v3584 = vpop.f32.mrf.mxu0
      %v3585 = vadd.f32 0.0, %v3584
      %v3586 = vpop.f32.mrf.mxu0
      %v3587 = vpop.f32.mrf.mxu0
      %v3588 = vadd.f32 0.0, %v3587
      %v3589 = vpop.f32.mrf.mxu0
      %3590 = vmatprep.mubr.bf16.mxu0 0
      %3591 = vmatmul.mubr.bf16.gmra.mxu0 %v3457
      %v3592 = vpop.f32.mrf.mxu0
      %v3593 = vadd.f32 0.0, %v3592
      %v3594 = vpop.f32.mrf.mxu0
      %v3595 = vpop.f32.mrf.mxu0
      %v3596 = vadd.f32 0.0, %v3595
      %v3597 = vpop.f32.mrf.mxu0
      %3598 = vmatprep.mubr.bf16.mxu0 0
      %3599 = vmatmul.mubr.bf16.gmra.mxu0 %v3458
      %v3600 = vpop.f32.mrf.mxu0
      %v3601 = vadd.f32 0.0, %v3600
      %v3602 = vpop.f32.mrf.mxu0
      %v3603 = vpop.f32.mrf.mxu0
      %v3604 = vadd.f32 0.0, %v3603
      %v3605 = vpop.f32.mrf.mxu0
      %3606 = vmatprep.mubr.bf16.mxu0 0
      %3607 = vmatmul.mubr.bf16.gmra.mxu0 %v3459
      %v3608 = vpop.f32.mrf.mxu0
      %v3609 = vadd.f32 0.0, %v3608
      %v3610 = vpop.f32.mrf.mxu0
      %v3611 = vpop.f32.mrf.mxu0
      %v3612 = vadd.f32 0.0, %v3611
      %v3613 = vpop.f32.mrf.mxu0
      %3614 = vmatprep.mubr.bf16.mxu0 0
      %3615 = vmatmul.mubr.bf16.gmra.mxu0 %v3460
      %v3616 = vpop.f32.mrf.mxu0
      %v3617 = vadd.f32 0.0, %v3616
      %v3618 = vpop.f32.mrf.mxu0
      %v3619 = vpop.f32.mrf.mxu0
      %v3620 = vadd.f32 0.0, %v3619
      %v3621 = vpop.f32.mrf.mxu0
      %3622 = vmatprep.mubr.bf16.mxu0 0
      %3623 = vmatmul.mubr.bf16.gmra.mxu0 %v3461
      %v3624 = vpop.f32.mrf.mxu0
      %v3625 = vadd.f32 0.0, %v3624
      %v3626 = vpop.f32.mrf.mxu0
      %v3627 = vpop.f32.mrf.mxu0
      %v3628 = vadd.f32 0.0, %v3627
      %v3629 = vpop.f32.mrf.mxu0
      %3630 = vmatprep.mubr.bf16.mxu0 0
      %3631 = vmatmul.mubr.bf16.gmra.mxu0 %v3462
      %v3632 = vpop.f32.mrf.mxu0
      %v3633 = vadd.f32 0.0, %v3632
      %v3634 = vpop.f32.mrf.mxu0
      %v3635 = vpop.f32.mrf.mxu0
      %v3636 = vadd.f32 0.0, %v3635
      %v3637 = vpop.f32.mrf.mxu0
      %3638 = vmatprep.mubr.bf16.mxu0 0
      %3639 = vmatmul.mubr.bf16.gmra.mxu0 %v3463
      %v3640 = vpop.f32.mrf.mxu0
      %v3641 = vadd.f32 0.0, %v3640
      %v3642 = vpop.f32.mrf.mxu0
      %v3643 = vpop.f32.mrf.mxu0
      %v3644 = vadd.f32 0.0, %v3643
      %v3645 = vpop.f32.mrf.mxu0
      %3646 = vmatprep.mubr.bf16.mxu0 0
      %3647 = vmatmul.mubr.bf16.gmra.mxu0 %v3464
      %v3648 = vpop.f32.mrf.mxu0
      %v3649 = vadd.f32 0.0, %v3648
      %v3650 = vpop.f32.mrf.mxu0
      %v3651 = vpop.f32.mrf.mxu0
      %v3652 = vadd.f32 0.0, %v3651
      %v3653 = vpop.f32.mrf.mxu0
      %3654 = vmatprep.mubr.bf16.mxu0 0
      %3655 = vmatmul.mubr.bf16.gmra.mxu0 %v3465
      %v3656 = vpop.f32.mrf.mxu0
      %v3657 = vadd.f32 0.0, %v3656
      %v3658 = vpop.f32.mrf.mxu0
      %v3659 = vpop.f32.mrf.mxu0
      %v3660 = vadd.f32 0.0, %v3659
      %v3661 = vpop.f32.mrf.mxu0
      %3662 = vmatprep.mubr.bf16.mxu0 0
      %3663 = vmatmul.mubr.bf16.gmra.mxu0 %v3466
      %v3664 = vpop.f32.mrf.mxu0
      %v3665 = vadd.f32 0.0, %v3664
      %v3666 = vpop.f32.mrf.mxu0
      %v3667 = vpop.f32.mrf.mxu0
      %v3668 = vadd.f32 0.0, %v3667
      %v3669 = vpop.f32.mrf.mxu0
      %3670 = vmatprep.mubr.bf16.mxu0 0
      %3671 = vmatmul.mubr.bf16.gmra.mxu0 %v3467
      %v3672 = vpop.f32.mrf.mxu0
      %v3673 = vadd.f32 0.0, %v3672
      %v3674 = vpop.f32.mrf.mxu0
      %v3675 = vpop.f32.mrf.mxu0
      %v3676 = vadd.f32 0.0, %v3675
      %v3677 = vpop.f32.mrf.mxu0
      %3678 = vmatprep.mubr.bf16.mxu0 0
      %3679 = vmatmul.mubr.bf16.gmra.mxu0 %v3468
      %v3680 = vpop.f32.mrf.mxu0
      %v3681 = vadd.f32 0.0, %v3680
      %v3682 = vpop.f32.mrf.mxu0
      %v3683 = vpop.f32.mrf.mxu0
      %v3684 = vadd.f32 0.0, %v3683
      %v3685 = vpop.f32.mrf.mxu0
      %3686 = vmatprep.mubr.bf16.mxu0 0
      %3687 = vmatmul.mubr.bf16.gmra.mxu0 %v3469
      %v3688 = vpop.f32.mrf.mxu0
      %v3689 = vadd.f32 0.0, %v3688
      %v3690 = vpop.f32.mrf.mxu0
      %v3691 = vpop.f32.mrf.mxu0
      %v3692 = vadd.f32 0.0, %v3691
      %v3693 = vpop.f32.mrf.mxu0
      %3694 = vdwg.mxu0
      %v3695 = vadd.f32 %v3308, %v3569
      %v3696 = vadd.f32 %v3309, %v3572
      %v3697 = vadd.f32 %v3310, %v3577
      %v3698 = vadd.f32 %v3311, %v3580
      %v3699 = vadd.f32 %v3312, %v3585
      %v3700 = vadd.f32 %v3313, %v3588
      %v3701 = vadd.f32 %v3314, %v3593
      %v3702 = vadd.f32 %v3315, %v3596
      %v3703 = vadd.f32 %v3316, %v3601
      %v3704 = vadd.f32 %v3317, %v3604
      %v3705 = vadd.f32 %v3318, %v3609
      %v3706 = vadd.f32 %v3319, %v3612
      %v3707 = vadd.f32 %v3320, %v3617
      %v3708 = vadd.f32 %v3321, %v3620
      %v3709 = vadd.f32 %v3322, %v3625
      %v3710 = vadd.f32 %v3323, %v3628
      %v3711 = vadd.f32 %v3324, %v3633
      %v3712 = vadd.f32 %v3325, %v3636
      %v3713 = vadd.f32 %v3326, %v3641
      %v3714 = vadd.f32 %v3327, %v3644
      %v3715 = vadd.f32 %v3328, %v3649
      %v3716 = vadd.f32 %v3329, %v3652
      %v3717 = vadd.f32 %v3330, %v3657
      %v3718 = vadd.f32 %v3331, %v3660
      %v3719 = vadd.f32 %v3332, %v3665
      %v3720 = vadd.f32 %v3333, %v3668
      %v3721 = vadd.f32 %v3334, %v3673
      %v3722 = vadd.f32 %v3335, %v3676
      %v3723 = vadd.f32 %v3336, %v3681
      %v3724 = vadd.f32 %v3337, %v3684
      %v3725 = vadd.f32 %v3338, %v3689
      %v3726 = vadd.f32 %v3339, %v3692
      %v3727 = vld [vmem:[%s3340] sm:$0xf]
      %v3728 = vld [vmem:[%s3340 + $0x4] sm:$0xf]
      %v3729 = vld [vmem:[%s3340 + $0x8] sm:$0x1]
      %v3730 = vld [vmem:[%s3340 + $0xc] sm:$0xf]
      %v3731 = vld [vmem:[%s3340 + $0x10] sm:$0xf]
      %v3732 = vld [vmem:[%s3340 + $0x14] sm:$0x1]
      %v3733 = vld [vmem:[%s3340 + $0x18] sm:$0xf]
      %v3734 = vld [vmem:[%s3340 + $0x1c] sm:$0xf]
      %v3735 = vld [vmem:[%s3340 + $0x20] sm:$0x1]
      %v3736 = vld [vmem:[%s3340 + $0x24] sm:$0xf]
      %v3737 = vld [vmem:[%s3340 + $0x28] sm:$0xf]
      %v3738 = vld [vmem:[%s3340 + $0x2c] sm:$0x1]
      %v3739 = vld [vmem:[%s3340 + $0x30] sm:$0xf]
      %v3740 = vld [vmem:[%s3340 + $0x34] sm:$0xf]
      %v3741 = vld [vmem:[%s3340 + $0x38] sm:$0x1]
      %v3742 = vld [vmem:[%s3340 + $0x3c] sm:$0xf]
      %v3743 = vld [vmem:[%s3340 + $0x40] sm:$0xf]
      %v3744 = vld [vmem:[%s3340 + $0x44] sm:$0x1]
      %v3745 = vld [vmem:[%s3340 + $0x48] sm:$0xf]
      %v3746 = vld [vmem:[%s3340 + $0x4c] sm:$0xf]
      %v3747 = vld [vmem:[%s3340 + $0x50] sm:$0x1]
      %v3748 = vld [vmem:[%s3340 + $0x54] sm:$0xf]
      %v3749 = vld [vmem:[%s3340 + $0x58] sm:$0xf]
      %v3750 = vld [vmem:[%s3340 + $0x5c] sm:$0x1]
      %v3751 = vld [vmem:[%s3340 + $0x60] sm:$0xf]
      %v3752 = vld [vmem:[%s3340 + $0x64] sm:$0xf]
      %v3753 = vld [vmem:[%s3340 + $0x68] sm:$0x1]
      %v3754 = vld [vmem:[%s3340 + $0x6c] sm:$0xf]
      %v3755 = vld [vmem:[%s3340 + $0x70] sm:$0xf]
      %v3756 = vld [vmem:[%s3340 + $0x74] sm:$0x1]
      %v3757 = vld [vmem:[%s3340 + $0x78] sm:$0xf]
      %v3758 = vld [vmem:[%s3340 + $0x7c] sm:$0xf]
      %v3759 = vld [vmem:[%s3340 + $0x80] sm:$0x1]
      %v3760 = vld [vmem:[%s3340 + $0x84] sm:$0xf]
      %v3761 = vld [vmem:[%s3340 + $0x88] sm:$0xf]
      %v3762 = vld [vmem:[%s3340 + $0x8c] sm:$0x1]
      %v3763 = vld [vmem:[%s3340 + $0x90] sm:$0xf]
      %v3764 = vld [vmem:[%s3340 + $0x94] sm:$0xf]
      %v3765 = vld [vmem:[%s3340 + $0x98] sm:$0x1]
      %v3766 = vld [vmem:[%s3340 + $0x9c] sm:$0xf]
      %v3767 = vld [vmem:[%s3340 + $0xa0] sm:$0xf]
      %v3768 = vld [vmem:[%s3340 + $0xa4] sm:$0x1]
      %v3769 = vld [vmem:[%s3340 + $0xa8] sm:$0xf]
      %v3770 = vld [vmem:[%s3340 + $0xac] sm:$0xf]
      %v3771 = vld [vmem:[%s3340 + $0xb0] sm:$0x1]
      %v3772 = vld [vmem:[%s3340 + $0xb4] sm:$0xf]
      %v3773 = vld [vmem:[%s3340 + $0xb8] sm:$0xf]
      %v3774 = vld [vmem:[%s3340 + $0xbc] sm:$0x1]
      %v3776 = vshrl.u32 %v3727, 16
      %v3778 = vrot.slane %v3776, 4
      %v3779 = vshll.u32 %v3727, 16
      %v3781 = vrot.slane %v3779, 5
      %v3782 = vor.u32 %v3778, %v3781
      %v3783 = vrot.slane %v3782, 4
      %v3785 = vshll.u32 %v3728, 16
      %v3787 = vrot.slane %v3785, 5
      %v3788 = vsel %vm236, %v3783, %v3787
      %v3789 = vshrl.u32 %v3728, 16
      %v3791 = vrot.slane %v3789, 4
      %v3792 = vor.u32 %v3791, %v3787
      %v3793 = vrot.slane %v3792, 4
      %v3795 = vshll.u32 %v3729, 16
      %v3797 = vrot.slane %v3795, 5
      %v3798 = vsel %vm236, %v3793, %v3797
      %v3800 = vshrl.u32 %v3730, 16
      %v3802 = vrot.slane %v3800, 4
      %v3803 = vshll.u32 %v3730, 16
      %v3805 = vrot.slane %v3803, 5
      %v3806 = vor.u32 %v3802, %v3805
      %v3807 = vrot.slane %v3806, 4
      %v3809 = vshll.u32 %v3731, 16
      %v3811 = vrot.slane %v3809, 5
      %v3812 = vsel %vm236, %v3807, %v3811
      %v3813 = vshrl.u32 %v3731, 16
      %v3815 = vrot.slane %v3813, 4
      %v3816 = vor.u32 %v3815, %v3811
      %v3817 = vrot.slane %v3816, 4
      %v3819 = vshll.u32 %v3732, 16
      %v3821 = vrot.slane %v3819, 5
      %v3822 = vsel %vm236, %v3817, %v3821
      %v3824 = vshrl.u32 %v3733, 16
      %v3826 = vrot.slane %v3824, 4
      %v3827 = vshll.u32 %v3733, 16
      %v3829 = vrot.slane %v3827, 5
      %v3830 = vor.u32 %v3826, %v3829
      %v3831 = vrot.slane %v3830, 4
      %v3833 = vshll.u32 %v3734, 16
      %v3835 = vrot.slane %v3833, 5
      %v3836 = vsel %vm236, %v3831, %v3835
      %v3837 = vshrl.u32 %v3734, 16
      %v3839 = vrot.slane %v3837, 4
      %v3840 = vor.u32 %v3839, %v3835
      %v3841 = vrot.slane %v3840, 4
      %v3843 = vshll.u32 %v3735, 16
      %v3845 = vrot.slane %v3843, 5
      %v3846 = vsel %vm236, %v3841, %v3845
      %v3848 = vshrl.u32 %v3736, 16
      %v3850 = vrot.slane %v3848, 4
      %v3851 = vshll.u32 %v3736, 16
      %v3853 = vrot.slane %v3851, 5
      %v3854 = vor.u32 %v3850, %v3853
      %v3855 = vrot.slane %v3854, 4
      %v3857 = vshll.u32 %v3737, 16
      %v3859 = vrot.slane %v3857, 5
      %v3860 = vsel %vm236, %v3855, %v3859
      %v3861 = vshrl.u32 %v3737, 16
      %v3863 = vrot.slane %v3861, 4
      %v3864 = vor.u32 %v3863, %v3859
      %v3865 = vrot.slane %v3864, 4
      %v3867 = vshll.u32 %v3738, 16
      %v3869 = vrot.slane %v3867, 5
      %v3870 = vsel %vm236, %v3865, %v3869
      %v3872 = vshrl.u32 %v3739, 16
      %v3874 = vrot.slane %v3872, 4
      %v3875 = vshll.u32 %v3739, 16
      %v3877 = vrot.slane %v3875, 5
      %v3878 = vor.u32 %v3874, %v3877
      %v3879 = vrot.slane %v3878, 4
      %v3881 = vshll.u32 %v3740, 16
      %v3883 = vrot.slane %v3881, 5
      %v3884 = vsel %vm236, %v3879, %v3883
      %v3885 = vshrl.u32 %v3740, 16
      %v3887 = vrot.slane %v3885, 4
      %v3888 = vor.u32 %v3887, %v3883
      %v3889 = vrot.slane %v3888, 4
      %v3891 = vshll.u32 %v3741, 16
      %v3893 = vrot.slane %v3891, 5
      %v3894 = vsel %vm236, %v3889, %v3893
      %v3896 = vshrl.u32 %v3742, 16
      %v3898 = vrot.slane %v3896, 4
      %v3899 = vshll.u32 %v3742, 16
      %v3901 = vrot.slane %v3899, 5
      %v3902 = vor.u32 %v3898, %v3901
      %v3903 = vrot.slane %v3902, 4
      %v3905 = vshll.u32 %v3743, 16
      %v3907 = vrot.slane %v3905, 5
      %v3908 = vsel %vm236, %v3903, %v3907
      %v3909 = vshrl.u32 %v3743, 16
      %v3911 = vrot.slane %v3909, 4
      %v3912 = vor.u32 %v3911, %v3907
      %v3913 = vrot.slane %v3912, 4
      %v3915 = vshll.u32 %v3744, 16
      %v3917 = vrot.slane %v3915, 5
      %v3918 = vsel %vm236, %v3913, %v3917
      %v3920 = vshrl.u32 %v3745, 16
      %v3922 = vrot.slane %v3920, 4
      %v3923 = vshll.u32 %v3745, 16
      %v3925 = vrot.slane %v3923, 5
      %v3926 = vor.u32 %v3922, %v3925
      %v3927 = vrot.slane %v3926, 4
      %v3929 = vshll.u32 %v3746, 16
      %v3931 = vrot.slane %v3929, 5
      %v3932 = vsel %vm236, %v3927, %v3931
      %v3933 = vshrl.u32 %v3746, 16
      %v3935 = vrot.slane %v3933, 4
      %v3936 = vor.u32 %v3935, %v3931
      %v3937 = vrot.slane %v3936, 4
      %v3939 = vshll.u32 %v3747, 16
      %v3941 = vrot.slane %v3939, 5
      %v3942 = vsel %vm236, %v3937, %v3941
      %v3944 = vshrl.u32 %v3748, 16
      %v3946 = vrot.slane %v3944, 4
      %v3947 = vshll.u32 %v3748, 16
      %v3949 = vrot.slane %v3947, 5
      %v3950 = vor.u32 %v3946, %v3949
      %v3951 = vrot.slane %v3950, 4
      %v3953 = vshll.u32 %v3749, 16
      %v3955 = vrot.slane %v3953, 5
      %v3956 = vsel %vm236, %v3951, %v3955
      %v3957 = vshrl.u32 %v3749, 16
      %v3959 = vrot.slane %v3957, 4
      %v3960 = vor.u32 %v3959, %v3955
      %v3961 = vrot.slane %v3960, 4
      %v3963 = vshll.u32 %v3750, 16
      %v3965 = vrot.slane %v3963, 5
      %v3966 = vsel %vm236, %v3961, %v3965
      %v3968 = vshrl.u32 %v3751, 16
      %v3970 = vrot.slane %v3968, 4
      %v3971 = vshll.u32 %v3751, 16
      %v3973 = vrot.slane %v3971, 5
      %v3974 = vor.u32 %v3970, %v3973
      %v3975 = vrot.slane %v3974, 4
      %v3977 = vshll.u32 %v3752, 16
      %v3979 = vrot.slane %v3977, 5
      %v3980 = vsel %vm236, %v3975, %v3979
      %v3981 = vshrl.u32 %v3752, 16
      %v3983 = vrot.slane %v3981, 4
      %v3984 = vor.u32 %v3983, %v3979
      %v3985 = vrot.slane %v3984, 4
      %v3987 = vshll.u32 %v3753, 16
      %v3989 = vrot.slane %v3987, 5
      %v3990 = vsel %vm236, %v3985, %v3989
      %v3992 = vshrl.u32 %v3754, 16
      %v3994 = vrot.slane %v3992, 4
      %v3995 = vshll.u32 %v3754, 16
      %v3997 = vrot.slane %v3995, 5
      %v3998 = vor.u32 %v3994, %v3997
      %v3999 = vrot.slane %v3998, 4
      %v4001 = vshll.u32 %v3755, 16
      %v4003 = vrot.slane %v4001, 5
      %v4004 = vsel %vm236, %v3999, %v4003
      %v4005 = vshrl.u32 %v3755, 16
      %v4007 = vrot.slane %v4005, 4
      %v4008 = vor.u32 %v4007, %v4003
      %v4009 = vrot.slane %v4008, 4
      %v4011 = vshll.u32 %v3756, 16
      %v4013 = vrot.slane %v4011, 5
      %v4014 = vsel %vm236, %v4009, %v4013
      %v4016 = vshrl.u32 %v3757, 16
      %v4018 = vrot.slane %v4016, 4
      %v4019 = vshll.u32 %v3757, 16
      %v4021 = vrot.slane %v4019, 5
      %v4022 = vor.u32 %v4018, %v4021
      %v4023 = vrot.slane %v4022, 4
      %v4025 = vshll.u32 %v3758, 16
      %v4027 = vrot.slane %v4025, 5
      %v4028 = vsel %vm236, %v4023, %v4027
      %v4029 = vshrl.u32 %v3758, 16
      %v4031 = vrot.slane %v4029, 4
      %v4032 = vor.u32 %v4031, %v4027
      %v4033 = vrot.slane %v4032, 4
      %v4035 = vshll.u32 %v3759, 16
      %v4037 = vrot.slane %v4035, 5
      %v4038 = vsel %vm236, %v4033, %v4037
      %v4040 = vshrl.u32 %v3760, 16
      %v4042 = vrot.slane %v4040, 4
      %v4043 = vshll.u32 %v3760, 16
      %v4045 = vrot.slane %v4043, 5
      %v4046 = vor.u32 %v4042, %v4045
      %v4047 = vrot.slane %v4046, 4
      %v4049 = vshll.u32 %v3761, 16
      %v4051 = vrot.slane %v4049, 5
      %v4052 = vsel %vm236, %v4047, %v4051
      %v4053 = vshrl.u32 %v3761, 16
      %v4055 = vrot.slane %v4053, 4
      %v4056 = vor.u32 %v4055, %v4051
      %v4057 = vrot.slane %v4056, 4
      %v4059 = vshll.u32 %v3762, 16
      %v4061 = vrot.slane %v4059, 5
      %v4062 = vsel %vm236, %v4057, %v4061
      %v4064 = vshrl.u32 %v3763, 16
      %v4066 = vrot.slane %v4064, 4
      %v4067 = vshll.u32 %v3763, 16
      %v4069 = vrot.slane %v4067, 5
      %v4070 = vor.u32 %v4066, %v4069
      %v4071 = vrot.slane %v4070, 4
      %v4073 = vshll.u32 %v3764, 16
      %v4075 = vrot.slane %v4073, 5
      %v4076 = vsel %vm236, %v4071, %v4075
      %v4077 = vshrl.u32 %v3764, 16
      %v4079 = vrot.slane %v4077, 4
      %v4080 = vor.u32 %v4079, %v4075
      %v4081 = vrot.slane %v4080, 4
      %v4083 = vshll.u32 %v3765, 16
      %v4085 = vrot.slane %v4083, 5
      %v4086 = vsel %vm236, %v4081, %v4085
      %v4088 = vshrl.u32 %v3766, 16
      %v4090 = vrot.slane %v4088, 4
      %v4091 = vshll.u32 %v3766, 16
      %v4093 = vrot.slane %v4091, 5
      %v4094 = vor.u32 %v4090, %v4093
      %v4095 = vrot.slane %v4094, 4
      %v4097 = vshll.u32 %v3767, 16
      %v4099 = vrot.slane %v4097, 5
      %v4100 = vsel %vm236, %v4095, %v4099
      %v4101 = vshrl.u32 %v3767, 16
      %v4103 = vrot.slane %v4101, 4
      %v4104 = vor.u32 %v4103, %v4099
      %v4105 = vrot.slane %v4104, 4
      %v4107 = vshll.u32 %v3768, 16
      %v4109 = vrot.slane %v4107, 5
      %v4110 = vsel %vm236, %v4105, %v4109
      %v4112 = vshrl.u32 %v3769, 16
      %v4114 = vrot.slane %v4112, 4
      %v4115 = vshll.u32 %v3769, 16
      %v4117 = vrot.slane %v4115, 5
      %v4118 = vor.u32 %v4114, %v4117
      %v4119 = vrot.slane %v4118, 4
      %v4121 = vshll.u32 %v3770, 16
      %v4123 = vrot.slane %v4121, 5
      %v4124 = vsel %vm236, %v4119, %v4123
      %v4125 = vshrl.u32 %v3770, 16
      %v4127 = vrot.slane %v4125, 4
      %v4128 = vor.u32 %v4127, %v4123
      %v4129 = vrot.slane %v4128, 4
      %v4131 = vshll.u32 %v3771, 16
      %v4133 = vrot.slane %v4131, 5
      %v4134 = vsel %vm236, %v4129, %v4133
      %v4136 = vshrl.u32 %v3772, 16
      %v4138 = vrot.slane %v4136, 4
      %v4139 = vshll.u32 %v3772, 16
      %v4141 = vrot.slane %v4139, 5
      %v4142 = vor.u32 %v4138, %v4141
      %v4143 = vrot.slane %v4142, 4
      %v4145 = vshll.u32 %v3773, 16
      %v4147 = vrot.slane %v4145, 5
      %v4148 = vsel %vm236, %v4143, %v4147
      %v4149 = vshrl.u32 %v3773, 16
      %v4151 = vrot.slane %v4149, 4
      %v4152 = vor.u32 %v4151, %v4147
      %v4153 = vrot.slane %v4152, 4
      %v4155 = vshll.u32 %v3774, 16
      %v4157 = vrot.slane %v4155, 5
      %v4158 = vsel %vm236, %v4153, %v4157
      %s4159 = scalar_lea.vmem %s1, 448
      %v4160 = vld [vmem:[%s4159] sm:$0xf]
      %v4161 = vld [vmem:[%s4159 + $0x4] sm:$0xf]
      %v4162 = vld [vmem:[%s4159 + $0x8] sm:$0xf]
      %v4163 = vld [vmem:[%s4159 + $0xc] sm:$0xf]
      %v4164 = vld [vmem:[%s4159 + $0x10] sm:$0xf]
      %v4165 = vld [vmem:[%s4159 + $0x14] sm:$0xf]
      %v4166 = vld [vmem:[%s4159 + $0x18] sm:$0xf]
      %v4167 = vld [vmem:[%s4159 + $0x1c] sm:$0xf]
      %v4168 = vld [vmem:[%s4159 + $0x20] sm:$0xf]
      %v4169 = vld [vmem:[%s4159 + $0x24] sm:$0xf]
      %v4170 = vld [vmem:[%s4159 + $0x28] sm:$0xf]
      %v4171 = vld [vmem:[%s4159 + $0x2c] sm:$0xf]
      %v4172 = vld [vmem:[%s4159 + $0x30] sm:$0xf]
      %v4173 = vld [vmem:[%s4159 + $0x34] sm:$0xf]
      %v4174 = vld [vmem:[%s4159 + $0x38] sm:$0xf]
      %v4175 = vld [vmem:[%s4159 + $0x3c] sm:$0xf]
      %v4176 = vunpack.c.l.b16 %v3788
      %v4177 = vunpack.c.l.b16 %v3798
      %v4178 = vunpack.c.l.b16 %v3812
      %v4179 = vunpack.c.l.b16 %v3822
      %v4180 = vunpack.c.l.b16 %v3836
      %v4181 = vunpack.c.l.b16 %v3846
      %v4182 = vunpack.c.l.b16 %v3860
      %v4183 = vunpack.c.l.b16 %v3870
      %v4184 = vunpack.c.l.b16 %v3884
      %v4185 = vunpack.c.l.b16 %v3894
      %v4186 = vunpack.c.l.b16 %v3908
      %v4187 = vunpack.c.l.b16 %v3918
      %v4188 = vunpack.c.l.b16 %v3932
      %v4189 = vunpack.c.l.b16 %v3942
      %v4190 = vunpack.c.l.b16 %v3956
      %v4191 = vunpack.c.l.b16 %v3966
      %v4192 = vunpack.c.l.b16 %v3980
      %v4193 = vunpack.c.l.b16 %v3990
      %v4194 = vunpack.c.l.b16 %v4004
      %v4195 = vunpack.c.l.b16 %v4014
      %v4196 = vunpack.c.l.b16 %v4028
      %v4197 = vunpack.c.l.b16 %v4038
      %v4198 = vunpack.c.l.b16 %v4052
      %v4199 = vunpack.c.l.b16 %v4062
      %v4200 = vunpack.c.l.b16 %v4076
      %v4201 = vunpack.c.l.b16 %v4086
      %v4202 = vunpack.c.l.b16 %v4100
      %v4203 = vunpack.c.l.b16 %v4110
      %v4204 = vunpack.c.l.b16 %v4124
      %v4205 = vunpack.c.l.b16 %v4134
      %v4206 = vunpack.c.l.b16 %v4148
      %v4207 = vunpack.c.l.b16 %v4158
      %v4208 = vpack.c.b16 %v4177, %v4176
      %v4209 = vpack.c.b16 %v4179, %v4178
      %v4210 = vpack.c.b16 %v4181, %v4180
      %v4211 = vpack.c.b16 %v4183, %v4182
      %v4212 = vpack.c.b16 %v4185, %v4184
      %v4213 = vpack.c.b16 %v4187, %v4186
      %v4214 = vpack.c.b16 %v4189, %v4188
      %v4215 = vpack.c.b16 %v4191, %v4190
      %v4216 = vpack.c.b16 %v4193, %v4192
      %v4217 = vpack.c.b16 %v4195, %v4194
      %v4218 = vpack.c.b16 %v4197, %v4196
      %v4219 = vpack.c.b16 %v4199, %v4198
      %v4220 = vpack.c.b16 %v4201, %v4200
      %v4221 = vpack.c.b16 %v4203, %v4202
      %v4222 = vpack.c.b16 %v4205, %v4204
      %v4223 = vpack.c.b16 %v4207, %v4206
      %v4256 = vunpack.c.l.b16 %v4160
      %v4257 = vunpack.c.l.b16 %v4161
      %v4258 = vunpack.c.l.b16 %v4162
      %v4259 = vunpack.c.l.b16 %v4163
      %v4260 = vunpack.c.l.b16 %v4164
      %v4261 = vunpack.c.l.b16 %v4165
      %v4262 = vunpack.c.l.b16 %v4166
      %v4263 = vunpack.c.l.b16 %v4167
      %v4264 = vunpack.c.l.b16 %v4168
      %v4265 = vunpack.c.l.b16 %v4169
      %v4266 = vunpack.c.l.b16 %v4170
      %v4267 = vunpack.c.l.b16 %v4171
      %v4268 = vunpack.c.l.b16 %v4172
      %v4269 = vunpack.c.l.b16 %v4173
      %v4270 = vunpack.c.l.b16 %v4174
      %v4271 = vunpack.c.l.b16 %v4175
      %v4272 = vpack.c.b16 %v4257, %v4256
      %v4273 = vpack.c.b16 %v4259, %v4258
      %v4274 = vpack.c.b16 %v4261, %v4260
      %v4275 = vpack.c.b16 %v4263, %v4262
      %v4276 = vpack.c.b16 %v4265, %v4264
      %v4277 = vpack.c.b16 %v4267, %v4266
      %v4278 = vpack.c.b16 %v4269, %v4268
      %v4279 = vpack.c.b16 %v4271, %v4270
      %4288 = vmatprep.subr.bf16.mxu0 0
      %4289 = vmatpush1.bf16.msra.mxu0 %v4279
      %4290 = vmatprep.subr.bf16.mxu0 0
      %4291 = vmatpush1.bf16.msra.mxu0 %v4278
      %4292 = vmatprep.subr.bf16.mxu0 0
      %4293 = vmatpush1.bf16.msra.mxu0 %v4277
      %4294 = vmatprep.subr.bf16.mxu0 0
      %4295 = vmatpush1.bf16.msra.mxu0 %v4276
      %4296 = vmatprep.subr.bf16.mxu0 0
      %4297 = vmatpush1.bf16.msra.mxu0 %v4275
      %4298 = vmatprep.subr.bf16.mxu0 0
      %4299 = vmatpush1.bf16.msra.mxu0 %v4274
      %4300 = vmatprep.subr.bf16.mxu0 0
      %4301 = vmatpush1.bf16.msra.mxu0 %v4273
      %4302 = vmatprep.subr.bf16.mxu0 0
      %4303 = vmatpush1.bf16.msra.mxu0 %v4272
      %4304 = vmatprep.subr.bf16.mxu0 0
      %4305 = vmatpush2.bf16.msra.mxu0 0
      %4306 = vmatprep.subr.bf16.mxu0 0
      %4307 = vmatpush2.bf16.msra.mxu0 0
      %4308 = vmatprep.subr.bf16.mxu0 0
      %4309 = vmatpush2.bf16.msra.mxu0 0
      %4310 = vmatprep.subr.bf16.mxu0 0
      %4311 = vmatpush2.bf16.msra.mxu0 0
      %4312 = vmatprep.subr.bf16.mxu0 0
      %4313 = vmatpush2.bf16.msra.mxu0 0
      %4314 = vmatprep.subr.bf16.mxu0 0
      %4315 = vmatpush2.bf16.msra.mxu0 0
      %4316 = vmatprep.subr.bf16.mxu0 0
      %4317 = vmatpush2.bf16.msra.mxu0 0
      %4318 = vmatprep.subr.bf16.mxu0 0
      %4319 = vmatpush2.bf16.msra.mxu0 0
      %4320 = vmatprep.mubr.bf16.mxu0 0
      %4321 = vmatmul.mubr.bf16.gmra.mxu0 %v4208
      %v4322 = vpop.f32.mrf.mxu0
      %v4323 = vadd.f32 0.0, %v4322
      %v4324 = vpop.f32.mrf.mxu0
      %v4325 = vpop.f32.mrf.mxu0
      %v4326 = vadd.f32 0.0, %v4325
      %v4327 = vpop.f32.mrf.mxu0
      %4328 = vmatprep.mubr.bf16.mxu0 0
      %4329 = vmatmul.mubr.bf16.gmra.mxu0 %v4209
      %v4330 = vpop.f32.mrf.mxu0
      %v4331 = vadd.f32 0.0, %v4330
      %v4332 = vpop.f32.mrf.mxu0
      %v4333 = vpop.f32.mrf.mxu0
      %v4334 = vadd.f32 0.0, %v4333
      %v4335 = vpop.f32.mrf.mxu0
      %4336 = vmatprep.mubr.bf16.mxu0 0
      %4337 = vmatmul.mubr.bf16.gmra.mxu0 %v4210
      %v4338 = vpop.f32.mrf.mxu0
      %v4339 = vadd.f32 0.0, %v4338
      %v4340 = vpop.f32.mrf.mxu0
      %v4341 = vpop.f32.mrf.mxu0
      %v4342 = vadd.f32 0.0, %v4341
      %v4343 = vpop.f32.mrf.mxu0
      %4344 = vmatprep.mubr.bf16.mxu0 0
      %4345 = vmatmul.mubr.bf16.gmra.mxu0 %v4211
      %v4346 = vpop.f32.mrf.mxu0
      %v4347 = vadd.f32 0.0, %v4346
      %v4348 = vpop.f32.mrf.mxu0
      %v4349 = vpop.f32.mrf.mxu0
      %v4350 = vadd.f32 0.0, %v4349
      %v4351 = vpop.f32.mrf.mxu0
      %4352 = vmatprep.mubr.bf16.mxu0 0
      %4353 = vmatmul.mubr.bf16.gmra.mxu0 %v4212
      %v4354 = vpop.f32.mrf.mxu0
      %v4355 = vadd.f32 0.0, %v4354
      %v4356 = vpop.f32.mrf.mxu0
      %v4357 = vpop.f32.mrf.mxu0
      %v4358 = vadd.f32 0.0, %v4357
      %v4359 = vpop.f32.mrf.mxu0
      %4360 = vmatprep.mubr.bf16.mxu0 0
      %4361 = vmatmul.mubr.bf16.gmra.mxu0 %v4213
      %v4362 = vpop.f32.mrf.mxu0
      %v4363 = vadd.f32 0.0, %v4362
      %v4364 = vpop.f32.mrf.mxu0
      %v4365 = vpop.f32.mrf.mxu0
      %v4366 = vadd.f32 0.0, %v4365
      %v4367 = vpop.f32.mrf.mxu0
      %4368 = vmatprep.mubr.bf16.mxu0 0
      %4369 = vmatmul.mubr.bf16.gmra.mxu0 %v4214
      %v4370 = vpop.f32.mrf.mxu0
      %v4371 = vadd.f32 0.0, %v4370
      %v4372 = vpop.f32.mrf.mxu0
      %v4373 = vpop.f32.mrf.mxu0
      %v4374 = vadd.f32 0.0, %v4373
      %v4375 = vpop.f32.mrf.mxu0
      %4376 = vmatprep.mubr.bf16.mxu0 0
      %4377 = vmatmul.mubr.bf16.gmra.mxu0 %v4215
      %v4378 = vpop.f32.mrf.mxu0
      %v4379 = vadd.f32 0.0, %v4378
      %v4380 = vpop.f32.mrf.mxu0
      %v4381 = vpop.f32.mrf.mxu0
      %v4382 = vadd.f32 0.0, %v4381
      %v4383 = vpop.f32.mrf.mxu0
      %4384 = vmatprep.mubr.bf16.mxu0 0
      %4385 = vmatmul.mubr.bf16.gmra.mxu0 %v4216
      %v4386 = vpop.f32.mrf.mxu0
      %v4387 = vadd.f32 0.0, %v4386
      %v4388 = vpop.f32.mrf.mxu0
      %v4389 = vpop.f32.mrf.mxu0
      %v4390 = vadd.f32 0.0, %v4389
      %v4391 = vpop.f32.mrf.mxu0
      %4392 = vmatprep.mubr.bf16.mxu0 0
      %4393 = vmatmul.mubr.bf16.gmra.mxu0 %v4217
      %v4394 = vpop.f32.mrf.mxu0
      %v4395 = vadd.f32 0.0, %v4394
      %v4396 = vpop.f32.mrf.mxu0
      %v4397 = vpop.f32.mrf.mxu0
      %v4398 = vadd.f32 0.0, %v4397
      %v4399 = vpop.f32.mrf.mxu0
      %4400 = vmatprep.mubr.bf16.mxu0 0
      %4401 = vmatmul.mubr.bf16.gmra.mxu0 %v4218
      %v4402 = vpop.f32.mrf.mxu0
      %v4403 = vadd.f32 0.0, %v4402
      %v4404 = vpop.f32.mrf.mxu0
      %v4405 = vpop.f32.mrf.mxu0
      %v4406 = vadd.f32 0.0, %v4405
      %v4407 = vpop.f32.mrf.mxu0
      %4408 = vmatprep.mubr.bf16.mxu0 0
      %4409 = vmatmul.mubr.bf16.gmra.mxu0 %v4219
      %v4410 = vpop.f32.mrf.mxu0
      %v4411 = vadd.f32 0.0, %v4410
      %v4412 = vpop.f32.mrf.mxu0
      %v4413 = vpop.f32.mrf.mxu0
      %v4414 = vadd.f32 0.0, %v4413
      %v4415 = vpop.f32.mrf.mxu0
      %4416 = vmatprep.mubr.bf16.mxu0 0
      %4417 = vmatmul.mubr.bf16.gmra.mxu0 %v4220
      %v4418 = vpop.f32.mrf.mxu0
      %v4419 = vadd.f32 0.0, %v4418
      %v4420 = vpop.f32.mrf.mxu0
      %v4421 = vpop.f32.mrf.mxu0
      %v4422 = vadd.f32 0.0, %v4421
      %v4423 = vpop.f32.mrf.mxu0
      %4424 = vmatprep.mubr.bf16.mxu0 0
      %4425 = vmatmul.mubr.bf16.gmra.mxu0 %v4221
      %v4426 = vpop.f32.mrf.mxu0
      %v4427 = vadd.f32 0.0, %v4426
      %v4428 = vpop.f32.mrf.mxu0
      %v4429 = vpop.f32.mrf.mxu0
      %v4430 = vadd.f32 0.0, %v4429
      %v4431 = vpop.f32.mrf.mxu0
      %4432 = vmatprep.mubr.bf16.mxu0 0
      %4433 = vmatmul.mubr.bf16.gmra.mxu0 %v4222
      %v4434 = vpop.f32.mrf.mxu0
      %v4435 = vadd.f32 0.0, %v4434
      %v4436 = vpop.f32.mrf.mxu0
      %v4437 = vpop.f32.mrf.mxu0
      %v4438 = vadd.f32 0.0, %v4437
      %v4439 = vpop.f32.mrf.mxu0
      %4440 = vmatprep.mubr.bf16.mxu0 0
      %4441 = vmatmul.mubr.bf16.gmra.mxu0 %v4223
      %v4442 = vpop.f32.mrf.mxu0
      %v4443 = vadd.f32 0.0, %v4442
      %v4444 = vpop.f32.mrf.mxu0
      %v4445 = vpop.f32.mrf.mxu0
      %v4446 = vadd.f32 0.0, %v4445
      %v4447 = vpop.f32.mrf.mxu0
      %4448 = vdwg.mxu0
      %v4449 = vadd.f32 %v3695, %v4323
      %v4450 = vadd.f32 %v3696, %v4326
      %v4451 = vadd.f32 %v3697, %v4331
      %v4452 = vadd.f32 %v3698, %v4334
      %v4453 = vadd.f32 %v3699, %v4339
      %v4454 = vadd.f32 %v3700, %v4342
      %v4455 = vadd.f32 %v3701, %v4347
      %v4456 = vadd.f32 %v3702, %v4350
      %v4457 = vadd.f32 %v3703, %v4355
      %v4458 = vadd.f32 %v3704, %v4358
      %v4459 = vadd.f32 %v3705, %v4363
      %v4460 = vadd.f32 %v3706, %v4366
      %v4461 = vadd.f32 %v3707, %v4371
      %v4462 = vadd.f32 %v3708, %v4374
      %v4463 = vadd.f32 %v3709, %v4379
      %v4464 = vadd.f32 %v3710, %v4382
      %v4465 = vadd.f32 %v3711, %v4387
      %v4466 = vadd.f32 %v3712, %v4390
      %v4467 = vadd.f32 %v3713, %v4395
      %v4468 = vadd.f32 %v3714, %v4398
      %v4469 = vadd.f32 %v3715, %v4403
      %v4470 = vadd.f32 %v3716, %v4406
      %v4471 = vadd.f32 %v3717, %v4411
      %v4472 = vadd.f32 %v3718, %v4414
      %v4473 = vadd.f32 %v3719, %v4419
      %v4474 = vadd.f32 %v3720, %v4422
      %v4475 = vadd.f32 %v3721, %v4427
      %v4476 = vadd.f32 %v3722, %v4430
      %v4477 = vadd.f32 %v3723, %v4435
      %v4478 = vadd.f32 %v3724, %v4438
      %v4479 = vadd.f32 %v3725, %v4443
      %v4480 = vadd.f32 %v3726, %v4446
      %v4481 = vld [vmem:[%s3340] sm:$0xe]
      %v4482 = vld [vmem:[%s3340 + $0xc] sm:$0xe]
      %v4483 = vld [vmem:[%s3340 + $0x18] sm:$0xe]
      %v4484 = vld [vmem:[%s3340 + $0x24] sm:$0xe]
      %v4485 = vld [vmem:[%s3340 + $0x30] sm:$0xe]
      %v4486 = vld [vmem:[%s3340 + $0x3c] sm:$0xe]
      %v4487 = vld [vmem:[%s3340 + $0x48] sm:$0xe]
      %v4488 = vld [vmem:[%s3340 + $0x54] sm:$0xe]
      %v4489 = vld [vmem:[%s3340 + $0x60] sm:$0xe]
      %v4490 = vld [vmem:[%s3340 + $0x6c] sm:$0xe]
      %v4491 = vld [vmem:[%s3340 + $0x78] sm:$0xe]
      %v4492 = vld [vmem:[%s3340 + $0x84] sm:$0xe]
      %v4493 = vld [vmem:[%s3340 + $0x90] sm:$0xe]
      %v4494 = vld [vmem:[%s3340 + $0x9c] sm:$0xe]
      %v4495 = vld [vmem:[%s3340 + $0xa8] sm:$0xe]
      %v4496 = vld [vmem:[%s3340 + $0xb4] sm:$0xe]
      %v4545 = vrot.slane %v4481, 5
      %v4546 = vrot.slane %v4545, 4
      %v4547 = vrot.slane %v3728, 5
      %v4548 = vsel %vm1266, %v4546, %v4547
      %v4549 = vrot.slane %v4547, 4
      %v4550 = vrot.slane %v3729, 5
      %v4551 = vsel %vm1266, %v4549, %v4550
      %v4552 = vrot.slane %v4482, 5
      %v4553 = vrot.slane %v4552, 4
      %v4554 = vrot.slane %v3731, 5
      %v4555 = vsel %vm1266, %v4553, %v4554
      %v4556 = vrot.slane %v4554, 4
      %v4557 = vrot.slane %v3732, 5
      %v4558 = vsel %vm1266, %v4556, %v4557
      %v4559 = vrot.slane %v4483, 5
      %v4560 = vrot.slane %v4559, 4
      %v4561 = vrot.slane %v3734, 5
      %v4562 = vsel %vm1266, %v4560, %v4561
      %v4563 = vrot.slane %v4561, 4
      %v4564 = vrot.slane %v3735, 5
      %v4565 = vsel %vm1266, %v4563, %v4564
      %v4566 = vrot.slane %v4484, 5
      %v4567 = vrot.slane %v4566, 4
      %v4568 = vrot.slane %v3737, 5
      %v4569 = vsel %vm1266, %v4567, %v4568
      %v4570 = vrot.slane %v4568, 4
      %v4571 = vrot.slane %v3738, 5
      %v4572 = vsel %vm1266, %v4570, %v4571
      %v4573 = vrot.slane %v4485, 5
      %v4574 = vrot.slane %v4573, 4
      %v4575 = vrot.slane %v3740, 5
      %v4576 = vsel %vm1266, %v4574, %v4575
      %v4577 = vrot.slane %v4575, 4
      %v4578 = vrot.slane %v3741, 5
      %v4579 = vsel %vm1266, %v4577, %v4578
      %v4580 = vrot.slane %v4486, 5
      %v4581 = vrot.slane %v4580, 4
      %v4582 = vrot.slane %v3743, 5
      %v4583 = vsel %vm1266, %v4581, %v4582
      %v4584 = vrot.slane %v4582, 4
      %v4585 = vrot.slane %v3744, 5
      %v4586 = vsel %vm1266, %v4584, %v4585
      %v4587 = vrot.slane %v4487, 5
      %v4588 = vrot.slane %v4587, 4
      %v4589 = vrot.slane %v3746, 5
      %v4590 = vsel %vm1266, %v4588, %v4589
      %v4591 = vrot.slane %v4589, 4
      %v4592 = vrot.slane %v3747, 5
      %v4593 = vsel %vm1266, %v4591, %v4592
      %v4594 = vrot.slane %v4488, 5
      %v4595 = vrot.slane %v4594, 4
      %v4596 = vrot.slane %v3749, 5
      %v4597 = vsel %vm1266, %v4595, %v4596
      %v4598 = vrot.slane %v4596, 4
      %v4599 = vrot.slane %v3750, 5
      %v4600 = vsel %vm1266, %v4598, %v4599
      %v4601 = vrot.slane %v4489, 5
      %v4602 = vrot.slane %v4601, 4
      %v4603 = vrot.slane %v3752, 5
      %v4604 = vsel %vm1266, %v4602, %v4603
      %v4605 = vrot.slane %v4603, 4
      %v4606 = vrot.slane %v3753, 5
      %v4607 = vsel %vm1266, %v4605, %v4606
      %v4608 = vrot.slane %v4490, 5
      %v4609 = vrot.slane %v4608, 4
      %v4610 = vrot.slane %v3755, 5
      %v4611 = vsel %vm1266, %v4609, %v4610
      %v4612 = vrot.slane %v4610, 4
      %v4613 = vrot.slane %v3756, 5
      %v4614 = vsel %vm1266, %v4612, %v4613
      %v4615 = vrot.slane %v4491, 5
      %v4616 = vrot.slane %v4615, 4
      %v4617 = vrot.slane %v3758, 5
      %v4618 = vsel %vm1266, %v4616, %v4617
      %v4619 = vrot.slane %v4617, 4
      %v4620 = vrot.slane %v3759, 5
      %v4621 = vsel %vm1266, %v4619, %v4620
      %v4622 = vrot.slane %v4492, 5
      %v4623 = vrot.slane %v4622, 4
      %v4624 = vrot.slane %v3761, 5
      %v4625 = vsel %vm1266, %v4623, %v4624
      %v4626 = vrot.slane %v4624, 4
      %v4627 = vrot.slane %v3762, 5
      %v4628 = vsel %vm1266, %v4626, %v4627
      %v4629 = vrot.slane %v4493, 5
      %v4630 = vrot.slane %v4629, 4
      %v4631 = vrot.slane %v3764, 5
      %v4632 = vsel %vm1266, %v4630, %v4631
      %v4633 = vrot.slane %v4631, 4
      %v4634 = vrot.slane %v3765, 5
      %v4635 = vsel %vm1266, %v4633, %v4634
      %v4636 = vrot.slane %v4494, 5
      %v4637 = vrot.slane %v4636, 4
      %v4638 = vrot.slane %v3767, 5
      %v4639 = vsel %vm1266, %v4637, %v4638
      %v4640 = vrot.slane %v4638, 4
      %v4641 = vrot.slane %v3768, 5
      %v4642 = vsel %vm1266, %v4640, %v4641
      %v4643 = vrot.slane %v4495, 5
      %v4644 = vrot.slane %v4643, 4
      %v4645 = vrot.slane %v3770, 5
      %v4646 = vsel %vm1266, %v4644, %v4645
      %v4647 = vrot.slane %v4645, 4
      %v4648 = vrot.slane %v3771, 5
      %v4649 = vsel %vm1266, %v4647, %v4648
      %v4650 = vrot.slane %v4496, 5
      %v4651 = vrot.slane %v4650, 4
      %v4652 = vrot.slane %v3773, 5
      %v4653 = vsel %vm1266, %v4651, %v4652
      %v4654 = vrot.slane %v4652, 4
      %v4655 = vrot.slane %v3774, 5
      %v4656 = vsel %vm1266, %v4654, %v4655
      %s4657 = scalar_lea.vmem %s1, 512
      %v4658 = vld [vmem:[%s4657] sm:$0xf]
      %v4659 = vld [vmem:[%s4657 + $0x4] sm:$0xf]
      %v4660 = vld [vmem:[%s4657 + $0x8] sm:$0xf]
      %v4661 = vld [vmem:[%s4657 + $0xc] sm:$0xf]
      %v4662 = vld [vmem:[%s4657 + $0x10] sm:$0xf]
      %v4663 = vld [vmem:[%s4657 + $0x14] sm:$0xf]
      %v4664 = vld [vmem:[%s4657 + $0x18] sm:$0xf]
      %v4665 = vld [vmem:[%s4657 + $0x1c] sm:$0xf]
      %v4666 = vld [vmem:[%s4657 + $0x20] sm:$0xf]
      %v4667 = vld [vmem:[%s4657 + $0x24] sm:$0xf]
      %v4668 = vld [vmem:[%s4657 + $0x28] sm:$0xf]
      %v4669 = vld [vmem:[%s4657 + $0x2c] sm:$0xf]
      %v4670 = vld [vmem:[%s4657 + $0x30] sm:$0xf]
      %v4671 = vld [vmem:[%s4657 + $0x34] sm:$0xf]
      %v4672 = vld [vmem:[%s4657 + $0x38] sm:$0xf]
      %v4673 = vld [vmem:[%s4657 + $0x3c] sm:$0xf]
      %v4674 = vunpack.c.l.b16 %v4548
      %v4675 = vunpack.c.l.b16 %v4551
      %v4676 = vunpack.c.l.b16 %v4555
      %v4677 = vunpack.c.l.b16 %v4558
      %v4678 = vunpack.c.l.b16 %v4562
      %v4679 = vunpack.c.l.b16 %v4565
      %v4680 = vunpack.c.l.b16 %v4569
      %v4681 = vunpack.c.l.b16 %v4572
      %v4682 = vunpack.c.l.b16 %v4576
      %v4683 = vunpack.c.l.b16 %v4579
      %v4684 = vunpack.c.l.b16 %v4583
      %v4685 = vunpack.c.l.b16 %v4586
      %v4686 = vunpack.c.l.b16 %v4590
      %v4687 = vunpack.c.l.b16 %v4593
      %v4688 = vunpack.c.l.b16 %v4597
      %v4689 = vunpack.c.l.b16 %v4600
      %v4690 = vunpack.c.l.b16 %v4604
      %v4691 = vunpack.c.l.b16 %v4607
      %v4692 = vunpack.c.l.b16 %v4611
      %v4693 = vunpack.c.l.b16 %v4614
      %v4694 = vunpack.c.l.b16 %v4618
      %v4695 = vunpack.c.l.b16 %v4621
      %v4696 = vunpack.c.l.b16 %v4625
      %v4697 = vunpack.c.l.b16 %v4628
      %v4698 = vunpack.c.l.b16 %v4632
      %v4699 = vunpack.c.l.b16 %v4635
      %v4700 = vunpack.c.l.b16 %v4639
      %v4701 = vunpack.c.l.b16 %v4642
      %v4702 = vunpack.c.l.b16 %v4646
      %v4703 = vunpack.c.l.b16 %v4649
      %v4704 = vunpack.c.l.b16 %v4653
      %v4705 = vunpack.c.l.b16 %v4656
      %v4706 = vpack.c.b16 %v4675, %v4674
      %v4707 = vpack.c.b16 %v4677, %v4676
      %v4708 = vpack.c.b16 %v4679, %v4678
      %v4709 = vpack.c.b16 %v4681, %v4680
      %v4710 = vpack.c.b16 %v4683, %v4682
      %v4711 = vpack.c.b16 %v4685, %v4684
      %v4712 = vpack.c.b16 %v4687, %v4686
      %v4713 = vpack.c.b16 %v4689, %v4688
      %v4714 = vpack.c.b16 %v4691, %v4690
      %v4715 = vpack.c.b16 %v4693, %v4692
      %v4716 = vpack.c.b16 %v4695, %v4694
      %v4717 = vpack.c.b16 %v4697, %v4696
      %v4718 = vpack.c.b16 %v4699, %v4698
      %v4719 = vpack.c.b16 %v4701, %v4700
      %v4720 = vpack.c.b16 %v4703, %v4702
      %v4721 = vpack.c.b16 %v4705, %v4704
      %v4754 = vunpack.c.l.b16 %v4658
      %v4755 = vunpack.c.l.b16 %v4659
      %v4756 = vunpack.c.l.b16 %v4660
      %v4757 = vunpack.c.l.b16 %v4661
      %v4758 = vunpack.c.l.b16 %v4662
      %v4759 = vunpack.c.l.b16 %v4663
      %v4760 = vunpack.c.l.b16 %v4664
      %v4761 = vunpack.c.l.b16 %v4665
      %v4762 = vunpack.c.l.b16 %v4666
      %v4763 = vunpack.c.l.b16 %v4667
      %v4764 = vunpack.c.l.b16 %v4668
      %v4765 = vunpack.c.l.b16 %v4669
      %v4766 = vunpack.c.l.b16 %v4670
      %v4767 = vunpack.c.l.b16 %v4671
      %v4768 = vunpack.c.l.b16 %v4672
      %v4769 = vunpack.c.l.b16 %v4673
      %v4770 = vpack.c.b16 %v4755, %v4754
      %v4771 = vpack.c.b16 %v4757, %v4756
      %v4772 = vpack.c.b16 %v4759, %v4758
      %v4773 = vpack.c.b16 %v4761, %v4760
      %v4774 = vpack.c.b16 %v4763, %v4762
      %v4775 = vpack.c.b16 %v4765, %v4764
      %v4776 = vpack.c.b16 %v4767, %v4766
      %v4777 = vpack.c.b16 %v4769, %v4768
      %4786 = vmatprep.subr.bf16.mxu0 0
      %4787 = vmatpush1.bf16.msra.mxu0 %v4777
      %4788 = vmatprep.subr.bf16.mxu0 0
      %4789 = vmatpush1.bf16.msra.mxu0 %v4776
      %4790 = vmatprep.subr.bf16.mxu0 0
      %4791 = vmatpush1.bf16.msra.mxu0 %v4775
      %4792 = vmatprep.subr.bf16.mxu0 0
      %4793 = vmatpush1.bf16.msra.mxu0 %v4774
      %4794 = vmatprep.subr.bf16.mxu0 0
      %4795 = vmatpush1.bf16.msra.mxu0 %v4773
      %4796 = vmatprep.subr.bf16.mxu0 0
      %4797 = vmatpush1.bf16.msra.mxu0 %v4772
      %4798 = vmatprep.subr.bf16.mxu0 0
      %4799 = vmatpush1.bf16.msra.mxu0 %v4771
      %4800 = vmatprep.subr.bf16.mxu0 0
      %4801 = vmatpush1.bf16.msra.mxu0 %v4770
      %4802 = vmatprep.subr.bf16.mxu0 0
      %4803 = vmatpush2.bf16.msra.mxu0 0
      %4804 = vmatprep.subr.bf16.mxu0 0
      %4805 = vmatpush2.bf16.msra.mxu0 0
      %4806 = vmatprep.subr.bf16.mxu0 0
      %4807 = vmatpush2.bf16.msra.mxu0 0
      %4808 = vmatprep.subr.bf16.mxu0 0
      %4809 = vmatpush2.bf16.msra.mxu0 0
      %4810 = vmatprep.subr.bf16.mxu0 0
      %4811 = vmatpush2.bf16.msra.mxu0 0
      %4812 = vmatprep.subr.bf16.mxu0 0
      %4813 = vmatpush2.bf16.msra.mxu0 0
      %4814 = vmatprep.subr.bf16.mxu0 0
      %4815 = vmatpush2.bf16.msra.mxu0 0
      %4816 = vmatprep.subr.bf16.mxu0 0
      %4817 = vmatpush2.bf16.msra.mxu0 0
      %4818 = vmatprep.mubr.bf16.mxu0 0
      %4819 = vmatmul.mubr.bf16.gmra.mxu0 %v4706
      %v4820 = vpop.f32.mrf.mxu0
      %v4821 = vadd.f32 0.0, %v4820
      %v4822 = vpop.f32.mrf.mxu0
      %v4823 = vpop.f32.mrf.mxu0
      %v4824 = vadd.f32 0.0, %v4823
      %v4825 = vpop.f32.mrf.mxu0
      %4826 = vmatprep.mubr.bf16.mxu0 0
      %4827 = vmatmul.mubr.bf16.gmra.mxu0 %v4707
      %v4828 = vpop.f32.mrf.mxu0
      %v4829 = vadd.f32 0.0, %v4828
      %v4830 = vpop.f32.mrf.mxu0
      %v4831 = vpop.f32.mrf.mxu0
      %v4832 = vadd.f32 0.0, %v4831
      %v4833 = vpop.f32.mrf.mxu0
      %4834 = vmatprep.mubr.bf16.mxu0 0
      %4835 = vmatmul.mubr.bf16.gmra.mxu0 %v4708
      %v4836 = vpop.f32.mrf.mxu0
      %v4837 = vadd.f32 0.0, %v4836
      %v4838 = vpop.f32.mrf.mxu0
      %v4839 = vpop.f32.mrf.mxu0
      %v4840 = vadd.f32 0.0, %v4839
      %v4841 = vpop.f32.mrf.mxu0
      %4842 = vmatprep.mubr.bf16.mxu0 0
      %4843 = vmatmul.mubr.bf16.gmra.mxu0 %v4709
      %v4844 = vpop.f32.mrf.mxu0
      %v4845 = vadd.f32 0.0, %v4844
      %v4846 = vpop.f32.mrf.mxu0
      %v4847 = vpop.f32.mrf.mxu0
      %v4848 = vadd.f32 0.0, %v4847
      %v4849 = vpop.f32.mrf.mxu0
      %4850 = vmatprep.mubr.bf16.mxu0 0
      %4851 = vmatmul.mubr.bf16.gmra.mxu0 %v4710
      %v4852 = vpop.f32.mrf.mxu0
      %v4853 = vadd.f32 0.0, %v4852
      %v4854 = vpop.f32.mrf.mxu0
      %v4855 = vpop.f32.mrf.mxu0
      %v4856 = vadd.f32 0.0, %v4855
      %v4857 = vpop.f32.mrf.mxu0
      %4858 = vmatprep.mubr.bf16.mxu0 0
      %4859 = vmatmul.mubr.bf16.gmra.mxu0 %v4711
      %v4860 = vpop.f32.mrf.mxu0
      %v4861 = vadd.f32 0.0, %v4860
      %v4862 = vpop.f32.mrf.mxu0
      %v4863 = vpop.f32.mrf.mxu0
      %v4864 = vadd.f32 0.0, %v4863
      %v4865 = vpop.f32.mrf.mxu0
      %4866 = vmatprep.mubr.bf16.mxu0 0
      %4867 = vmatmul.mubr.bf16.gmra.mxu0 %v4712
      %v4868 = vpop.f32.mrf.mxu0
      %v4869 = vadd.f32 0.0, %v4868
      %v4870 = vpop.f32.mrf.mxu0
      %v4871 = vpop.f32.mrf.mxu0
      %v4872 = vadd.f32 0.0, %v4871
      %v4873 = vpop.f32.mrf.mxu0
      %4874 = vmatprep.mubr.bf16.mxu0 0
      %4875 = vmatmul.mubr.bf16.gmra.mxu0 %v4713
      %v4876 = vpop.f32.mrf.mxu0
      %v4877 = vadd.f32 0.0, %v4876
      %v4878 = vpop.f32.mrf.mxu0
      %v4879 = vpop.f32.mrf.mxu0
      %v4880 = vadd.f32 0.0, %v4879
      %v4881 = vpop.f32.mrf.mxu0
      %4882 = vmatprep.mubr.bf16.mxu0 0
      %4883 = vmatmul.mubr.bf16.gmra.mxu0 %v4714
      %v4884 = vpop.f32.mrf.mxu0
      %v4885 = vadd.f32 0.0, %v4884
      %v4886 = vpop.f32.mrf.mxu0
      %v4887 = vpop.f32.mrf.mxu0
      %v4888 = vadd.f32 0.0, %v4887
      %v4889 = vpop.f32.mrf.mxu0
      %4890 = vmatprep.mubr.bf16.mxu0 0
      %4891 = vmatmul.mubr.bf16.gmra.mxu0 %v4715
      %v4892 = vpop.f32.mrf.mxu0
      %v4893 = vadd.f32 0.0, %v4892
      %v4894 = vpop.f32.mrf.mxu0
      %v4895 = vpop.f32.mrf.mxu0
      %v4896 = vadd.f32 0.0, %v4895
      %v4897 = vpop.f32.mrf.mxu0
      %4898 = vmatprep.mubr.bf16.mxu0 0
      %4899 = vmatmul.mubr.bf16.gmra.mxu0 %v4716
      %v4900 = vpop.f32.mrf.mxu0
      %v4901 = vadd.f32 0.0, %v4900
      %v4902 = vpop.f32.mrf.mxu0
      %v4903 = vpop.f32.mrf.mxu0
      %v4904 = vadd.f32 0.0, %v4903
      %v4905 = vpop.f32.mrf.mxu0
      %4906 = vmatprep.mubr.bf16.mxu0 0
      %4907 = vmatmul.mubr.bf16.gmra.mxu0 %v4717
      %v4908 = vpop.f32.mrf.mxu0
      %v4909 = vadd.f32 0.0, %v4908
      %v4910 = vpop.f32.mrf.mxu0
      %v4911 = vpop.f32.mrf.mxu0
      %v4912 = vadd.f32 0.0, %v4911
      %v4913 = vpop.f32.mrf.mxu0
      %4914 = vmatprep.mubr.bf16.mxu0 0
      %4915 = vmatmul.mubr.bf16.gmra.mxu0 %v4718
      %v4916 = vpop.f32.mrf.mxu0
      %v4917 = vadd.f32 0.0, %v4916
      %v4918 = vpop.f32.mrf.mxu0
      %v4919 = vpop.f32.mrf.mxu0
      %v4920 = vadd.f32 0.0, %v4919
      %v4921 = vpop.f32.mrf.mxu0
      %4922 = vmatprep.mubr.bf16.mxu0 0
      %4923 = vmatmul.mubr.bf16.gmra.mxu0 %v4719
      %v4924 = vpop.f32.mrf.mxu0
      %v4925 = vadd.f32 0.0, %v4924
      %v4926 = vpop.f32.mrf.mxu0
      %v4927 = vpop.f32.mrf.mxu0
      %v4928 = vadd.f32 0.0, %v4927
      %v4929 = vpop.f32.mrf.mxu0
      %4930 = vmatprep.mubr.bf16.mxu0 0
      %4931 = vmatmul.mubr.bf16.gmra.mxu0 %v4720
      %v4932 = vpop.f32.mrf.mxu0
      %v4933 = vadd.f32 0.0, %v4932
      %v4934 = vpop.f32.mrf.mxu0
      %v4935 = vpop.f32.mrf.mxu0
      %v4936 = vadd.f32 0.0, %v4935
      %v4937 = vpop.f32.mrf.mxu0
      %4938 = vmatprep.mubr.bf16.mxu0 0
      %4939 = vmatmul.mubr.bf16.gmra.mxu0 %v4721
      %v4940 = vpop.f32.mrf.mxu0
      %v4941 = vadd.f32 0.0, %v4940
      %v4942 = vpop.f32.mrf.mxu0
      %v4943 = vpop.f32.mrf.mxu0
      %v4944 = vadd.f32 0.0, %v4943
      %v4945 = vpop.f32.mrf.mxu0
      %4946 = vdwg.mxu0
      %v4947 = vadd.f32 %v4449, %v4821
      %v4948 = vadd.f32 %v4450, %v4824
      %v4949 = vadd.f32 %v4451, %v4829
      %v4950 = vadd.f32 %v4452, %v4832
      %v4951 = vadd.f32 %v4453, %v4837
      %v4952 = vadd.f32 %v4454, %v4840
      %v4953 = vadd.f32 %v4455, %v4845
      %v4954 = vadd.f32 %v4456, %v4848
      %v4955 = vadd.f32 %v4457, %v4853
      %v4956 = vadd.f32 %v4458, %v4856
      %v4957 = vadd.f32 %v4459, %v4861
      %v4958 = vadd.f32 %v4460, %v4864
      %v4959 = vadd.f32 %v4461, %v4869
      %v4960 = vadd.f32 %v4462, %v4872
      %v4961 = vadd.f32 %v4463, %v4877
      %v4962 = vadd.f32 %v4464, %v4880
      %v4963 = vadd.f32 %v4465, %v4885
      %v4964 = vadd.f32 %v4466, %v4888
      %v4965 = vadd.f32 %v4467, %v4893
      %v4966 = vadd.f32 %v4468, %v4896
      %v4967 = vadd.f32 %v4469, %v4901
      %v4968 = vadd.f32 %v4470, %v4904
      %v4969 = vadd.f32 %v4471, %v4909
      %v4970 = vadd.f32 %v4472, %v4912
      %v4971 = vadd.f32 %v4473, %v4917
      %v4972 = vadd.f32 %v4474, %v4920
      %v4973 = vadd.f32 %v4475, %v4925
      %v4974 = vadd.f32 %v4476, %v4928
      %v4975 = vadd.f32 %v4477, %v4933
      %v4976 = vadd.f32 %v4478, %v4936
      %v4977 = vadd.f32 %v4479, %v4941
      %v4978 = vadd.f32 %v4480, %v4944
      %4979 = vst [vmem:[%s168] sm:$0xff] %v4947
      %4980 = vst [vmem:[%s168 + $0x8] sm:$0xff] %v4948
      %4981 = vst [vmem:[%s168 + $0x10] sm:$0xff] %v4949
      %4982 = vst [vmem:[%s168 + $0x18] sm:$0xff] %v4950
      %4983 = vst [vmem:[%s168 + $0x20] sm:$0xff] %v4951
      %4984 = vst [vmem:[%s168 + $0x28] sm:$0xff] %v4952
      %4985 = vst [vmem:[%s168 + $0x30] sm:$0xff] %v4953
      %4986 = vst [vmem:[%s168 + $0x38] sm:$0xff] %v4954
      %4987 = vst [vmem:[%s168 + $0x40] sm:$0xff] %v4955
      %4988 = vst [vmem:[%s168 + $0x48] sm:$0xff] %v4956
      %4989 = vst [vmem:[%s168 + $0x50] sm:$0xff] %v4957
      %4990 = vst [vmem:[%s168 + $0x58] sm:$0xff] %v4958
      %4991 = vst [vmem:[%s168 + $0x60] sm:$0xff] %v4959
      %4992 = vst [vmem:[%s168 + $0x68] sm:$0xff] %v4960
      %4993 = vst [vmem:[%s168 + $0x70] sm:$0xff] %v4961
      %4994 = vst [vmem:[%s168 + $0x78] sm:$0xff] %v4962
      %4995 = vst [vmem:[%s168 + $0x80] sm:$0xff] %v4963
      %4996 = vst [vmem:[%s168 + $0x88] sm:$0xff] %v4964
      %4997 = vst [vmem:[%s168 + $0x90] sm:$0xff] %v4965
      %4998 = vst [vmem:[%s168 + $0x98] sm:$0xff] %v4966
      %4999 = vst [vmem:[%s168 + $0xa0] sm:$0xff] %v4967
      %5000 = vst [vmem:[%s168 + $0xa8] sm:$0xff] %v4968
      %5001 = vst [vmem:[%s168 + $0xb0] sm:$0xff] %v4969
      %5002 = vst [vmem:[%s168 + $0xb8] sm:$0xff] %v4970
      %5003 = vst [vmem:[%s168 + $0xc0] sm:$0xff] %v4971
      %5004 = vst [vmem:[%s168 + $0xc8] sm:$0xff] %v4972
      %5005 = vst [vmem:[%s168 + $0xd0] sm:$0xff] %v4973
      %5006 = vst [vmem:[%s168 + $0xd8] sm:$0xff] %v4974
      %5007 = vst [vmem:[%s168 + $0xe0] sm:$0xff] %v4975
      %5008 = vst [vmem:[%s168 + $0xe8] sm:$0xff] %v4976
      %5009 = vst [vmem:[%s168 + $0xf0] sm:$0xff] %v4977
      %5010 = vst [vmem:[%s168 + $0xf8] sm:$0xff] %v4978
      %p5011 = scmp.eq.s32.totalorder %s15, 0
      // Predicated region
      $region29: #{bottleneck_forward.7} parent=27 // pred_check
        %p5012 = pneg %p5011
      $region30: #{bottleneck_forward.7} parent=27 // pred_check_branch
        %5014 = sbr.rel (%p5012) target = $region32
      $region31: #{bottleneck_forward.7} parent=27 // pred_region
        %5015 = vst [vmem:[%s3] sm:$0x3] 0.0
      $region32: #{bottleneck_forward.7} parent=27 // pred_fallthru
        _
      %v5016 = vld [vmem:[%s3] sm:$0x3]
      %v5017 = vadd.f32 %v4947, %v4948
      %v5018 = vadd.f32 %v5017, %v4949
      %v5019 = vadd.f32 %v5018, %v4950
      %v5020 = vadd.f32 %v5019, %v4951
      %v5021 = vadd.f32 %v5020, %v4952
      %v5022 = vadd.f32 %v5021, %v4953
      %v5023 = vadd.f32 %v5022, %v4954
      %v5024 = vadd.f32 %v5023, %v4955
      %v5025 = vadd.f32 %v5024, %v4956
      %v5026 = vadd.f32 %v5025, %v4957
      %v5027 = vadd.f32 %v5026, %v4958
      %v5028 = vadd.f32 %v5027, %v4959
      %v5029 = vadd.f32 %v5028, %v4960
      %v5030 = vadd.f32 %v5029, %v4961
      %v5031 = vadd.f32 %v5030, %v4962
      %v5032 = vadd.f32 %v5031, %v4963
      %v5033 = vadd.f32 %v5032, %v4964
      %v5034 = vadd.f32 %v5033, %v4965
      %v5035 = vadd.f32 %v5034, %v4966
      %v5036 = vadd.f32 %v5035, %v4967
      %v5037 = vadd.f32 %v5036, %v4968
      %v5038 = vadd.f32 %v5037, %v4969
      %v5039 = vadd.f32 %v5038, %v4970
      %v5040 = vadd.f32 %v5039, %v4971
      %v5041 = vadd.f32 %v5040, %v4972
      %v5042 = vadd.f32 %v5041, %v4973
      %v5043 = vadd.f32 %v5042, %v4974
      %v5044 = vadd.f32 %v5043, %v4975
      %v5045 = vadd.f32 %v5044, %v4976
      %v5046 = vadd.f32 %v5045, %v4977
      %v5047 = vadd.f32 %v5046, %v4978
      %v5048 = vrot.slane %v5047, 4
      %v5049 = vadd.f32 %v5047, %v5048
      %v5050 = vrot.slane %v5049, 2
      %v5051 = vadd.f32 %v5049, %v5050
      %v5052 = vrot.slane %v5051, 1
      %v5053 = vadd.f32 %v5051, %v5052
      %v5054 = vmul.f32 %v4947, %v4947
      %v5055 = vmul.f32 %v4948, %v4948
      %v5056 = vmul.f32 %v4949, %v4949
      %v5057 = vmul.f32 %v4950, %v4950
      %v5058 = vmul.f32 %v4951, %v4951
      %v5059 = vmul.f32 %v4952, %v4952
      %v5060 = vmul.f32 %v4953, %v4953
      %v5061 = vmul.f32 %v4954, %v4954
      %v5062 = vmul.f32 %v4955, %v4955
      %v5063 = vmul.f32 %v4956, %v4956
      %v5064 = vmul.f32 %v4957, %v4957
      %v5065 = vmul.f32 %v4958, %v4958
      %v5066 = vmul.f32 %v4959, %v4959
      %v5067 = vmul.f32 %v4960, %v4960
      %v5068 = vmul.f32 %v4961, %v4961
      %v5069 = vmul.f32 %v4962, %v4962
      %v5070 = vmul.f32 %v4963, %v4963
      %v5071 = vmul.f32 %v4964, %v4964
      %v5072 = vmul.f32 %v4965, %v4965
      %v5073 = vmul.f32 %v4966, %v4966
      %v5074 = vmul.f32 %v4967, %v4967
      %v5075 = vmul.f32 %v4968, %v4968
      %v5076 = vmul.f32 %v4969, %v4969
      %v5077 = vmul.f32 %v4970, %v4970
      %v5078 = vmul.f32 %v4971, %v4971
      %v5079 = vmul.f32 %v4972, %v4972
      %v5080 = vmul.f32 %v4973, %v4973
      %v5081 = vmul.f32 %v4974, %v4974
      %v5082 = vmul.f32 %v4975, %v4975
      %v5083 = vmul.f32 %v4976, %v4976
      %v5084 = vmul.f32 %v4977, %v4977
      %v5085 = vmul.f32 %v4978, %v4978
      %v5086 = vadd.f32 %v5054, %v5055
      %v5087 = vadd.f32 %v5086, %v5056
      %v5088 = vadd.f32 %v5087, %v5057
      %v5089 = vadd.f32 %v5088, %v5058
      %v5090 = vadd.f32 %v5089, %v5059
      %v5091 = vadd.f32 %v5090, %v5060
      %v5092 = vadd.f32 %v5091, %v5061
      %v5093 = vadd.f32 %v5092, %v5062
      %v5094 = vadd.f32 %v5093, %v5063
      %v5095 = vadd.f32 %v5094, %v5064
      %v5096 = vadd.f32 %v5095, %v5065
      %v5097 = vadd.f32 %v5096, %v5066
      %v5098 = vadd.f32 %v5097, %v5067
      %v5099 = vadd.f32 %v5098, %v5068
      %v5100 = vadd.f32 %v5099, %v5069
      %v5101 = vadd.f32 %v5100, %v5070
      %v5102 = vadd.f32 %v5101, %v5071
      %v5103 = vadd.f32 %v5102, %v5072
      %v5104 = vadd.f32 %v5103, %v5073
      %v5105 = vadd.f32 %v5104, %v5074
      %v5106 = vadd.f32 %v5105, %v5075
      %v5107 = vadd.f32 %v5106, %v5076
      %v5108 = vadd.f32 %v5107, %v5077
      %v5109 = vadd.f32 %v5108, %v5078
      %v5110 = vadd.f32 %v5109, %v5079
      %v5111 = vadd.f32 %v5110, %v5080
      %v5112 = vadd.f32 %v5111, %v5081
      %v5113 = vadd.f32 %v5112, %v5082
      %v5114 = vadd.f32 %v5113, %v5083
      %v5115 = vadd.f32 %v5114, %v5084
      %v5116 = vadd.f32 %v5115, %v5085
      %v5117 = vrot.slane %v5116, 4
      %v5118 = vadd.f32 %v5116, %v5117
      %v5119 = vrot.slane %v5118, 2
      %v5120 = vadd.f32 %v5118, %v5119
      %v5121 = vrot.slane %v5120, 1
      %v5122 = vadd.f32 %v5120, %v5121
      %vm5123 = vcmask 1040384
      %v5124 = vsel %vm5123, %v5053, %v5122
      %v5125 = vadd.f32 %v5016, %v5124
      %5126 = vst [vmem:[%s3] sm:$0x3] %v5125
      %p5127 = scmp.lt.s32.totalorder %s15, 2
      %s5128 = scalar_select %p5127, %s15, 2
      %s5129 = smul.addr %s5128, 32
      %s5130 = smul.addr %s5129, 8
      %s5131 = scalar_lea.vmem %s2, %s5130
      // Predicated region
      $region33: #{bottleneck_forward.7} parent=27 // pred_check
        %p5132 = pneg %p80
      $region34: #{bottleneck_forward.7} parent=27 // pred_check_branch
        %5134 = sbr.rel (%p5132) target = $region36
      $region35: #{bottleneck_forward.7} parent=27 // pred_region
        _
      $region36: #{bottleneck_forward.7} parent=27 // pred_fallthru
        _
      // Predicated region
      $region37: #{bottleneck_forward.7} parent=27 // pred_check
        %p5135 = pneg %p101
      $region38: #{bottleneck_forward.7} parent=27 // pred_check_branch
        %5137 = sbr.rel (%p5135) target = $region40
      $region39: #{bottleneck_forward.7} parent=27 // pred_region
        _
      $region40: #{bottleneck_forward.7} parent=27 // pred_fallthru
        _
      // Predicated region
      $region41: #{bottleneck_forward.7} parent=27 // pred_check
        %p5138 = pneg %p101
      $region42: #{bottleneck_forward.7} parent=27 // pred_check_branch
        %5140 = sbr.rel (%p5138) target = $region44
      $region43: #{bottleneck_forward.7} parent=27 // pred_region
        _
      $region44: #{bottleneck_forward.7} parent=27 // pred_fallthru
        _
    $region28: #{bottleneck_forward.7} parent=5 // pred_fallthru
      _
    %p5141 = scmp.le.s32.totalorder 2, %s10
    // Predicated region
    $region45: #{bottleneck_forward.7} parent=5 // pred_check
      %p5142 = pneg %p5141
    $region46: #{bottleneck_forward.7} parent=5 // pred_check_branch
      %5144 = sbr.rel (%p5142) target = $region48
    $region47: #{bottleneck_forward.7} parent=5 // pred_region
      %s5145 = ssub.s32 %s10, 2
      // Predicated region
      $region49: #{bottleneck_forward.7} parent=47 // pred_check
        %p5146 = pneg %p86
      $region50: #{bottleneck_forward.7} parent=47 // pred_check_branch
        %5148 = sbr.rel (%p5146) target = $region52
      $region51: #{bottleneck_forward.7} parent=47 // pred_region
        %p5149 = scmp.lt.s32.totalorder %s16, 2
        %s5150 = scalar_select %p5149, %s16, 2
        %s5151 = smul.addr %s5150, 32
        %s5152 = smul.addr %s5151, 8
        %s5153 = scalar_lea.vmem %s2, %s5152
      $region52: #{bottleneck_forward.7} parent=47 // pred_fallthru
        _
    $region48: #{bottleneck_forward.7} parent=5 // pred_fallthru
      _
  $region6: #{bottleneck_forward.7} parent=0 // loop_footer
    %s14 = sadd.s32 1, %s10
  $region7: #{bottleneck_forward.7} parent=0 // loop_footer_branch
    %9 = sbr.rel target = $region3
  $region8: #{bottleneck_forward.7} parent=0 // loop_exit
    _

</llo_original>
